<compile_context>
chip_gen: v6e
topology: v6e:2x2x1
jax: 0.10.0
libtpu: 0.0.40
codegen_flags: <defaults>
</compile_context>

<pallas_src>
import functools

import jax
import jax.numpy as jnp
from jax import lax
from jax.experimental import pallas as pl
from jax.experimental.pallas import tpu as pltpu

EPS = 1e-10        # LayerNormalization epsilon of the reference module
NEG_INF = -1e9     # masked_fill value in scaled_dot_product_no_loop_batch


# ----------------------------------------------------------------------------
# In-kernel helpers (traced inside the Pallas kernel bodies)
# ----------------------------------------------------------------------------
def _add_layernorm(a, b, g, s):
    """layer_norm(a + b): scale*(x - mean)/(biased_std + eps) + shift, f32."""
    x = a + b
    mean = jnp.mean(x, axis=-1, keepdims=True)
    xc = x - mean
    std = jnp.sqrt(jnp.mean(xc * xc, axis=-1, keepdims=True))   # unbiased=False
    return g * xc / (std + EPS) + s


def _fused_mha(x_q, x_kv, mask, wq, bq, wk, bk, wv, bv, wpj, bpj,
               num_heads, cdt, approx):
    """Multi-head attention for one (query-tile, batch) block, all heads fused.

    x_q: (Tq, M) queries, x_kv: (K, M) keys/values.  wq/wk/wv: (M, H*D)
    head-concatenated slabs (dtype cdt), wpj: (H*D, M).  mask: (Tq, K) float
    (1.0 = masked) or None (cross attention).
    """
    hd = wq.shape[1]
    d = hd // num_heads
    inv_sqrt_d = 1.0 / (d ** 0.5)

    xq = x_q.astype(cdt)
    xkv = x_kv.astype(cdt)
    # One wide MXU pass per projection; 1/sqrt(d) folded into q once.
    q = (jnp.dot(xq, wq, preferred_element_type=jnp.float32) + bq) * inv_sqrt_d
    k = jnp.dot(xkv, wk, preferred_element_type=jnp.float32) + bk
    v = jnp.dot(xkv, wv, preferred_element_type=jnp.float32) + bv

    heads = []
    for h in range(num_heads):                    # static unroll, H is small
        sl = slice(h * d, (h + 1) * d)
        qh = q[:, sl].astype(cdt)                 # (Tq, D)
        kh = k[:, sl].astype(cdt)                 # (K, D)
        vh = v[:, sl].astype(cdt)                 # (K, D)
        # contract last dims of both operands -> no explicit transpose of kh
        s = lax.dot_general(qh, kh, (((1,), (1,)), ((), ())),
                            preferred_element_type=jnp.float32)   # (Tq, K)
        if mask is not None:
            s = jnp.where(mask > 0.0, NEG_INF, s)
        s = s - jnp.max(s, axis=-1, keepdims=True)
        p = jnp.exp(s)
        denom = jnp.sum(p, axis=-1, keepdims=True)
        if approx:
            p = p * pl.reciprocal(denom, approx=True)
        else:
            p = p / denom
        heads.append(jnp.dot(p.astype(cdt), vh,
                             preferred_element_type=jnp.float32))  # (Tq, D)

    # cat(heads) once, then ONE output projection with contraction width H*D.
    o = jnp.concatenate(heads, axis=-1).astype(cdt)                # (Tq, H*D)
    return jnp.dot(o, wpj, preferred_element_type=jnp.float32) + bpj


# ----------------------------------------------------------------------------
# Fused decoder-block kernel: one program per (batch, query-tile)
# ----------------------------------------------------------------------------
def _decoder_block_kernel(num_heads, cdt, approx,
                          decq_ref, dec_ref, enc_ref, mask_ref,
                          wq1_ref, bq1_ref, wk1_ref, bk1_ref, wv1_ref, bv1_ref,
                          wpj1_ref, bpj1_ref, ln1g_ref, ln1b_ref,
                          wq2_ref, bq2_ref, wk2_ref, bk2_ref, wv2_ref, bv2_ref,
                          wpj2_ref, bpj2_ref, ln2g_ref, ln2b_ref,
                          ffw1_ref, ffb1_ref, ffw2_ref, ffb2_ref,
                          ln3g_ref, ln3b_ref,
                          out_ref):
    x0 = decq_ref[...]         # (Tq, M) query rows of this tile
    dec_full = dec_ref[...]    # (K, M)  full decoder input (self-attn K/V)
    enc = enc_ref[...]         # (K, M)  encoder output (cross-attn K/V)

    # masked self-attention + residual + LN   (dropout == identity, eval mode)
    a1 = _fused_mha(x0, dec_full, mask_ref[...],
                    wq1_ref[...], bq1_ref[...], wk1_ref[...], bk1_ref[...],
                    wv1_ref[...], bv1_ref[...], wpj1_ref[...], bpj1_ref[...],
                    num_heads, cdt, approx)
    x1 = _add_layernorm(x0, a1, ln1g_ref[...], ln1b_ref[...])

    # cross-attention (mask-free) + residual + LN
    a2 = _fused_mha(x1, enc, None,
                    wq2_ref[...], bq2_ref[...], wk2_ref[...], bk2_ref[...],
                    wv2_ref[...], bv2_ref[...], wpj2_ref[...], bpj2_ref[...],
                    num_heads, cdt, approx)
    x2 = _add_layernorm(x1, a2, ln2g_ref[...], ln2b_ref[...])

    # feed-forward (linear - relu - linear) + residual + LN
    h = jnp.maximum(
        jnp.dot(x2.astype(cdt), ffw1_ref[...],
                preferred_element_type=jnp.float32) + ffb1_ref[...], 0.0)
    f = (jnp.dot(h.astype(cdt), ffw2_ref[...],
                 preferred_element_type=jnp.float32) + ffb2_ref[...])
    out_ref[...] = _add_layernorm(x2, f, ln3g_ref[...], ln3b_ref[...])


def _vocab_proj_kernel(cdt, x_ref, w_ref, b_ref, o_ref):
    o_ref[...] = (jnp.dot(x_ref[...].astype(cdt), w_ref[...],
                          preferred_element_type=jnp.float32) + b_ref[...])


# ----------------------------------------------------------------------------
# Wrappers calling pallas_call
# ----------------------------------------------------------------------------
def _layer_param_list(fp):
    return [
        fp["a1"]["wq"], fp["a1"]["bq"], fp["a1"]["wk"], fp["a1"]["bk"],
        fp["a1"]["wv"], fp["a1"]["bv"], fp["a1"]["w_pj"], fp["a1"]["b_pj"],
        fp["ln1_g"], fp["ln1_b"],
        fp["a2"]["wq"], fp["a2"]["bq"], fp["a2"]["wk"], fp["a2"]["bk"],
        fp["a2"]["wv"], fp["a2"]["bv"], fp["a2"]["w_pj"], fp["a2"]["b_pj"],
        fp["ln2_g"], fp["ln2_b"],
        fp["ff_w1"], fp["ff_b1"], fp["ff_w2"], fp["ff_b2"],
        fp["ln3_g"], fp["ln3_b"],
    ]


def decoder_block(fp, dec_inp, enc_inp, mask, num_heads, *, block_q=None):
    N, K, M = dec_inp.shape
    tq = K if block_q is None else int(block_q)
    if K % tq != 0 or (tq != K and tq % 8 != 0):
        tq = K                                    # safe fallback: one tile per batch

    params = _layer_param_list(fp)
    cdt = params[0].dtype                         # matmul compute dtype (f32 / bf16)
    approx = cdt != jnp.float32                   # approx softmax recip only on perf path

    mask_batched = mask.shape[0] == N             # (N,K,K) or shared (1,K,K)

    def mask_idx(n, i):
        return (n if mask_batched else 0, i, 0)

    act_q = pl.BlockSpec((None, tq, M), lambda n, i: (n, i, 0))
    act_full = pl.BlockSpec((None, K, M), lambda n, i: (n, 0, 0))

    def const2d(p):                               # batch/tile-invariant weight block
        return pl.BlockSpec(p.shape, lambda n, i: (0, 0))

    in_specs = ([act_q, act_full, act_full,
                 pl.BlockSpec((None, tq, K), mask_idx)]
                + [const2d(p) for p in params])

    return pl.pallas_call(
        functools.partial(_decoder_block_kernel, num_heads, cdt, approx),
        grid=(N, K // tq),
        in_specs=in_specs,
        out_specs=pl.BlockSpec((None, tq, M), lambda n, i: (n, i, 0)),
        out_shape=jax.ShapeDtypeStruct((N, K, M), jnp.float32),
        compiler_params=pltpu.CompilerParams(
            dimension_semantics=("parallel", "parallel"),
            vmem_limit_bytes=64 * 1024 * 1024),
    )(dec_inp, dec_inp, enc_inp, mask, *params)


def vocab_projection(x, w, b, *, block_v=None):
    N, K, M = x.shape
    V = w.shape[1]
    cdt = w.dtype
    tv = V if block_v is None else int(block_v)
    if tv >= V or V % tv != 0 or tv % 128 != 0:
        tv = V                                    # full-width fallback (small vocab)
    return pl.pallas_call(
        functools.partial(_vocab_proj_kernel, cdt),
        grid=(N, V // tv),
        in_specs=[pl.BlockSpec((None, K, M), lambda n, j: (n, 0, 0)),
                  pl.BlockSpec((M, tv), lambda n, j: (0, j)),
                  pl.BlockSpec((1, tv), lambda n, j: (0, j))],
        out_specs=pl.BlockSpec((None, K, tv), lambda n, j: (n, 0, j)),
        out_shape=jax.ShapeDtypeStruct((N, K, V), jnp.float32),
        compiler_params=pltpu.CompilerParams(
            dimension_semantics=("parallel", "parallel"),
            vmem_limit_bytes=64 * 1024 * 1024),
    )(x, w, b)


# ----------------------------------------------------------------------------
# Parameter fusion, done ONCE at load time (hoisted out of the forward path):
# per-head (H, M, D) -> head-concatenated (M, H*D) slabs, matmul weights cast
# to the compute dtype.  Column order matches torch.cat([head_i...], dim=-1).
# ----------------------------------------------------------------------------
def _fuse_mha_params(p, dtype):
    H, Min, Dq = p["wq"].shape
    Dv = p["wv"].shape[-1]
    return dict(
        wq=jnp.transpose(p["wq"], (1, 0, 2)).reshape(Min, H * Dq).astype(dtype),
        bq=p["bq"].reshape(1, H * Dq).astype(jnp.float32),
        wk=jnp.transpose(p["wk"], (1, 0, 2)).reshape(Min, H * Dq).astype(dtype),
        bk=p["bk"].reshape(1, H * Dq).astype(jnp.float32),
        wv=jnp.transpose(p["wv"], (1, 0, 2)).reshape(Min, H * Dv).astype(dtype),
        bv=p["bv"].reshape(1, H * Dv).astype(jnp.float32),
        w_pj=p["w_pj"].astype(dtype),
        b_pj=p["b_pj"].astype(jnp.float32),
    )


def fuse_decoder_params(params, *, param_dtype=jnp.bfloat16):
    layers = []
    for lp in params["layers"]:
        layers.append(dict(
            a1=_fuse_mha_params(lp["attn_self"], param_dtype),
            a2=_fuse_mha_params(lp["attn_cross"], param_dtype),
            ln1_g=lp["ln1_g"], ln1_b=lp["ln1_b"],
            ln2_g=lp["ln2_g"], ln2_b=lp["ln2_b"],
            ln3_g=lp["ln3_g"], ln3_b=lp["ln3_b"],
            ff_w1=lp["ff_w1"].astype(param_dtype), ff_b1=lp["ff_b1"],
            ff_w2=lp["ff_w2"].astype(param_dtype), ff_b2=lp["ff_b2"],
        ))
    return dict(layers=layers,
                proj_w=params["proj_w"].astype(param_dtype),
                proj_b=params["proj_b"])


def decoder_forward(fused, target_seq, enc_out, mask, *, num_heads,
                    block_q=None, block_v=None):
    out = target_seq
    for fp in fused["layers"]:
        out = decoder_block(fp, out, enc_out, mask, num_heads, block_q=block_q)
    return vocab_projection(out, fused["proj_w"], fused["proj_b"],
                            block_v=block_v)


# ----------------------------------------------------------------------------
# Deterministic synthetic parameters (shapes mirror the PyTorch module)
# ----------------------------------------------------------------------------
def _u(key, shape, scale=0.1):
    return jax.random.uniform(key, shape, jnp.float32, -scale, scale)


def init_mha(key, num_heads, dim_in, dim_out):
    ks = jax.random.split(key, 8)
    return dict(
        wq=_u(ks[0], (num_heads, dim_in, dim_out)),
        bq=_u(ks[1], (num_heads, 1, dim_out)),
        wk=_u(ks[2], (num_heads, dim_in, dim_out)),
        bk=_u(ks[3], (num_heads, 1, dim_out)),
        wv=_u(ks[4], (num_heads, dim_in, dim_out)),
        bv=_u(ks[5], (num_heads, 1, dim_out)),
        w_pj=_u(ks[6], (num_heads * dim_out, dim_in)),
        b_pj=_u(ks[7], (1, dim_in)),
    )


def init_block(key, num_heads, emb_dim, ff_dim):
    ks = jax.random.split(key, 6)
    return dict(
        attn_self=init_mha(ks[0], num_heads, emb_dim, emb_dim // num_heads),
        attn_cross=init_mha(ks[1], num_heads, emb_dim, emb_dim // num_heads),
        ln1_g=jnp.ones((1, emb_dim), jnp.float32),
        ln1_b=jnp.zeros((1, emb_dim), jnp.float32),
        ln2_g=jnp.ones((1, emb_dim), jnp.float32),
        ln2_b=jnp.zeros((1, emb_dim), jnp.float32),
        ln3_g=jnp.ones((1, emb_dim), jnp.float32),
        ln3_b=jnp.zeros((1, emb_dim), jnp.float32),
        ff_w1=_u(ks[2], (emb_dim, ff_dim)),
        ff_b1=_u(ks[3], (1, ff_dim)),
        ff_w2=_u(ks[4], (ff_dim, emb_dim)),
        ff_b2=_u(ks[5], (1, emb_dim)),
    )


def init_decoder(key, num_heads, emb_dim, ff_dim, num_layers, vocab_len):
    ks = jax.random.split(key, num_layers + 2)
    return dict(
        layers=[init_block(ks[i], num_heads, emb_dim, ff_dim)
                for i in range(num_layers)],
        proj_w=_u(ks[-2], (emb_dim, vocab_len)),
        proj_b=_u(ks[-1], (1, vocab_len)),
    )


# ----------------------------------------------------------------------------
# Pure-JAX per-head reference (mirrors the PyTorch forward) for correctness
# ----------------------------------------------------------------------------
def _ref_mha(p, q_in, kv_in, mask):
    H = p["wq"].shape[0]
    outs = []
    for h in range(H):
        Q = q_in @ p["wq"][h] + p["bq"][h]
        Kk = kv_in @ p["wk"][h] + p["bk"][h]
        V = kv_in @ p["wv"][h] + p["bv"][h]
        s = jnp.einsum("nkd,nld->nkl", Q, Kk) / (Q.shape[-1] ** 0.5)
        if mask is not None:
            s = jnp.where(mask > 0, NEG_INF, s)
        w = jax.nn.softmax(s, axis=-1)
        outs.append(jnp.einsum("nkl,nld->nkd", w, V))
    cat = jnp.concatenate(outs, axis=-1)
    return cat @ p["w_pj"] + p["b_pj"]


def _ref_ln(x, g, b):
    mean = jnp.mean(x, axis=-1, keepdims=True)
    xc = x - mean
    std = jnp.sqrt(jnp.mean(xc * xc, axis=-1, keepdims=True))
    return g * xc / (std + EPS) + b


def _ref_block(p, dec, enc, mask):
    x = _ref_ln(dec + _ref_mha(p["attn_self"], dec, dec, mask),
                p["ln1_g"], p["ln1_b"])
    x = _ref_ln(x + _ref_mha(p["attn_cross"], x, enc, None),
                p["ln2_g"], p["ln2_b"])
    f = jnp.maximum(x @ p["ff_w1"] + p["ff_b1"], 0.0) @ p["ff_w2"] + p["ff_b2"]
    return _ref_ln(x + f, p["ln3_g"], p["ln3_b"])


def _ref_decoder(params, target, enc, mask):
    out = target
    for lp in params["layers"]:
        out = _ref_block(lp, out, enc, mask)
    return out @ params["proj_w"] + params["proj_b"]


# ----------------------------------------------------------------------------
if __name__ == "__main__":
    # batch, seq, emb, heads, ff-hidden, layers, vocab
    N, K, M, H, F, L, V = 2, 16, 32, 4, 64, 2, 256
    key = jax.random.PRNGKey(0)
    k_tgt, k_enc, k_par = jax.random.split(key, 3)
    params = init_decoder(k_par, H, M, F, L, V)
    target = jax.random.normal(k_tgt, (N, K, M), jnp.float32)
    enc_out = jax.random.normal(k_enc, (N, K, M), jnp.float32)
    # Shared causal (subsequent) mask, 1.0 where future positions are masked.
    # Passed once as (1, K, K); the kernel fetches it with a batch-invariant block.
    mask = jnp.triu(jnp.ones((K, K), jnp.float32), k=1)[None]

    fwd = jax.jit(functools.partial(decoder_forward, num_heads=H,
                                    block_q=8, block_v=128))

    # Pure-JAX reference at full f32 matmul precision as the ground truth.
    with jax.default_matmul_precision("highest"):
        ref = jax.block_until_ready(_ref_decoder(params, target, enc_out, mask))

    # Exact-semantics path: f32 weights, exact softmax normalization.
    fused_f32 = fuse_decoder_params(params, param_dtype=jnp.float32)
    out_f32 = jax.block_until_ready(fwd(fused_f32, target, enc_out, mask))
    assert out_f32.shape == (N, K, V), out_f32.shape
    err_f32 = float(jnp.max(jnp.abs(out_f32 - ref)))
    assert err_f32 < 2e-2, f"f32 path max-abs-err {err_f32}"

    # Performance path: bf16 matmul operands, f32 accumulation / LN / softmax.
    fused_bf16 = fuse_decoder_params(params, param_dtype=jnp.bfloat16)
    out_bf16 = jax.block_until_ready(fwd(fused_bf16, target, enc_out, mask))
    err_bf16 = float(jnp.max(jnp.abs(out_bf16 - ref)))
    assert err_bf16 < 6e-2, f"bf16 path max-abs-err {err_bf16}"

    print("KERNEL_OK")
</pallas_src>

<mosaic_0001>
module attributes {stable_mosaic.version = 11 : i64} {
  func.func @_decoder_block_kernel(%arg0: i32, %arg1: i32, %arg2: memref<1x8x32xf32, #tpu.memory_space<vmem>>, %arg3: memref<1x16x32xf32, #tpu.memory_space<vmem>>, %arg4: memref<1x16x32xf32, #tpu.memory_space<vmem>>, %arg5: memref<1x8x16xf32, #tpu.memory_space<vmem>>, %arg6: memref<32x32xf32, #tpu.memory_space<vmem>>, %arg7: memref<1x32xf32, #tpu.memory_space<vmem>>, %arg8: memref<32x32xf32, #tpu.memory_space<vmem>>, %arg9: memref<1x32xf32, #tpu.memory_space<vmem>>, %arg10: memref<32x32xf32, #tpu.memory_space<vmem>>, %arg11: memref<1x32xf32, #tpu.memory_space<vmem>>, %arg12: memref<32x32xf32, #tpu.memory_space<vmem>>, %arg13: memref<1x32xf32, #tpu.memory_space<vmem>>, %arg14: memref<1x32xf32, #tpu.memory_space<vmem>>, %arg15: memref<1x32xf32, #tpu.memory_space<vmem>>, %arg16: memref<32x32xf32, #tpu.memory_space<vmem>>, %arg17: memref<1x32xf32, #tpu.memory_space<vmem>>, %arg18: memref<32x32xf32, #tpu.memory_space<vmem>>, %arg19: memref<1x32xf32, #tpu.memory_space<vmem>>, %arg20: memref<32x32xf32, #tpu.memory_space<vmem>>, %arg21: memref<1x32xf32, #tpu.memory_space<vmem>>, %arg22: memref<32x32xf32, #tpu.memory_space<vmem>>, %arg23: memref<1x32xf32, #tpu.memory_space<vmem>>, %arg24: memref<1x32xf32, #tpu.memory_space<vmem>>, %arg25: memref<1x32xf32, #tpu.memory_space<vmem>>, %arg26: memref<32x64xf32, #tpu.memory_space<vmem>>, %arg27: memref<1x64xf32, #tpu.memory_space<vmem>>, %arg28: memref<64x32xf32, #tpu.memory_space<vmem>>, %arg29: memref<1x32xf32, #tpu.memory_space<vmem>>, %arg30: memref<1x32xf32, #tpu.memory_space<vmem>>, %arg31: memref<1x32xf32, #tpu.memory_space<vmem>>, %arg32: memref<1x8x32xf32, #tpu.memory_space<vmem>>) attributes {dimension_semantics = [#tpu.dimension_semantics<parallel>, #tpu.dimension_semantics<parallel>], iteration_bounds = array<i64: 2, 2>, scalar_prefetch = 0 : i64, scratch_operands = 0 : i64, tpu.core_type = #tpu.core_type<tc>, window_params = [{transform_indices = @transform_0, window_bounds = array<i64: 1, 8, 32>}, {transform_indices = @transform_1, window_bounds = array<i64: 1, 16, 32>}, {transform_indices = @transform_2, window_bounds = array<i64: 1, 16, 32>}, {transform_indices = @transform_3, window_bounds = array<i64: 1, 8, 16>}, {pipeline_mode = #tpu.pipeline_mode<synchronous>, transform_indices = @transform_4, window_bounds = array<i64: 32, 32>}, {pipeline_mode = #tpu.pipeline_mode<synchronous>, transform_indices = @transform_5, window_bounds = array<i64: 1, 32>}, {pipeline_mode = #tpu.pipeline_mode<synchronous>, transform_indices = @transform_6, window_bounds = array<i64: 32, 32>}, {pipeline_mode = #tpu.pipeline_mode<synchronous>, transform_indices = @transform_7, window_bounds = array<i64: 1, 32>}, {pipeline_mode = #tpu.pipeline_mode<synchronous>, transform_indices = @transform_8, window_bounds = array<i64: 32, 32>}, {pipeline_mode = #tpu.pipeline_mode<synchronous>, transform_indices = @transform_9, window_bounds = array<i64: 1, 32>}, {pipeline_mode = #tpu.pipeline_mode<synchronous>, transform_indices = @transform_10, window_bounds = array<i64: 32, 32>}, {pipeline_mode = #tpu.pipeline_mode<synchronous>, transform_indices = @transform_11, window_bounds = array<i64: 1, 32>}, {pipeline_mode = #tpu.pipeline_mode<synchronous>, transform_indices = @transform_12, window_bounds = array<i64: 1, 32>}, {pipeline_mode = #tpu.pipeline_mode<synchronous>, transform_indices = @transform_13, window_bounds = array<i64: 1, 32>}, {pipeline_mode = #tpu.pipeline_mode<synchronous>, transform_indices = @transform_14, window_bounds = array<i64: 32, 32>}, {pipeline_mode = #tpu.pipeline_mode<synchronous>, transform_indices = @transform_15, window_bounds = array<i64: 1, 32>}, {pipeline_mode = #tpu.pipeline_mode<synchronous>, transform_indices = @transform_16, window_bounds = array<i64: 32, 32>}, {pipeline_mode = #tpu.pipeline_mode<synchronous>, transform_indices = @transform_17, window_bounds = array<i64: 1, 32>}, {pipeline_mode = #tpu.pipeline_mode<synchronous>, transform_indices = @transform_18, window_bounds = array<i64: 32, 32>}, {pipeline_mode = #tpu.pipeline_mode<synchronous>, transform_indices = @transform_19, window_bounds = array<i64: 1, 32>}, {pipeline_mode = #tpu.pipeline_mode<synchronous>, transform_indices = @transform_20, window_bounds = array<i64: 32, 32>}, {pipeline_mode = #tpu.pipeline_mode<synchronous>, transform_indices = @transform_21, window_bounds = array<i64: 1, 32>}, {pipeline_mode = #tpu.pipeline_mode<synchronous>, transform_indices = @transform_22, window_bounds = array<i64: 1, 32>}, {pipeline_mode = #tpu.pipeline_mode<synchronous>, transform_indices = @transform_23, window_bounds = array<i64: 1, 32>}, {pipeline_mode = #tpu.pipeline_mode<synchronous>, transform_indices = @transform_24, window_bounds = array<i64: 32, 64>}, {pipeline_mode = #tpu.pipeline_mode<synchronous>, transform_indices = @transform_25, window_bounds = array<i64: 1, 64>}, {pipeline_mode = #tpu.pipeline_mode<synchronous>, transform_indices = @transform_26, window_bounds = array<i64: 64, 32>}, {pipeline_mode = #tpu.pipeline_mode<synchronous>, transform_indices = @transform_27, window_bounds = array<i64: 1, 32>}, {pipeline_mode = #tpu.pipeline_mode<synchronous>, transform_indices = @transform_28, window_bounds = array<i64: 1, 32>}, {pipeline_mode = #tpu.pipeline_mode<synchronous>, transform_indices = @transform_29, window_bounds = array<i64: 1, 32>}, {transform_indices = @transform_30, window_bounds = array<i64: 1, 8, 32>}]} {
    %c0 = arith.constant 0 : index
    %c0_0 = arith.constant 0 : index
    %c0_1 = arith.constant 0 : index
    %0 = vector.load %arg2[%c0, %c0_0, %c0_1] : memref<1x8x32xf32, #tpu.memory_space<vmem>>, vector<1x8x32xf32>
    %1 = vector.shape_cast %0 : vector<1x8x32xf32> to vector<8x32xf32>
    %c0_2 = arith.constant 0 : index
    %c0_3 = arith.constant 0 : index
    %c0_4 = arith.constant 0 : index
    %2 = vector.load %arg3[%c0_2, %c0_3, %c0_4] : memref<1x16x32xf32, #tpu.memory_space<vmem>>, vector<1x16x32xf32>
    %3 = vector.shape_cast %2 : vector<1x16x32xf32> to vector<16x32xf32>
    %c0_5 = arith.constant 0 : index
    %c0_6 = arith.constant 0 : index
    %c0_7 = arith.constant 0 : index
    %4 = vector.load %arg4[%c0_5, %c0_6, %c0_7] : memref<1x16x32xf32, #tpu.memory_space<vmem>>, vector<1x16x32xf32>
    %5 = vector.shape_cast %4 : vector<1x16x32xf32> to vector<16x32xf32>
    %c0_8 = arith.constant 0 : index
    %c0_9 = arith.constant 0 : index
    %c0_10 = arith.constant 0 : index
    %6 = vector.load %arg5[%c0_8, %c0_9, %c0_10] : memref<1x8x16xf32, #tpu.memory_space<vmem>>, vector<1x8x16xf32>
    %7 = vector.shape_cast %6 : vector<1x8x16xf32> to vector<8x16xf32>
    %c0_11 = arith.constant 0 : index
    %c0_12 = arith.constant 0 : index
    %8 = vector.load %arg6[%c0_11, %c0_12] : memref<32x32xf32, #tpu.memory_space<vmem>>, vector<32x32xf32>
    %c0_13 = arith.constant 0 : index
    %c0_14 = arith.constant 0 : index
    %9 = vector.load %arg7[%c0_13, %c0_14] : memref<1x32xf32, #tpu.memory_space<vmem>>, vector<1x32xf32>
    %c0_15 = arith.constant 0 : index
    %c0_16 = arith.constant 0 : index
    %10 = vector.load %arg8[%c0_15, %c0_16] : memref<32x32xf32, #tpu.memory_space<vmem>>, vector<32x32xf32>
    %c0_17 = arith.constant 0 : index
    %c0_18 = arith.constant 0 : index
    %11 = vector.load %arg9[%c0_17, %c0_18] : memref<1x32xf32, #tpu.memory_space<vmem>>, vector<1x32xf32>
    %c0_19 = arith.constant 0 : index
    %c0_20 = arith.constant 0 : index
    %12 = vector.load %arg10[%c0_19, %c0_20] : memref<32x32xf32, #tpu.memory_space<vmem>>, vector<32x32xf32>
    %c0_21 = arith.constant 0 : index
    %c0_22 = arith.constant 0 : index
    %13 = vector.load %arg11[%c0_21, %c0_22] : memref<1x32xf32, #tpu.memory_space<vmem>>, vector<1x32xf32>
    %c0_23 = arith.constant 0 : index
    %c0_24 = arith.constant 0 : index
    %14 = vector.load %arg12[%c0_23, %c0_24] : memref<32x32xf32, #tpu.memory_space<vmem>>, vector<32x32xf32>
    %c0_25 = arith.constant 0 : index
    %c0_26 = arith.constant 0 : index
    %15 = vector.load %arg13[%c0_25, %c0_26] : memref<1x32xf32, #tpu.memory_space<vmem>>, vector<1x32xf32>
    %cst = arith.constant dense<0.000000e+00> : vector<8x32xf32>
    %16 = tpu.matmul %1, %8, %cst {dimension_numbers = #tpu.dot_dimension_numbers<[1], [0], [0], [1], [0, 0, 1, 1], [], []>} : vector<8x32xf32>, vector<32x32xf32>, vector<8x32xf32> -> vector<8x32xf32>
    %17 = vector.broadcast %9 : vector<1x32xf32> to vector<8x32xf32>
    %18 = arith.addf %16, %17 : vector<8x32xf32>
    %cst_27 = arith.constant 0.353553385 : f32
    %19 = vector.broadcast %cst_27 : f32 to vector<8x32xf32>
    %20 = arith.mulf %18, %19 : vector<8x32xf32>
    %cst_28 = arith.constant dense<0.000000e+00> : vector<16x32xf32>
    %21 = tpu.matmul %3, %10, %cst_28 {dimension_numbers = #tpu.dot_dimension_numbers<[1], [0], [0], [1], [0, 0, 1, 1], [], []>} : vector<16x32xf32>, vector<32x32xf32>, vector<16x32xf32> -> vector<16x32xf32>
    %22 = vector.broadcast %11 : vector<1x32xf32> to vector<16x32xf32>
    %23 = arith.addf %21, %22 : vector<16x32xf32>
    %cst_29 = arith.constant dense<0.000000e+00> : vector<16x32xf32>
    %24 = tpu.matmul %3, %12, %cst_29 {dimension_numbers = #tpu.dot_dimension_numbers<[1], [0], [0], [1], [0, 0, 1, 1], [], []>} : vector<16x32xf32>, vector<32x32xf32>, vector<16x32xf32> -> vector<16x32xf32>
    %25 = vector.broadcast %13 : vector<1x32xf32> to vector<16x32xf32>
    %26 = arith.addf %24, %25 : vector<16x32xf32>
    %27 = vector.extract_strided_slice %20 {offsets = [0, 0], sizes = [8, 8], strides = [1, 1]} : vector<8x32xf32> to vector<8x8xf32>
    %28 = vector.extract_strided_slice %23 {offsets = [0, 0], sizes = [16, 8], strides = [1, 1]} : vector<16x32xf32> to vector<16x8xf32>
    %29 = vector.extract_strided_slice %26 {offsets = [0, 0], sizes = [16, 8], strides = [1, 1]} : vector<16x32xf32> to vector<16x8xf32>
    %cst_30 = arith.constant dense<0.000000e+00> : vector<8x16xf32>
    %30 = tpu.matmul %27, %28, %cst_30 {dimension_numbers = #tpu.dot_dimension_numbers<[1], [1], [0], [0], [0, 0, 1, 0], [], []>} : vector<8x8xf32>, vector<16x8xf32>, vector<8x16xf32> -> vector<8x16xf32>
    %cst_31 = arith.constant 0.000000e+00 : f32
    %31 = vector.broadcast %cst_31 : f32 to vector<8x16xf32>
    %32 = arith.cmpf ogt, %7, %31 : vector<8x16xf32>
    %cst_32 = arith.constant -1.000000e+09 : f32
    %33 = vector.broadcast %cst_32 : f32 to vector<8x16xf32>
    %34 = arith.select %32, %33, %30 : vector<8x16xi1>, vector<8x16xf32>
    %cst_33 = arith.constant dense<0xFF800000> : vector<8xf32>
    %35 = vector.multi_reduction <maximumf>, %34, %cst_33 [1] : vector<8x16xf32> to vector<8xf32>
    %36 = vector.shape_cast %35 : vector<8xf32> to vector<8x1xf32>
    %37 = vector.broadcast %36 : vector<8x1xf32> to vector<8x16xf32>
    %38 = arith.subf %34, %37 : vector<8x16xf32>
    %39 = math.exp %38 : vector<8x16xf32>
    %cst_34 = arith.constant dense<0.000000e+00> : vector<8xf32>
    %40 = vector.multi_reduction <add>, %39, %cst_34 [1] : vector<8x16xf32> to vector<8xf32>
    %41 = vector.shape_cast %40 : vector<8xf32> to vector<8x1xf32>
    %42 = vector.broadcast %41 : vector<8x1xf32> to vector<8x16xf32>
    %43 = arith.divf %39, %42 : vector<8x16xf32>
    %cst_35 = arith.constant dense<0.000000e+00> : vector<8x8xf32>
    %44 = tpu.matmul %43, %29, %cst_35 {dimension_numbers = #tpu.dot_dimension_numbers<[1], [0], [0], [1], [0, 0, 1, 1], [], []>} : vector<8x16xf32>, vector<16x8xf32>, vector<8x8xf32> -> vector<8x8xf32>
    %45 = vector.extract_strided_slice %20 {offsets = [0, 8], sizes = [8, 8], strides = [1, 1]} : vector<8x32xf32> to vector<8x8xf32>
    %46 = vector.extract_strided_slice %23 {offsets = [0, 8], sizes = [16, 8], strides = [1, 1]} : vector<16x32xf32> to vector<16x8xf32>
    %47 = vector.extract_strided_slice %26 {offsets = [0, 8], sizes = [16, 8], strides = [1, 1]} : vector<16x32xf32> to vector<16x8xf32>
    %cst_36 = arith.constant dense<0.000000e+00> : vector<8x16xf32>
    %48 = tpu.matmul %45, %46, %cst_36 {dimension_numbers = #tpu.dot_dimension_numbers<[1], [1], [0], [0], [0, 0, 1, 0], [], []>} : vector<8x8xf32>, vector<16x8xf32>, vector<8x16xf32> -> vector<8x16xf32>
    %cst_37 = arith.constant 0.000000e+00 : f32
    %49 = vector.broadcast %cst_37 : f32 to vector<8x16xf32>
    %50 = arith.cmpf ogt, %7, %49 : vector<8x16xf32>
    %cst_38 = arith.constant -1.000000e+09 : f32
    %51 = vector.broadcast %cst_38 : f32 to vector<8x16xf32>
    %52 = arith.select %50, %51, %48 : vector<8x16xi1>, vector<8x16xf32>
    %cst_39 = arith.constant dense<0xFF800000> : vector<8xf32>
    %53 = vector.multi_reduction <maximumf>, %52, %cst_39 [1] : vector<8x16xf32> to vector<8xf32>
    %54 = vector.shape_cast %53 : vector<8xf32> to vector<8x1xf32>
    %55 = vector.broadcast %54 : vector<8x1xf32> to vector<8x16xf32>
    %56 = arith.subf %52, %55 : vector<8x16xf32>
    %57 = math.exp %56 : vector<8x16xf32>
    %cst_40 = arith.constant dense<0.000000e+00> : vector<8xf32>
    %58 = vector.multi_reduction <add>, %57, %cst_40 [1] : vector<8x16xf32> to vector<8xf32>
    %59 = vector.shape_cast %58 : vector<8xf32> to vector<8x1xf32>
    %60 = vector.broadcast %59 : vector<8x1xf32> to vector<8x16xf32>
    %61 = arith.divf %57, %60 : vector<8x16xf32>
    %cst_41 = arith.constant dense<0.000000e+00> : vector<8x8xf32>
    %62 = tpu.matmul %61, %47, %cst_41 {dimension_numbers = #tpu.dot_dimension_numbers<[1], [0], [0], [1], [0, 0, 1, 1], [], []>} : vector<8x16xf32>, vector<16x8xf32>, vector<8x8xf32> -> vector<8x8xf32>
    %63 = vector.extract_strided_slice %20 {offsets = [0, 16], sizes = [8, 8], strides = [1, 1]} : vector<8x32xf32> to vector<8x8xf32>
    %64 = vector.extract_strided_slice %23 {offsets = [0, 16], sizes = [16, 8], strides = [1, 1]} : vector<16x32xf32> to vector<16x8xf32>
    %65 = vector.extract_strided_slice %26 {offsets = [0, 16], sizes = [16, 8], strides = [1, 1]} : vector<16x32xf32> to vector<16x8xf32>
    %cst_42 = arith.constant dense<0.000000e+00> : vector<8x16xf32>
    %66 = tpu.matmul %63, %64, %cst_42 {dimension_numbers = #tpu.dot_dimension_numbers<[1], [1], [0], [0], [0, 0, 1, 0], [], []>} : vector<8x8xf32>, vector<16x8xf32>, vector<8x16xf32> -> vector<8x16xf32>
    %cst_43 = arith.constant 0.000000e+00 : f32
    %67 = vector.broadcast %cst_43 : f32 to vector<8x16xf32>
    %68 = arith.cmpf ogt, %7, %67 : vector<8x16xf32>
    %cst_44 = arith.constant -1.000000e+09 : f32
    %69 = vector.broadcast %cst_44 : f32 to vector<8x16xf32>
    %70 = arith.select %68, %69, %66 : vector<8x16xi1>, vector<8x16xf32>
    %cst_45 = arith.constant dense<0xFF800000> : vector<8xf32>
    %71 = vector.multi_reduction <maximumf>, %70, %cst_45 [1] : vector<8x16xf32> to vector<8xf32>
    %72 = vector.shape_cast %71 : vector<8xf32> to vector<8x1xf32>
    %73 = vector.broadcast %72 : vector<8x1xf32> to vector<8x16xf32>
    %74 = arith.subf %70, %73 : vector<8x16xf32>
    %75 = math.exp %74 : vector<8x16xf32>
    %cst_46 = arith.constant dense<0.000000e+00> : vector<8xf32>
    %76 = vector.multi_reduction <add>, %75, %cst_46 [1] : vector<8x16xf32> to vector<8xf32>
    %77 = vector.shape_cast %76 : vector<8xf32> to vector<8x1xf32>
    %78 = vector.broadcast %77 : vector<8x1xf32> to vector<8x16xf32>
    %79 = arith.divf %75, %78 : vector<8x16xf32>
    %cst_47 = arith.constant dense<0.000000e+00> : vector<8x8xf32>
    %80 = tpu.matmul %79, %65, %cst_47 {dimension_numbers = #tpu.dot_dimension_numbers<[1], [0], [0], [1], [0, 0, 1, 1], [], []>} : vector<8x16xf32>, vector<16x8xf32>, vector<8x8xf32> -> vector<8x8xf32>
    %81 = vector.extract_strided_slice %20 {offsets = [0, 24], sizes = [8, 8], strides = [1, 1]} : vector<8x32xf32> to vector<8x8xf32>
    %82 = vector.extract_strided_slice %23 {offsets = [0, 24], sizes = [16, 8], strides = [1, 1]} : vector<16x32xf32> to vector<16x8xf32>
    %83 = vector.extract_strided_slice %26 {offsets = [0, 24], sizes = [16, 8], strides = [1, 1]} : vector<16x32xf32> to vector<16x8xf32>
    %cst_48 = arith.constant dense<0.000000e+00> : vector<8x16xf32>
    %84 = tpu.matmul %81, %82, %cst_48 {dimension_numbers = #tpu.dot_dimension_numbers<[1], [1], [0], [0], [0, 0, 1, 0], [], []>} : vector<8x8xf32>, vector<16x8xf32>, vector<8x16xf32> -> vector<8x16xf32>
    %cst_49 = arith.constant 0.000000e+00 : f32
    %85 = vector.broadcast %cst_49 : f32 to vector<8x16xf32>
    %86 = arith.cmpf ogt, %7, %85 : vector<8x16xf32>
    %cst_50 = arith.constant -1.000000e+09 : f32
    %87 = vector.broadcast %cst_50 : f32 to vector<8x16xf32>
    %88 = arith.select %86, %87, %84 : vector<8x16xi1>, vector<8x16xf32>
    %cst_51 = arith.constant dense<0xFF800000> : vector<8xf32>
    %89 = vector.multi_reduction <maximumf>, %88, %cst_51 [1] : vector<8x16xf32> to vector<8xf32>
    %90 = vector.shape_cast %89 : vector<8xf32> to vector<8x1xf32>
    %91 = vector.broadcast %90 : vector<8x1xf32> to vector<8x16xf32>
    %92 = arith.subf %88, %91 : vector<8x16xf32>
    %93 = math.exp %92 : vector<8x16xf32>
    %cst_52 = arith.constant dense<0.000000e+00> : vector<8xf32>
    %94 = vector.multi_reduction <add>, %93, %cst_52 [1] : vector<8x16xf32> to vector<8xf32>
    %95 = vector.shape_cast %94 : vector<8xf32> to vector<8x1xf32>
    %96 = vector.broadcast %95 : vector<8x1xf32> to vector<8x16xf32>
    %97 = arith.divf %93, %96 : vector<8x16xf32>
    %cst_53 = arith.constant dense<0.000000e+00> : vector<8x8xf32>
    %98 = tpu.matmul %97, %83, %cst_53 {dimension_numbers = #tpu.dot_dimension_numbers<[1], [0], [0], [1], [0, 0, 1, 1], [], []>} : vector<8x16xf32>, vector<16x8xf32>, vector<8x8xf32> -> vector<8x8xf32>
    %99 = tpu.concatenate %44, %62, %80, %98 in 1 : vector<8x8xf32>, vector<8x8xf32>, vector<8x8xf32>, vector<8x8xf32> -> vector<8x32xf32>
    %cst_54 = arith.constant dense<0.000000e+00> : vector<8x32xf32>
    %100 = tpu.matmul %99, %14, %cst_54 {dimension_numbers = #tpu.dot_dimension_numbers<[1], [0], [0], [1], [0, 0, 1, 1], [], []>} : vector<8x32xf32>, vector<32x32xf32>, vector<8x32xf32> -> vector<8x32xf32>
    %101 = vector.broadcast %15 : vector<1x32xf32> to vector<8x32xf32>
    %102 = arith.addf %100, %101 : vector<8x32xf32>
    %c0_55 = arith.constant 0 : index
    %c0_56 = arith.constant 0 : index
    %103 = vector.load %arg14[%c0_55, %c0_56] : memref<1x32xf32, #tpu.memory_space<vmem>>, vector<1x32xf32>
    %c0_57 = arith.constant 0 : index
    %c0_58 = arith.constant 0 : index
    %104 = vector.load %arg15[%c0_57, %c0_58] : memref<1x32xf32, #tpu.memory_space<vmem>>, vector<1x32xf32>
    %105 = arith.addf %1, %102 : vector<8x32xf32>
    %cst_59 = arith.constant dense<0.000000e+00> : vector<8xf32>
    %106 = vector.multi_reduction <add>, %105, %cst_59 [1] : vector<8x32xf32> to vector<8xf32>
    %107 = vector.shape_cast %106 : vector<8xf32> to vector<8x1xf32>
    %cst_60 = arith.constant 3.200000e+01 : f32
    %108 = vector.broadcast %cst_60 : f32 to vector<8x1xf32>
    %109 = arith.divf %107, %108 : vector<8x1xf32>
    %110 = vector.broadcast %109 : vector<8x1xf32> to vector<8x32xf32>
    %111 = arith.subf %105, %110 : vector<8x32xf32>
    %112 = arith.mulf %111, %111 : vector<8x32xf32>
    %cst_61 = arith.constant dense<0.000000e+00> : vector<8xf32>
    %113 = vector.multi_reduction <add>, %112, %cst_61 [1] : vector<8x32xf32> to vector<8xf32>
    %114 = vector.shape_cast %113 : vector<8xf32> to vector<8x1xf32>
    %cst_62 = arith.constant 3.200000e+01 : f32
    %115 = vector.broadcast %cst_62 : f32 to vector<8x1xf32>
    %116 = arith.divf %114, %115 : vector<8x1xf32>
    %117 = math.sqrt %116 : vector<8x1xf32>
    %118 = vector.broadcast %103 : vector<1x32xf32> to vector<8x32xf32>
    %119 = arith.mulf %118, %111 : vector<8x32xf32>
    %cst_63 = arith.constant 1.000000e-10 : f32
    %120 = vector.broadcast %cst_63 : f32 to vector<8x1xf32>
    %121 = arith.addf %117, %120 : vector<8x1xf32>
    %122 = vector.broadcast %121 : vector<8x1xf32> to vector<8x32xf32>
    %123 = arith.divf %119, %122 : vector<8x32xf32>
    %124 = vector.broadcast %104 : vector<1x32xf32> to vector<8x32xf32>
    %125 = arith.addf %123, %124 : vector<8x32xf32>
    %c0_64 = arith.constant 0 : index
    %c0_65 = arith.constant 0 : index
    %126 = vector.load %arg16[%c0_64, %c0_65] : memref<32x32xf32, #tpu.memory_space<vmem>>, vector<32x32xf32>
    %c0_66 = arith.constant 0 : index
    %c0_67 = arith.constant 0 : index
    %127 = vector.load %arg17[%c0_66, %c0_67] : memref<1x32xf32, #tpu.memory_space<vmem>>, vector<1x32xf32>
    %c0_68 = arith.constant 0 : index
    %c0_69 = arith.constant 0 : index
    %128 = vector.load %arg18[%c0_68, %c0_69] : memref<32x32xf32, #tpu.memory_space<vmem>>, vector<32x32xf32>
    %c0_70 = arith.constant 0 : index
    %c0_71 = arith.constant 0 : index
    %129 = vector.load %arg19[%c0_70, %c0_71] : memref<1x32xf32, #tpu.memory_space<vmem>>, vector<1x32xf32>
    %c0_72 = arith.constant 0 : index
    %c0_73 = arith.constant 0 : index
    %130 = vector.load %arg20[%c0_72, %c0_73] : memref<32x32xf32, #tpu.memory_space<vmem>>, vector<32x32xf32>
    %c0_74 = arith.constant 0 : index
    %c0_75 = arith.constant 0 : index
    %131 = vector.load %arg21[%c0_74, %c0_75] : memref<1x32xf32, #tpu.memory_space<vmem>>, vector<1x32xf32>
    %c0_76 = arith.constant 0 : index
    %c0_77 = arith.constant 0 : index
    %132 = vector.load %arg22[%c0_76, %c0_77] : memref<32x32xf32, #tpu.memory_space<vmem>>, vector<32x32xf32>
    %c0_78 = arith.constant 0 : index
    %c0_79 = arith.constant 0 : index
    %133 = vector.load %arg23[%c0_78, %c0_79] : memref<1x32xf32, #tpu.memory_space<vmem>>, vector<1x32xf32>
    %cst_80 = arith.constant dense<0.000000e+00> : vector<8x32xf32>
    %134 = tpu.matmul %125, %126, %cst_80 {dimension_numbers = #tpu.dot_dimension_numbers<[1], [0], [0], [1], [0, 0, 1, 1], [], []>} : vector<8x32xf32>, vector<32x32xf32>, vector<8x32xf32> -> vector<8x32xf32>
    %135 = vector.broadcast %127 : vector<1x32xf32> to vector<8x32xf32>
    %136 = arith.addf %134, %135 : vector<8x32xf32>
    %cst_81 = arith.constant 0.353553385 : f32
    %137 = vector.broadcast %cst_81 : f32 to vector<8x32xf32>
    %138 = arith.mulf %136, %137 : vector<8x32xf32>
    %cst_82 = arith.constant dense<0.000000e+00> : vector<16x32xf32>
    %139 = tpu.matmul %5, %128, %cst_82 {dimension_numbers = #tpu.dot_dimension_numbers<[1], [0], [0], [1], [0, 0, 1, 1], [], []>} : vector<16x32xf32>, vector<32x32xf32>, vector<16x32xf32> -> vector<16x32xf32>
    %140 = vector.broadcast %129 : vector<1x32xf32> to vector<16x32xf32>
    %141 = arith.addf %139, %140 : vector<16x32xf32>
    %cst_83 = arith.constant dense<0.000000e+00> : vector<16x32xf32>
    %142 = tpu.matmul %5, %130, %cst_83 {dimension_numbers = #tpu.dot_dimension_numbers<[1], [0], [0], [1], [0, 0, 1, 1], [], []>} : vector<16x32xf32>, vector<32x32xf32>, vector<16x32xf32> -> vector<16x32xf32>
    %143 = vector.broadcast %131 : vector<1x32xf32> to vector<16x32xf32>
    %144 = arith.addf %142, %143 : vector<16x32xf32>
    %145 = vector.extract_strided_slice %138 {offsets = [0, 0], sizes = [8, 8], strides = [1, 1]} : vector<8x32xf32> to vector<8x8xf32>
    %146 = vector.extract_strided_slice %141 {offsets = [0, 0], sizes = [16, 8], strides = [1, 1]} : vector<16x32xf32> to vector<16x8xf32>
    %147 = vector.extract_strided_slice %144 {offsets = [0, 0], sizes = [16, 8], strides = [1, 1]} : vector<16x32xf32> to vector<16x8xf32>
    %cst_84 = arith.constant dense<0.000000e+00> : vector<8x16xf32>
    %148 = tpu.matmul %145, %146, %cst_84 {dimension_numbers = #tpu.dot_dimension_numbers<[1], [1], [0], [0], [0, 0, 1, 0], [], []>} : vector<8x8xf32>, vector<16x8xf32>, vector<8x16xf32> -> vector<8x16xf32>
    %cst_85 = arith.constant dense<0xFF800000> : vector<8xf32>
    %149 = vector.multi_reduction <maximumf>, %148, %cst_85 [1] : vector<8x16xf32> to vector<8xf32>
    %150 = vector.shape_cast %149 : vector<8xf32> to vector<8x1xf32>
    %151 = vector.broadcast %150 : vector<8x1xf32> to vector<8x16xf32>
    %152 = arith.subf %148, %151 : vector<8x16xf32>
    %153 = math.exp %152 : vector<8x16xf32>
    %cst_86 = arith.constant dense<0.000000e+00> : vector<8xf32>
    %154 = vector.multi_reduction <add>, %153, %cst_86 [1] : vector<8x16xf32> to vector<8xf32>
    %155 = vector.shape_cast %154 : vector<8xf32> to vector<8x1xf32>
    %156 = vector.broadcast %155 : vector<8x1xf32> to vector<8x16xf32>
    %157 = arith.divf %153, %156 : vector<8x16xf32>
    %cst_87 = arith.constant dense<0.000000e+00> : vector<8x8xf32>
    %158 = tpu.matmul %157, %147, %cst_87 {dimension_numbers = #tpu.dot_dimension_numbers<[1], [0], [0], [1], [0, 0, 1, 1], [], []>} : vector<8x16xf32>, vector<16x8xf32>, vector<8x8xf32> -> vector<8x8xf32>
    %159 = vector.extract_strided_slice %138 {offsets = [0, 8], sizes = [8, 8], strides = [1, 1]} : vector<8x32xf32> to vector<8x8xf32>
    %160 = vector.extract_strided_slice %141 {offsets = [0, 8], sizes = [16, 8], strides = [1, 1]} : vector<16x32xf32> to vector<16x8xf32>
    %161 = vector.extract_strided_slice %144 {offsets = [0, 8], sizes = [16, 8], strides = [1, 1]} : vector<16x32xf32> to vector<16x8xf32>
    %cst_88 = arith.constant dense<0.000000e+00> : vector<8x16xf32>
    %162 = tpu.matmul %159, %160, %cst_88 {dimension_numbers = #tpu.dot_dimension_numbers<[1], [1], [0], [0], [0, 0, 1, 0], [], []>} : vector<8x8xf32>, vector<16x8xf32>, vector<8x16xf32> -> vector<8x16xf32>
    %cst_89 = arith.constant dense<0xFF800000> : vector<8xf32>
    %163 = vector.multi_reduction <maximumf>, %162, %cst_89 [1] : vector<8x16xf32> to vector<8xf32>
    %164 = vector.shape_cast %163 : vector<8xf32> to vector<8x1xf32>
    %165 = vector.broadcast %164 : vector<8x1xf32> to vector<8x16xf32>
    %166 = arith.subf %162, %165 : vector<8x16xf32>
    %167 = math.exp %166 : vector<8x16xf32>
    %cst_90 = arith.constant dense<0.000000e+00> : vector<8xf32>
    %168 = vector.multi_reduction <add>, %167, %cst_90 [1] : vector<8x16xf32> to vector<8xf32>
    %169 = vector.shape_cast %168 : vector<8xf32> to vector<8x1xf32>
    %170 = vector.broadcast %169 : vector<8x1xf32> to vector<8x16xf32>
    %171 = arith.divf %167, %170 : vector<8x16xf32>
    %cst_91 = arith.constant dense<0.000000e+00> : vector<8x8xf32>
    %172 = tpu.matmul %171, %161, %cst_91 {dimension_numbers = #tpu.dot_dimension_numbers<[1], [0], [0], [1], [0, 0, 1, 1], [], []>} : vector<8x16xf32>, vector<16x8xf32>, vector<8x8xf32> -> vector<8x8xf32>
    %173 = vector.extract_strided_slice %138 {offsets = [0, 16], sizes = [8, 8], strides = [1, 1]} : vector<8x32xf32> to vector<8x8xf32>
    %174 = vector.extract_strided_slice %141 {offsets = [0, 16], sizes = [16, 8], strides = [1, 1]} : vector<16x32xf32> to vector<16x8xf32>
    %175 = vector.extract_strided_slice %144 {offsets = [0, 16], sizes = [16, 8], strides = [1, 1]} : vector<16x32xf32> to vector<16x8xf32>
    %cst_92 = arith.constant dense<0.000000e+00> : vector<8x16xf32>
    %176 = tpu.matmul %173, %174, %cst_92 {dimension_numbers = #tpu.dot_dimension_numbers<[1], [1], [0], [0], [0, 0, 1, 0], [], []>} : vector<8x8xf32>, vector<16x8xf32>, vector<8x16xf32> -> vector<8x16xf32>
    %cst_93 = arith.constant dense<0xFF800000> : vector<8xf32>
    %177 = vector.multi_reduction <maximumf>, %176, %cst_93 [1] : vector<8x16xf32> to vector<8xf32>
    %178 = vector.shape_cast %177 : vector<8xf32> to vector<8x1xf32>
    %179 = vector.broadcast %178 : vector<8x1xf32> to vector<8x16xf32>
    %180 = arith.subf %176, %179 : vector<8x16xf32>
    %181 = math.exp %180 : vector<8x16xf32>
    %cst_94 = arith.constant dense<0.000000e+00> : vector<8xf32>
    %182 = vector.multi_reduction <add>, %181, %cst_94 [1] : vector<8x16xf32> to vector<8xf32>
    %183 = vector.shape_cast %182 : vector<8xf32> to vector<8x1xf32>
    %184 = vector.broadcast %183 : vector<8x1xf32> to vector<8x16xf32>
    %185 = arith.divf %181, %184 : vector<8x16xf32>
    %cst_95 = arith.constant dense<0.000000e+00> : vector<8x8xf32>
    %186 = tpu.matmul %185, %175, %cst_95 {dimension_numbers = #tpu.dot_dimension_numbers<[1], [0], [0], [1], [0, 0, 1, 1], [], []>} : vector<8x16xf32>, vector<16x8xf32>, vector<8x8xf32> -> vector<8x8xf32>
    %187 = vector.extract_strided_slice %138 {offsets = [0, 24], sizes = [8, 8], strides = [1, 1]} : vector<8x32xf32> to vector<8x8xf32>
    %188 = vector.extract_strided_slice %141 {offsets = [0, 24], sizes = [16, 8], strides = [1, 1]} : vector<16x32xf32> to vector<16x8xf32>
    %189 = vector.extract_strided_slice %144 {offsets = [0, 24], sizes = [16, 8], strides = [1, 1]} : vector<16x32xf32> to vector<16x8xf32>
    %cst_96 = arith.constant dense<0.000000e+00> : vector<8x16xf32>
    %190 = tpu.matmul %187, %188, %cst_96 {dimension_numbers = #tpu.dot_dimension_numbers<[1], [1], [0], [0], [0, 0, 1, 0], [], []>} : vector<8x8xf32>, vector<16x8xf32>, vector<8x16xf32> -> vector<8x16xf32>
    %cst_97 = arith.constant dense<0xFF800000> : vector<8xf32>
    %191 = vector.multi_reduction <maximumf>, %190, %cst_97 [1] : vector<8x16xf32> to vector<8xf32>
    %192 = vector.shape_cast %191 : vector<8xf32> to vector<8x1xf32>
    %193 = vector.broadcast %192 : vector<8x1xf32> to vector<8x16xf32>
    %194 = arith.subf %190, %193 : vector<8x16xf32>
    %195 = math.exp %194 : vector<8x16xf32>
    %cst_98 = arith.constant dense<0.000000e+00> : vector<8xf32>
    %196 = vector.multi_reduction <add>, %195, %cst_98 [1] : vector<8x16xf32> to vector<8xf32>
    %197 = vector.shape_cast %196 : vector<8xf32> to vector<8x1xf32>
    %198 = vector.broadcast %197 : vector<8x1xf32> to vector<8x16xf32>
    %199 = arith.divf %195, %198 : vector<8x16xf32>
    %cst_99 = arith.constant dense<0.000000e+00> : vector<8x8xf32>
    %200 = tpu.matmul %199, %189, %cst_99 {dimension_numbers = #tpu.dot_dimension_numbers<[1], [0], [0], [1], [0, 0, 1, 1], [], []>} : vector<8x16xf32>, vector<16x8xf32>, vector<8x8xf32> -> vector<8x8xf32>
    %201 = tpu.concatenate %158, %172, %186, %200 in 1 : vector<8x8xf32>, vector<8x8xf32>, vector<8x8xf32>, vector<8x8xf32> -> vector<8x32xf32>
    %cst_100 = arith.constant dense<0.000000e+00> : vector<8x32xf32>
    %202 = tpu.matmul %201, %132, %cst_100 {dimension_numbers = #tpu.dot_dimension_numbers<[1], [0], [0], [1], [0, 0, 1, 1], [], []>} : vector<8x32xf32>, vector<32x32xf32>, vector<8x32xf32> -> vector<8x32xf32>
    %203 = vector.broadcast %133 : vector<1x32xf32> to vector<8x32xf32>
    %204 = arith.addf %202, %203 : vector<8x32xf32>
    %c0_101 = arith.constant 0 : index
    %c0_102 = arith.constant 0 : index
    %205 = vector.load %arg24[%c0_101, %c0_102] : memref<1x32xf32, #tpu.memory_space<vmem>>, vector<1x32xf32>
    %c0_103 = arith.constant 0 : index
    %c0_104 = arith.constant 0 : index
    %206 = vector.load %arg25[%c0_103, %c0_104] : memref<1x32xf32, #tpu.memory_space<vmem>>, vector<1x32xf32>
    %207 = arith.addf %125, %204 : vector<8x32xf32>
    %cst_105 = arith.constant dense<0.000000e+00> : vector<8xf32>
    %208 = vector.multi_reduction <add>, %207, %cst_105 [1] : vector<8x32xf32> to vector<8xf32>
    %209 = vector.shape_cast %208 : vector<8xf32> to vector<8x1xf32>
    %cst_106 = arith.constant 3.200000e+01 : f32
    %210 = vector.broadcast %cst_106 : f32 to vector<8x1xf32>
    %211 = arith.divf %209, %210 : vector<8x1xf32>
    %212 = vector.broadcast %211 : vector<8x1xf32> to vector<8x32xf32>
    %213 = arith.subf %207, %212 : vector<8x32xf32>
    %214 = arith.mulf %213, %213 : vector<8x32xf32>
    %cst_107 = arith.constant dense<0.000000e+00> : vector<8xf32>
    %215 = vector.multi_reduction <add>, %214, %cst_107 [1] : vector<8x32xf32> to vector<8xf32>
    %216 = vector.shape_cast %215 : vector<8xf32> to vector<8x1xf32>
    %cst_108 = arith.constant 3.200000e+01 : f32
    %217 = vector.broadcast %cst_108 : f32 to vector<8x1xf32>
    %218 = arith.divf %216, %217 : vector<8x1xf32>
    %219 = math.sqrt %218 : vector<8x1xf32>
    %220 = vector.broadcast %205 : vector<1x32xf32> to vector<8x32xf32>
    %221 = arith.mulf %220, %213 : vector<8x32xf32>
    %cst_109 = arith.constant 1.000000e-10 : f32
    %222 = vector.broadcast %cst_109 : f32 to vector<8x1xf32>
    %223 = arith.addf %219, %222 : vector<8x1xf32>
    %224 = vector.broadcast %223 : vector<8x1xf32> to vector<8x32xf32>
    %225 = arith.divf %221, %224 : vector<8x32xf32>
    %226 = vector.broadcast %206 : vector<1x32xf32> to vector<8x32xf32>
    %227 = arith.addf %225, %226 : vector<8x32xf32>
    %c0_110 = arith.constant 0 : index
    %c0_111 = arith.constant 0 : index
    %228 = vector.load %arg26[%c0_110, %c0_111] : memref<32x64xf32, #tpu.memory_space<vmem>>, vector<32x64xf32>
    %cst_112 = arith.constant dense<0.000000e+00> : vector<8x64xf32>
    %229 = tpu.matmul %227, %228, %cst_112 {dimension_numbers = #tpu.dot_dimension_numbers<[1], [0], [0], [1], [0, 0, 1, 1], [], []>} : vector<8x32xf32>, vector<32x64xf32>, vector<8x64xf32> -> vector<8x64xf32>
    %c0_113 = arith.constant 0 : index
    %c0_114 = arith.constant 0 : index
    %230 = vector.load %arg27[%c0_113, %c0_114] : memref<1x64xf32, #tpu.memory_space<vmem>>, vector<1x64xf32>
    %231 = vector.broadcast %230 : vector<1x64xf32> to vector<8x64xf32>
    %232 = arith.addf %229, %231 : vector<8x64xf32>
    %cst_115 = arith.constant 0.000000e+00 : f32
    %233 = vector.broadcast %cst_115 : f32 to vector<8x64xf32>
    %234 = arith.maximumf %232, %233 : vector<8x64xf32>
    %c0_116 = arith.constant 0 : index
    %c0_117 = arith.constant 0 : index
    %235 = vector.load %arg28[%c0_116, %c0_117] : memref<64x32xf32, #tpu.memory_space<vmem>>, vector<64x32xf32>
    %cst_118 = arith.constant dense<0.000000e+00> : vector<8x32xf32>
    %236 = tpu.matmul %234, %235, %cst_118 {dimension_numbers = #tpu.dot_dimension_numbers<[1], [0], [0], [1], [0, 0, 1, 1], [], []>} : vector<8x64xf32>, vector<64x32xf32>, vector<8x32xf32> -> vector<8x32xf32>
    %c0_119 = arith.constant 0 : index
    %c0_120 = arith.constant 0 : index
    %237 = vector.load %arg29[%c0_119, %c0_120] : memref<1x32xf32, #tpu.memory_space<vmem>>, vector<1x32xf32>
    %238 = vector.broadcast %237 : vector<1x32xf32> to vector<8x32xf32>
    %239 = arith.addf %236, %238 : vector<8x32xf32>
    %c0_121 = arith.constant 0 : index
    %c0_122 = arith.constant 0 : index
    %240 = vector.load %arg30[%c0_121, %c0_122] : memref<1x32xf32, #tpu.memory_space<vmem>>, vector<1x32xf32>
    %c0_123 = arith.constant 0 : index
    %c0_124 = arith.constant 0 : index
    %241 = vector.load %arg31[%c0_123, %c0_124] : memref<1x32xf32, #tpu.memory_space<vmem>>, vector<1x32xf32>
    %242 = arith.addf %227, %239 : vector<8x32xf32>
    %cst_125 = arith.constant dense<0.000000e+00> : vector<8xf32>
    %243 = vector.multi_reduction <add>, %242, %cst_125 [1] : vector<8x32xf32> to vector<8xf32>
    %244 = vector.shape_cast %243 : vector<8xf32> to vector<8x1xf32>
    %cst_126 = arith.constant 3.200000e+01 : f32
    %245 = vector.broadcast %cst_126 : f32 to vector<8x1xf32>
    %246 = arith.divf %244, %245 : vector<8x1xf32>
    %247 = vector.broadcast %246 : vector<8x1xf32> to vector<8x32xf32>
    %248 = arith.subf %242, %247 : vector<8x32xf32>
    %249 = arith.mulf %248, %248 : vector<8x32xf32>
    %cst_127 = arith.constant dense<0.000000e+00> : vector<8xf32>
    %250 = vector.multi_reduction <add>, %249, %cst_127 [1] : vector<8x32xf32> to vector<8xf32>
    %251 = vector.shape_cast %250 : vector<8xf32> to vector<8x1xf32>
    %cst_128 = arith.constant 3.200000e+01 : f32
    %252 = vector.broadcast %cst_128 : f32 to vector<8x1xf32>
    %253 = arith.divf %251, %252 : vector<8x1xf32>
    %254 = math.sqrt %253 : vector<8x1xf32>
    %255 = vector.broadcast %240 : vector<1x32xf32> to vector<8x32xf32>
    %256 = arith.mulf %255, %248 : vector<8x32xf32>
    %cst_129 = arith.constant 1.000000e-10 : f32
    %257 = vector.broadcast %cst_129 : f32 to vector<8x1xf32>
    %258 = arith.addf %254, %257 : vector<8x1xf32>
    %259 = vector.broadcast %258 : vector<8x1xf32> to vector<8x32xf32>
    %260 = arith.divf %256, %259 : vector<8x32xf32>
    %261 = vector.broadcast %241 : vector<1x32xf32> to vector<8x32xf32>
    %262 = arith.addf %260, %261 : vector<8x32xf32>
    %c0_130 = arith.constant 0 : index
    %c0_131 = arith.constant 0 : index
    %c0_132 = arith.constant 0 : index
    %263 = vector.load %arg32[%c0_130, %c0_131, %c0_132] : memref<1x8x32xf32, #tpu.memory_space<vmem>>, vector<1x8x32xf32>
    %264 = vector.shape_cast %263 : vector<1x8x32xf32> to vector<8x32xf32>
    %265 = vector.shape_cast %262 : vector<8x32xf32> to vector<1x8x32xf32>
    tpu.vector_store %arg32[%c0_130, %c0_131, %c0_132], %265 {strides = array<i32>} : memref<1x8x32xf32, #tpu.memory_space<vmem>>, vector<1x8x32xf32>,
    return
  }
  func.func @transform_0(%arg0: i32, %arg1: i32) -> (i32, i32, i32) {
    %c0_i32 = arith.constant 0 : i32
    %c0_i32_0 = arith.constant 0 : i32
    return %arg0, %arg1, %c0_i32 : i32, i32, i32
  }
  func.func @transform_1(%arg0: i32, %arg1: i32) -> (i32, i32, i32) {
    %c0_i32 = arith.constant 0 : i32
    %c0_i32_0 = arith.constant 0 : i32
    %c0_i32_1 = arith.constant 0 : i32
    return %arg0, %c0_i32, %c0_i32_0 : i32, i32, i32
  }
  func.func @transform_2(%arg0: i32, %arg1: i32) -> (i32, i32, i32) {
    %c0_i32 = arith.constant 0 : i32
    %c0_i32_0 = arith.constant 0 : i32
    %c0_i32_1 = arith.constant 0 : i32
    return %arg0, %c0_i32, %c0_i32_0 : i32, i32, i32
  }
  func.func @transform_3(%arg0: i32, %arg1: i32) -> (i32, i32, i32) {
    %c0_i32 = arith.constant 0 : i32
    %c0_i32_0 = arith.constant 0 : i32
    %c0_i32_1 = arith.constant 0 : i32
    return %c0_i32, %arg1, %c0_i32_0 : i32, i32, i32
  }
  func.func @transform_4(%arg0: i32, %arg1: i32) -> (i32, i32) {
    %c0_i32 = arith.constant 0 : i32
    %c0_i32_0 = arith.constant 0 : i32
    %c0_i32_1 = arith.constant 0 : i32
    return %c0_i32, %c0_i32_0 : i32, i32
  }
  func.func @transform_5(%arg0: i32, %arg1: i32) -> (i32, i32) {
    %c0_i32 = arith.constant 0 : i32
    %c0_i32_0 = arith.constant 0 : i32
    %c0_i32_1 = arith.constant 0 : i32
    return %c0_i32, %c0_i32_0 : i32, i32
  }
  func.func @transform_6(%arg0: i32, %arg1: i32) -> (i32, i32) {
    %c0_i32 = arith.constant 0 : i32
    %c0_i32_0 = arith.constant 0 : i32
    %c0_i32_1 = arith.constant 0 : i32
    return %c0_i32, %c0_i32_0 : i32, i32
  }
  func.func @transform_7(%arg0: i32, %arg1: i32) -> (i32, i32) {
    %c0_i32 = arith.constant 0 : i32
    %c0_i32_0 = arith.constant 0 : i32
    %c0_i32_1 = arith.constant 0 : i32
    return %c0_i32, %c0_i32_0 : i32, i32
  }
  func.func @transform_8(%arg0: i32, %arg1: i32) -> (i32, i32) {
    %c0_i32 = arith.constant 0 : i32
    %c0_i32_0 = arith.constant 0 : i32
    %c0_i32_1 = arith.constant 0 : i32
    return %c0_i32, %c0_i32_0 : i32, i32
  }
  func.func @transform_9(%arg0: i32, %arg1: i32) -> (i32, i32) {
    %c0_i32 = arith.constant 0 : i32
    %c0_i32_0 = arith.constant 0 : i32
    %c0_i32_1 = arith.constant 0 : i32
    return %c0_i32, %c0_i32_0 : i32, i32
  }
  func.func @transform_10(%arg0: i32, %arg1: i32) -> (i32, i32) {
    %c0_i32 = arith.constant 0 : i32
    %c0_i32_0 = arith.constant 0 : i32
    %c0_i32_1 = arith.constant 0 : i32
    return %c0_i32, %c0_i32_0 : i32, i32
  }
  func.func @transform_11(%arg0: i32, %arg1: i32) -> (i32, i32) {
    %c0_i32 = arith.constant 0 : i32
    %c0_i32_0 = arith.constant 0 : i32
    %c0_i32_1 = arith.constant 0 : i32
    return %c0_i32, %c0_i32_0 : i32, i32
  }
  func.func @transform_12(%arg0: i32, %arg1: i32) -> (i32, i32) {
    %c0_i32 = arith.constant 0 : i32
    %c0_i32_0 = arith.constant 0 : i32
    %c0_i32_1 = arith.constant 0 : i32
    return %c0_i32, %c0_i32_0 : i32, i32
  }
  func.func @transform_13(%arg0: i32, %arg1: i32) -> (i32, i32) {
    %c0_i32 = arith.constant 0 : i32
    %c0_i32_0 = arith.constant 0 : i32
    %c0_i32_1 = arith.constant 0 : i32
    return %c0_i32, %c0_i32_0 : i32, i32
  }
  func.func @transform_14(%arg0: i32, %arg1: i32) -> (i32, i32) {
    %c0_i32 = arith.constant 0 : i32
    %c0_i32_0 = arith.constant 0 : i32
    %c0_i32_1 = arith.constant 0 : i32
    return %c0_i32, %c0_i32_0 : i32, i32
  }
  func.func @transform_15(%arg0: i32, %arg1: i32) -> (i32, i32) {
    %c0_i32 = arith.constant 0 : i32
    %c0_i32_0 = arith.constant 0 : i32
    %c0_i32_1 = arith.constant 0 : i32
    return %c0_i32, %c0_i32_0 : i32, i32
  }
  func.func @transform_16(%arg0: i32, %arg1: i32) -> (i32, i32) {
    %c0_i32 = arith.constant 0 : i32
    %c0_i32_0 = arith.constant 0 : i32
    %c0_i32_1 = arith.constant 0 : i32
    return %c0_i32, %c0_i32_0 : i32, i32
  }
  func.func @transform_17(%arg0: i32, %arg1: i32) -> (i32, i32) {
    %c0_i32 = arith.constant 0 : i32
    %c0_i32_0 = arith.constant 0 : i32
    %c0_i32_1 = arith.constant 0 : i32
    return %c0_i32, %c0_i32_0 : i32, i32
  }
  func.func @transform_18(%arg0: i32, %arg1: i32) -> (i32, i32) {
    %c0_i32 = arith.constant 0 : i32
    %c0_i32_0 = arith.constant 0 : i32
    %c0_i32_1 = arith.constant 0 : i32
    return %c0_i32, %c0_i32_0 : i32, i32
  }
  func.func @transform_19(%arg0: i32, %arg1: i32) -> (i32, i32) {
    %c0_i32 = arith.constant 0 : i32
    %c0_i32_0 = arith.constant 0 : i32
    %c0_i32_1 = arith.constant 0 : i32
    return %c0_i32, %c0_i32_0 : i32, i32
  }
  func.func @transform_20(%arg0: i32, %arg1: i32) -> (i32, i32) {
    %c0_i32 = arith.constant 0 : i32
    %c0_i32_0 = arith.constant 0 : i32
    %c0_i32_1 = arith.constant 0 : i32
    return %c0_i32, %c0_i32_0 : i32, i32
  }
  func.func @transform_21(%arg0: i32, %arg1: i32) -> (i32, i32) {
    %c0_i32 = arith.constant 0 : i32
    %c0_i32_0 = arith.constant 0 : i32
    %c0_i32_1 = arith.constant 0 : i32
    return %c0_i32, %c0_i32_0 : i32, i32
  }
  func.func @transform_22(%arg0: i32, %arg1: i32) -> (i32, i32) {
    %c0_i32 = arith.constant 0 : i32
    %c0_i32_0 = arith.constant 0 : i32
    %c0_i32_1 = arith.constant 0 : i32
    return %c0_i32, %c0_i32_0 : i32, i32
  }
  func.func @transform_23(%arg0: i32, %arg1: i32) -> (i32, i32) {
    %c0_i32 = arith.constant 0 : i32
    %c0_i32_0 = arith.constant 0 : i32
    %c0_i32_1 = arith.constant 0 : i32
    return %c0_i32, %c0_i32_0 : i32, i32
  }
  func.func @transform_24(%arg0: i32, %arg1: i32) -> (i32, i32) {
    %c0_i32 = arith.constant 0 : i32
    %c0_i32_0 = arith.constant 0 : i32
    %c0_i32_1 = arith.constant 0 : i32
    return %c0_i32, %c0_i32_0 : i32, i32
  }
  func.func @transform_25(%arg0: i32, %arg1: i32) -> (i32, i32) {
    %c0_i32 = arith.constant 0 : i32
    %c0_i32_0 = arith.constant 0 : i32
    %c0_i32_1 = arith.constant 0 : i32
    return %c0_i32, %c0_i32_0 : i32, i32
  }
  func.func @transform_26(%arg0: i32, %arg1: i32) -> (i32, i32) {
    %c0_i32 = arith.constant 0 : i32
    %c0_i32_0 = arith.constant 0 : i32
    %c0_i32_1 = arith.constant 0 : i32
    return %c0_i32, %c0_i32_0 : i32, i32
  }
  func.func @transform_27(%arg0: i32, %arg1: i32) -> (i32, i32) {
    %c0_i32 = arith.constant 0 : i32
    %c0_i32_0 = arith.constant 0 : i32
    %c0_i32_1 = arith.constant 0 : i32
    return %c0_i32, %c0_i32_0 : i32, i32
  }
  func.func @transform_28(%arg0: i32, %arg1: i32) -> (i32, i32) {
    %c0_i32 = arith.constant 0 : i32
    %c0_i32_0 = arith.constant 0 : i32
    %c0_i32_1 = arith.constant 0 : i32
    return %c0_i32, %c0_i32_0 : i32, i32
  }
  func.func @transform_29(%arg0: i32, %arg1: i32) -> (i32, i32) {
    %c0_i32 = arith.constant 0 : i32
    %c0_i32_0 = arith.constant 0 : i32
    %c0_i32_1 = arith.constant 0 : i32
    return %c0_i32, %c0_i32_0 : i32, i32
  }
  func.func @transform_30(%arg0: i32, %arg1: i32) -> (i32, i32, i32) {
    %c0_i32 = arith.constant 0 : i32
    %c0_i32_0 = arith.constant 0 : i32
    return %arg0, %arg1, %c0_i32 : i32, i32, i32
  }
}

module attributes {stable_mosaic.version = 11 : i64} {
  func.func @_decoder_block_kernel(%arg0: i32, %arg1: i32, %arg2: memref<1x8x32xf32, #tpu.memory_space<vmem>>, %arg3: memref<1x16x32xf32, #tpu.memory_space<vmem>>, %arg4: memref<1x16x32xf32, #tpu.memory_space<vmem>>, %arg5: memref<1x8x16xf32, #tpu.memory_space<vmem>>, %arg6: memref<32x32xf32, #tpu.memory_space<vmem>>, %arg7: memref<1x32xf32, #tpu.memory_space<vmem>>, %arg8: memref<32x32xf32, #tpu.memory_space<vmem>>, %arg9: memref<1x32xf32, #tpu.memory_space<vmem>>, %arg10: memref<32x32xf32, #tpu.memory_space<vmem>>, %arg11: memref<1x32xf32, #tpu.memory_space<vmem>>, %arg12: memref<32x32xf32, #tpu.memory_space<vmem>>, %arg13: memref<1x32xf32, #tpu.memory_space<vmem>>, %arg14: memref<1x32xf32, #tpu.memory_space<vmem>>, %arg15: memref<1x32xf32, #tpu.memory_space<vmem>>, %arg16: memref<32x32xf32, #tpu.memory_space<vmem>>, %arg17: memref<1x32xf32, #tpu.memory_space<vmem>>, %arg18: memref<32x32xf32, #tpu.memory_space<vmem>>, %arg19: memref<1x32xf32, #tpu.memory_space<vmem>>, %arg20: memref<32x32xf32, #tpu.memory_space<vmem>>, %arg21: memref<1x32xf32, #tpu.memory_space<vmem>>, %arg22: memref<32x32xf32, #tpu.memory_space<vmem>>, %arg23: memref<1x32xf32, #tpu.memory_space<vmem>>, %arg24: memref<1x32xf32, #tpu.memory_space<vmem>>, %arg25: memref<1x32xf32, #tpu.memory_space<vmem>>, %arg26: memref<32x64xf32, #tpu.memory_space<vmem>>, %arg27: memref<1x64xf32, #tpu.memory_space<vmem>>, %arg28: memref<64x32xf32, #tpu.memory_space<vmem>>, %arg29: memref<1x32xf32, #tpu.memory_space<vmem>>, %arg30: memref<1x32xf32, #tpu.memory_space<vmem>>, %arg31: memref<1x32xf32, #tpu.memory_space<vmem>>, %arg32: memref<1x8x32xf32, #tpu.memory_space<vmem>>) attributes {dimension_semantics = [#tpu.dimension_semantics<parallel>, #tpu.dimension_semantics<parallel>], iteration_bounds = array<i64: 2, 2>, scalar_prefetch = 0 : i64, scratch_operands = 0 : i64, tpu.core_type = #tpu.core_type<tc>, window_params = [{transform_indices = @transform_0, window_bounds = array<i64: 1, 8, 32>}, {transform_indices = @transform_1, window_bounds = array<i64: 1, 16, 32>}, {transform_indices = @transform_2, window_bounds = array<i64: 1, 16, 32>}, {transform_indices = @transform_3, window_bounds = array<i64: 1, 8, 16>}, {pipeline_mode = #tpu.pipeline_mode<synchronous>, transform_indices = @transform_4, window_bounds = array<i64: 32, 32>}, {pipeline_mode = #tpu.pipeline_mode<synchronous>, transform_indices = @transform_5, window_bounds = array<i64: 1, 32>}, {pipeline_mode = #tpu.pipeline_mode<synchronous>, transform_indices = @transform_6, window_bounds = array<i64: 32, 32>}, {pipeline_mode = #tpu.pipeline_mode<synchronous>, transform_indices = @transform_7, window_bounds = array<i64: 1, 32>}, {pipeline_mode = #tpu.pipeline_mode<synchronous>, transform_indices = @transform_8, window_bounds = array<i64: 32, 32>}, {pipeline_mode = #tpu.pipeline_mode<synchronous>, transform_indices = @transform_9, window_bounds = array<i64: 1, 32>}, {pipeline_mode = #tpu.pipeline_mode<synchronous>, transform_indices = @transform_10, window_bounds = array<i64: 32, 32>}, {pipeline_mode = #tpu.pipeline_mode<synchronous>, transform_indices = @transform_11, window_bounds = array<i64: 1, 32>}, {pipeline_mode = #tpu.pipeline_mode<synchronous>, transform_indices = @transform_12, window_bounds = array<i64: 1, 32>}, {pipeline_mode = #tpu.pipeline_mode<synchronous>, transform_indices = @transform_13, window_bounds = array<i64: 1, 32>}, {pipeline_mode = #tpu.pipeline_mode<synchronous>, transform_indices = @transform_14, window_bounds = array<i64: 32, 32>}, {pipeline_mode = #tpu.pipeline_mode<synchronous>, transform_indices = @transform_15, window_bounds = array<i64: 1, 32>}, {pipeline_mode = #tpu.pipeline_mode<synchronous>, transform_indices = @transform_16, window_bounds = array<i64: 32, 32>}, {pipeline_mode = #tpu.pipeline_mode<synchronous>, transform_indices = @transform_17, window_bounds = array<i64: 1, 32>}, {pipeline_mode = #tpu.pipeline_mode<synchronous>, transform_indices = @transform_18, window_bounds = array<i64: 32, 32>}, {pipeline_mode = #tpu.pipeline_mode<synchronous>, transform_indices = @transform_19, window_bounds = array<i64: 1, 32>}, {pipeline_mode = #tpu.pipeline_mode<synchronous>, transform_indices = @transform_20, window_bounds = array<i64: 32, 32>}, {pipeline_mode = #tpu.pipeline_mode<synchronous>, transform_indices = @transform_21, window_bounds = array<i64: 1, 32>}, {pipeline_mode = #tpu.pipeline_mode<synchronous>, transform_indices = @transform_22, window_bounds = array<i64: 1, 32>}, {pipeline_mode = #tpu.pipeline_mode<synchronous>, transform_indices = @transform_23, window_bounds = array<i64: 1, 32>}, {pipeline_mode = #tpu.pipeline_mode<synchronous>, transform_indices = @transform_24, window_bounds = array<i64: 32, 64>}, {pipeline_mode = #tpu.pipeline_mode<synchronous>, transform_indices = @transform_25, window_bounds = array<i64: 1, 64>}, {pipeline_mode = #tpu.pipeline_mode<synchronous>, transform_indices = @transform_26, window_bounds = array<i64: 64, 32>}, {pipeline_mode = #tpu.pipeline_mode<synchronous>, transform_indices = @transform_27, window_bounds = array<i64: 1, 32>}, {pipeline_mode = #tpu.pipeline_mode<synchronous>, transform_indices = @transform_28, window_bounds = array<i64: 1, 32>}, {pipeline_mode = #tpu.pipeline_mode<synchronous>, transform_indices = @transform_29, window_bounds = array<i64: 1, 32>}, {transform_indices = @transform_30, window_bounds = array<i64: 1, 8, 32>}]} {
    %c0 = arith.constant 0 : index
    %c0_0 = arith.constant 0 : index
    %c0_1 = arith.constant 0 : index
    %0 = vector.load %arg2[%c0, %c0_0, %c0_1] : memref<1x8x32xf32, #tpu.memory_space<vmem>>, vector<1x8x32xf32>
    %1 = vector.shape_cast %0 : vector<1x8x32xf32> to vector<8x32xf32>
    %c0_2 = arith.constant 0 : index
    %c0_3 = arith.constant 0 : index
    %c0_4 = arith.constant 0 : index
    %2 = vector.load %arg3[%c0_2, %c0_3, %c0_4] : memref<1x16x32xf32, #tpu.memory_space<vmem>>, vector<1x16x32xf32>
    %3 = vector.shape_cast %2 : vector<1x16x32xf32> to vector<16x32xf32>
    %c0_5 = arith.constant 0 : index
    %c0_6 = arith.constant 0 : index
    %c0_7 = arith.constant 0 : index
    %4 = vector.load %arg4[%c0_5, %c0_6, %c0_7] : memref<1x16x32xf32, #tpu.memory_space<vmem>>, vector<1x16x32xf32>
    %5 = vector.shape_cast %4 : vector<1x16x32xf32> to vector<16x32xf32>
    %c0_8 = arith.constant 0 : index
    %c0_9 = arith.constant 0 : index
    %c0_10 = arith.constant 0 : index
    %6 = vector.load %arg5[%c0_8, %c0_9, %c0_10] : memref<1x8x16xf32, #tpu.memory_space<vmem>>, vector<1x8x16xf32>
    %7 = vector.shape_cast %6 : vector<1x8x16xf32> to vector<8x16xf32>
    %c0_11 = arith.constant 0 : index
    %c0_12 = arith.constant 0 : index
    %8 = vector.load %arg6[%c0_11, %c0_12] : memref<32x32xf32, #tpu.memory_space<vmem>>, vector<32x32xf32>
    %c0_13 = arith.constant 0 : index
    %c0_14 = arith.constant 0 : index
    %9 = vector.load %arg7[%c0_13, %c0_14] : memref<1x32xf32, #tpu.memory_space<vmem>>, vector<1x32xf32>
    %c0_15 = arith.constant 0 : index
    %c0_16 = arith.constant 0 : index
    %10 = vector.load %arg8[%c0_15, %c0_16] : memref<32x32xf32, #tpu.memory_space<vmem>>, vector<32x32xf32>
    %c0_17 = arith.constant 0 : index
    %c0_18 = arith.constant 0 : index
    %11 = vector.load %arg9[%c0_17, %c0_18] : memref<1x32xf32, #tpu.memory_space<vmem>>, vector<1x32xf32>
    %c0_19 = arith.constant 0 : index
    %c0_20 = arith.constant 0 : index
    %12 = vector.load %arg10[%c0_19, %c0_20] : memref<32x32xf32, #tpu.memory_space<vmem>>, vector<32x32xf32>
    %c0_21 = arith.constant 0 : index
    %c0_22 = arith.constant 0 : index
    %13 = vector.load %arg11[%c0_21, %c0_22] : memref<1x32xf32, #tpu.memory_space<vmem>>, vector<1x32xf32>
    %c0_23 = arith.constant 0 : index
    %c0_24 = arith.constant 0 : index
    %14 = vector.load %arg12[%c0_23, %c0_24] : memref<32x32xf32, #tpu.memory_space<vmem>>, vector<32x32xf32>
    %c0_25 = arith.constant 0 : index
    %c0_26 = arith.constant 0 : index
    %15 = vector.load %arg13[%c0_25, %c0_26] : memref<1x32xf32, #tpu.memory_space<vmem>>, vector<1x32xf32>
    %cst = arith.constant dense<0.000000e+00> : vector<8x32xf32>
    %16 = tpu.matmul %1, %8, %cst {dimension_numbers = #tpu.dot_dimension_numbers<[1], [0], [0], [1], [0, 0, 1, 1], [], []>} : vector<8x32xf32>, vector<32x32xf32>, vector<8x32xf32> -> vector<8x32xf32>
    %17 = vector.broadcast %9 : vector<1x32xf32> to vector<8x32xf32>
    %18 = arith.addf %16, %17 : vector<8x32xf32>
    %cst_27 = arith.constant 0.353553385 : f32
    %19 = vector.broadcast %cst_27 : f32 to vector<8x32xf32>
    %20 = arith.mulf %18, %19 : vector<8x32xf32>
    %cst_28 = arith.constant dense<0.000000e+00> : vector<16x32xf32>
    %21 = tpu.matmul %3, %10, %cst_28 {dimension_numbers = #tpu.dot_dimension_numbers<[1], [0], [0], [1], [0, 0, 1, 1], [], []>} : vector<16x32xf32>, vector<32x32xf32>, vector<16x32xf32> -> vector<16x32xf32>
    %22 = vector.broadcast %11 : vector<1x32xf32> to vector<16x32xf32>
    %23 = arith.addf %21, %22 : vector<16x32xf32>
    %cst_29 = arith.constant dense<0.000000e+00> : vector<16x32xf32>
    %24 = tpu.matmul %3, %12, %cst_29 {dimension_numbers = #tpu.dot_dimension_numbers<[1], [0], [0], [1], [0, 0, 1, 1], [], []>} : vector<16x32xf32>, vector<32x32xf32>, vector<16x32xf32> -> vector<16x32xf32>
    %25 = vector.broadcast %13 : vector<1x32xf32> to vector<16x32xf32>
    %26 = arith.addf %24, %25 : vector<16x32xf32>
    %27 = vector.extract_strided_slice %20 {offsets = [0, 0], sizes = [8, 8], strides = [1, 1]} : vector<8x32xf32> to vector<8x8xf32>
    %28 = vector.extract_strided_slice %23 {offsets = [0, 0], sizes = [16, 8], strides = [1, 1]} : vector<16x32xf32> to vector<16x8xf32>
    %29 = vector.extract_strided_slice %26 {offsets = [0, 0], sizes = [16, 8], strides = [1, 1]} : vector<16x32xf32> to vector<16x8xf32>
    %cst_30 = arith.constant dense<0.000000e+00> : vector<8x16xf32>
    %30 = tpu.matmul %27, %28, %cst_30 {dimension_numbers = #tpu.dot_dimension_numbers<[1], [1], [0], [0], [0, 0, 1, 0], [], []>} : vector<8x8xf32>, vector<16x8xf32>, vector<8x16xf32> -> vector<8x16xf32>
    %cst_31 = arith.constant 0.000000e+00 : f32
    %31 = vector.broadcast %cst_31 : f32 to vector<8x16xf32>
    %32 = arith.cmpf ogt, %7, %31 : vector<8x16xf32>
    %cst_32 = arith.constant -1.000000e+09 : f32
    %33 = vector.broadcast %cst_32 : f32 to vector<8x16xf32>
    %34 = arith.select %32, %33, %30 : vector<8x16xi1>, vector<8x16xf32>
    %cst_33 = arith.constant dense<0xFF800000> : vector<8xf32>
    %35 = vector.multi_reduction <maximumf>, %34, %cst_33 [1] : vector<8x16xf32> to vector<8xf32>
    %36 = vector.shape_cast %35 : vector<8xf32> to vector<8x1xf32>
    %37 = vector.broadcast %36 : vector<8x1xf32> to vector<8x16xf32>
    %38 = arith.subf %34, %37 : vector<8x16xf32>
    %39 = math.exp %38 : vector<8x16xf32>
    %cst_34 = arith.constant dense<0.000000e+00> : vector<8xf32>
    %40 = vector.multi_reduction <add>, %39, %cst_34 [1] : vector<8x16xf32> to vector<8xf32>
    %41 = vector.shape_cast %40 : vector<8xf32> to vector<8x1xf32>
    %42 = vector.broadcast %41 : vector<8x1xf32> to vector<8x16xf32>
    %43 = arith.divf %39, %42 : vector<8x16xf32>
    %cst_35 = arith.constant dense<0.000000e+00> : vector<8x8xf32>
    %44 = tpu.matmul %43, %29, %cst_35 {dimension_numbers = #tpu.dot_dimension_numbers<[1], [0], [0], [1], [0, 0, 1, 1], [], []>} : vector<8x16xf32>, vector<16x8xf32>, vector<8x8xf32> -> vector<8x8xf32>
    %45 = vector.extract_strided_slice %20 {offsets = [0, 8], sizes = [8, 8], strides = [1, 1]} : vector<8x32xf32> to vector<8x8xf32>
    %46 = vector.extract_strided_slice %23 {offsets = [0, 8], sizes = [16, 8], strides = [1, 1]} : vector<16x32xf32> to vector<16x8xf32>
    %47 = vector.extract_strided_slice %26 {offsets = [0, 8], sizes = [16, 8], strides = [1, 1]} : vector<16x32xf32> to vector<16x8xf32>
    %cst_36 = arith.constant dense<0.000000e+00> : vector<8x16xf32>
    %48 = tpu.matmul %45, %46, %cst_36 {dimension_numbers = #tpu.dot_dimension_numbers<[1], [1], [0], [0], [0, 0, 1, 0], [], []>} : vector<8x8xf32>, vector<16x8xf32>, vector<8x16xf32> -> vector<8x16xf32>
    %cst_37 = arith.constant 0.000000e+00 : f32
    %49 = vector.broadcast %cst_37 : f32 to vector<8x16xf32>
    %50 = arith.cmpf ogt, %7, %49 : vector<8x16xf32>
    %cst_38 = arith.constant -1.000000e+09 : f32
    %51 = vector.broadcast %cst_38 : f32 to vector<8x16xf32>
    %52 = arith.select %50, %51, %48 : vector<8x16xi1>, vector<8x16xf32>
    %cst_39 = arith.constant dense<0xFF800000> : vector<8xf32>
    %53 = vector.multi_reduction <maximumf>, %52, %cst_39 [1] : vector<8x16xf32> to vector<8xf32>
    %54 = vector.shape_cast %53 : vector<8xf32> to vector<8x1xf32>
    %55 = vector.broadcast %54 : vector<8x1xf32> to vector<8x16xf32>
    %56 = arith.subf %52, %55 : vector<8x16xf32>
    %57 = math.exp %56 : vector<8x16xf32>
    %cst_40 = arith.constant dense<0.000000e+00> : vector<8xf32>
    %58 = vector.multi_reduction <add>, %57, %cst_40 [1] : vector<8x16xf32> to vector<8xf32>
    %59 = vector.shape_cast %58 : vector<8xf32> to vector<8x1xf32>
    %60 = vector.broadcast %59 : vector<8x1xf32> to vector<8x16xf32>
    %61 = arith.divf %57, %60 : vector<8x16xf32>
    %cst_41 = arith.constant dense<0.000000e+00> : vector<8x8xf32>
    %62 = tpu.matmul %61, %47, %cst_41 {dimension_numbers = #tpu.dot_dimension_numbers<[1], [0], [0], [1], [0, 0, 1, 1], [], []>} : vector<8x16xf32>, vector<16x8xf32>, vector<8x8xf32> -> vector<8x8xf32>
    %63 = vector.extract_strided_slice %20 {offsets = [0, 16], sizes = [8, 8], strides = [1, 1]} : vector<8x32xf32> to vector<8x8xf32>
    %64 = vector.extract_strided_slice %23 {offsets = [0, 16], sizes = [16, 8], strides = [1, 1]} : vector<16x32xf32> to vector<16x8xf32>
    %65 = vector.extract_strided_slice %26 {offsets = [0, 16], sizes = [16, 8], strides = [1, 1]} : vector<16x32xf32> to vector<16x8xf32>
    %cst_42 = arith.constant dense<0.000000e+00> : vector<8x16xf32>
    %66 = tpu.matmul %63, %64, %cst_42 {dimension_numbers = #tpu.dot_dimension_numbers<[1], [1], [0], [0], [0, 0, 1, 0], [], []>} : vector<8x8xf32>, vector<16x8xf32>, vector<8x16xf32> -> vector<8x16xf32>
    %cst_43 = arith.constant 0.000000e+00 : f32
    %67 = vector.broadcast %cst_43 : f32 to vector<8x16xf32>
    %68 = arith.cmpf ogt, %7, %67 : vector<8x16xf32>
    %cst_44 = arith.constant -1.000000e+09 : f32
    %69 = vector.broadcast %cst_44 : f32 to vector<8x16xf32>
    %70 = arith.select %68, %69, %66 : vector<8x16xi1>, vector<8x16xf32>
    %cst_45 = arith.constant dense<0xFF800000> : vector<8xf32>
    %71 = vector.multi_reduction <maximumf>, %70, %cst_45 [1] : vector<8x16xf32> to vector<8xf32>
    %72 = vector.shape_cast %71 : vector<8xf32> to vector<8x1xf32>
    %73 = vector.broadcast %72 : vector<8x1xf32> to vector<8x16xf32>
    %74 = arith.subf %70, %73 : vector<8x16xf32>
    %75 = math.exp %74 : vector<8x16xf32>
    %cst_46 = arith.constant dense<0.000000e+00> : vector<8xf32>
    %76 = vector.multi_reduction <add>, %75, %cst_46 [1] : vector<8x16xf32> to vector<8xf32>
    %77 = vector.shape_cast %76 : vector<8xf32> to vector<8x1xf32>
    %78 = vector.broadcast %77 : vector<8x1xf32> to vector<8x16xf32>
    %79 = arith.divf %75, %78 : vector<8x16xf32>
    %cst_47 = arith.constant dense<0.000000e+00> : vector<8x8xf32>
    %80 = tpu.matmul %79, %65, %cst_47 {dimension_numbers = #tpu.dot_dimension_numbers<[1], [0], [0], [1], [0, 0, 1, 1], [], []>} : vector<8x16xf32>, vector<16x8xf32>, vector<8x8xf32> -> vector<8x8xf32>
    %81 = vector.extract_strided_slice %20 {offsets = [0, 24], sizes = [8, 8], strides = [1, 1]} : vector<8x32xf32> to vector<8x8xf32>
    %82 = vector.extract_strided_slice %23 {offsets = [0, 24], sizes = [16, 8], strides = [1, 1]} : vector<16x32xf32> to vector<16x8xf32>
    %83 = vector.extract_strided_slice %26 {offsets = [0, 24], sizes = [16, 8], strides = [1, 1]} : vector<16x32xf32> to vector<16x8xf32>
    %cst_48 = arith.constant dense<0.000000e+00> : vector<8x16xf32>
    %84 = tpu.matmul %81, %82, %cst_48 {dimension_numbers = #tpu.dot_dimension_numbers<[1], [1], [0], [0], [0, 0, 1, 0], [], []>} : vector<8x8xf32>, vector<16x8xf32>, vector<8x16xf32> -> vector<8x16xf32>
    %cst_49 = arith.constant 0.000000e+00 : f32
    %85 = vector.broadcast %cst_49 : f32 to vector<8x16xf32>
    %86 = arith.cmpf ogt, %7, %85 : vector<8x16xf32>
    %cst_50 = arith.constant -1.000000e+09 : f32
    %87 = vector.broadcast %cst_50 : f32 to vector<8x16xf32>
    %88 = arith.select %86, %87, %84 : vector<8x16xi1>, vector<8x16xf32>
    %cst_51 = arith.constant dense<0xFF800000> : vector<8xf32>
    %89 = vector.multi_reduction <maximumf>, %88, %cst_51 [1] : vector<8x16xf32> to vector<8xf32>
    %90 = vector.shape_cast %89 : vector<8xf32> to vector<8x1xf32>
    %91 = vector.broadcast %90 : vector<8x1xf32> to vector<8x16xf32>
    %92 = arith.subf %88, %91 : vector<8x16xf32>
    %93 = math.exp %92 : vector<8x16xf32>
    %cst_52 = arith.constant dense<0.000000e+00> : vector<8xf32>
    %94 = vector.multi_reduction <add>, %93, %cst_52 [1] : vector<8x16xf32> to vector<8xf32>
    %95 = vector.shape_cast %94 : vector<8xf32> to vector<8x1xf32>
    %96 = vector.broadcast %95 : vector<8x1xf32> to vector<8x16xf32>
    %97 = arith.divf %93, %96 : vector<8x16xf32>
    %cst_53 = arith.constant dense<0.000000e+00> : vector<8x8xf32>
    %98 = tpu.matmul %97, %83, %cst_53 {dimension_numbers = #tpu.dot_dimension_numbers<[1], [0], [0], [1], [0, 0, 1, 1], [], []>} : vector<8x16xf32>, vector<16x8xf32>, vector<8x8xf32> -> vector<8x8xf32>
    %99 = tpu.concatenate %44, %62, %80, %98 in 1 : vector<8x8xf32>, vector<8x8xf32>, vector<8x8xf32>, vector<8x8xf32> -> vector<8x32xf32>
    %cst_54 = arith.constant dense<0.000000e+00> : vector<8x32xf32>
    %100 = tpu.matmul %99, %14, %cst_54 {dimension_numbers = #tpu.dot_dimension_numbers<[1], [0], [0], [1], [0, 0, 1, 1], [], []>} : vector<8x32xf32>, vector<32x32xf32>, vector<8x32xf32> -> vector<8x32xf32>
    %101 = vector.broadcast %15 : vector<1x32xf32> to vector<8x32xf32>
    %102 = arith.addf %100, %101 : vector<8x32xf32>
    %c0_55 = arith.constant 0 : index
    %c0_56 = arith.constant 0 : index
    %103 = vector.load %arg14[%c0_55, %c0_56] : memref<1x32xf32, #tpu.memory_space<vmem>>, vector<1x32xf32>
    %c0_57 = arith.constant 0 : index
    %c0_58 = arith.constant 0 : index
    %104 = vector.load %arg15[%c0_57, %c0_58] : memref<1x32xf32, #tpu.memory_space<vmem>>, vector<1x32xf32>
    %105 = arith.addf %1, %102 : vector<8x32xf32>
    %cst_59 = arith.constant dense<0.000000e+00> : vector<8xf32>
    %106 = vector.multi_reduction <add>, %105, %cst_59 [1] : vector<8x32xf32> to vector<8xf32>
    %107 = vector.shape_cast %106 : vector<8xf32> to vector<8x1xf32>
    %cst_60 = arith.constant 3.200000e+01 : f32
    %108 = vector.broadcast %cst_60 : f32 to vector<8x1xf32>
    %109 = arith.divf %107, %108 : vector<8x1xf32>
    %110 = vector.broadcast %109 : vector<8x1xf32> to vector<8x32xf32>
    %111 = arith.subf %105, %110 : vector<8x32xf32>
    %112 = arith.mulf %111, %111 : vector<8x32xf32>
    %cst_61 = arith.constant dense<0.000000e+00> : vector<8xf32>
    %113 = vector.multi_reduction <add>, %112, %cst_61 [1] : vector<8x32xf32> to vector<8xf32>
    %114 = vector.shape_cast %113 : vector<8xf32> to vector<8x1xf32>
    %cst_62 = arith.constant 3.200000e+01 : f32
    %115 = vector.broadcast %cst_62 : f32 to vector<8x1xf32>
    %116 = arith.divf %114, %115 : vector<8x1xf32>
    %117 = math.sqrt %116 : vector<8x1xf32>
    %118 = vector.broadcast %103 : vector<1x32xf32> to vector<8x32xf32>
    %119 = arith.mulf %118, %111 : vector<8x32xf32>
    %cst_63 = arith.constant 1.000000e-10 : f32
    %120 = vector.broadcast %cst_63 : f32 to vector<8x1xf32>
    %121 = arith.addf %117, %120 : vector<8x1xf32>
    %122 = vector.broadcast %121 : vector<8x1xf32> to vector<8x32xf32>
    %123 = arith.divf %119, %122 : vector<8x32xf32>
    %124 = vector.broadcast %104 : vector<1x32xf32> to vector<8x32xf32>
    %125 = arith.addf %123, %124 : vector<8x32xf32>
    %c0_64 = arith.constant 0 : index
    %c0_65 = arith.constant 0 : index
    %126 = vector.load %arg16[%c0_64, %c0_65] : memref<32x32xf32, #tpu.memory_space<vmem>>, vector<32x32xf32>
    %c0_66 = arith.constant 0 : index
    %c0_67 = arith.constant 0 : index
    %127 = vector.load %arg17[%c0_66, %c0_67] : memref<1x32xf32, #tpu.memory_space<vmem>>, vector<1x32xf32>
    %c0_68 = arith.constant 0 : index
    %c0_69 = arith.constant 0 : index
    %128 = vector.load %arg18[%c0_68, %c0_69] : memref<32x32xf32, #tpu.memory_space<vmem>>, vector<32x32xf32>
    %c0_70 = arith.constant 0 : index
    %c0_71 = arith.constant 0 : index
    %129 = vector.load %arg19[%c0_70, %c0_71] : memref<1x32xf32, #tpu.memory_space<vmem>>, vector<1x32xf32>
    %c0_72 = arith.constant 0 : index
    %c0_73 = arith.constant 0 : index
    %130 = vector.load %arg20[%c0_72, %c0_73] : memref<32x32xf32, #tpu.memory_space<vmem>>, vector<32x32xf32>
    %c0_74 = arith.constant 0 : index
    %c0_75 = arith.constant 0 : index
    %131 = vector.load %arg21[%c0_74, %c0_75] : memref<1x32xf32, #tpu.memory_space<vmem>>, vector<1x32xf32>
    %c0_76 = arith.constant 0 : index
    %c0_77 = arith.constant 0 : index
    %132 = vector.load %arg22[%c0_76, %c0_77] : memref<32x32xf32, #tpu.memory_space<vmem>>, vector<32x32xf32>
    %c0_78 = arith.constant 0 : index
    %c0_79 = arith.constant 0 : index
    %133 = vector.load %arg23[%c0_78, %c0_79] : memref<1x32xf32, #tpu.memory_space<vmem>>, vector<1x32xf32>
    %cst_80 = arith.constant dense<0.000000e+00> : vector<8x32xf32>
    %134 = tpu.matmul %125, %126, %cst_80 {dimension_numbers = #tpu.dot_dimension_numbers<[1], [0], [0], [1], [0, 0, 1, 1], [], []>} : vector<8x32xf32>, vector<32x32xf32>, vector<8x32xf32> -> vector<8x32xf32>
    %135 = vector.broadcast %127 : vector<1x32xf32> to vector<8x32xf32>
    %136 = arith.addf %134, %135 : vector<8x32xf32>
    %cst_81 = arith.constant 0.353553385 : f32
    %137 = vector.broadcast %cst_81 : f32 to vector<8x32xf32>
    %138 = arith.mulf %136, %137 : vector<8x32xf32>
    %cst_82 = arith.constant dense<0.000000e+00> : vector<16x32xf32>
    %139 = tpu.matmul %5, %128, %cst_82 {dimension_numbers = #tpu.dot_dimension_numbers<[1], [0], [0], [1], [0, 0, 1, 1], [], []>} : vector<16x32xf32>, vector<32x32xf32>, vector<16x32xf32> -> vector<16x32xf32>
    %140 = vector.broadcast %129 : vector<1x32xf32> to vector<16x32xf32>
    %141 = arith.addf %139, %140 : vector<16x32xf32>
    %cst_83 = arith.constant dense<0.000000e+00> : vector<16x32xf32>
    %142 = tpu.matmul %5, %130, %cst_83 {dimension_numbers = #tpu.dot_dimension_numbers<[1], [0], [0], [1], [0, 0, 1, 1], [], []>} : vector<16x32xf32>, vector<32x32xf32>, vector<16x32xf32> -> vector<16x32xf32>
    %143 = vector.broadcast %131 : vector<1x32xf32> to vector<16x32xf32>
    %144 = arith.addf %142, %143 : vector<16x32xf32>
    %145 = vector.extract_strided_slice %138 {offsets = [0, 0], sizes = [8, 8], strides = [1, 1]} : vector<8x32xf32> to vector<8x8xf32>
    %146 = vector.extract_strided_slice %141 {offsets = [0, 0], sizes = [16, 8], strides = [1, 1]} : vector<16x32xf32> to vector<16x8xf32>
    %147 = vector.extract_strided_slice %144 {offsets = [0, 0], sizes = [16, 8], strides = [1, 1]} : vector<16x32xf32> to vector<16x8xf32>
    %cst_84 = arith.constant dense<0.000000e+00> : vector<8x16xf32>
    %148 = tpu.matmul %145, %146, %cst_84 {dimension_numbers = #tpu.dot_dimension_numbers<[1], [1], [0], [0], [0, 0, 1, 0], [], []>} : vector<8x8xf32>, vector<16x8xf32>, vector<8x16xf32> -> vector<8x16xf32>
    %cst_85 = arith.constant dense<0xFF800000> : vector<8xf32>
    %149 = vector.multi_reduction <maximumf>, %148, %cst_85 [1] : vector<8x16xf32> to vector<8xf32>
    %150 = vector.shape_cast %149 : vector<8xf32> to vector<8x1xf32>
    %151 = vector.broadcast %150 : vector<8x1xf32> to vector<8x16xf32>
    %152 = arith.subf %148, %151 : vector<8x16xf32>
    %153 = math.exp %152 : vector<8x16xf32>
    %cst_86 = arith.constant dense<0.000000e+00> : vector<8xf32>
    %154 = vector.multi_reduction <add>, %153, %cst_86 [1] : vector<8x16xf32> to vector<8xf32>
    %155 = vector.shape_cast %154 : vector<8xf32> to vector<8x1xf32>
    %156 = vector.broadcast %155 : vector<8x1xf32> to vector<8x16xf32>
    %157 = arith.divf %153, %156 : vector<8x16xf32>
    %cst_87 = arith.constant dense<0.000000e+00> : vector<8x8xf32>
    %158 = tpu.matmul %157, %147, %cst_87 {dimension_numbers = #tpu.dot_dimension_numbers<[1], [0], [0], [1], [0, 0, 1, 1], [], []>} : vector<8x16xf32>, vector<16x8xf32>, vector<8x8xf32> -> vector<8x8xf32>
    %159 = vector.extract_strided_slice %138 {offsets = [0, 8], sizes = [8, 8], strides = [1, 1]} : vector<8x32xf32> to vector<8x8xf32>
    %160 = vector.extract_strided_slice %141 {offsets = [0, 8], sizes = [16, 8], strides = [1, 1]} : vector<16x32xf32> to vector<16x8xf32>
    %161 = vector.extract_strided_slice %144 {offsets = [0, 8], sizes = [16, 8], strides = [1, 1]} : vector<16x32xf32> to vector<16x8xf32>
    %cst_88 = arith.constant dense<0.000000e+00> : vector<8x16xf32>
    %162 = tpu.matmul %159, %160, %cst_88 {dimension_numbers = #tpu.dot_dimension_numbers<[1], [1], [0], [0], [0, 0, 1, 0], [], []>} : vector<8x8xf32>, vector<16x8xf32>, vector<8x16xf32> -> vector<8x16xf32>
    %cst_89 = arith.constant dense<0xFF800000> : vector<8xf32>
    %163 = vector.multi_reduction <maximumf>, %162, %cst_89 [1] : vector<8x16xf32> to vector<8xf32>
    %164 = vector.shape_cast %163 : vector<8xf32> to vector<8x1xf32>
    %165 = vector.broadcast %164 : vector<8x1xf32> to vector<8x16xf32>
    %166 = arith.subf %162, %165 : vector<8x16xf32>
    %167 = math.exp %166 : vector<8x16xf32>
    %cst_90 = arith.constant dense<0.000000e+00> : vector<8xf32>
    %168 = vector.multi_reduction <add>, %167, %cst_90 [1] : vector<8x16xf32> to vector<8xf32>
    %169 = vector.shape_cast %168 : vector<8xf32> to vector<8x1xf32>
    %170 = vector.broadcast %169 : vector<8x1xf32> to vector<8x16xf32>
    %171 = arith.divf %167, %170 : vector<8x16xf32>
    %cst_91 = arith.constant dense<0.000000e+00> : vector<8x8xf32>
    %172 = tpu.matmul %171, %161, %cst_91 {dimension_numbers = #tpu.dot_dimension_numbers<[1], [0], [0], [1], [0, 0, 1, 1], [], []>} : vector<8x16xf32>, vector<16x8xf32>, vector<8x8xf32> -> vector<8x8xf32>
    %173 = vector.extract_strided_slice %138 {offsets = [0, 16], sizes = [8, 8], strides = [1, 1]} : vector<8x32xf32> to vector<8x8xf32>
    %174 = vector.extract_strided_slice %141 {offsets = [0, 16], sizes = [16, 8], strides = [1, 1]} : vector<16x32xf32> to vector<16x8xf32>
    %175 = vector.extract_strided_slice %144 {offsets = [0, 16], sizes = [16, 8], strides = [1, 1]} : vector<16x32xf32> to vector<16x8xf32>
    %cst_92 = arith.constant dense<0.000000e+00> : vector<8x16xf32>
    %176 = tpu.matmul %173, %174, %cst_92 {dimension_numbers = #tpu.dot_dimension_numbers<[1], [1], [0], [0], [0, 0, 1, 0], [], []>} : vector<8x8xf32>, vector<16x8xf32>, vector<8x16xf32> -> vector<8x16xf32>
    %cst_93 = arith.constant dense<0xFF800000> : vector<8xf32>
    %177 = vector.multi_reduction <maximumf>, %176, %cst_93 [1] : vector<8x16xf32> to vector<8xf32>
    %178 = vector.shape_cast %177 : vector<8xf32> to vector<8x1xf32>
    %179 = vector.broadcast %178 : vector<8x1xf32> to vector<8x16xf32>
    %180 = arith.subf %176, %179 : vector<8x16xf32>
    %181 = math.exp %180 : vector<8x16xf32>
    %cst_94 = arith.constant dense<0.000000e+00> : vector<8xf32>
    %182 = vector.multi_reduction <add>, %181, %cst_94 [1] : vector<8x16xf32> to vector<8xf32>
    %183 = vector.shape_cast %182 : vector<8xf32> to vector<8x1xf32>
    %184 = vector.broadcast %183 : vector<8x1xf32> to vector<8x16xf32>
    %185 = arith.divf %181, %184 : vector<8x16xf32>
    %cst_95 = arith.constant dense<0.000000e+00> : vector<8x8xf32>
    %186 = tpu.matmul %185, %175, %cst_95 {dimension_numbers = #tpu.dot_dimension_numbers<[1], [0], [0], [1], [0, 0, 1, 1], [], []>} : vector<8x16xf32>, vector<16x8xf32>, vector<8x8xf32> -> vector<8x8xf32>
    %187 = vector.extract_strided_slice %138 {offsets = [0, 24], sizes = [8, 8], strides = [1, 1]} : vector<8x32xf32> to vector<8x8xf32>
    %188 = vector.extract_strided_slice %141 {offsets = [0, 24], sizes = [16, 8], strides = [1, 1]} : vector<16x32xf32> to vector<16x8xf32>
    %189 = vector.extract_strided_slice %144 {offsets = [0, 24], sizes = [16, 8], strides = [1, 1]} : vector<16x32xf32> to vector<16x8xf32>
    %cst_96 = arith.constant dense<0.000000e+00> : vector<8x16xf32>
    %190 = tpu.matmul %187, %188, %cst_96 {dimension_numbers = #tpu.dot_dimension_numbers<[1], [1], [0], [0], [0, 0, 1, 0], [], []>} : vector<8x8xf32>, vector<16x8xf32>, vector<8x16xf32> -> vector<8x16xf32>
    %cst_97 = arith.constant dense<0xFF800000> : vector<8xf32>
    %191 = vector.multi_reduction <maximumf>, %190, %cst_97 [1] : vector<8x16xf32> to vector<8xf32>
    %192 = vector.shape_cast %191 : vector<8xf32> to vector<8x1xf32>
    %193 = vector.broadcast %192 : vector<8x1xf32> to vector<8x16xf32>
    %194 = arith.subf %190, %193 : vector<8x16xf32>
    %195 = math.exp %194 : vector<8x16xf32>
    %cst_98 = arith.constant dense<0.000000e+00> : vector<8xf32>
    %196 = vector.multi_reduction <add>, %195, %cst_98 [1] : vector<8x16xf32> to vector<8xf32>
    %197 = vector.shape_cast %196 : vector<8xf32> to vector<8x1xf32>
    %198 = vector.broadcast %197 : vector<8x1xf32> to vector<8x16xf32>
    %199 = arith.divf %195, %198 : vector<8x16xf32>
    %cst_99 = arith.constant dense<0.000000e+00> : vector<8x8xf32>
    %200 = tpu.matmul %199, %189, %cst_99 {dimension_numbers = #tpu.dot_dimension_numbers<[1], [0], [0], [1], [0, 0, 1, 1], [], []>} : vector<8x16xf32>, vector<16x8xf32>, vector<8x8xf32> -> vector<8x8xf32>
    %201 = tpu.concatenate %158, %172, %186, %200 in 1 : vector<8x8xf32>, vector<8x8xf32>, vector<8x8xf32>, vector<8x8xf32> -> vector<8x32xf32>
    %cst_100 = arith.constant dense<0.000000e+00> : vector<8x32xf32>
    %202 = tpu.matmul %201, %132, %cst_100 {dimension_numbers = #tpu.dot_dimension_numbers<[1], [0], [0], [1], [0, 0, 1, 1], [], []>} : vector<8x32xf32>, vector<32x32xf32>, vector<8x32xf32> -> vector<8x32xf32>
    %203 = vector.broadcast %133 : vector<1x32xf32> to vector<8x32xf32>
    %204 = arith.addf %202, %203 : vector<8x32xf32>
    %c0_101 = arith.constant 0 : index
    %c0_102 = arith.constant 0 : index
    %205 = vector.load %arg24[%c0_101, %c0_102] : memref<1x32xf32, #tpu.memory_space<vmem>>, vector<1x32xf32>
    %c0_103 = arith.constant 0 : index
    %c0_104 = arith.constant 0 : index
    %206 = vector.load %arg25[%c0_103, %c0_104] : memref<1x32xf32, #tpu.memory_space<vmem>>, vector<1x32xf32>
    %207 = arith.addf %125, %204 : vector<8x32xf32>
    %cst_105 = arith.constant dense<0.000000e+00> : vector<8xf32>
    %208 = vector.multi_reduction <add>, %207, %cst_105 [1] : vector<8x32xf32> to vector<8xf32>
    %209 = vector.shape_cast %208 : vector<8xf32> to vector<8x1xf32>
    %cst_106 = arith.constant 3.200000e+01 : f32
    %210 = vector.broadcast %cst_106 : f32 to vector<8x1xf32>
    %211 = arith.divf %209, %210 : vector<8x1xf32>
    %212 = vector.broadcast %211 : vector<8x1xf32> to vector<8x32xf32>
    %213 = arith.subf %207, %212 : vector<8x32xf32>
    %214 = arith.mulf %213, %213 : vector<8x32xf32>
    %cst_107 = arith.constant dense<0.000000e+00> : vector<8xf32>
    %215 = vector.multi_reduction <add>, %214, %cst_107 [1] : vector<8x32xf32> to vector<8xf32>
    %216 = vector.shape_cast %215 : vector<8xf32> to vector<8x1xf32>
    %cst_108 = arith.constant 3.200000e+01 : f32
    %217 = vector.broadcast %cst_108 : f32 to vector<8x1xf32>
    %218 = arith.divf %216, %217 : vector<8x1xf32>
    %219 = math.sqrt %218 : vector<8x1xf32>
    %220 = vector.broadcast %205 : vector<1x32xf32> to vector<8x32xf32>
    %221 = arith.mulf %220, %213 : vector<8x32xf32>
    %cst_109 = arith.constant 1.000000e-10 : f32
    %222 = vector.broadcast %cst_109 : f32 to vector<8x1xf32>
    %223 = arith.addf %219, %222 : vector<8x1xf32>
    %224 = vector.broadcast %223 : vector<8x1xf32> to vector<8x32xf32>
    %225 = arith.divf %221, %224 : vector<8x32xf32>
    %226 = vector.broadcast %206 : vector<1x32xf32> to vector<8x32xf32>
    %227 = arith.addf %225, %226 : vector<8x32xf32>
    %c0_110 = arith.constant 0 : index
    %c0_111 = arith.constant 0 : index
    %228 = vector.load %arg26[%c0_110, %c0_111] : memref<32x64xf32, #tpu.memory_space<vmem>>, vector<32x64xf32>
    %cst_112 = arith.constant dense<0.000000e+00> : vector<8x64xf32>
    %229 = tpu.matmul %227, %228, %cst_112 {dimension_numbers = #tpu.dot_dimension_numbers<[1], [0], [0], [1], [0, 0, 1, 1], [], []>} : vector<8x32xf32>, vector<32x64xf32>, vector<8x64xf32> -> vector<8x64xf32>
    %c0_113 = arith.constant 0 : index
    %c0_114 = arith.constant 0 : index
    %230 = vector.load %arg27[%c0_113, %c0_114] : memref<1x64xf32, #tpu.memory_space<vmem>>, vector<1x64xf32>
    %231 = vector.broadcast %230 : vector<1x64xf32> to vector<8x64xf32>
    %232 = arith.addf %229, %231 : vector<8x64xf32>
    %cst_115 = arith.constant 0.000000e+00 : f32
    %233 = vector.broadcast %cst_115 : f32 to vector<8x64xf32>
    %234 = arith.maximumf %232, %233 : vector<8x64xf32>
    %c0_116 = arith.constant 0 : index
    %c0_117 = arith.constant 0 : index
    %235 = vector.load %arg28[%c0_116, %c0_117] : memref<64x32xf32, #tpu.memory_space<vmem>>, vector<64x32xf32>
    %cst_118 = arith.constant dense<0.000000e+00> : vector<8x32xf32>
    %236 = tpu.matmul %234, %235, %cst_118 {dimension_numbers = #tpu.dot_dimension_numbers<[1], [0], [0], [1], [0, 0, 1, 1], [], []>} : vector<8x64xf32>, vector<64x32xf32>, vector<8x32xf32> -> vector<8x32xf32>
    %c0_119 = arith.constant 0 : index
    %c0_120 = arith.constant 0 : index
    %237 = vector.load %arg29[%c0_119, %c0_120] : memref<1x32xf32, #tpu.memory_space<vmem>>, vector<1x32xf32>
    %238 = vector.broadcast %237 : vector<1x32xf32> to vector<8x32xf32>
    %239 = arith.addf %236, %238 : vector<8x32xf32>
    %c0_121 = arith.constant 0 : index
    %c0_122 = arith.constant 0 : index
    %240 = vector.load %arg30[%c0_121, %c0_122] : memref<1x32xf32, #tpu.memory_space<vmem>>, vector<1x32xf32>
    %c0_123 = arith.constant 0 : index
    %c0_124 = arith.constant 0 : index
    %241 = vector.load %arg31[%c0_123, %c0_124] : memref<1x32xf32, #tpu.memory_space<vmem>>, vector<1x32xf32>
    %242 = arith.addf %227, %239 : vector<8x32xf32>
    %cst_125 = arith.constant dense<0.000000e+00> : vector<8xf32>
    %243 = vector.multi_reduction <add>, %242, %cst_125 [1] : vector<8x32xf32> to vector<8xf32>
    %244 = vector.shape_cast %243 : vector<8xf32> to vector<8x1xf32>
    %cst_126 = arith.constant 3.200000e+01 : f32
    %245 = vector.broadcast %cst_126 : f32 to vector<8x1xf32>
    %246 = arith.divf %244, %245 : vector<8x1xf32>
    %247 = vector.broadcast %246 : vector<8x1xf32> to vector<8x32xf32>
    %248 = arith.subf %242, %247 : vector<8x32xf32>
    %249 = arith.mulf %248, %248 : vector<8x32xf32>
    %cst_127 = arith.constant dense<0.000000e+00> : vector<8xf32>
    %250 = vector.multi_reduction <add>, %249, %cst_127 [1] : vector<8x32xf32> to vector<8xf32>
    %251 = vector.shape_cast %250 : vector<8xf32> to vector<8x1xf32>
    %cst_128 = arith.constant 3.200000e+01 : f32
    %252 = vector.broadcast %cst_128 : f32 to vector<8x1xf32>
    %253 = arith.divf %251, %252 : vector<8x1xf32>
    %254 = math.sqrt %253 : vector<8x1xf32>
    %255 = vector.broadcast %240 : vector<1x32xf32> to vector<8x32xf32>
    %256 = arith.mulf %255, %248 : vector<8x32xf32>
    %cst_129 = arith.constant 1.000000e-10 : f32
    %257 = vector.broadcast %cst_129 : f32 to vector<8x1xf32>
    %258 = arith.addf %254, %257 : vector<8x1xf32>
    %259 = vector.broadcast %258 : vector<8x1xf32> to vector<8x32xf32>
    %260 = arith.divf %256, %259 : vector<8x32xf32>
    %261 = vector.broadcast %241 : vector<1x32xf32> to vector<8x32xf32>
    %262 = arith.addf %260, %261 : vector<8x32xf32>
    %c0_130 = arith.constant 0 : index
    %c0_131 = arith.constant 0 : index
    %c0_132 = arith.constant 0 : index
    %263 = vector.load %arg32[%c0_130, %c0_131, %c0_132] : memref<1x8x32xf32, #tpu.memory_space<vmem>>, vector<1x8x32xf32>
    %264 = vector.shape_cast %263 : vector<1x8x32xf32> to vector<8x32xf32>
    %265 = vector.shape_cast %262 : vector<8x32xf32> to vector<1x8x32xf32>
    tpu.vector_store %arg32[%c0_130, %c0_131, %c0_132], %265 {strides = array<i32>} : memref<1x8x32xf32, #tpu.memory_space<vmem>>, vector<1x8x32xf32>,
    return
  }
  func.func @transform_0(%arg0: i32, %arg1: i32) -> (i32, i32, i32) {
    %c0_i32 = arith.constant 0 : i32
    %c0_i32_0 = arith.constant 0 : i32
    return %arg0, %arg1, %c0_i32 : i32, i32, i32
  }
  func.func @transform_1(%arg0: i32, %arg1: i32) -> (i32, i32, i32) {
    %c0_i32 = arith.constant 0 : i32
    %c0_i32_0 = arith.constant 0 : i32
    %c0_i32_1 = arith.constant 0 : i32
    return %arg0, %c0_i32, %c0_i32_0 : i32, i32, i32
  }
  func.func @transform_2(%arg0: i32, %arg1: i32) -> (i32, i32, i32) {
    %c0_i32 = arith.constant 0 : i32
    %c0_i32_0 = arith.constant 0 : i32
    %c0_i32_1 = arith.constant 0 : i32
    return %arg0, %c0_i32, %c0_i32_0 : i32, i32, i32
  }
  func.func @transform_3(%arg0: i32, %arg1: i32) -> (i32, i32, i32) {
    %c0_i32 = arith.constant 0 : i32
    %c0_i32_0 = arith.constant 0 : i32
    %c0_i32_1 = arith.constant 0 : i32
    return %c0_i32, %arg1, %c0_i32_0 : i32, i32, i32
  }
  func.func @transform_4(%arg0: i32, %arg1: i32) -> (i32, i32) {
    %c0_i32 = arith.constant 0 : i32
    %c0_i32_0 = arith.constant 0 : i32
    %c0_i32_1 = arith.constant 0 : i32
    return %c0_i32, %c0_i32_0 : i32, i32
  }
  func.func @transform_5(%arg0: i32, %arg1: i32) -> (i32, i32) {
    %c0_i32 = arith.constant 0 : i32
    %c0_i32_0 = arith.constant 0 : i32
    %c0_i32_1 = arith.constant 0 : i32
    return %c0_i32, %c0_i32_0 : i32, i32
  }
  func.func @transform_6(%arg0: i32, %arg1: i32) -> (i32, i32) {
    %c0_i32 = arith.constant 0 : i32
    %c0_i32_0 = arith.constant 0 : i32
    %c0_i32_1 = arith.constant 0 : i32
    return %c0_i32, %c0_i32_0 : i32, i32
  }
  func.func @transform_7(%arg0: i32, %arg1: i32) -> (i32, i32) {
    %c0_i32 = arith.constant 0 : i32
    %c0_i32_0 = arith.constant 0 : i32
    %c0_i32_1 = arith.constant 0 : i32
    return %c0_i32, %c0_i32_0 : i32, i32
  }
  func.func @transform_8(%arg0: i32, %arg1: i32) -> (i32, i32) {
    %c0_i32 = arith.constant 0 : i32
    %c0_i32_0 = arith.constant 0 : i32
    %c0_i32_1 = arith.constant 0 : i32
    return %c0_i32, %c0_i32_0 : i32, i32
  }
  func.func @transform_9(%arg0: i32, %arg1: i32) -> (i32, i32) {
    %c0_i32 = arith.constant 0 : i32
    %c0_i32_0 = arith.constant 0 : i32
    %c0_i32_1 = arith.constant 0 : i32
    return %c0_i32, %c0_i32_0 : i32, i32
  }
  func.func @transform_10(%arg0: i32, %arg1: i32) -> (i32, i32) {
    %c0_i32 = arith.constant 0 : i32
    %c0_i32_0 = arith.constant 0 : i32
    %c0_i32_1 = arith.constant 0 : i32
    return %c0_i32, %c0_i32_0 : i32, i32
  }
  func.func @transform_11(%arg0: i32, %arg1: i32) -> (i32, i32) {
    %c0_i32 = arith.constant 0 : i32
    %c0_i32_0 = arith.constant 0 : i32
    %c0_i32_1 = arith.constant 0 : i32
    return %c0_i32, %c0_i32_0 : i32, i32
  }
  func.func @transform_12(%arg0: i32, %arg1: i32) -> (i32, i32) {
    %c0_i32 = arith.constant 0 : i32
    %c0_i32_0 = arith.constant 0 : i32
    %c0_i32_1 = arith.constant 0 : i32
    return %c0_i32, %c0_i32_0 : i32, i32
  }
  func.func @transform_13(%arg0: i32, %arg1: i32) -> (i32, i32) {
    %c0_i32 = arith.constant 0 : i32
    %c0_i32_0 = arith.constant 0 : i32
    %c0_i32_1 = arith.constant 0 : i32
    return %c0_i32, %c0_i32_0 : i32, i32
  }
  func.func @transform_14(%arg0: i32, %arg1: i32) -> (i32, i32) {
    %c0_i32 = arith.constant 0 : i32
    %c0_i32_0 = arith.constant 0 : i32
    %c0_i32_1 = arith.constant 0 : i32
    return %c0_i32, %c0_i32_0 : i32, i32
  }
  func.func @transform_15(%arg0: i32, %arg1: i32) -> (i32, i32) {
    %c0_i32 = arith.constant 0 : i32
    %c0_i32_0 = arith.constant 0 : i32
    %c0_i32_1 = arith.constant 0 : i32
    return %c0_i32, %c0_i32_0 : i32, i32
  }
  func.func @transform_16(%arg0: i32, %arg1: i32) -> (i32, i32) {
    %c0_i32 = arith.constant 0 : i32
    %c0_i32_0 = arith.constant 0 : i32
    %c0_i32_1 = arith.constant 0 : i32
    return %c0_i32, %c0_i32_0 : i32, i32
  }
  func.func @transform_17(%arg0: i32, %arg1: i32) -> (i32, i32) {
    %c0_i32 = arith.constant 0 : i32
    %c0_i32_0 = arith.constant 0 : i32
    %c0_i32_1 = arith.constant 0 : i32
    return %c0_i32, %c0_i32_0 : i32, i32
  }
  func.func @transform_18(%arg0: i32, %arg1: i32) -> (i32, i32) {
    %c0_i32 = arith.constant 0 : i32
    %c0_i32_0 = arith.constant 0 : i32
    %c0_i32_1 = arith.constant 0 : i32
    return %c0_i32, %c0_i32_0 : i32, i32
  }
  func.func @transform_19(%arg0: i32, %arg1: i32) -> (i32, i32) {
    %c0_i32 = arith.constant 0 : i32
    %c0_i32_0 = arith.constant 0 : i32
    %c0_i32_1 = arith.constant 0 : i32
    return %c0_i32, %c0_i32_0 : i32, i32
  }
  func.func @transform_20(%arg0: i32, %arg1: i32) -> (i32, i32) {
    %c0_i32 = arith.constant 0 : i32
    %c0_i32_0 = arith.constant 0 : i32
    %c0_i32_1 = arith.constant 0 : i32
    return %c0_i32, %c0_i32_0 : i32, i32
  }
  func.func @transform_21(%arg0: i32, %arg1: i32) -> (i32, i32) {
    %c0_i32 = arith.constant 0 : i32
    %c0_i32_0 = arith.constant 0 : i32
    %c0_i32_1 = arith.constant 0 : i32
    return %c0_i32, %c0_i32_0 : i32, i32
  }
  func.func @transform_22(%arg0: i32, %arg1: i32) -> (i32, i32) {
    %c0_i32 = arith.constant 0 : i32
    %c0_i32_0 = arith.constant 0 : i32
    %c0_i32_1 = arith.constant 0 : i32
    return %c0_i32, %c0_i32_0 : i32, i32
  }
  func.func @transform_23(%arg0: i32, %arg1: i32) -> (i32, i32) {
    %c0_i32 = arith.constant 0 : i32
    %c0_i32_0 = arith.constant 0 : i32
    %c0_i32_1 = arith.constant 0 : i32
    return %c0_i32, %c0_i32_0 : i32, i32
  }
  func.func @transform_24(%arg0: i32, %arg1: i32) -> (i32, i32) {
    %c0_i32 = arith.constant 0 : i32
    %c0_i32_0 = arith.constant 0 : i32
    %c0_i32_1 = arith.constant 0 : i32
    return %c0_i32, %c0_i32_0 : i32, i32
  }
  func.func @transform_25(%arg0: i32, %arg1: i32) -> (i32, i32) {
    %c0_i32 = arith.constant 0 : i32
    %c0_i32_0 = arith.constant 0 : i32
    %c0_i32_1 = arith.constant 0 : i32
    return %c0_i32, %c0_i32_0 : i32, i32
  }
  func.func @transform_26(%arg0: i32, %arg1: i32) -> (i32, i32) {
    %c0_i32 = arith.constant 0 : i32
    %c0_i32_0 = arith.constant 0 : i32
    %c0_i32_1 = arith.constant 0 : i32
    return %c0_i32, %c0_i32_0 : i32, i32
  }
  func.func @transform_27(%arg0: i32, %arg1: i32) -> (i32, i32) {
    %c0_i32 = arith.constant 0 : i32
    %c0_i32_0 = arith.constant 0 : i32
    %c0_i32_1 = arith.constant 0 : i32
    return %c0_i32, %c0_i32_0 : i32, i32
  }
  func.func @transform_28(%arg0: i32, %arg1: i32) -> (i32, i32) {
    %c0_i32 = arith.constant 0 : i32
    %c0_i32_0 = arith.constant 0 : i32
    %c0_i32_1 = arith.constant 0 : i32
    return %c0_i32, %c0_i32_0 : i32, i32
  }
  func.func @transform_29(%arg0: i32, %arg1: i32) -> (i32, i32) {
    %c0_i32 = arith.constant 0 : i32
    %c0_i32_0 = arith.constant 0 : i32
    %c0_i32_1 = arith.constant 0 : i32
    return %c0_i32, %c0_i32_0 : i32, i32
  }
  func.func @transform_30(%arg0: i32, %arg1: i32) -> (i32, i32, i32) {
    %c0_i32 = arith.constant 0 : i32
    %c0_i32_0 = arith.constant 0 : i32
    return %arg0, %arg1, %c0_i32 : i32, i32, i32
  }
}

module attributes {stable_mosaic.version = 11 : i64} {
  func.func @_vocab_proj_kernel(%arg0: i32, %arg1: i32, %arg2: memref<1x16x32xf32, #tpu.memory_space<vmem>>, %arg3: memref<32x128xf32, #tpu.memory_space<vmem>>, %arg4: memref<1x128xf32, #tpu.memory_space<vmem>>, %arg5: memref<1x16x128xf32, #tpu.memory_space<vmem>>) attributes {dimension_semantics = [#tpu.dimension_semantics<parallel>, #tpu.dimension_semantics<parallel>], iteration_bounds = array<i64: 2, 2>, scalar_prefetch = 0 : i64, scratch_operands = 0 : i64, tpu.core_type = #tpu.core_type<tc>, window_params = [{transform_indices = @transform_0, window_bounds = array<i64: 1, 16, 32>}, {transform_indices = @transform_1, window_bounds = array<i64: 32, 128>}, {transform_indices = @transform_2, window_bounds = array<i64: 1, 128>}, {transform_indices = @transform_3, window_bounds = array<i64: 1, 16, 128>}]} {
    %c0 = arith.constant 0 : index
    %c0_0 = arith.constant 0 : index
    %c0_1 = arith.constant 0 : index
    %0 = vector.load %arg2[%c0, %c0_0, %c0_1] : memref<1x16x32xf32, #tpu.memory_space<vmem>>, vector<1x16x32xf32>
    %1 = vector.shape_cast %0 : vector<1x16x32xf32> to vector<16x32xf32>
    %c0_2 = arith.constant 0 : index
    %c0_3 = arith.constant 0 : index
    %2 = vector.load %arg3[%c0_2, %c0_3] : memref<32x128xf32, #tpu.memory_space<vmem>>, vector<32x128xf32>
    %cst = arith.constant dense<0.000000e+00> : vector<16x128xf32>
    %3 = tpu.matmul %1, %2, %cst {dimension_numbers = #tpu.dot_dimension_numbers<[1], [0], [0], [1], [0, 0, 1, 1], [], []>} : vector<16x32xf32>, vector<32x128xf32>, vector<16x128xf32> -> vector<16x128xf32>
    %c0_4 = arith.constant 0 : index
    %c0_5 = arith.constant 0 : index
    %4 = vector.load %arg4[%c0_4, %c0_5] : memref<1x128xf32, #tpu.memory_space<vmem>>, vector<1x128xf32>
    %5 = vector.broadcast %4 : vector<1x128xf32> to vector<16x128xf32>
    %6 = arith.addf %3, %5 : vector<16x128xf32>
    %c0_6 = arith.constant 0 : index
    %c0_7 = arith.constant 0 : index
    %c0_8 = arith.constant 0 : index
    %7 = vector.load %arg5[%c0_6, %c0_7, %c0_8] : memref<1x16x128xf32, #tpu.memory_space<vmem>>, vector<1x16x128xf32>
    %8 = vector.shape_cast %7 : vector<1x16x128xf32> to vector<16x128xf32>
    %9 = vector.shape_cast %6 : vector<16x128xf32> to vector<1x16x128xf32>
    tpu.vector_store %arg5[%c0_6, %c0_7, %c0_8], %9 {strides = array<i32>} : memref<1x16x128xf32, #tpu.memory_space<vmem>>, vector<1x16x128xf32>,
    return
  }
  func.func @transform_0(%arg0: i32, %arg1: i32) -> (i32, i32, i32) {
    %c0_i32 = arith.constant 0 : i32
    %c0_i32_0 = arith.constant 0 : i32
    %c0_i32_1 = arith.constant 0 : i32
    return %arg0, %c0_i32, %c0_i32_0 : i32, i32, i32
  }
  func.func @transform_1(%arg0: i32, %arg1: i32) -> (i32, i32) {
    %c0_i32 = arith.constant 0 : i32
    %c0_i32_0 = arith.constant 0 : i32
    return %c0_i32, %arg1 : i32, i32
  }
  func.func @transform_2(%arg0: i32, %arg1: i32) -> (i32, i32) {
    %c0_i32 = arith.constant 0 : i32
    %c0_i32_0 = arith.constant 0 : i32
    return %c0_i32, %arg1 : i32, i32
  }
  func.func @transform_3(%arg0: i32, %arg1: i32) -> (i32, i32, i32) {
    %c0_i32 = arith.constant 0 : i32
    %c0_i32_0 = arith.constant 0 : i32
    return %arg0, %c0_i32, %arg1 : i32, i32, i32
  }
}

</mosaic_0001>

<llo_original>
// kernel: decoder_forward.5
$region0: #{decoder_forward.5}
  #allocation0 [shape = 'u32[]', space=smem, size = 0x4, offset = 0x4, fixed_abs, tag = 'smem constant byte address 0x4 - core index']
  #allocation1 [shape = 'u32[144,128]{1,0:T(1,128)}', space=vmem, size = 0x12000, scoped, tag = 'internal scratch']
  %s0 = inlined_call_operand.vmem [shape: f32[2,16,32], index: 0, kind: input, shape index: {}]
  %s1 = inlined_call_operand.vmem [shape: f32[32,256], index: 1, kind: input, shape index: {}]
  %s2 = inlined_call_operand.vmem [shape: f32[1,256], index: 2, kind: input, shape index: {}]
  %s3 = inlined_call_operand.hbm [shape: f32[2,16,256], index: 3, kind: output, shape index: {}]
  %s4 = sld [smem:[#allocation0]]
  $region83: #{decoder_forward.5} parent=0
    _
  %s6 = ssub.s32 1, %s4
  %s7 = scalar_select 0, %s6, %s4
  $region1: #{decoder_forward.5} parent=0
    #allocation2 [shape = 'u8[32768]{0}', space=vmem, size = 0x8000, scoped, tag = 'input window, operand 1']
    #allocation3 [shape = 'u8[16384]{0}', space=vmem, size = 0x4000, scoped, tag = 'output window, operand 0']
    #allocation4 [shape = 's32[2]{0}', space=sflag, size = 0x8, scoped, tag = 'scoped memory for decoder_forward.5']
    %8 = vsyncpa [#allocation4], 0
    %s9 = scalar_lea.sflag [#allocation4], 1
    %10 = vsyncpa %s9, 0
    loop: start=0, step=1, limit=6
    $region2: #{decoder_forward.5} parent=1 // loop_pre_header
      _
    $region3: #{decoder_forward.5} parent=1 // loop_header
      %s12 = sphi 0, %s16
      %p13 = scmp.ge.s32.totalorder %s12, 6
      %s19 = sphi 0, %s31
      %s20 = sphi 0, %s27
      %s21 = sphi 0, %s19
      %s22 = sphi 0, %s20
      %s23 = sphi 0, %s21
      %s24 = sphi 0, %s22
      %s34 = sphi 0, %s36
      %s37 = sphi 0, %s34
      %s38 = sphi 0, %s37
      %s54 = sphi 0, %s38
      %s60 = sphi 0, %s62
      %s63 = sphi 0, %s60
      %s64 = sphi 0, %s63
      %s80 = sphi 0, %s64
      %s86 = sphi 0, %s88
      %s89 = sphi 0, %s86
      %s90 = sphi 0, %s89
      %s106 = sphi 0, %s90
      %s114 = sphi 0, %s116
      %s117 = sphi 0, %s114
      %s118 = sphi 0, %s117
      %s134 = sphi 0, %s118
    $region4: #{decoder_forward.5} parent=1 // loop_header_branch
      %15 = sbr.rel (%p13) target = $region8
    $region5: #{decoder_forward.5} parent=1 // loop_body
      %s17 = ssub.s32 %s12, 1
      %s18 = ssub.s32 %s12, 2
      %s25 = sadd.s32 1, %s20
      %p26 = scmp.ge.s32.totalorder %s25, 2
      %s27 = scalar_select %p26, 0, %s25
      %s28 = sadd.s32 1, %s19
      %s29 = scalar_select %p26, %s28, %s19
      %p30 = scmp.ge.s32.totalorder %s29, 2
      %s31 = scalar_select %p30, 0, %s29
      %s32 = ssub.s32 %s19, %s31
      %p33 = scmp.eq.s32.totalorder %s32, 0
      %s35 = sadd.s32 %s34, 1
      %s36 = scalar_select %p33, %s34, %s35
      %p39 = pneg %p33
      %p40 = scmp.eq.s32.totalorder %s12, 3
      %p41 = por %p39, %p40
      %p42 = scmp.ne.s32.totalorder %s34, %s37
      %p43 = scmp.eq.s32.totalorder %s12, 0
      %p44 = por %p42, %p43
      %p45 = scmp.ne.s32.totalorder %s34, %s37
      %p46 = scmp.eq.s32.totalorder %s17, 3
      %p47 = por %p45, %p46
      %p48 = scmp.ne.s32.totalorder %s37, %s38
      %p49 = scmp.eq.s32.totalorder %s17, 0
      %p50 = por %p48, %p49
      %p51 = scmp.ne.s32.totalorder %s37, %s38
      %p52 = scmp.eq.s32.totalorder %s18, 3
      %p53 = por %p51, %p52
      %p55 = scmp.ne.s32.totalorder %s38, %s54
      %p56 = scmp.eq.s32.totalorder %s18, 0
      %p57 = por %p55, %p56
      %s58 = ssub.s32 %s20, %s27
      %p59 = scmp.eq.s32.totalorder %s58, 0
      %s61 = sadd.s32 %s60, 1
      %s62 = scalar_select %p59, %s60, %s61
      %p65 = pneg %p59
      %p66 = scmp.eq.s32.totalorder %s12, 3
      %p67 = por %p65, %p66
      %p68 = scmp.ne.s32.totalorder %s60, %s63
      %p69 = scmp.eq.s32.totalorder %s12, 0
      %p70 = por %p68, %p69
      %p71 = scmp.ne.s32.totalorder %s60, %s63
      %p72 = scmp.eq.s32.totalorder %s17, 3
      %p73 = por %p71, %p72
      %p74 = scmp.ne.s32.totalorder %s63, %s64
      %p75 = scmp.eq.s32.totalorder %s17, 0
      %p76 = por %p74, %p75
      %p77 = scmp.ne.s32.totalorder %s63, %s64
      %p78 = scmp.eq.s32.totalorder %s18, 3
      %p79 = por %p77, %p78
      %p81 = scmp.ne.s32.totalorder %s64, %s80
      %p82 = scmp.eq.s32.totalorder %s18, 0
      %p83 = por %p81, %p82
      %s84 = ssub.s32 %s20, %s27
      %p85 = scmp.eq.s32.totalorder %s84, 0
      %s87 = sadd.s32 %s86, 1
      %s88 = scalar_select %p85, %s86, %s87
      %p91 = pneg %p85
      %p92 = scmp.eq.s32.totalorder %s12, 3
      %p93 = por %p91, %p92
      %p94 = scmp.ne.s32.totalorder %s86, %s89
      %p95 = scmp.eq.s32.totalorder %s12, 0
      %p96 = por %p94, %p95
      %p97 = scmp.ne.s32.totalorder %s86, %s89
      %p98 = scmp.eq.s32.totalorder %s17, 3
      %p99 = por %p97, %p98
      %p100 = scmp.ne.s32.totalorder %s89, %s90
      %p101 = scmp.eq.s32.totalorder %s17, 0
      %p102 = por %p100, %p101
      %p103 = scmp.ne.s32.totalorder %s89, %s90
      %p104 = scmp.eq.s32.totalorder %s18, 3
      %p105 = por %p103, %p104
      %p107 = scmp.ne.s32.totalorder %s90, %s106
      %p108 = scmp.eq.s32.totalorder %s18, 0
      %p109 = por %p107, %p108
      %s110 = ssub.s32 %s19, %s31
      %s111 = ssub.s32 %s20, %s27
      %s112 = sor.u32 %s110, %s111
      %p113 = scmp.eq.s32.totalorder %s112, 0
      %s115 = sadd.s32 %s114, 1
      %s116 = scalar_select %p113, %s114, %s115
      %p119 = pneg %p113
      %p120 = scmp.eq.s32.totalorder %s12, 3
      %p121 = por %p119, %p120
      %p122 = scmp.ne.s32.totalorder %s114, %s117
      %p123 = scmp.eq.s32.totalorder %s12, 0
      %p124 = por %p122, %p123
      %p125 = scmp.ne.s32.totalorder %s114, %s117
      %p126 = scmp.eq.s32.totalorder %s17, 3
      %p127 = por %p125, %p126
      %p128 = scmp.ne.s32.totalorder %s117, %s118
      %p129 = scmp.eq.s32.totalorder %s17, 0
      %p130 = por %p128, %p129
      %p131 = scmp.ne.s32.totalorder %s117, %s118
      %p132 = scmp.eq.s32.totalorder %s18, 3
      %p133 = por %p131, %p132
      %p135 = scmp.ne.s32.totalorder %s118, %s134
      %p136 = scmp.eq.s32.totalorder %s18, 0
      %p137 = por %p135, %p136
      %p138 = scmp.le.s32.totalorder 1, %s12
      %p139 = scmp.lt.s32.totalorder %s12, 5
      %p140 = pnand %p138, %p139
      %p141 = pneg %p140
      // Predicated region
      $region9: #{decoder_forward.5} parent=5 // pred_check
        _
      $region10: #{decoder_forward.5} parent=5 // pred_check_branch
        %143 = sbr.rel (%p140) target = $region12
      $region11: #{decoder_forward.5} parent=5 // pred_region
        %s144 = ssub.s32 %s12, 1
      $region12: #{decoder_forward.5} parent=5 // pred_fallthru
        _
      %p145 = scmp.lt.s32.totalorder %s12, 4
      // Predicated region
      $region13: #{decoder_forward.5} parent=5 // pred_check
        %p146 = pneg %p145
      $region14: #{decoder_forward.5} parent=5 // pred_check_branch
        %148 = sbr.rel (%p146) target = $region16
      $region15: #{decoder_forward.5} parent=5 // pred_region
        // Predicated region
        $region17: #{decoder_forward.5} parent=15 // pred_check
          %p149 = pneg %p44
        $region18: #{decoder_forward.5} parent=15 // pred_check_branch
          %151 = sbr.rel (%p149) target = $region20
        $region19: #{decoder_forward.5} parent=15 // pred_region
          %p152 = scmp.lt.s32.totalorder %s19, 1
          %s153 = scalar_select %p152, %s19, 1
          %s154 = smul.addr %s153, 2
          %s155 = smul.addr %s154, 8
          %s156 = scalar_lea.vmem %s0, %s155
        $region20: #{decoder_forward.5} parent=15 // pred_fallthru
          _
        // Predicated region
        $region21: #{decoder_forward.5} parent=15 // pred_check
          %p157 = pneg %p70
        $region22: #{decoder_forward.5} parent=15 // pred_check_branch
          %159 = sbr.rel (%p157) target = $region24
        $region23: #{decoder_forward.5} parent=15 // pred_region
          %s160 = sand.u32 %s60, 1
          %s161 = sand.u32 %s60, 1
          %s162 = smul.addr %s161, 32
          %s163 = scalar_lea.vmem [#allocation2], %s162
          %s164 = smul.addr %s20, 8
          %s165 = scalar_lea.vmem %s1, %s164
          // Predicated region
          $region25: #{decoder_forward.5} parent=23 // pred_check
            _
          $region26: #{decoder_forward.5} parent=23 // pred_check_branch
            %167 = sbr.rel (0) target = $region28
          $region27: #{decoder_forward.5} parent=23 // pred_region
            // Predicated region
            $region29: #{decoder_forward.5} parent=27 // pred_check
              _
            $region30: #{decoder_forward.5} parent=27 // pred_check_branch
              %169 = sbr.rel (0) target = $region32
            $region31: #{decoder_forward.5} parent=27 // pred_region
              // Predicated region
              $region44: #{decoder_forward.5} parent=31 // pred_check
                _
              $region45: #{decoder_forward.5} parent=31 // pred_check_branch
                %191 = sbr.rel (0) target = $region47
              $region46: #{decoder_forward.5} parent=31 // pred_region
                loop: start=0, step=1, limit=1
                $region48: #{decoder_forward.5} parent=46 // loop_pre_header
                  _
                $region49: #{decoder_forward.5} parent=46 // loop_header
                  %s193 = sphi 0, %s197
                  %p194 = scmp.ge.s32.totalorder %s193, 1
                  %s198 = sphi %s165, %s165
                  %s199 = sphi %s163, %s163
                $region50: #{decoder_forward.5} parent=46 // loop_header_branch
                  %196 = sbr.rel (%p194) target = $region54
                $region51: #{decoder_forward.5} parent=46 // loop_body
                  %v200 = vld [vmem:[%s198] sm:$0xff]
                  %201 = vst [vmem:[%s199] sm:$0xff] %v200
                  %v202 = vld [vmem:[%s198 + $0x10] sm:$0xff]
                  %203 = vst [vmem:[%s199 + $0x8] sm:$0xff] %v202
                  %v204 = vld [vmem:[%s198 + $0x20] sm:$0xff]
                  %205 = vst [vmem:[%s199 + $0x10] sm:$0xff] %v204
                  %v206 = vld [vmem:[%s198 + $0x30] sm:$0xff]
                  %207 = vst [vmem:[%s199 + $0x18] sm:$0xff] %v206
                $region52: #{decoder_forward.5} parent=46 // loop_footer
                  %s197 = sadd.s32 1, %s193
                $region53: #{decoder_forward.5} parent=46 // loop_footer_branch
                  %192 = sbr.rel target = $region49
                $region54: #{decoder_forward.5} parent=46 // loop_exit
                  _
              $region47: #{decoder_forward.5} parent=31 // pred_fallthru
                _
              // Predicated region
              $region55: #{decoder_forward.5} parent=31 // pred_check
                _
              $region56: #{decoder_forward.5} parent=31 // pred_check_branch
                %209 = sbr.rel target = $region58
              $region57: #{decoder_forward.5} parent=31 // pred_region
                _
              $region58: #{decoder_forward.5} parent=31 // pred_fallthru
                _
            $region32: #{decoder_forward.5} parent=27 // pred_fallthru
              _
            // Predicated region
            $region33: #{decoder_forward.5} parent=27 // pred_check
              _
            $region34: #{decoder_forward.5} parent=27 // pred_check_branch
              %171 = sbr.rel target = $region36
            $region35: #{decoder_forward.5} parent=27 // pred_region
              %s173 = ssub.s32 256, 1
              loop: start=0, step=1, limit=1
              $region37: #{decoder_forward.5} parent=35 // loop_pre_header
                _
              $region38: #{decoder_forward.5} parent=35 // loop_header
                %s175 = sphi 0, %s179
                %p176 = scmp.ge.s32.totalorder %s175, 1
                %s180 = sphi %s165, %s165
                %s181 = sphi %s163, %s163
              $region39: #{decoder_forward.5} parent=35 // loop_header_branch
                %178 = sbr.rel (%p176) target = $region43
              $region40: #{decoder_forward.5} parent=35 // loop_body
                %v182 = vld [vmem:[%s180] sm:%s173]
                %183 = vst [vmem:[%s181] sm:%s173] %v182
                %v184 = vld [vmem:[%s180 + $0x10] sm:%s173]
                %185 = vst [vmem:[%s181 + $0x8] sm:%s173] %v184
                %v186 = vld [vmem:[%s180 + $0x20] sm:%s173]
                %187 = vst [vmem:[%s181 + $0x10] sm:%s173] %v186
                %v188 = vld [vmem:[%s180 + $0x30] sm:%s173]
                %189 = vst [vmem:[%s181 + $0x18] sm:%s173] %v188
              $region41: #{decoder_forward.5} parent=35 // loop_footer
                %s179 = sadd.s32 1, %s175
              $region42: #{decoder_forward.5} parent=35 // loop_footer_branch
                %174 = sbr.rel target = $region38
              $region43: #{decoder_forward.5} parent=35 // loop_exit
                _
            $region36: #{decoder_forward.5} parent=27 // pred_fallthru
              _
          $region28: #{decoder_forward.5} parent=23 // pred_fallthru
            _
          %210 = vnop
        $region24: #{decoder_forward.5} parent=15 // pred_fallthru
          _
        // Predicated region
        $region59: #{decoder_forward.5} parent=15 // pred_check
          %p211 = pneg %p96
        $region60: #{decoder_forward.5} parent=15 // pred_check_branch
          %213 = sbr.rel (%p211) target = $region62
        $region61: #{decoder_forward.5} parent=15 // pred_region
          %p214 = scmp.lt.s32.totalorder %s20, 1
          %s215 = scalar_select %p214, %s20, 1
          %s216 = scalar_lea.vmem %s2, %s215
        $region62: #{decoder_forward.5} parent=15 // pred_fallthru
          _
      $region16: #{decoder_forward.5} parent=5 // pred_fallthru
        _
      %p217 = scmp.le.s32.totalorder 1, %s12
      %p218 = scmp.lt.s32.totalorder %s12, 5
      %p219 = pnand %p217, %p218
      %p220 = pneg %p219
      // Predicated region
      $region63: #{decoder_forward.5} parent=5 // pred_check
        _
      $region64: #{decoder_forward.5} parent=5 // pred_check_branch
        %222 = sbr.rel (%p219) target = $region66
      $region65: #{decoder_forward.5} parent=5 // pred_region
        %s223 = ssub.s32 %s12, 1
        %s224 = sand.u32 %s63, 1
        %s225 = sand.u32 %s63, 1
        %s226 = smul.addr %s225, 32
        %s227 = scalar_lea.vmem [#allocation2], %s226
        // Predicated region
        $region67: #{decoder_forward.5} parent=65 // pred_check
          %p228 = pneg %p76
        $region68: #{decoder_forward.5} parent=65 // pred_check_branch
          %230 = sbr.rel (%p228) target = $region70
        $region69: #{decoder_forward.5} parent=65 // pred_region
          _
        $region70: #{decoder_forward.5} parent=65 // pred_fallthru
          _
        %p231 = scmp.lt.s32.totalorder %s21, 1
        %s232 = scalar_select %p231, %s21, 1
        %s233 = smul.addr %s232, 2
        %s234 = smul.addr %s233, 8
        %s235 = scalar_lea.vmem %s0, %s234
        %p236 = pneg %p50
        %p237 = pneg %p47
        %s238 = sand.u32 %s63, 1
        %s239 = sand.u32 %s63, 1
        %s240 = smul.addr %s239, 32
        %s241 = scalar_lea.vmem [#allocation2], %s240
        %p242 = pneg %p76
        %p243 = pneg %p73
        %p244 = scmp.lt.s32.totalorder %s22, 1
        %s245 = scalar_select %p244, %s22, 1
        %s246 = scalar_lea.vmem %s2, %s245
        %p247 = pneg %p102
        %p248 = pneg %p99
        %p249 = pneg %p130
        %p250 = pneg %p127
        %s251 = sand.u32 %s117, 1
        %s252 = scalar_lea.sflag [#allocation4], %s251
        %s253 = sand.u32 %s117, 1
        %s254 = smul.addr %s253, 16
        %s255 = scalar_lea.vmem [#allocation3], %s254
        %p256 = scmp.lt.s32.totalorder %s21, 1
        %s257 = scalar_select %p256, %s21, 1
        %s258 = smul.addr %s257, 2
        %s259 = smul.addr %s258, 8
        %s260 = scalar_lea.vmem %s0, %s259
        %p261 = scmp.lt.s32.totalorder %s22, 1
        %s262 = scalar_select %p261, %s22, 1
        %s263 = scalar_lea.vmem %s2, %s262
        %v264 = vld [vmem:[%s260] sm:$0xff]
        %v265 = vld [vmem:[%s260 + $0x8] sm:$0xff]
        %v266 = vld [vmem:[%s227] sm:$0xff]
        %v267 = vld [vmem:[%s227 + $0x8] sm:$0xff]
        %v268 = vld [vmem:[%s227 + $0x10] sm:$0xff]
        %v269 = vld [vmem:[%s227 + $0x18] sm:$0xff]
        %v270 = vld [vmem:[%s263] sm:$0x1]
        %v272 = vlaneseq
        %v273 = vshrl.u32 %v272, 7
        %v274 = vsub.s32 0, %v273
        %v275 = vrot.slane %v270, %v274
        %vm277 = vcmask 261120
        %v279 = vsel %vm277, %v264, 0
        %v282 = vsel %vm277, %v265, 0
        %284 = vmatprep.subr.mxu0 0.0
        %285 = vmatpush1.msra.mxu0 0.0
        %286 = vmatprep.subr.mxu0 0.0
        %287 = vmatpush1.msra.mxu0 0.0
        %288 = vmatprep.subr.mxu0 0.0
        %289 = vmatpush1.msra.mxu0 0.0
        %290 = vmatprep.subr.mxu0 0.0
        %291 = vmatpush1.msra.mxu0 0.0
        %292 = vmatprep.subr.mxu0 0.0
        %293 = vmatpush1.msra.mxu0 0.0
        %294 = vmatprep.subr.mxu0 0.0
        %295 = vmatpush1.msra.mxu0 0.0
        %296 = vmatprep.subr.mxu0 0.0
        %297 = vmatpush1.msra.mxu0 0.0
        %298 = vmatprep.subr.mxu0 0.0
        %299 = vmatpush1.msra.mxu0 0.0
        %300 = vmatprep.subr.mxu0 0.0
        %301 = vmatpush1.msra.mxu0 0.0
        %302 = vmatprep.subr.mxu0 0.0
        %303 = vmatpush1.msra.mxu0 0.0
        %304 = vmatprep.subr.mxu0 0.0
        %305 = vmatpush1.msra.mxu0 0.0
        %306 = vmatprep.subr.mxu0 0.0
        %307 = vmatpush1.msra.mxu0 0.0
        %308 = vmatprep.subr.mxu0 0.0
        %309 = vmatpush1.msra.mxu0 %v269
        %310 = vmatprep.subr.mxu0 0.0
        %311 = vmatpush1.msra.mxu0 %v268
        %312 = vmatprep.subr.mxu0 0.0
        %313 = vmatpush1.msra.mxu0 %v267
        %314 = vmatprep.subr.mxu0 0.0
        %315 = vmatpush1.msra.mxu0 %v266
        %316 = vmatprep.subr.mxu0 0.0
        %317 = vmatpush2.msra.mxu0 0.0
        %318 = vmatprep.subr.mxu0 0.0
        %319 = vmatpush2.msra.mxu0 0.0
        %320 = vmatprep.subr.mxu0 0.0
        %321 = vmatpush2.msra.mxu0 0.0
        %322 = vmatprep.subr.mxu0 0.0
        %323 = vmatpush2.msra.mxu0 0.0
        %324 = vmatprep.subr.mxu0 0.0
        %325 = vmatpush2.msra.mxu0 0.0
        %326 = vmatprep.subr.mxu0 0.0
        %327 = vmatpush2.msra.mxu0 0.0
        %328 = vmatprep.subr.mxu0 0.0
        %329 = vmatpush2.msra.mxu0 0.0
        %330 = vmatprep.subr.mxu0 0.0
        %331 = vmatpush2.msra.mxu0 0.0
        %332 = vmatprep.subr.mxu0 0.0
        %333 = vmatpush2.msra.mxu0 0.0
        %334 = vmatprep.subr.mxu0 0.0
        %335 = vmatpush2.msra.mxu0 0.0
        %336 = vmatprep.subr.mxu0 0.0
        %337 = vmatpush2.msra.mxu0 0.0
        %338 = vmatprep.subr.mxu0 0.0
        %339 = vmatpush2.msra.mxu0 0.0
        %340 = vmatprep.subr.mxu0 0.0
        %341 = vmatpush2.msra.mxu0 0.0
        %342 = vmatprep.subr.mxu0 0.0
        %343 = vmatpush2.msra.mxu0 0.0
        %344 = vmatprep.subr.mxu0 0.0
        %345 = vmatpush2.msra.mxu0 0.0
        %346 = vmatprep.subr.mxu0 0.0
        %347 = vmatpush2.msra.mxu0 0.0
        %348 = vmatprep.mubr.f32.mxu0 0.0
        %349 = vmatmul.mubr.f32.gmra.mxu0 %v279
        %v350 = vpop.f32.mrf.mxu0
        %v351 = vadd.f32 %v275, %v350
        %v352 = vpop.f32.mrf.mxu0
        %353 = vmatprep.mubr.f32.mxu0 0.0
        %354 = vmatmul.mubr.f32.gmra.mxu0 %v282
        %v355 = vpop.f32.mrf.mxu0
        %v356 = vadd.f32 %v275, %v355
        %v357 = vpop.f32.mrf.mxu0
        %358 = vdwg.mxu0
        %359 = vst [vmem:[%s255] sm:$0xff] %v351
        %360 = vst [vmem:[%s255 + $0x8] sm:$0xff] %v356
        %s361 = sand.u32 %s117, 1
        %s362 = scalar_lea.sflag [#allocation4], %s361
        %s363 = sand.u32 %s117, 1
        %s364 = smul.addr %s363, 16
        %s365 = scalar_lea.vmem [#allocation3], %s364
        // Predicated region
        $region71: #{decoder_forward.5} parent=65 // pred_check
          %p366 = pneg %p127
        $region72: #{decoder_forward.5} parent=65 // pred_check_branch
          %368 = sbr.rel (%p366) target = $region74
        $region73: #{decoder_forward.5} parent=65 // pred_region
          %s370 = ssub.s32 256, 256
          %371 = vsyncadd %s362, %s370
          %s372 = smul.addr %s21, 4
          %s373 = sadd.s32 %s22, %s372
          %s374 = smul.addr %s373, 128
          %s375 = scalar_lea.hbm %s3, %s374
          %s376 = sshll.u32 %s365, 4
          %s377 = int_to_ptr.vmem [resolvable:$true] %s376
          %382 = dma.vmem_to_hbm [thread:$0]  %s377, 256, %s375, %s362, 128, 256, 8
        $region74: #{decoder_forward.5} parent=65 // pred_fallthru
          _
      $region66: #{decoder_forward.5} parent=5 // pred_fallthru
        _
      %p383 = scmp.le.s32.totalorder 2, %s12
      // Predicated region
      $region75: #{decoder_forward.5} parent=5 // pred_check
        %p384 = pneg %p383
      $region76: #{decoder_forward.5} parent=5 // pred_check_branch
        %386 = sbr.rel (%p384) target = $region78
      $region77: #{decoder_forward.5} parent=5 // pred_region
        %s387 = ssub.s32 %s12, 2
        // Predicated region
        $region79: #{decoder_forward.5} parent=77 // pred_check
          %p388 = pneg %p133
        $region80: #{decoder_forward.5} parent=77 // pred_check_branch
          %390 = sbr.rel (%p388) target = $region82
        $region81: #{decoder_forward.5} parent=77 // pred_region
          %s391 = sand.u32 %s118, 1
          %s392 = scalar_lea.sflag [#allocation4], %s391
          %s393 = sand.u32 %s118, 1
          %s394 = smul.addr %s393, 16
          %s395 = scalar_lea.vmem [#allocation3], %s394
          %396 = dma.done %s392, 256
        $region82: #{decoder_forward.5} parent=77 // pred_fallthru
          _
      $region78: #{decoder_forward.5} parent=5 // pred_fallthru
        _
    $region6: #{decoder_forward.5} parent=1 // loop_footer
      %s16 = sadd.s32 1, %s12
    $region7: #{decoder_forward.5} parent=1 // loop_footer_branch
      %11 = sbr.rel target = $region3
    $region8: #{decoder_forward.5} parent=1 // loop_exit
      _
    %397 = vsyncpa [#allocation4], 1
    %s398 = scalar_lea.sflag [#allocation4], 1
    %399 = vsyncpa %s398, 1

// kernel: decoder_forward.4
$region0: #{decoder_forward.4}
  #allocation0 [shape = 'u32[]', space=smem, size = 0x4, offset = 0x4, fixed_abs, tag = 'smem constant byte address 0x4 - core index']
  #allocation1 [shape = 'u32[144,128]{1,0:T(1,128)}', space=vmem, size = 0x12000, scoped, tag = 'internal scratch']
  %s0 = inlined_call_operand.smem [shape: u32[31], index: -1, kind: input, shape index: {}]
  %s1 = sld [smem:[%s0]]
  %s2 = scalar_lea.smem %s0, 1
  %s3 = sld [smem:[%s2]]
  %s4 = scalar_lea.smem %s0, 2
  %s5 = sld [smem:[%s4]]
  %s6 = scalar_lea.smem %s0, 3
  %s7 = sld [smem:[%s6]]
  %s8 = scalar_lea.smem %s0, 4
  %s9 = sld [smem:[%s8]]
  %s10 = scalar_lea.smem %s0, 5
  %s11 = sld [smem:[%s10]]
  %s12 = scalar_lea.smem %s0, 6
  %s13 = sld [smem:[%s12]]
  %s14 = scalar_lea.smem %s0, 7
  %s15 = sld [smem:[%s14]]
  %s16 = scalar_lea.smem %s0, 8
  %s17 = sld [smem:[%s16]]
  %s18 = scalar_lea.smem %s0, 9
  %s19 = sld [smem:[%s18]]
  %s20 = scalar_lea.smem %s0, 10
  %s21 = sld [smem:[%s20]]
  %s22 = scalar_lea.smem %s0, 11
  %s23 = sld [smem:[%s22]]
  %s24 = scalar_lea.smem %s0, 12
  %s25 = sld [smem:[%s24]]
  %s26 = scalar_lea.smem %s0, 13
  %s27 = sld [smem:[%s26]]
  %s28 = scalar_lea.smem %s0, 14
  %s29 = sld [smem:[%s28]]
  %s30 = scalar_lea.smem %s0, 15
  %s31 = sld [smem:[%s30]]
  %s32 = scalar_lea.smem %s0, 16
  %s33 = sld [smem:[%s32]]
  %s34 = scalar_lea.smem %s0, 17
  %s35 = sld [smem:[%s34]]
  %s36 = scalar_lea.smem %s0, 18
  %s37 = sld [smem:[%s36]]
  %s38 = scalar_lea.smem %s0, 19
  %s39 = sld [smem:[%s38]]
  %s40 = scalar_lea.smem %s0, 20
  %s41 = sld [smem:[%s40]]
  %s42 = scalar_lea.smem %s0, 21
  %s43 = sld [smem:[%s42]]
  %s44 = scalar_lea.smem %s0, 22
  %s45 = sld [smem:[%s44]]
  %s46 = scalar_lea.smem %s0, 23
  %s47 = sld [smem:[%s46]]
  %s48 = scalar_lea.smem %s0, 24
  %s49 = sld [smem:[%s48]]
  %s50 = scalar_lea.smem %s0, 25
  %s51 = sld [smem:[%s50]]
  %s52 = scalar_lea.smem %s0, 26
  %s53 = sld [smem:[%s52]]
  %s54 = scalar_lea.smem %s0, 27
  %s55 = sld [smem:[%s54]]
  %s56 = scalar_lea.smem %s0, 28
  %s57 = sld [smem:[%s56]]
  %s58 = scalar_lea.smem %s0, 29
  %s59 = sld [smem:[%s58]]
  %s60 = scalar_lea.smem %s0, 30
  %s61 = sld [smem:[%s60]]
  %s62 = sld [smem:[#allocation0]]
  $region157: #{decoder_forward.4} parent=0
    _
  %s64 = ssub.s32 1, %s62
  %s65 = scalar_select 0, %s64, %s62
  $region1: #{decoder_forward.4} parent=0
    #allocation2 [shape = 'u8[512]{0}', space=vmem, size = 0x400, scoped, tag = 'input window, operand 29, single buffered']
    #allocation3 [shape = 's32[2]{0}', space=sflag, size = 0x8, scoped, tag = 'scoped memory for decoder_forward.4']
    %66 = vsyncpa [#allocation3], 0
    loop: start=0, step=1, limit=6
    $region2: #{decoder_forward.4} parent=1 // loop_pre_header
      _
    $region3: #{decoder_forward.4} parent=1 // loop_header
      %s68 = sphi 0, %s72
      %p69 = scmp.ge.s32.totalorder %s68, 6
      %s75 = sphi 0, %s87
      %s76 = sphi 0, %s83
      %s77 = sphi 0, %s75
      %s78 = sphi 0, %s76
      %s79 = sphi 0, %s77
      %s80 = sphi 0, %s78
      %s92 = sphi 0, %s94
      %s95 = sphi 0, %s92
      %s96 = sphi 0, %s95
      %s112 = sphi 0, %s96
      %s118 = sphi 0, %s120
      %s121 = sphi 0, %s118
      %s122 = sphi 0, %s121
      %s138 = sphi 0, %s122
      %s144 = sphi 0, %s146
      %s147 = sphi 0, %s144
      %s148 = sphi 0, %s147
      %s164 = sphi 0, %s148
      %s170 = sphi 0, %s172
      %s173 = sphi 0, %s170
      %s174 = sphi 0, %s173
      %s190 = sphi 0, %s174
      %s194 = sphi 0, %s194
      %s196 = sphi 0, %s194
      %s197 = sphi 0, %s196
      %s211 = sphi 0, %s197
      %s215 = sphi 0, %s215
      %s217 = sphi 0, %s215
      %s218 = sphi 0, %s217
      %s232 = sphi 0, %s218
      %s236 = sphi 0, %s236
      %s238 = sphi 0, %s236
      %s239 = sphi 0, %s238
      %s253 = sphi 0, %s239
      %s257 = sphi 0, %s257
      %s259 = sphi 0, %s257
      %s260 = sphi 0, %s259
      %s274 = sphi 0, %s260
      %s278 = sphi 0, %s278
      %s280 = sphi 0, %s278
      %s281 = sphi 0, %s280
      %s295 = sphi 0, %s281
      %s299 = sphi 0, %s299
      %s301 = sphi 0, %s299
      %s302 = sphi 0, %s301
      %s316 = sphi 0, %s302
      %s320 = sphi 0, %s320
      %s322 = sphi 0, %s320
      %s323 = sphi 0, %s322
      %s337 = sphi 0, %s323
      %s341 = sphi 0, %s341
      %s343 = sphi 0, %s341
      %s344 = sphi 0, %s343
      %s358 = sphi 0, %s344
      %s362 = sphi 0, %s362
      %s364 = sphi 0, %s362
      %s365 = sphi 0, %s364
      %s379 = sphi 0, %s365
      %s383 = sphi 0, %s383
      %s385 = sphi 0, %s383
      %s386 = sphi 0, %s385
      %s400 = sphi 0, %s386
      %s404 = sphi 0, %s404
      %s406 = sphi 0, %s404
      %s407 = sphi 0, %s406
      %s421 = sphi 0, %s407
      %s425 = sphi 0, %s425
      %s427 = sphi 0, %s425
      %s428 = sphi 0, %s427
      %s442 = sphi 0, %s428
      %s446 = sphi 0, %s446
      %s448 = sphi 0, %s446
      %s449 = sphi 0, %s448
      %s463 = sphi 0, %s449
      %s467 = sphi 0, %s467
      %s469 = sphi 0, %s467
      %s470 = sphi 0, %s469
      %s484 = sphi 0, %s470
      %s488 = sphi 0, %s488
      %s490 = sphi 0, %s488
      %s491 = sphi 0, %s490
      %s505 = sphi 0, %s491
      %s509 = sphi 0, %s509
      %s511 = sphi 0, %s509
      %s512 = sphi 0, %s511
      %s526 = sphi 0, %s512
      %s530 = sphi 0, %s530
      %s532 = sphi 0, %s530
      %s533 = sphi 0, %s532
      %s547 = sphi 0, %s533
      %s551 = sphi 0, %s551
      %s553 = sphi 0, %s551
      %s554 = sphi 0, %s553
      %s568 = sphi 0, %s554
      %s572 = sphi 0, %s572
      %s574 = sphi 0, %s572
      %s575 = sphi 0, %s574
      %s589 = sphi 0, %s575
      %s593 = sphi 0, %s593
      %s595 = sphi 0, %s593
      %s596 = sphi 0, %s595
      %s610 = sphi 0, %s596
      %s614 = sphi 0, %s614
      %s616 = sphi 0, %s614
      %s617 = sphi 0, %s616
      %s631 = sphi 0, %s617
      %s635 = sphi 0, %s635
      %s637 = sphi 0, %s635
      %s638 = sphi 0, %s637
      %s652 = sphi 0, %s638
      %s656 = sphi 0, %s656
      %s658 = sphi 0, %s656
      %s659 = sphi 0, %s658
      %s673 = sphi 0, %s659
      %s677 = sphi 0, %s677
      %s679 = sphi 0, %s677
      %s680 = sphi 0, %s679
      %s694 = sphi 0, %s680
      %s698 = sphi 0, %s698
      %s700 = sphi 0, %s698
      %s701 = sphi 0, %s700
      %s715 = sphi 0, %s701
      %s719 = sphi 0, %s719
      %s721 = sphi 0, %s719
      %s722 = sphi 0, %s721
      %s736 = sphi 0, %s722
      %s744 = sphi 0, %s746
      %s747 = sphi 0, %s744
      %s748 = sphi 0, %s747
      %s764 = sphi 0, %s748
    $region4: #{decoder_forward.4} parent=1 // loop_header_branch
      %71 = sbr.rel (%p69) target = $region8
    $region5: #{decoder_forward.4} parent=1 // loop_body
      %s73 = ssub.s32 %s68, 1
      %s74 = ssub.s32 %s68, 2
      %s81 = sadd.s32 1, %s76
      %p82 = scmp.ge.s32.totalorder %s81, 2
      %s83 = scalar_select %p82, 0, %s81
      %s84 = sadd.s32 1, %s75
      %s85 = scalar_select %p82, %s84, %s75
      %p86 = scmp.ge.s32.totalorder %s85, 2
      %s87 = scalar_select %p86, 0, %s85
      %s88 = ssub.s32 %s75, %s87
      %s89 = ssub.s32 %s76, %s83
      %s90 = sor.u32 %s88, %s89
      %p91 = scmp.eq.s32.totalorder %s90, 0
      %s93 = sadd.s32 %s92, 1
      %s94 = scalar_select %p91, %s92, %s93
      %p97 = pneg %p91
      %p98 = scmp.eq.s32.totalorder %s68, 3
      %p99 = por %p97, %p98
      %p100 = scmp.ne.s32.totalorder %s92, %s95
      %p101 = scmp.eq.s32.totalorder %s68, 0
      %p102 = por %p100, %p101
      %p103 = scmp.ne.s32.totalorder %s92, %s95
      %p104 = scmp.eq.s32.totalorder %s73, 3
      %p105 = por %p103, %p104
      %p106 = scmp.ne.s32.totalorder %s95, %s96
      %p107 = scmp.eq.s32.totalorder %s73, 0
      %p108 = por %p106, %p107
      %p109 = scmp.ne.s32.totalorder %s95, %s96
      %p110 = scmp.eq.s32.totalorder %s74, 3
      %p111 = por %p109, %p110
      %p113 = scmp.ne.s32.totalorder %s96, %s112
      %p114 = scmp.eq.s32.totalorder %s74, 0
      %p115 = por %p113, %p114
      %s116 = ssub.s32 %s75, %s87
      %p117 = scmp.eq.s32.totalorder %s116, 0
      %s119 = sadd.s32 %s118, 1
      %s120 = scalar_select %p117, %s118, %s119
      %p123 = pneg %p117
      %p124 = scmp.eq.s32.totalorder %s68, 3
      %p125 = por %p123, %p124
      %p126 = scmp.ne.s32.totalorder %s118, %s121
      %p127 = scmp.eq.s32.totalorder %s68, 0
      %p128 = por %p126, %p127
      %p129 = scmp.ne.s32.totalorder %s118, %s121
      %p130 = scmp.eq.s32.totalorder %s73, 3
      %p131 = por %p129, %p130
      %p132 = scmp.ne.s32.totalorder %s121, %s122
      %p133 = scmp.eq.s32.totalorder %s73, 0
      %p134 = por %p132, %p133
      %p135 = scmp.ne.s32.totalorder %s121, %s122
      %p136 = scmp.eq.s32.totalorder %s74, 3
      %p137 = por %p135, %p136
      %p139 = scmp.ne.s32.totalorder %s122, %s138
      %p140 = scmp.eq.s32.totalorder %s74, 0
      %p141 = por %p139, %p140
      %s142 = ssub.s32 %s75, %s87
      %p143 = scmp.eq.s32.totalorder %s142, 0
      %s145 = sadd.s32 %s144, 1
      %s146 = scalar_select %p143, %s144, %s145
      %p149 = pneg %p143
      %p150 = scmp.eq.s32.totalorder %s68, 3
      %p151 = por %p149, %p150
      %p152 = scmp.ne.s32.totalorder %s144, %s147
      %p153 = scmp.eq.s32.totalorder %s68, 0
      %p154 = por %p152, %p153
      %p155 = scmp.ne.s32.totalorder %s144, %s147
      %p156 = scmp.eq.s32.totalorder %s73, 3
      %p157 = por %p155, %p156
      %p158 = scmp.ne.s32.totalorder %s147, %s148
      %p159 = scmp.eq.s32.totalorder %s73, 0
      %p160 = por %p158, %p159
      %p161 = scmp.ne.s32.totalorder %s147, %s148
      %p162 = scmp.eq.s32.totalorder %s74, 3
      %p163 = por %p161, %p162
      %p165 = scmp.ne.s32.totalorder %s148, %s164
      %p166 = scmp.eq.s32.totalorder %s74, 0
      %p167 = por %p165, %p166
      %s168 = ssub.s32 %s76, %s83
      %p169 = scmp.eq.s32.totalorder %s168, 0
      %s171 = sadd.s32 %s170, 1
      %s172 = scalar_select %p169, %s170, %s171
      %p175 = pneg %p169
      %p176 = scmp.eq.s32.totalorder %s68, 3
      %p177 = por %p175, %p176
      %p178 = scmp.ne.s32.totalorder %s170, %s173
      %p179 = scmp.eq.s32.totalorder %s68, 0
      %p180 = por %p178, %p179
      %p181 = scmp.ne.s32.totalorder %s170, %s173
      %p182 = scmp.eq.s32.totalorder %s73, 3
      %p183 = por %p181, %p182
      %p184 = scmp.ne.s32.totalorder %s173, %s174
      %p185 = scmp.eq.s32.totalorder %s73, 0
      %p186 = por %p184, %p185
      %p187 = scmp.ne.s32.totalorder %s173, %s174
      %p188 = scmp.eq.s32.totalorder %s74, 3
      %p189 = por %p187, %p188
      %p191 = scmp.ne.s32.totalorder %s174, %s190
      %p192 = scmp.eq.s32.totalorder %s74, 0
      %p193 = por %p191, %p192
      %s195 = sadd.s32 %s194, 1
      %p198 = scmp.eq.s32.totalorder %s68, 3
      %p199 = scmp.ne.s32.totalorder %s194, %s196
      %p200 = scmp.eq.s32.totalorder %s68, 0
      %p201 = por %p199, %p200
      %p202 = scmp.ne.s32.totalorder %s194, %s196
      %p203 = scmp.eq.s32.totalorder %s73, 3
      %p204 = por %p202, %p203
      %p205 = scmp.ne.s32.totalorder %s196, %s197
      %p206 = scmp.eq.s32.totalorder %s73, 0
      %p207 = por %p205, %p206
      %p208 = scmp.ne.s32.totalorder %s196, %s197
      %p209 = scmp.eq.s32.totalorder %s74, 3
      %p210 = por %p208, %p209
      %p212 = scmp.ne.s32.totalorder %s197, %s211
      %p213 = scmp.eq.s32.totalorder %s74, 0
      %p214 = por %p212, %p213
      %s216 = sadd.s32 %s215, 1
      %p219 = scmp.eq.s32.totalorder %s68, 3
      %p220 = scmp.ne.s32.totalorder %s215, %s217
      %p221 = scmp.eq.s32.totalorder %s68, 0
      %p222 = por %p220, %p221
      %p223 = scmp.ne.s32.totalorder %s215, %s217
      %p224 = scmp.eq.s32.totalorder %s73, 3
      %p225 = por %p223, %p224
      %p226 = scmp.ne.s32.totalorder %s217, %s218
      %p227 = scmp.eq.s32.totalorder %s73, 0
      %p228 = por %p226, %p227
      %p229 = scmp.ne.s32.totalorder %s217, %s218
      %p230 = scmp.eq.s32.totalorder %s74, 3
      %p231 = por %p229, %p230
      %p233 = scmp.ne.s32.totalorder %s218, %s232
      %p234 = scmp.eq.s32.totalorder %s74, 0
      %p235 = por %p233, %p234
      %s237 = sadd.s32 %s236, 1
      %p240 = scmp.eq.s32.totalorder %s68, 3
      %p241 = scmp.ne.s32.totalorder %s236, %s238
      %p242 = scmp.eq.s32.totalorder %s68, 0
      %p243 = por %p241, %p242
      %p244 = scmp.ne.s32.totalorder %s236, %s238
      %p245 = scmp.eq.s32.totalorder %s73, 3
      %p246 = por %p244, %p245
      %p247 = scmp.ne.s32.totalorder %s238, %s239
      %p248 = scmp.eq.s32.totalorder %s73, 0
      %p249 = por %p247, %p248
      %p250 = scmp.ne.s32.totalorder %s238, %s239
      %p251 = scmp.eq.s32.totalorder %s74, 3
      %p252 = por %p250, %p251
      %p254 = scmp.ne.s32.totalorder %s239, %s253
      %p255 = scmp.eq.s32.totalorder %s74, 0
      %p256 = por %p254, %p255
      %s258 = sadd.s32 %s257, 1
      %p261 = scmp.eq.s32.totalorder %s68, 3
      %p262 = scmp.ne.s32.totalorder %s257, %s259
      %p263 = scmp.eq.s32.totalorder %s68, 0
      %p264 = por %p262, %p263
      %p265 = scmp.ne.s32.totalorder %s257, %s259
      %p266 = scmp.eq.s32.totalorder %s73, 3
      %p267 = por %p265, %p266
      %p268 = scmp.ne.s32.totalorder %s259, %s260
      %p269 = scmp.eq.s32.totalorder %s73, 0
      %p270 = por %p268, %p269
      %p271 = scmp.ne.s32.totalorder %s259, %s260
      %p272 = scmp.eq.s32.totalorder %s74, 3
      %p273 = por %p271, %p272
      %p275 = scmp.ne.s32.totalorder %s260, %s274
      %p276 = scmp.eq.s32.totalorder %s74, 0
      %p277 = por %p275, %p276
      %s279 = sadd.s32 %s278, 1
      %p282 = scmp.eq.s32.totalorder %s68, 3
      %p283 = scmp.ne.s32.totalorder %s278, %s280
      %p284 = scmp.eq.s32.totalorder %s68, 0
      %p285 = por %p283, %p284
      %p286 = scmp.ne.s32.totalorder %s278, %s280
      %p287 = scmp.eq.s32.totalorder %s73, 3
      %p288 = por %p286, %p287
      %p289 = scmp.ne.s32.totalorder %s280, %s281
      %p290 = scmp.eq.s32.totalorder %s73, 0
      %p291 = por %p289, %p290
      %p292 = scmp.ne.s32.totalorder %s280, %s281
      %p293 = scmp.eq.s32.totalorder %s74, 3
      %p294 = por %p292, %p293
      %p296 = scmp.ne.s32.totalorder %s281, %s295
      %p297 = scmp.eq.s32.totalorder %s74, 0
      %p298 = por %p296, %p297
      %s300 = sadd.s32 %s299, 1
      %p303 = scmp.eq.s32.totalorder %s68, 3
      %p304 = scmp.ne.s32.totalorder %s299, %s301
      %p305 = scmp.eq.s32.totalorder %s68, 0
      %p306 = por %p304, %p305
      %p307 = scmp.ne.s32.totalorder %s299, %s301
      %p308 = scmp.eq.s32.totalorder %s73, 3
      %p309 = por %p307, %p308
      %p310 = scmp.ne.s32.totalorder %s301, %s302
      %p311 = scmp.eq.s32.totalorder %s73, 0
      %p312 = por %p310, %p311
      %p313 = scmp.ne.s32.totalorder %s301, %s302
      %p314 = scmp.eq.s32.totalorder %s74, 3
      %p315 = por %p313, %p314
      %p317 = scmp.ne.s32.totalorder %s302, %s316
      %p318 = scmp.eq.s32.totalorder %s74, 0
      %p319 = por %p317, %p318
      %s321 = sadd.s32 %s320, 1
      %p324 = scmp.eq.s32.totalorder %s68, 3
      %p325 = scmp.ne.s32.totalorder %s320, %s322
      %p326 = scmp.eq.s32.totalorder %s68, 0
      %p327 = por %p325, %p326
      %p328 = scmp.ne.s32.totalorder %s320, %s322
      %p329 = scmp.eq.s32.totalorder %s73, 3
      %p330 = por %p328, %p329
      %p331 = scmp.ne.s32.totalorder %s322, %s323
      %p332 = scmp.eq.s32.totalorder %s73, 0
      %p333 = por %p331, %p332
      %p334 = scmp.ne.s32.totalorder %s322, %s323
      %p335 = scmp.eq.s32.totalorder %s74, 3
      %p336 = por %p334, %p335
      %p338 = scmp.ne.s32.totalorder %s323, %s337
      %p339 = scmp.eq.s32.totalorder %s74, 0
      %p340 = por %p338, %p339
      %s342 = sadd.s32 %s341, 1
      %p345 = scmp.eq.s32.totalorder %s68, 3
      %p346 = scmp.ne.s32.totalorder %s341, %s343
      %p347 = scmp.eq.s32.totalorder %s68, 0
      %p348 = por %p346, %p347
      %p349 = scmp.ne.s32.totalorder %s341, %s343
      %p350 = scmp.eq.s32.totalorder %s73, 3
      %p351 = por %p349, %p350
      %p352 = scmp.ne.s32.totalorder %s343, %s344
      %p353 = scmp.eq.s32.totalorder %s73, 0
      %p354 = por %p352, %p353
      %p355 = scmp.ne.s32.totalorder %s343, %s344
      %p356 = scmp.eq.s32.totalorder %s74, 3
      %p357 = por %p355, %p356
      %p359 = scmp.ne.s32.totalorder %s344, %s358
      %p360 = scmp.eq.s32.totalorder %s74, 0
      %p361 = por %p359, %p360
      %s363 = sadd.s32 %s362, 1
      %p366 = scmp.eq.s32.totalorder %s68, 3
      %p367 = scmp.ne.s32.totalorder %s362, %s364
      %p368 = scmp.eq.s32.totalorder %s68, 0
      %p369 = por %p367, %p368
      %p370 = scmp.ne.s32.totalorder %s362, %s364
      %p371 = scmp.eq.s32.totalorder %s73, 3
      %p372 = por %p370, %p371
      %p373 = scmp.ne.s32.totalorder %s364, %s365
      %p374 = scmp.eq.s32.totalorder %s73, 0
      %p375 = por %p373, %p374
      %p376 = scmp.ne.s32.totalorder %s364, %s365
      %p377 = scmp.eq.s32.totalorder %s74, 3
      %p378 = por %p376, %p377
      %p380 = scmp.ne.s32.totalorder %s365, %s379
      %p381 = scmp.eq.s32.totalorder %s74, 0
      %p382 = por %p380, %p381
      %s384 = sadd.s32 %s383, 1
      %p387 = scmp.eq.s32.totalorder %s68, 3
      %p388 = scmp.ne.s32.totalorder %s383, %s385
      %p389 = scmp.eq.s32.totalorder %s68, 0
      %p390 = por %p388, %p389
      %p391 = scmp.ne.s32.totalorder %s383, %s385
      %p392 = scmp.eq.s32.totalorder %s73, 3
      %p393 = por %p391, %p392
      %p394 = scmp.ne.s32.totalorder %s385, %s386
      %p395 = scmp.eq.s32.totalorder %s73, 0
      %p396 = por %p394, %p395
      %p397 = scmp.ne.s32.totalorder %s385, %s386
      %p398 = scmp.eq.s32.totalorder %s74, 3
      %p399 = por %p397, %p398
      %p401 = scmp.ne.s32.totalorder %s386, %s400
      %p402 = scmp.eq.s32.totalorder %s74, 0
      %p403 = por %p401, %p402
      %s405 = sadd.s32 %s404, 1
      %p408 = scmp.eq.s32.totalorder %s68, 3
      %p409 = scmp.ne.s32.totalorder %s404, %s406
      %p410 = scmp.eq.s32.totalorder %s68, 0
      %p411 = por %p409, %p410
      %p412 = scmp.ne.s32.totalorder %s404, %s406
      %p413 = scmp.eq.s32.totalorder %s73, 3
      %p414 = por %p412, %p413
      %p415 = scmp.ne.s32.totalorder %s406, %s407
      %p416 = scmp.eq.s32.totalorder %s73, 0
      %p417 = por %p415, %p416
      %p418 = scmp.ne.s32.totalorder %s406, %s407
      %p419 = scmp.eq.s32.totalorder %s74, 3
      %p420 = por %p418, %p419
      %p422 = scmp.ne.s32.totalorder %s407, %s421
      %p423 = scmp.eq.s32.totalorder %s74, 0
      %p424 = por %p422, %p423
      %s426 = sadd.s32 %s425, 1
      %p429 = scmp.eq.s32.totalorder %s68, 3
      %p430 = scmp.ne.s32.totalorder %s425, %s427
      %p431 = scmp.eq.s32.totalorder %s68, 0
      %p432 = por %p430, %p431
      %p433 = scmp.ne.s32.totalorder %s425, %s427
      %p434 = scmp.eq.s32.totalorder %s73, 3
      %p435 = por %p433, %p434
      %p436 = scmp.ne.s32.totalorder %s427, %s428
      %p437 = scmp.eq.s32.totalorder %s73, 0
      %p438 = por %p436, %p437
      %p439 = scmp.ne.s32.totalorder %s427, %s428
      %p440 = scmp.eq.s32.totalorder %s74, 3
      %p441 = por %p439, %p440
      %p443 = scmp.ne.s32.totalorder %s428, %s442
      %p444 = scmp.eq.s32.totalorder %s74, 0
      %p445 = por %p443, %p444
      %s447 = sadd.s32 %s446, 1
      %p450 = scmp.eq.s32.totalorder %s68, 3
      %p451 = scmp.ne.s32.totalorder %s446, %s448
      %p452 = scmp.eq.s32.totalorder %s68, 0
      %p453 = por %p451, %p452
      %p454 = scmp.ne.s32.totalorder %s446, %s448
      %p455 = scmp.eq.s32.totalorder %s73, 3
      %p456 = por %p454, %p455
      %p457 = scmp.ne.s32.totalorder %s448, %s449
      %p458 = scmp.eq.s32.totalorder %s73, 0
      %p459 = por %p457, %p458
      %p460 = scmp.ne.s32.totalorder %s448, %s449
      %p461 = scmp.eq.s32.totalorder %s74, 3
      %p462 = por %p460, %p461
      %p464 = scmp.ne.s32.totalorder %s449, %s463
      %p465 = scmp.eq.s32.totalorder %s74, 0
      %p466 = por %p464, %p465
      %s468 = sadd.s32 %s467, 1
      %p471 = scmp.eq.s32.totalorder %s68, 3
      %p472 = scmp.ne.s32.totalorder %s467, %s469
      %p473 = scmp.eq.s32.totalorder %s68, 0
      %p474 = por %p472, %p473
      %p475 = scmp.ne.s32.totalorder %s467, %s469
      %p476 = scmp.eq.s32.totalorder %s73, 3
      %p477 = por %p475, %p476
      %p478 = scmp.ne.s32.totalorder %s469, %s470
      %p479 = scmp.eq.s32.totalorder %s73, 0
      %p480 = por %p478, %p479
      %p481 = scmp.ne.s32.totalorder %s469, %s470
      %p482 = scmp.eq.s32.totalorder %s74, 3
      %p483 = por %p481, %p482
      %p485 = scmp.ne.s32.totalorder %s470, %s484
      %p486 = scmp.eq.s32.totalorder %s74, 0
      %p487 = por %p485, %p486
      %s489 = sadd.s32 %s488, 1
      %p492 = scmp.eq.s32.totalorder %s68, 3
      %p493 = scmp.ne.s32.totalorder %s488, %s490
      %p494 = scmp.eq.s32.totalorder %s68, 0
      %p495 = por %p493, %p494
      %p496 = scmp.ne.s32.totalorder %s488, %s490
      %p497 = scmp.eq.s32.totalorder %s73, 3
      %p498 = por %p496, %p497
      %p499 = scmp.ne.s32.totalorder %s490, %s491
      %p500 = scmp.eq.s32.totalorder %s73, 0
      %p501 = por %p499, %p500
      %p502 = scmp.ne.s32.totalorder %s490, %s491
      %p503 = scmp.eq.s32.totalorder %s74, 3
      %p504 = por %p502, %p503
      %p506 = scmp.ne.s32.totalorder %s491, %s505
      %p507 = scmp.eq.s32.totalorder %s74, 0
      %p508 = por %p506, %p507
      %s510 = sadd.s32 %s509, 1
      %p513 = scmp.eq.s32.totalorder %s68, 3
      %p514 = scmp.ne.s32.totalorder %s509, %s511
      %p515 = scmp.eq.s32.totalorder %s68, 0
      %p516 = por %p514, %p515
      %p517 = scmp.ne.s32.totalorder %s509, %s511
      %p518 = scmp.eq.s32.totalorder %s73, 3
      %p519 = por %p517, %p518
      %p520 = scmp.ne.s32.totalorder %s511, %s512
      %p521 = scmp.eq.s32.totalorder %s73, 0
      %p522 = por %p520, %p521
      %p523 = scmp.ne.s32.totalorder %s511, %s512
      %p524 = scmp.eq.s32.totalorder %s74, 3
      %p525 = por %p523, %p524
      %p527 = scmp.ne.s32.totalorder %s512, %s526
      %p528 = scmp.eq.s32.totalorder %s74, 0
      %p529 = por %p527, %p528
      %s531 = sadd.s32 %s530, 1
      %p534 = scmp.eq.s32.totalorder %s68, 3
      %p535 = scmp.ne.s32.totalorder %s530, %s532
      %p536 = scmp.eq.s32.totalorder %s68, 0
      %p537 = por %p535, %p536
      %p538 = scmp.ne.s32.totalorder %s530, %s532
      %p539 = scmp.eq.s32.totalorder %s73, 3
      %p540 = por %p538, %p539
      %p541 = scmp.ne.s32.totalorder %s532, %s533
      %p542 = scmp.eq.s32.totalorder %s73, 0
      %p543 = por %p541, %p542
      %p544 = scmp.ne.s32.totalorder %s532, %s533
      %p545 = scmp.eq.s32.totalorder %s74, 3
      %p546 = por %p544, %p545
      %p548 = scmp.ne.s32.totalorder %s533, %s547
      %p549 = scmp.eq.s32.totalorder %s74, 0
      %p550 = por %p548, %p549
      %s552 = sadd.s32 %s551, 1
      %p555 = scmp.eq.s32.totalorder %s68, 3
      %p556 = scmp.ne.s32.totalorder %s551, %s553
      %p557 = scmp.eq.s32.totalorder %s68, 0
      %p558 = por %p556, %p557
      %p559 = scmp.ne.s32.totalorder %s551, %s553
      %p560 = scmp.eq.s32.totalorder %s73, 3
      %p561 = por %p559, %p560
      %p562 = scmp.ne.s32.totalorder %s553, %s554
      %p563 = scmp.eq.s32.totalorder %s73, 0
      %p564 = por %p562, %p563
      %p565 = scmp.ne.s32.totalorder %s553, %s554
      %p566 = scmp.eq.s32.totalorder %s74, 3
      %p567 = por %p565, %p566
      %p569 = scmp.ne.s32.totalorder %s554, %s568
      %p570 = scmp.eq.s32.totalorder %s74, 0
      %p571 = por %p569, %p570
      %s573 = sadd.s32 %s572, 1
      %p576 = scmp.eq.s32.totalorder %s68, 3
      %p577 = scmp.ne.s32.totalorder %s572, %s574
      %p578 = scmp.eq.s32.totalorder %s68, 0
      %p579 = por %p577, %p578
      %p580 = scmp.ne.s32.totalorder %s572, %s574
      %p581 = scmp.eq.s32.totalorder %s73, 3
      %p582 = por %p580, %p581
      %p583 = scmp.ne.s32.totalorder %s574, %s575
      %p584 = scmp.eq.s32.totalorder %s73, 0
      %p585 = por %p583, %p584
      %p586 = scmp.ne.s32.totalorder %s574, %s575
      %p587 = scmp.eq.s32.totalorder %s74, 3
      %p588 = por %p586, %p587
      %p590 = scmp.ne.s32.totalorder %s575, %s589
      %p591 = scmp.eq.s32.totalorder %s74, 0
      %p592 = por %p590, %p591
      %s594 = sadd.s32 %s593, 1
      %p597 = scmp.eq.s32.totalorder %s68, 3
      %p598 = scmp.ne.s32.totalorder %s593, %s595
      %p599 = scmp.eq.s32.totalorder %s68, 0
      %p600 = por %p598, %p599
      %p601 = scmp.ne.s32.totalorder %s593, %s595
      %p602 = scmp.eq.s32.totalorder %s73, 3
      %p603 = por %p601, %p602
      %p604 = scmp.ne.s32.totalorder %s595, %s596
      %p605 = scmp.eq.s32.totalorder %s73, 0
      %p606 = por %p604, %p605
      %p607 = scmp.ne.s32.totalorder %s595, %s596
      %p608 = scmp.eq.s32.totalorder %s74, 3
      %p609 = por %p607, %p608
      %p611 = scmp.ne.s32.totalorder %s596, %s610
      %p612 = scmp.eq.s32.totalorder %s74, 0
      %p613 = por %p611, %p612
      %s615 = sadd.s32 %s614, 1
      %p618 = scmp.eq.s32.totalorder %s68, 3
      %p619 = scmp.ne.s32.totalorder %s614, %s616
      %p620 = scmp.eq.s32.totalorder %s68, 0
      %p621 = por %p619, %p620
      %p622 = scmp.ne.s32.totalorder %s614, %s616
      %p623 = scmp.eq.s32.totalorder %s73, 3
      %p624 = por %p622, %p623
      %p625 = scmp.ne.s32.totalorder %s616, %s617
      %p626 = scmp.eq.s32.totalorder %s73, 0
      %p627 = por %p625, %p626
      %p628 = scmp.ne.s32.totalorder %s616, %s617
      %p629 = scmp.eq.s32.totalorder %s74, 3
      %p630 = por %p628, %p629
      %p632 = scmp.ne.s32.totalorder %s617, %s631
      %p633 = scmp.eq.s32.totalorder %s74, 0
      %p634 = por %p632, %p633
      %s636 = sadd.s32 %s635, 1
      %p639 = scmp.eq.s32.totalorder %s68, 3
      %p640 = scmp.ne.s32.totalorder %s635, %s637
      %p641 = scmp.eq.s32.totalorder %s68, 0
      %p642 = por %p640, %p641
      %p643 = scmp.ne.s32.totalorder %s635, %s637
      %p644 = scmp.eq.s32.totalorder %s73, 3
      %p645 = por %p643, %p644
      %p646 = scmp.ne.s32.totalorder %s637, %s638
      %p647 = scmp.eq.s32.totalorder %s73, 0
      %p648 = por %p646, %p647
      %p649 = scmp.ne.s32.totalorder %s637, %s638
      %p650 = scmp.eq.s32.totalorder %s74, 3
      %p651 = por %p649, %p650
      %p653 = scmp.ne.s32.totalorder %s638, %s652
      %p654 = scmp.eq.s32.totalorder %s74, 0
      %p655 = por %p653, %p654
      %s657 = sadd.s32 %s656, 1
      %p660 = scmp.eq.s32.totalorder %s68, 3
      %p661 = scmp.ne.s32.totalorder %s656, %s658
      %p662 = scmp.eq.s32.totalorder %s68, 0
      %p663 = por %p661, %p662
      %p664 = scmp.ne.s32.totalorder %s656, %s658
      %p665 = scmp.eq.s32.totalorder %s73, 3
      %p666 = por %p664, %p665
      %p667 = scmp.ne.s32.totalorder %s658, %s659
      %p668 = scmp.eq.s32.totalorder %s73, 0
      %p669 = por %p667, %p668
      %p670 = scmp.ne.s32.totalorder %s658, %s659
      %p671 = scmp.eq.s32.totalorder %s74, 3
      %p672 = por %p670, %p671
      %p674 = scmp.ne.s32.totalorder %s659, %s673
      %p675 = scmp.eq.s32.totalorder %s74, 0
      %p676 = por %p674, %p675
      %s678 = sadd.s32 %s677, 1
      %p681 = scmp.eq.s32.totalorder %s68, 3
      %p682 = scmp.ne.s32.totalorder %s677, %s679
      %p683 = scmp.eq.s32.totalorder %s68, 0
      %p684 = por %p682, %p683
      %p685 = scmp.ne.s32.totalorder %s677, %s679
      %p686 = scmp.eq.s32.totalorder %s73, 3
      %p687 = por %p685, %p686
      %p688 = scmp.ne.s32.totalorder %s679, %s680
      %p689 = scmp.eq.s32.totalorder %s73, 0
      %p690 = por %p688, %p689
      %p691 = scmp.ne.s32.totalorder %s679, %s680
      %p692 = scmp.eq.s32.totalorder %s74, 3
      %p693 = por %p691, %p692
      %p695 = scmp.ne.s32.totalorder %s680, %s694
      %p696 = scmp.eq.s32.totalorder %s74, 0
      %p697 = por %p695, %p696
      %s699 = sadd.s32 %s698, 1
      %p702 = scmp.eq.s32.totalorder %s68, 3
      %p703 = scmp.ne.s32.totalorder %s698, %s700
      %p704 = scmp.eq.s32.totalorder %s68, 0
      %p705 = por %p703, %p704
      %p706 = scmp.ne.s32.totalorder %s698, %s700
      %p707 = scmp.eq.s32.totalorder %s73, 3
      %p708 = por %p706, %p707
      %p709 = scmp.ne.s32.totalorder %s700, %s701
      %p710 = scmp.eq.s32.totalorder %s73, 0
      %p711 = por %p709, %p710
      %p712 = scmp.ne.s32.totalorder %s700, %s701
      %p713 = scmp.eq.s32.totalorder %s74, 3
      %p714 = por %p712, %p713
      %p716 = scmp.ne.s32.totalorder %s701, %s715
      %p717 = scmp.eq.s32.totalorder %s74, 0
      %p718 = por %p716, %p717
      %s720 = sadd.s32 %s719, 1
      %p723 = scmp.eq.s32.totalorder %s68, 3
      %p724 = scmp.ne.s32.totalorder %s719, %s721
      %p725 = scmp.eq.s32.totalorder %s68, 0
      %p726 = por %p724, %p725
      %p727 = scmp.ne.s32.totalorder %s719, %s721
      %p728 = scmp.eq.s32.totalorder %s73, 3
      %p729 = por %p727, %p728
      %p730 = scmp.ne.s32.totalorder %s721, %s722
      %p731 = scmp.eq.s32.totalorder %s73, 0
      %p732 = por %p730, %p731
      %p733 = scmp.ne.s32.totalorder %s721, %s722
      %p734 = scmp.eq.s32.totalorder %s74, 3
      %p735 = por %p733, %p734
      %p737 = scmp.ne.s32.totalorder %s722, %s736
      %p738 = scmp.eq.s32.totalorder %s74, 0
      %p739 = por %p737, %p738
      %s740 = ssub.s32 %s75, %s87
      %s741 = ssub.s32 %s76, %s83
      %s742 = sor.u32 %s740, %s741
      %p743 = scmp.eq.s32.totalorder %s742, 0
      %s745 = sadd.s32 %s744, 1
      %s746 = scalar_select %p743, %s744, %s745
      %p749 = pneg %p743
      %p750 = scmp.eq.s32.totalorder %s68, 3
      %p751 = por %p749, %p750
      %p752 = scmp.ne.s32.totalorder %s744, %s747
      %p753 = scmp.eq.s32.totalorder %s68, 0
      %p754 = por %p752, %p753
      %p755 = scmp.ne.s32.totalorder %s744, %s747
      %p756 = scmp.eq.s32.totalorder %s73, 3
      %p757 = por %p755, %p756
      %p758 = scmp.ne.s32.totalorder %s747, %s748
      %p759 = scmp.eq.s32.totalorder %s73, 0
      %p760 = por %p758, %p759
      %p761 = scmp.ne.s32.totalorder %s747, %s748
      %p762 = scmp.eq.s32.totalorder %s74, 3
      %p763 = por %p761, %p762
      %p765 = scmp.ne.s32.totalorder %s748, %s764
      %p766 = scmp.eq.s32.totalorder %s74, 0
      %p767 = por %p765, %p766
      %p768 = scmp.le.s32.totalorder 1, %s68
      %p769 = scmp.lt.s32.totalorder %s68, 5
      %p770 = pnand %p768, %p769
      %p771 = pneg %p770
      // Predicated region
      $region9: #{decoder_forward.4} parent=5 // pred_check
        _
      $region10: #{decoder_forward.4} parent=5 // pred_check_branch
        %773 = sbr.rel (%p770) target = $region12
      $region11: #{decoder_forward.4} parent=5 // pred_region
        %s774 = ssub.s32 %s68, 1
        // Predicated region
        $region13: #{decoder_forward.4} parent=11 // pred_check
          %p775 = pneg %p207
        $region14: #{decoder_forward.4} parent=11 // pred_check_branch
          %777 = sbr.rel (%p775) target = $region16
        $region15: #{decoder_forward.4} parent=11 // pred_region
          _
        $region16: #{decoder_forward.4} parent=11 // pred_fallthru
          _
        // Predicated region
        $region17: #{decoder_forward.4} parent=11 // pred_check
          %p778 = pneg %p228
        $region18: #{decoder_forward.4} parent=11 // pred_check_branch
          %780 = sbr.rel (%p778) target = $region20
        $region19: #{decoder_forward.4} parent=11 // pred_region
          _
        $region20: #{decoder_forward.4} parent=11 // pred_fallthru
          _
        // Predicated region
        $region21: #{decoder_forward.4} parent=11 // pred_check
          %p781 = pneg %p249
        $region22: #{decoder_forward.4} parent=11 // pred_check_branch
          %783 = sbr.rel (%p781) target = $region24
        $region23: #{decoder_forward.4} parent=11 // pred_region
          _
        $region24: #{decoder_forward.4} parent=11 // pred_fallthru
          _
        // Predicated region
        $region25: #{decoder_forward.4} parent=11 // pred_check
          %p784 = pneg %p270
        $region26: #{decoder_forward.4} parent=11 // pred_check_branch
          %786 = sbr.rel (%p784) target = $region28
        $region27: #{decoder_forward.4} parent=11 // pred_region
          _
        $region28: #{decoder_forward.4} parent=11 // pred_fallthru
          _
        // Predicated region
        $region29: #{decoder_forward.4} parent=11 // pred_check
          %p787 = pneg %p291
        $region30: #{decoder_forward.4} parent=11 // pred_check_branch
          %789 = sbr.rel (%p787) target = $region32
        $region31: #{decoder_forward.4} parent=11 // pred_region
          _
        $region32: #{decoder_forward.4} parent=11 // pred_fallthru
          _
        // Predicated region
        $region33: #{decoder_forward.4} parent=11 // pred_check
          %p790 = pneg %p312
        $region34: #{decoder_forward.4} parent=11 // pred_check_branch
          %792 = sbr.rel (%p790) target = $region36
        $region35: #{decoder_forward.4} parent=11 // pred_region
          _
        $region36: #{decoder_forward.4} parent=11 // pred_fallthru
          _
        // Predicated region
        $region37: #{decoder_forward.4} parent=11 // pred_check
          %p793 = pneg %p333
        $region38: #{decoder_forward.4} parent=11 // pred_check_branch
          %795 = sbr.rel (%p793) target = $region40
        $region39: #{decoder_forward.4} parent=11 // pred_region
          _
        $region40: #{decoder_forward.4} parent=11 // pred_fallthru
          _
        // Predicated region
        $region41: #{decoder_forward.4} parent=11 // pred_check
          %p796 = pneg %p354
        $region42: #{decoder_forward.4} parent=11 // pred_check_branch
          %798 = sbr.rel (%p796) target = $region44
        $region43: #{decoder_forward.4} parent=11 // pred_region
          _
        $region44: #{decoder_forward.4} parent=11 // pred_fallthru
          _
        // Predicated region
        $region45: #{decoder_forward.4} parent=11 // pred_check
          %p799 = pneg %p375
        $region46: #{decoder_forward.4} parent=11 // pred_check_branch
          %801 = sbr.rel (%p799) target = $region48
        $region47: #{decoder_forward.4} parent=11 // pred_region
          _
        $region48: #{decoder_forward.4} parent=11 // pred_fallthru
          _
        // Predicated region
        $region49: #{decoder_forward.4} parent=11 // pred_check
          %p802 = pneg %p396
        $region50: #{decoder_forward.4} parent=11 // pred_check_branch
          %804 = sbr.rel (%p802) target = $region52
        $region51: #{decoder_forward.4} parent=11 // pred_region
          _
        $region52: #{decoder_forward.4} parent=11 // pred_fallthru
          _
        // Predicated region
        $region53: #{decoder_forward.4} parent=11 // pred_check
          %p805 = pneg %p417
        $region54: #{decoder_forward.4} parent=11 // pred_check_branch
          %807 = sbr.rel (%p805) target = $region56
        $region55: #{decoder_forward.4} parent=11 // pred_region
          _
        $region56: #{decoder_forward.4} parent=11 // pred_fallthru
          _
        // Predicated region
        $region57: #{decoder_forward.4} parent=11 // pred_check
          %p808 = pneg %p438
        $region58: #{decoder_forward.4} parent=11 // pred_check_branch
          %810 = sbr.rel (%p808) target = $region60
        $region59: #{decoder_forward.4} parent=11 // pred_region
          _
        $region60: #{decoder_forward.4} parent=11 // pred_fallthru
          _
        // Predicated region
        $region61: #{decoder_forward.4} parent=11 // pred_check
          %p811 = pneg %p459
        $region62: #{decoder_forward.4} parent=11 // pred_check_branch
          %813 = sbr.rel (%p811) target = $region64
        $region63: #{decoder_forward.4} parent=11 // pred_region
          _
        $region64: #{decoder_forward.4} parent=11 // pred_fallthru
          _
        // Predicated region
        $region65: #{decoder_forward.4} parent=11 // pred_check
          %p814 = pneg %p480
        $region66: #{decoder_forward.4} parent=11 // pred_check_branch
          %816 = sbr.rel (%p814) target = $region68
        $region67: #{decoder_forward.4} parent=11 // pred_region
          _
        $region68: #{decoder_forward.4} parent=11 // pred_fallthru
          _
        // Predicated region
        $region69: #{decoder_forward.4} parent=11 // pred_check
          %p817 = pneg %p501
        $region70: #{decoder_forward.4} parent=11 // pred_check_branch
          %819 = sbr.rel (%p817) target = $region72
        $region71: #{decoder_forward.4} parent=11 // pred_region
          _
        $region72: #{decoder_forward.4} parent=11 // pred_fallthru
          _
        // Predicated region
        $region73: #{decoder_forward.4} parent=11 // pred_check
          %p820 = pneg %p522
        $region74: #{decoder_forward.4} parent=11 // pred_check_branch
          %822 = sbr.rel (%p820) target = $region76
        $region75: #{decoder_forward.4} parent=11 // pred_region
          _
        $region76: #{decoder_forward.4} parent=11 // pred_fallthru
          _
        // Predicated region
        $region77: #{decoder_forward.4} parent=11 // pred_check
          %p823 = pneg %p543
        $region78: #{decoder_forward.4} parent=11 // pred_check_branch
          %825 = sbr.rel (%p823) target = $region80
        $region79: #{decoder_forward.4} parent=11 // pred_region
          _
        $region80: #{decoder_forward.4} parent=11 // pred_fallthru
          _
        // Predicated region
        $region81: #{decoder_forward.4} parent=11 // pred_check
          %p826 = pneg %p564
        $region82: #{decoder_forward.4} parent=11 // pred_check_branch
          %828 = sbr.rel (%p826) target = $region84
        $region83: #{decoder_forward.4} parent=11 // pred_region
          _
        $region84: #{decoder_forward.4} parent=11 // pred_fallthru
          _
        // Predicated region
        $region85: #{decoder_forward.4} parent=11 // pred_check
          %p829 = pneg %p585
        $region86: #{decoder_forward.4} parent=11 // pred_check_branch
          %831 = sbr.rel (%p829) target = $region88
        $region87: #{decoder_forward.4} parent=11 // pred_region
          _
        $region88: #{decoder_forward.4} parent=11 // pred_fallthru
          _
        // Predicated region
        $region89: #{decoder_forward.4} parent=11 // pred_check
          %p832 = pneg %p606
        $region90: #{decoder_forward.4} parent=11 // pred_check_branch
          %834 = sbr.rel (%p832) target = $region92
        $region91: #{decoder_forward.4} parent=11 // pred_region
          _
        $region92: #{decoder_forward.4} parent=11 // pred_fallthru
          _
        // Predicated region
        $region93: #{decoder_forward.4} parent=11 // pred_check
          %p835 = pneg %p627
        $region94: #{decoder_forward.4} parent=11 // pred_check_branch
          %837 = sbr.rel (%p835) target = $region96
        $region95: #{decoder_forward.4} parent=11 // pred_region
          _
        $region96: #{decoder_forward.4} parent=11 // pred_fallthru
          _
        // Predicated region
        $region97: #{decoder_forward.4} parent=11 // pred_check
          %p838 = pneg %p648
        $region98: #{decoder_forward.4} parent=11 // pred_check_branch
          %840 = sbr.rel (%p838) target = $region100
        $region99: #{decoder_forward.4} parent=11 // pred_region
          _
        $region100: #{decoder_forward.4} parent=11 // pred_fallthru
          _
        // Predicated region
        $region101: #{decoder_forward.4} parent=11 // pred_check
          %p841 = pneg %p669
        $region102: #{decoder_forward.4} parent=11 // pred_check_branch
          %843 = sbr.rel (%p841) target = $region104
        $region103: #{decoder_forward.4} parent=11 // pred_region
          _
        $region104: #{decoder_forward.4} parent=11 // pred_fallthru
          _
        // Predicated region
        $region105: #{decoder_forward.4} parent=11 // pred_check
          %p844 = pneg %p690
        $region106: #{decoder_forward.4} parent=11 // pred_check_branch
          %846 = sbr.rel (%p844) target = $region108
        $region107: #{decoder_forward.4} parent=11 // pred_region
          _
        $region108: #{decoder_forward.4} parent=11 // pred_fallthru
          _
        // Predicated region
        $region109: #{decoder_forward.4} parent=11 // pred_check
          %p847 = pneg %p711
        $region110: #{decoder_forward.4} parent=11 // pred_check_branch
          %849 = sbr.rel (%p847) target = $region112
        $region111: #{decoder_forward.4} parent=11 // pred_region
          _
        $region112: #{decoder_forward.4} parent=11 // pred_fallthru
          _
        // Predicated region
        $region113: #{decoder_forward.4} parent=11 // pred_check
          %p850 = pneg %p732
        $region114: #{decoder_forward.4} parent=11 // pred_check_branch
          %852 = sbr.rel (%p850) target = $region116
        $region115: #{decoder_forward.4} parent=11 // pred_region
          %s854 = ssub.s32 16, 16
          %855 = vsyncadd [#allocation3], %s854
          %s857 = sshll.u32 [#allocation2], 4
          %s858 = int_to_ptr.vmem [resolvable:$true] %s857
          %860 = dma.hbm_to_vmem [thread:$0]  %s59, 16, %s858, [#allocation3]
        $region116: #{decoder_forward.4} parent=11 // pred_fallthru
          _
      $region12: #{decoder_forward.4} parent=5 // pred_fallthru
        _
      %p861 = scmp.lt.s32.totalorder %s68, 4
      // Predicated region
      $region117: #{decoder_forward.4} parent=5 // pred_check
        %p862 = pneg %p861
      $region118: #{decoder_forward.4} parent=5 // pred_check_branch
        %864 = sbr.rel (%p862) target = $region120
      $region119: #{decoder_forward.4} parent=5 // pred_region
        // Predicated region
        $region121: #{decoder_forward.4} parent=119 // pred_check
          %p865 = pneg %p102
        $region122: #{decoder_forward.4} parent=119 // pred_check_branch
          %867 = sbr.rel (%p865) target = $region124
        $region123: #{decoder_forward.4} parent=119 // pred_region
          %p868 = scmp.lt.s32.totalorder %s75, 1
          %s869 = scalar_select %p868, %s75, 1
          %p870 = scmp.lt.s32.totalorder %s76, 1
          %s871 = scalar_select %p870, %s76, 1
          %s872 = smul.addr %s869, 2
          %s873 = sadd.s32 %s871, %s872
          %s874 = smul.addr %s873, 8
          %s875 = scalar_lea.vmem %s1, %s874
        $region124: #{decoder_forward.4} parent=119 // pred_fallthru
          _
        // Predicated region
        $region125: #{decoder_forward.4} parent=119 // pred_check
          %p876 = pneg %p128
        $region126: #{decoder_forward.4} parent=119 // pred_check_branch
          %878 = sbr.rel (%p876) target = $region128
        $region127: #{decoder_forward.4} parent=119 // pred_region
          %p879 = scmp.lt.s32.totalorder %s75, 1
          %s880 = scalar_select %p879, %s75, 1
          %s881 = smul.addr %s880, 2
          %s882 = smul.addr %s881, 8
          %s883 = scalar_lea.vmem %s3, %s882
        $region128: #{decoder_forward.4} parent=119 // pred_fallthru
          _
        // Predicated region
        $region129: #{decoder_forward.4} parent=119 // pred_check
          %p884 = pneg %p154
        $region130: #{decoder_forward.4} parent=119 // pred_check_branch
          %886 = sbr.rel (%p884) target = $region132
        $region131: #{decoder_forward.4} parent=119 // pred_region
          %p887 = scmp.lt.s32.totalorder %s75, 1
          %s888 = scalar_select %p887, %s75, 1
          %s889 = smul.addr %s888, 2
          %s890 = smul.addr %s889, 8
          %s891 = scalar_lea.vmem %s5, %s890
        $region132: #{decoder_forward.4} parent=119 // pred_fallthru
          _
        // Predicated region
        $region133: #{decoder_forward.4} parent=119 // pred_check
          %p892 = pneg %p180
        $region134: #{decoder_forward.4} parent=119 // pred_check_branch
          %894 = sbr.rel (%p892) target = $region136
        $region135: #{decoder_forward.4} parent=119 // pred_region
          %p895 = scmp.lt.s32.totalorder %s76, 1
          %s896 = scalar_select %p895, %s76, 1
          %s897 = smul.addr %s896, 8
          %s898 = scalar_lea.vmem %s7, %s897
        $region136: #{decoder_forward.4} parent=119 // pred_fallthru
          _
      $region120: #{decoder_forward.4} parent=5 // pred_fallthru
        _
      %p899 = scmp.le.s32.totalorder 1, %s68
      %p900 = scmp.lt.s32.totalorder %s68, 5
      %p901 = pnand %p899, %p900
      %p902 = pneg %p901
      // Predicated region
      $region137: #{decoder_forward.4} parent=5 // pred_check
        _
      $region138: #{decoder_forward.4} parent=5 // pred_check_branch
        %904 = sbr.rel (%p901) target = $region140
      $region139: #{decoder_forward.4} parent=5 // pred_region
        %s905 = ssub.s32 %s68, 1
        // Predicated region
        $region141: #{decoder_forward.4} parent=139 // pred_check
          %p906 = pneg %p732
        $region142: #{decoder_forward.4} parent=139 // pred_check_branch
          %908 = sbr.rel (%p906) target = $region144
        $region143: #{decoder_forward.4} parent=139 // pred_region
          %909 = dma.done [#allocation3], 16
        $region144: #{decoder_forward.4} parent=139 // pred_fallthru
          _
        %p910 = scmp.lt.s32.totalorder %s77, 1
        %s911 = scalar_select %p910, %s77, 1
        %p912 = scmp.lt.s32.totalorder %s78, 1
        %s913 = scalar_select %p912, %s78, 1
        %s914 = smul.addr %s911, 2
        %s915 = sadd.s32 %s913, %s914
        %s916 = smul.addr %s915, 8
        %s917 = scalar_lea.vmem %s1, %s916
        %p918 = pneg %p108
        %p919 = pneg %p105
        %p920 = scmp.lt.s32.totalorder %s77, 1
        %s921 = scalar_select %p920, %s77, 1
        %s922 = smul.addr %s921, 2
        %s923 = smul.addr %s922, 8
        %s924 = scalar_lea.vmem %s3, %s923
        %p925 = pneg %p134
        %p926 = pneg %p131
        %p927 = scmp.lt.s32.totalorder %s77, 1
        %s928 = scalar_select %p927, %s77, 1
        %s929 = smul.addr %s928, 2
        %s930 = smul.addr %s929, 8
        %s931 = scalar_lea.vmem %s5, %s930
        %p932 = pneg %p160
        %p933 = pneg %p157
        %p934 = scmp.lt.s32.totalorder %s78, 1
        %s935 = scalar_select %p934, %s78, 1
        %s936 = smul.addr %s935, 8
        %s937 = scalar_lea.vmem %s7, %s936
        %p938 = pneg %p186
        %p939 = pneg %p183
        %p940 = pneg %p207
        %p941 = pneg %p204
        %p942 = pneg %p228
        %p943 = pneg %p225
        %p944 = pneg %p249
        %p945 = pneg %p246
        %p946 = pneg %p270
        %p947 = pneg %p267
        %p948 = pneg %p291
        %p949 = pneg %p288
        %p950 = pneg %p312
        %p951 = pneg %p309
        %p952 = pneg %p333
        %p953 = pneg %p330
        %p954 = pneg %p354
        %p955 = pneg %p351
        %p956 = pneg %p375
        %p957 = pneg %p372
        %p958 = pneg %p396
        %p959 = pneg %p393
        %p960 = pneg %p417
        %p961 = pneg %p414
        %p962 = pneg %p438
        %p963 = pneg %p435
        %p964 = pneg %p459
        %p965 = pneg %p456
        %p966 = pneg %p480
        %p967 = pneg %p477
        %p968 = pneg %p501
        %p969 = pneg %p498
        %p970 = pneg %p522
        %p971 = pneg %p519
        %p972 = pneg %p543
        %p973 = pneg %p540
        %p974 = pneg %p564
        %p975 = pneg %p561
        %p976 = pneg %p585
        %p977 = pneg %p582
        %p978 = pneg %p606
        %p979 = pneg %p603
        %p980 = pneg %p627
        %p981 = pneg %p624
        %p982 = pneg %p648
        %p983 = pneg %p645
        %p984 = pneg %p669
        %p985 = pneg %p666
        %p986 = pneg %p690
        %p987 = pneg %p687
        %p988 = pneg %p711
        %p989 = pneg %p708
        %p990 = pneg %p732
        %p991 = pneg %p729
        %p992 = pneg %p760
        %p993 = pneg %p757
        %p994 = scmp.lt.s32.totalorder %s77, 1
        %s995 = scalar_select %p994, %s77, 1
        %p996 = scmp.lt.s32.totalorder %s78, 1
        %s997 = scalar_select %p996, %s78, 1
        %s998 = smul.addr %s995, 2
        %s999 = sadd.s32 %s997, %s998
        %s1000 = smul.addr %s999, 8
        %s1001 = scalar_lea.vmem %s61, %s1000
        %p1002 = scmp.lt.s32.totalorder %s77, 1
        %s1003 = scalar_select %p1002, %s77, 1
        %p1004 = scmp.lt.s32.totalorder %s78, 1
        %s1005 = scalar_select %p1004, %s78, 1
        %s1006 = smul.addr %s1003, 2
        %s1007 = sadd.s32 %s1005, %s1006
        %s1008 = smul.addr %s1007, 8
        %s1009 = scalar_lea.vmem %s1, %s1008
        %p1010 = scmp.lt.s32.totalorder %s77, 1
        %s1011 = scalar_select %p1010, %s77, 1
        %s1012 = smul.addr %s1011, 2
        %s1013 = smul.addr %s1012, 8
        %s1014 = scalar_lea.vmem %s3, %s1013
        %p1015 = scmp.lt.s32.totalorder %s77, 1
        %s1016 = scalar_select %p1015, %s77, 1
        %s1017 = smul.addr %s1016, 2
        %s1018 = smul.addr %s1017, 8
        %s1019 = scalar_lea.vmem %s5, %s1018
        %p1020 = scmp.lt.s32.totalorder %s78, 1
        %s1021 = scalar_select %p1020, %s78, 1
        %s1022 = smul.addr %s1021, 8
        %s1023 = scalar_lea.vmem %s7, %s1022
        %p1024 = scmp.lt.s32.totalorder %s77, 1
        %s1025 = scalar_select %p1024, %s77, 1
        %p1026 = scmp.lt.s32.totalorder %s78, 1
        %s1027 = scalar_select %p1026, %s78, 1
        %s1028 = smul.addr %s1025, 2
        %s1029 = sadd.s32 %s1027, %s1028
        %s1030 = smul.addr %s1029, 8
        %s1031 = scalar_lea.vmem %s61, %s1030
        %v1032 = vld [vmem:[%s1009] sm:$0xff]
        %v1033 = vld [vmem:[%s1014] sm:$0xff]
        %v1034 = vld [vmem:[%s1014 + $0x8] sm:$0xff]
        %v1035 = vld [vmem:[%s1019] sm:$0xff]
        %v1036 = vld [vmem:[%s1019 + $0x8] sm:$0xff]
        %v1037 = vld [vmem:[%s1023] sm:$0xff]
        %v1038 = vld [vmem:[%s9] sm:$0xff]
        %v1039 = vld [vmem:[%s9 + $0x8] sm:$0xff]
        %v1040 = vld [vmem:[%s9 + $0x10] sm:$0xff]
        %v1041 = vld [vmem:[%s9 + $0x18] sm:$0xff]
        %v1042 = vld [vmem:[%s11] sm:$0x1]
        %v1043 = vld [vmem:[%s13] sm:$0xff]
        %v1044 = vld [vmem:[%s13 + $0x8] sm:$0xff]
        %v1045 = vld [vmem:[%s13 + $0x10] sm:$0xff]
        %v1046 = vld [vmem:[%s13 + $0x18] sm:$0xff]
        %v1047 = vld [vmem:[%s15] sm:$0x1]
        %v1048 = vld [vmem:[%s17] sm:$0xff]
        %v1049 = vld [vmem:[%s17 + $0x8] sm:$0xff]
        %v1050 = vld [vmem:[%s17 + $0x10] sm:$0xff]
        %v1051 = vld [vmem:[%s17 + $0x18] sm:$0xff]
        %v1052 = vld [vmem:[%s19] sm:$0x1]
        %v1053 = vld [vmem:[%s21] sm:$0xff]
        %v1054 = vld [vmem:[%s21 + $0x8] sm:$0xff]
        %v1055 = vld [vmem:[%s21 + $0x10] sm:$0xff]
        %v1056 = vld [vmem:[%s21 + $0x18] sm:$0xff]
        %v1057 = vld [vmem:[%s23] sm:$0x1]
        %v1059 = vlaneseq
        %v1060 = vshrl.u32 %v1059, 7
        %v1061 = vsub.s32 0, %v1060
        %v1062 = vrot.slane %v1042, %v1061
        %vm1064 = vcmask 261120
        %v1066 = vsel %vm1064, %v1032, 0
        %1068 = vmatprep.subr.mxu0 0.0
        %1069 = vmatpush1.msra.mxu0 0.0
        %1070 = vmatprep.subr.mxu0 0.0
        %1071 = vmatpush1.msra.mxu0 0.0
        %1072 = vmatprep.subr.mxu0 0.0
        %1073 = vmatpush1.msra.mxu0 0.0
        %1074 = vmatprep.subr.mxu0 0.0
        %1075 = vmatpush1.msra.mxu0 0.0
        %1076 = vmatprep.subr.mxu0 0.0
        %1077 = vmatpush1.msra.mxu0 0.0
        %1078 = vmatprep.subr.mxu0 0.0
        %1079 = vmatpush1.msra.mxu0 0.0
        %1080 = vmatprep.subr.mxu0 0.0
        %1081 = vmatpush1.msra.mxu0 0.0
        %1082 = vmatprep.subr.mxu0 0.0
        %1083 = vmatpush1.msra.mxu0 0.0
        %1084 = vmatprep.subr.mxu0 0.0
        %1085 = vmatpush1.msra.mxu0 0.0
        %1086 = vmatprep.subr.mxu0 0.0
        %1087 = vmatpush1.msra.mxu0 0.0
        %1088 = vmatprep.subr.mxu0 0.0
        %1089 = vmatpush1.msra.mxu0 0.0
        %1090 = vmatprep.subr.mxu0 0.0
        %1091 = vmatpush1.msra.mxu0 0.0
        %1092 = vmatprep.subr.mxu0 0.0
        %1093 = vmatpush1.msra.mxu0 %v1041
        %1094 = vmatprep.subr.mxu0 0.0
        %1095 = vmatpush1.msra.mxu0 %v1040
        %1096 = vmatprep.subr.mxu0 0.0
        %1097 = vmatpush1.msra.mxu0 %v1039
        %1098 = vmatprep.subr.mxu0 0.0
        %1099 = vmatpush1.msra.mxu0 %v1038
        %1100 = vmatprep.subr.mxu0 0.0
        %1101 = vmatpush2.msra.mxu0 0.0
        %1102 = vmatprep.subr.mxu0 0.0
        %1103 = vmatpush2.msra.mxu0 0.0
        %1104 = vmatprep.subr.mxu0 0.0
        %1105 = vmatpush2.msra.mxu0 0.0
        %1106 = vmatprep.subr.mxu0 0.0
        %1107 = vmatpush2.msra.mxu0 0.0
        %1108 = vmatprep.subr.mxu0 0.0
        %1109 = vmatpush2.msra.mxu0 0.0
        %1110 = vmatprep.subr.mxu0 0.0
        %1111 = vmatpush2.msra.mxu0 0.0
        %1112 = vmatprep.subr.mxu0 0.0
        %1113 = vmatpush2.msra.mxu0 0.0
        %1114 = vmatprep.subr.mxu0 0.0
        %1115 = vmatpush2.msra.mxu0 0.0
        %1116 = vmatprep.subr.mxu0 0.0
        %1117 = vmatpush2.msra.mxu0 0.0
        %1118 = vmatprep.subr.mxu0 0.0
        %1119 = vmatpush2.msra.mxu0 0.0
        %1120 = vmatprep.subr.mxu0 0.0
        %1121 = vmatpush2.msra.mxu0 0.0
        %1122 = vmatprep.subr.mxu0 0.0
        %1123 = vmatpush2.msra.mxu0 0.0
        %1124 = vmatprep.subr.mxu0 0.0
        %1125 = vmatpush2.msra.mxu0 0.0
        %1126 = vmatprep.subr.mxu0 0.0
        %1127 = vmatpush2.msra.mxu0 0.0
        %1128 = vmatprep.subr.mxu0 0.0
        %1129 = vmatpush2.msra.mxu0 0.0
        %1130 = vmatprep.subr.mxu0 0.0
        %1131 = vmatpush2.msra.mxu0 0.0
        %1132 = vmatprep.mubr.f32.mxu0 0.0
        %1133 = vmatmul.mubr.f32.gmra.mxu0 %v1066
        %v1134 = vpop.f32.mrf.mxu0
        %v1135 = vadd.f32 %v1062, %v1134
        %v1136 = vpop.f32.mrf.mxu0
        %1137 = vdwg.mxu0
        %v1138 = vmul.f32 %v1135, 0.35355338
        %v1140 = vlaneseq
        %v1141 = vshrl.u32 %v1140, 7
        %v1142 = vsub.s32 0, %v1141
        %v1143 = vrot.slane %v1047, %v1142
        %v1146 = vsel %vm1064, %v1033, 0
        %v1149 = vsel %vm1064, %v1034, 0
        %1151 = vmatprep.subr.mxu0 0.0
        %1152 = vmatpush1.msra.mxu0 0.0
        %1153 = vmatprep.subr.mxu0 0.0
        %1154 = vmatpush1.msra.mxu0 0.0
        %1155 = vmatprep.subr.mxu0 0.0
        %1156 = vmatpush1.msra.mxu0 0.0
        %1157 = vmatprep.subr.mxu0 0.0
        %1158 = vmatpush1.msra.mxu0 0.0
        %1159 = vmatprep.subr.mxu0 0.0
        %1160 = vmatpush1.msra.mxu0 0.0
        %1161 = vmatprep.subr.mxu0 0.0
        %1162 = vmatpush1.msra.mxu0 0.0
        %1163 = vmatprep.subr.mxu0 0.0
        %1164 = vmatpush1.msra.mxu0 0.0
        %1165 = vmatprep.subr.mxu0 0.0
        %1166 = vmatpush1.msra.mxu0 0.0
        %1167 = vmatprep.subr.mxu0 0.0
        %1168 = vmatpush1.msra.mxu0 0.0
        %1169 = vmatprep.subr.mxu0 0.0
        %1170 = vmatpush1.msra.mxu0 0.0
        %1171 = vmatprep.subr.mxu0 0.0
        %1172 = vmatpush1.msra.mxu0 0.0
        %1173 = vmatprep.subr.mxu0 0.0
        %1174 = vmatpush1.msra.mxu0 0.0
        %1175 = vmatprep.subr.mxu0 0.0
        %1176 = vmatpush1.msra.mxu0 %v1046
        %1177 = vmatprep.subr.mxu0 0.0
        %1178 = vmatpush1.msra.mxu0 %v1045
        %1179 = vmatprep.subr.mxu0 0.0
        %1180 = vmatpush1.msra.mxu0 %v1044
        %1181 = vmatprep.subr.mxu0 0.0
        %1182 = vmatpush1.msra.mxu0 %v1043
        %1183 = vmatprep.subr.mxu0 0.0
        %1184 = vmatpush2.msra.mxu0 0.0
        %1185 = vmatprep.subr.mxu0 0.0
        %1186 = vmatpush2.msra.mxu0 0.0
        %1187 = vmatprep.subr.mxu0 0.0
        %1188 = vmatpush2.msra.mxu0 0.0
        %1189 = vmatprep.subr.mxu0 0.0
        %1190 = vmatpush2.msra.mxu0 0.0
        %1191 = vmatprep.subr.mxu0 0.0
        %1192 = vmatpush2.msra.mxu0 0.0
        %1193 = vmatprep.subr.mxu0 0.0
        %1194 = vmatpush2.msra.mxu0 0.0
        %1195 = vmatprep.subr.mxu0 0.0
        %1196 = vmatpush2.msra.mxu0 0.0
        %1197 = vmatprep.subr.mxu0 0.0
        %1198 = vmatpush2.msra.mxu0 0.0
        %1199 = vmatprep.subr.mxu0 0.0
        %1200 = vmatpush2.msra.mxu0 0.0
        %1201 = vmatprep.subr.mxu0 0.0
        %1202 = vmatpush2.msra.mxu0 0.0
        %1203 = vmatprep.subr.mxu0 0.0
        %1204 = vmatpush2.msra.mxu0 0.0
        %1205 = vmatprep.subr.mxu0 0.0
        %1206 = vmatpush2.msra.mxu0 0.0
        %1207 = vmatprep.subr.mxu0 0.0
        %1208 = vmatpush2.msra.mxu0 0.0
        %1209 = vmatprep.subr.mxu0 0.0
        %1210 = vmatpush2.msra.mxu0 0.0
        %1211 = vmatprep.subr.mxu0 0.0
        %1212 = vmatpush2.msra.mxu0 0.0
        %1213 = vmatprep.subr.mxu0 0.0
        %1214 = vmatpush2.msra.mxu0 0.0
        %1215 = vmatprep.mubr.f32.mxu0 0.0
        %1216 = vmatmul.mubr.f32.gmra.mxu0 %v1146
        %v1217 = vpop.f32.mrf.mxu0
        %v1218 = vadd.f32 %v1143, %v1217
        %v1219 = vpop.f32.mrf.mxu0
        %1220 = vmatprep.mubr.f32.mxu0 0.0
        %1221 = vmatmul.mubr.f32.gmra.mxu0 %v1149
        %v1222 = vpop.f32.mrf.mxu0
        %v1223 = vadd.f32 %v1143, %v1222
        %v1224 = vpop.f32.mrf.mxu0
        %1225 = vdwg.mxu0
        %v1227 = vlaneseq
        %v1228 = vshrl.u32 %v1227, 7
        %v1229 = vsub.s32 0, %v1228
        %v1230 = vrot.slane %v1052, %v1229
        %1232 = vmatprep.subr.mxu0 0.0
        %1233 = vmatpush1.msra.mxu0 0.0
        %1234 = vmatprep.subr.mxu0 0.0
        %1235 = vmatpush1.msra.mxu0 0.0
        %1236 = vmatprep.subr.mxu0 0.0
        %1237 = vmatpush1.msra.mxu0 0.0
        %1238 = vmatprep.subr.mxu0 0.0
        %1239 = vmatpush1.msra.mxu0 0.0
        %1240 = vmatprep.subr.mxu0 0.0
        %1241 = vmatpush1.msra.mxu0 0.0
        %1242 = vmatprep.subr.mxu0 0.0
        %1243 = vmatpush1.msra.mxu0 0.0
        %1244 = vmatprep.subr.mxu0 0.0
        %1245 = vmatpush1.msra.mxu0 0.0
        %1246 = vmatprep.subr.mxu0 0.0
        %1247 = vmatpush1.msra.mxu0 0.0
        %1248 = vmatprep.subr.mxu0 0.0
        %1249 = vmatpush1.msra.mxu0 0.0
        %1250 = vmatprep.subr.mxu0 0.0
        %1251 = vmatpush1.msra.mxu0 0.0
        %1252 = vmatprep.subr.mxu0 0.0
        %1253 = vmatpush1.msra.mxu0 0.0
        %1254 = vmatprep.subr.mxu0 0.0
        %1255 = vmatpush1.msra.mxu0 0.0
        %1256 = vmatprep.subr.mxu0 0.0
        %1257 = vmatpush1.msra.mxu0 %v1051
        %1258 = vmatprep.subr.mxu0 0.0
        %1259 = vmatpush1.msra.mxu0 %v1050
        %1260 = vmatprep.subr.mxu0 0.0
        %1261 = vmatpush1.msra.mxu0 %v1049
        %1262 = vmatprep.subr.mxu0 0.0
        %1263 = vmatpush1.msra.mxu0 %v1048
        %1264 = vmatprep.subr.mxu0 0.0
        %1265 = vmatpush2.msra.mxu0 0.0
        %1266 = vmatprep.subr.mxu0 0.0
        %1267 = vmatpush2.msra.mxu0 0.0
        %1268 = vmatprep.subr.mxu0 0.0
        %1269 = vmatpush2.msra.mxu0 0.0
        %1270 = vmatprep.subr.mxu0 0.0
        %1271 = vmatpush2.msra.mxu0 0.0
        %1272 = vmatprep.subr.mxu0 0.0
        %1273 = vmatpush2.msra.mxu0 0.0
        %1274 = vmatprep.subr.mxu0 0.0
        %1275 = vmatpush2.msra.mxu0 0.0
        %1276 = vmatprep.subr.mxu0 0.0
        %1277 = vmatpush2.msra.mxu0 0.0
        %1278 = vmatprep.subr.mxu0 0.0
        %1279 = vmatpush2.msra.mxu0 0.0
        %1280 = vmatprep.subr.mxu0 0.0
        %1281 = vmatpush2.msra.mxu0 0.0
        %1282 = vmatprep.subr.mxu0 0.0
        %1283 = vmatpush2.msra.mxu0 0.0
        %1284 = vmatprep.subr.mxu0 0.0
        %1285 = vmatpush2.msra.mxu0 0.0
        %1286 = vmatprep.subr.mxu0 0.0
        %1287 = vmatpush2.msra.mxu0 0.0
        %1288 = vmatprep.subr.mxu0 0.0
        %1289 = vmatpush2.msra.mxu0 0.0
        %1290 = vmatprep.subr.mxu0 0.0
        %1291 = vmatpush2.msra.mxu0 0.0
        %1292 = vmatprep.subr.mxu0 0.0
        %1293 = vmatpush2.msra.mxu0 0.0
        %1294 = vmatprep.subr.mxu0 0.0
        %1295 = vmatpush2.msra.mxu0 0.0
        %1296 = vmatprep.mubr.f32.mxu0 0.0
        %1297 = vmatmul.mubr.f32.gmra.mxu0 %v1146
        %v1298 = vpop.f32.mrf.mxu0
        %v1299 = vadd.f32 %v1230, %v1298
        %v1300 = vpop.f32.mrf.mxu0
        %1301 = vmatprep.mubr.f32.mxu0 0.0
        %1302 = vmatmul.mubr.f32.gmra.mxu0 %v1149
        %v1303 = vpop.f32.mrf.mxu0
        %v1304 = vadd.f32 %v1230, %v1303
        %v1305 = vpop.f32.mrf.mxu0
        %1306 = vdwg.mxu0
        %vm1307 = vcmask 64512
        %v1309 = vsel %vm1307, %v1138, 0
        %v1312 = vsel %vm1307, %v1218, 0
        %v1315 = vsel %vm1307, %v1223, 0
        %1317 = vmatprep.subr.mxu0 0.0
        %1318 = vmatpush1.xpose.msra.mxu0 0.0
        %1319 = vmatprep.subr.mxu0 0.0
        %1320 = vmatpush1.xpose.msra.mxu0 0.0
        %1321 = vmatprep.subr.mxu0 0.0
        %1322 = vmatpush1.xpose.msra.mxu0 0.0
        %1323 = vmatprep.subr.mxu0 0.0
        %1324 = vmatpush1.xpose.msra.mxu0 0.0
        %1325 = vmatprep.subr.mxu0 0.0
        %1326 = vmatpush1.xpose.msra.mxu0 0.0
        %1327 = vmatprep.subr.mxu0 0.0
        %1328 = vmatpush1.xpose.msra.mxu0 0.0
        %1329 = vmatprep.subr.mxu0 0.0
        %1330 = vmatpush1.xpose.msra.mxu0 0.0
        %1331 = vmatprep.subr.mxu0 0.0
        %1332 = vmatpush1.xpose.msra.mxu0 0.0
        %1333 = vmatprep.subr.mxu0 0.0
        %1334 = vmatpush1.xpose.msra.mxu0 0.0
        %1335 = vmatprep.subr.mxu0 0.0
        %1336 = vmatpush1.xpose.msra.mxu0 0.0
        %1337 = vmatprep.subr.mxu0 0.0
        %1338 = vmatpush1.xpose.msra.mxu0 0.0
        %1339 = vmatprep.subr.mxu0 0.0
        %1340 = vmatpush1.xpose.msra.mxu0 0.0
        %1341 = vmatprep.subr.mxu0 0.0
        %1342 = vmatpush1.xpose.msra.mxu0 0.0
        %1343 = vmatprep.subr.mxu0 0.0
        %1344 = vmatpush1.xpose.msra.mxu0 0.0
        %1345 = vmatprep.subr.mxu0 0.0
        %1346 = vmatpush1.xpose.msra.mxu0 %v1315
        %1347 = vmatprep.subr.mxu0 0.0
        %1348 = vmatpush1.xpose.msra.mxu0 %v1312
        %1349 = vmatprep.subr.mxu0 0.0
        %1350 = vmatpush2.xpose.msra.mxu0 0.0
        %1351 = vmatprep.subr.mxu0 0.0
        %1352 = vmatpush2.xpose.msra.mxu0 0.0
        %1353 = vmatprep.subr.mxu0 0.0
        %1354 = vmatpush2.xpose.msra.mxu0 0.0
        %1355 = vmatprep.subr.mxu0 0.0
        %1356 = vmatpush2.xpose.msra.mxu0 0.0
        %1357 = vmatprep.subr.mxu0 0.0
        %1358 = vmatpush2.xpose.msra.mxu0 0.0
        %1359 = vmatprep.subr.mxu0 0.0
        %1360 = vmatpush2.xpose.msra.mxu0 0.0
        %1361 = vmatprep.subr.mxu0 0.0
        %1362 = vmatpush2.xpose.msra.mxu0 0.0
        %1363 = vmatprep.subr.mxu0 0.0
        %1364 = vmatpush2.xpose.msra.mxu0 0.0
        %1365 = vmatprep.subr.mxu0 0.0
        %1366 = vmatpush2.xpose.msra.mxu0 0.0
        %1367 = vmatprep.subr.mxu0 0.0
        %1368 = vmatpush2.xpose.msra.mxu0 0.0
        %1369 = vmatprep.subr.mxu0 0.0
        %1370 = vmatpush2.xpose.msra.mxu0 0.0
        %1371 = vmatprep.subr.mxu0 0.0
        %1372 = vmatpush2.xpose.msra.mxu0 0.0
        %1373 = vmatprep.subr.mxu0 0.0
        %1374 = vmatpush2.xpose.msra.mxu0 0.0
        %1375 = vmatprep.subr.mxu0 0.0
        %1376 = vmatpush2.xpose.msra.mxu0 0.0
        %1377 = vmatprep.subr.mxu0 0.0
        %1378 = vmatpush2.xpose.msra.mxu0 0.0
        %1379 = vmatprep.subr.mxu0 0.0
        %1380 = vmatpush2.xpose.msra.mxu0 0.0
        %1381 = vmatprep.mubr.f32.mxu0 0.0
        %1382 = vmatmul.mubr.f32.gmra.mxu0 %v1309
        %v1383 = vpop.f32.mrf.mxu0
        %v1384 = vadd.f32 0.0, %v1383
        %v1385 = vpop.f32.mrf.mxu0
        %1386 = vdwg.mxu0
        %vm1387 = vcmp.gt.f32.partialorder %v1037, 0.0
        %v1388 = vsel %vm1387, -1e+09, %v1384
        %vm1389 = vcmask 130048
        %v1390 = vsel %vm1389, %v1388, -inf
        %1391 = vmax.xlane.f32.xlu0 %v1390
        %v1392 = vpop.xlane.xlu0 %1391
        %v1393 = vsub.f32 %v1388, %v1392
        %v1394 = vmul.f32 %v1393, 1.442695
        %v1395 = vpow.pop %v1394
        %v1396 = vsel %vm1389, %v1395, 0.0
        %1397 = vadd.xlane.f32.xlu0 %v1396
        %v1398 = vpop.xlane.xlu0 %1397
        %v1399 = vrcp.pop %v1398
        %v1400 = vmul.f32 %v1395, %v1399
        %v1402 = vsel %vm1389, %v1400, 0
        %1404 = vmatprep.subr.mxu0 0.0
        %1405 = vmatpush1.msra.mxu0 0.0
        %1406 = vmatprep.subr.mxu0 0.0
        %1407 = vmatpush1.msra.mxu0 0.0
        %1408 = vmatprep.subr.mxu0 0.0
        %1409 = vmatpush1.msra.mxu0 0.0
        %1410 = vmatprep.subr.mxu0 0.0
        %1411 = vmatpush1.msra.mxu0 0.0
        %1412 = vmatprep.subr.mxu0 0.0
        %1413 = vmatpush1.msra.mxu0 0.0
        %1414 = vmatprep.subr.mxu0 0.0
        %1415 = vmatpush1.msra.mxu0 0.0
        %1416 = vmatprep.subr.mxu0 0.0
        %1417 = vmatpush1.msra.mxu0 0.0
        %1418 = vmatprep.subr.mxu0 0.0
        %1419 = vmatpush1.msra.mxu0 0.0
        %1420 = vmatprep.subr.mxu0 0.0
        %1421 = vmatpush1.msra.mxu0 0.0
        %1422 = vmatprep.subr.mxu0 0.0
        %1423 = vmatpush1.msra.mxu0 0.0
        %1424 = vmatprep.subr.mxu0 0.0
        %1425 = vmatpush1.msra.mxu0 0.0
        %1426 = vmatprep.subr.mxu0 0.0
        %1427 = vmatpush1.msra.mxu0 0.0
        %1428 = vmatprep.subr.mxu0 0.0
        %1429 = vmatpush1.msra.mxu0 0.0
        %1430 = vmatprep.subr.mxu0 0.0
        %1431 = vmatpush1.msra.mxu0 0.0
        %1432 = vmatprep.subr.mxu0 0.0
        %1433 = vmatpush1.msra.mxu0 %v1304
        %1434 = vmatprep.subr.mxu0 0.0
        %1435 = vmatpush1.msra.mxu0 %v1299
        %1436 = vmatprep.subr.mxu0 0.0
        %1437 = vmatpush2.msra.mxu0 0.0
        %1438 = vmatprep.subr.mxu0 0.0
        %1439 = vmatpush2.msra.mxu0 0.0
        %1440 = vmatprep.subr.mxu0 0.0
        %1441 = vmatpush2.msra.mxu0 0.0
        %1442 = vmatprep.subr.mxu0 0.0
        %1443 = vmatpush2.msra.mxu0 0.0
        %1444 = vmatprep.subr.mxu0 0.0
        %1445 = vmatpush2.msra.mxu0 0.0
        %1446 = vmatprep.subr.mxu0 0.0
        %1447 = vmatpush2.msra.mxu0 0.0
        %1448 = vmatprep.subr.mxu0 0.0
        %1449 = vmatpush2.msra.mxu0 0.0
        %1450 = vmatprep.subr.mxu0 0.0
        %1451 = vmatpush2.msra.mxu0 0.0
        %1452 = vmatprep.subr.mxu0 0.0
        %1453 = vmatpush2.msra.mxu0 0.0
        %1454 = vmatprep.subr.mxu0 0.0
        %1455 = vmatpush2.msra.mxu0 0.0
        %1456 = vmatprep.subr.mxu0 0.0
        %1457 = vmatpush2.msra.mxu0 0.0
        %1458 = vmatprep.subr.mxu0 0.0
        %1459 = vmatpush2.msra.mxu0 0.0
        %1460 = vmatprep.subr.mxu0 0.0
        %1461 = vmatpush2.msra.mxu0 0.0
        %1462 = vmatprep.subr.mxu0 0.0
        %1463 = vmatpush2.msra.mxu0 0.0
        %1464 = vmatprep.subr.mxu0 0.0
        %1465 = vmatpush2.msra.mxu0 0.0
        %1466 = vmatprep.subr.mxu0 0.0
        %1467 = vmatpush2.msra.mxu0 0.0
        %1468 = vmatprep.mubr.f32.mxu0 0.0
        %1469 = vmatmul.mubr.f32.gmra.mxu0 %v1402
        %v1470 = vpop.f32.mrf.mxu0
        %v1471 = vadd.f32 0.0, %v1470
        %v1472 = vpop.f32.mrf.mxu0
        %1473 = vdwg.mxu0
        %1474 = vrot.lane.b32.xlu0 %v1138, 120
        %v1475 = vpop.permute.xlu0 %1474
        %1476 = vrot.lane.b32.xlu0 %v1218, 120
        %v1477 = vpop.permute.xlu0 %1476
        %1478 = vrot.lane.b32.xlu0 %v1223, 120
        %v1479 = vpop.permute.xlu0 %1478
        %v1480 = vsel %vm1307, %v1475, 0
        %v1482 = vsel %vm1307, %v1477, 0
        %v1484 = vsel %vm1307, %v1479, 0
        %1486 = vmatprep.subr.mxu0 0.0
        %1487 = vmatpush1.xpose.msra.mxu0 0.0
        %1488 = vmatprep.subr.mxu0 0.0
        %1489 = vmatpush1.xpose.msra.mxu0 0.0
        %1490 = vmatprep.subr.mxu0 0.0
        %1491 = vmatpush1.xpose.msra.mxu0 0.0
        %1492 = vmatprep.subr.mxu0 0.0
        %1493 = vmatpush1.xpose.msra.mxu0 0.0
        %1494 = vmatprep.subr.mxu0 0.0
        %1495 = vmatpush1.xpose.msra.mxu0 0.0
        %1496 = vmatprep.subr.mxu0 0.0
        %1497 = vmatpush1.xpose.msra.mxu0 0.0
        %1498 = vmatprep.subr.mxu0 0.0
        %1499 = vmatpush1.xpose.msra.mxu0 0.0
        %1500 = vmatprep.subr.mxu0 0.0
        %1501 = vmatpush1.xpose.msra.mxu0 0.0
        %1502 = vmatprep.subr.mxu0 0.0
        %1503 = vmatpush1.xpose.msra.mxu0 0.0
        %1504 = vmatprep.subr.mxu0 0.0
        %1505 = vmatpush1.xpose.msra.mxu0 0.0
        %1506 = vmatprep.subr.mxu0 0.0
        %1507 = vmatpush1.xpose.msra.mxu0 0.0
        %1508 = vmatprep.subr.mxu0 0.0
        %1509 = vmatpush1.xpose.msra.mxu0 0.0
        %1510 = vmatprep.subr.mxu0 0.0
        %1511 = vmatpush1.xpose.msra.mxu0 0.0
        %1512 = vmatprep.subr.mxu0 0.0
        %1513 = vmatpush1.xpose.msra.mxu0 0.0
        %1514 = vmatprep.subr.mxu0 0.0
        %1515 = vmatpush1.xpose.msra.mxu0 %v1484
        %1516 = vmatprep.subr.mxu0 0.0
        %1517 = vmatpush1.xpose.msra.mxu0 %v1482
        %1518 = vmatprep.subr.mxu0 0.0
        %1519 = vmatpush2.xpose.msra.mxu0 0.0
        %1520 = vmatprep.subr.mxu0 0.0
        %1521 = vmatpush2.xpose.msra.mxu0 0.0
        %1522 = vmatprep.subr.mxu0 0.0
        %1523 = vmatpush2.xpose.msra.mxu0 0.0
        %1524 = vmatprep.subr.mxu0 0.0
        %1525 = vmatpush2.xpose.msra.mxu0 0.0
        %1526 = vmatprep.subr.mxu0 0.0
        %1527 = vmatpush2.xpose.msra.mxu0 0.0
        %1528 = vmatprep.subr.mxu0 0.0
        %1529 = vmatpush2.xpose.msra.mxu0 0.0
        %1530 = vmatprep.subr.mxu0 0.0
        %1531 = vmatpush2.xpose.msra.mxu0 0.0
        %1532 = vmatprep.subr.mxu0 0.0
        %1533 = vmatpush2.xpose.msra.mxu0 0.0
        %1534 = vmatprep.subr.mxu0 0.0
        %1535 = vmatpush2.xpose.msra.mxu0 0.0
        %1536 = vmatprep.subr.mxu0 0.0
        %1537 = vmatpush2.xpose.msra.mxu0 0.0
        %1538 = vmatprep.subr.mxu0 0.0
        %1539 = vmatpush2.xpose.msra.mxu0 0.0
        %1540 = vmatprep.subr.mxu0 0.0
        %1541 = vmatpush2.xpose.msra.mxu0 0.0
        %1542 = vmatprep.subr.mxu0 0.0
        %1543 = vmatpush2.xpose.msra.mxu0 0.0
        %1544 = vmatprep.subr.mxu0 0.0
        %1545 = vmatpush2.xpose.msra.mxu0 0.0
        %1546 = vmatprep.subr.mxu0 0.0
        %1547 = vmatpush2.xpose.msra.mxu0 0.0
        %1548 = vmatprep.subr.mxu0 0.0
        %1549 = vmatpush2.xpose.msra.mxu0 0.0
        %1550 = vmatprep.mubr.f32.mxu0 0.0
        %1551 = vmatmul.mubr.f32.gmra.mxu0 %v1480
        %v1552 = vpop.f32.mrf.mxu0
        %v1553 = vadd.f32 0.0, %v1552
        %v1554 = vpop.f32.mrf.mxu0
        %1555 = vdwg.mxu0
        %v1556 = vsel %vm1387, -1e+09, %v1553
        %v1557 = vsel %vm1389, %v1556, -inf
        %1558 = vmax.xlane.f32.xlu0 %v1557
        %v1559 = vpop.xlane.xlu0 %1558
        %v1560 = vsub.f32 %v1556, %v1559
        %v1561 = vmul.f32 %v1560, 1.442695
        %v1562 = vpow.pop %v1561
        %v1563 = vsel %vm1389, %v1562, 0.0
        %1564 = vadd.xlane.f32.xlu0 %v1563
        %v1565 = vpop.xlane.xlu0 %1564
        %v1566 = vrcp.pop %v1565
        %v1567 = vmul.f32 %v1562, %v1566
        %1570 = vrot.lane.b32.xlu0 %v1299, 120
        %v1571 = vpop.permute.xlu0 %1570
        %1572 = vrot.lane.b32.xlu0 %v1304, 120
        %v1573 = vpop.permute.xlu0 %1572
        %v1577 = vsel %vm1389, %v1567, 0
        %1579 = vmatprep.subr.mxu0 0.0
        %1580 = vmatpush1.msra.mxu0 0.0
        %1581 = vmatprep.subr.mxu0 0.0
        %1582 = vmatpush1.msra.mxu0 0.0
        %1583 = vmatprep.subr.mxu0 0.0
        %1584 = vmatpush1.msra.mxu0 0.0
        %1585 = vmatprep.subr.mxu0 0.0
        %1586 = vmatpush1.msra.mxu0 0.0
        %1587 = vmatprep.subr.mxu0 0.0
        %1588 = vmatpush1.msra.mxu0 0.0
        %1589 = vmatprep.subr.mxu0 0.0
        %1590 = vmatpush1.msra.mxu0 0.0
        %1591 = vmatprep.subr.mxu0 0.0
        %1592 = vmatpush1.msra.mxu0 0.0
        %1593 = vmatprep.subr.mxu0 0.0
        %1594 = vmatpush1.msra.mxu0 0.0
        %1595 = vmatprep.subr.mxu0 0.0
        %1596 = vmatpush1.msra.mxu0 0.0
        %1597 = vmatprep.subr.mxu0 0.0
        %1598 = vmatpush1.msra.mxu0 0.0
        %1599 = vmatprep.subr.mxu0 0.0
        %1600 = vmatpush1.msra.mxu0 0.0
        %1601 = vmatprep.subr.mxu0 0.0
        %1602 = vmatpush1.msra.mxu0 0.0
        %1603 = vmatprep.subr.mxu0 0.0
        %1604 = vmatpush1.msra.mxu0 0.0
        %1605 = vmatprep.subr.mxu0 0.0
        %1606 = vmatpush1.msra.mxu0 0.0
        %1607 = vmatprep.subr.mxu0 0.0
        %1608 = vmatpush1.msra.mxu0 %v1573
        %1609 = vmatprep.subr.mxu0 0.0
        %1610 = vmatpush1.msra.mxu0 %v1571
        %1611 = vmatprep.subr.mxu0 0.0
        %1612 = vmatpush2.msra.mxu0 0.0
        %1613 = vmatprep.subr.mxu0 0.0
        %1614 = vmatpush2.msra.mxu0 0.0
        %1615 = vmatprep.subr.mxu0 0.0
        %1616 = vmatpush2.msra.mxu0 0.0
        %1617 = vmatprep.subr.mxu0 0.0
        %1618 = vmatpush2.msra.mxu0 0.0
        %1619 = vmatprep.subr.mxu0 0.0
        %1620 = vmatpush2.msra.mxu0 0.0
        %1621 = vmatprep.subr.mxu0 0.0
        %1622 = vmatpush2.msra.mxu0 0.0
        %1623 = vmatprep.subr.mxu0 0.0
        %1624 = vmatpush2.msra.mxu0 0.0
        %1625 = vmatprep.subr.mxu0 0.0
        %1626 = vmatpush2.msra.mxu0 0.0
        %1627 = vmatprep.subr.mxu0 0.0
        %1628 = vmatpush2.msra.mxu0 0.0
        %1629 = vmatprep.subr.mxu0 0.0
        %1630 = vmatpush2.msra.mxu0 0.0
        %1631 = vmatprep.subr.mxu0 0.0
        %1632 = vmatpush2.msra.mxu0 0.0
        %1633 = vmatprep.subr.mxu0 0.0
        %1634 = vmatpush2.msra.mxu0 0.0
        %1635 = vmatprep.subr.mxu0 0.0
        %1636 = vmatpush2.msra.mxu0 0.0
        %1637 = vmatprep.subr.mxu0 0.0
        %1638 = vmatpush2.msra.mxu0 0.0
        %1639 = vmatprep.subr.mxu0 0.0
        %1640 = vmatpush2.msra.mxu0 0.0
        %1641 = vmatprep.subr.mxu0 0.0
        %1642 = vmatpush2.msra.mxu0 0.0
        %1643 = vmatprep.mubr.f32.mxu0 0.0
        %1644 = vmatmul.mubr.f32.gmra.mxu0 %v1577
        %v1645 = vpop.f32.mrf.mxu0
        %v1646 = vadd.f32 0.0, %v1645
        %v1647 = vpop.f32.mrf.mxu0
        %1648 = vdwg.mxu0
        %1649 = vrot.lane.b32.xlu0 %v1138, 112
        %v1650 = vpop.permute.xlu0 %1649
        %1651 = vrot.lane.b32.xlu0 %v1218, 112
        %v1652 = vpop.permute.xlu0 %1651
        %1653 = vrot.lane.b32.xlu0 %v1223, 112
        %v1654 = vpop.permute.xlu0 %1653
        %v1655 = vsel %vm1307, %v1650, 0
        %v1657 = vsel %vm1307, %v1652, 0
        %v1659 = vsel %vm1307, %v1654, 0
        %1661 = vmatprep.subr.mxu0 0.0
        %1662 = vmatpush1.xpose.msra.mxu0 0.0
        %1663 = vmatprep.subr.mxu0 0.0
        %1664 = vmatpush1.xpose.msra.mxu0 0.0
        %1665 = vmatprep.subr.mxu0 0.0
        %1666 = vmatpush1.xpose.msra.mxu0 0.0
        %1667 = vmatprep.subr.mxu0 0.0
        %1668 = vmatpush1.xpose.msra.mxu0 0.0
        %1669 = vmatprep.subr.mxu0 0.0
        %1670 = vmatpush1.xpose.msra.mxu0 0.0
        %1671 = vmatprep.subr.mxu0 0.0
        %1672 = vmatpush1.xpose.msra.mxu0 0.0
        %1673 = vmatprep.subr.mxu0 0.0
        %1674 = vmatpush1.xpose.msra.mxu0 0.0
        %1675 = vmatprep.subr.mxu0 0.0
        %1676 = vmatpush1.xpose.msra.mxu0 0.0
        %1677 = vmatprep.subr.mxu0 0.0
        %1678 = vmatpush1.xpose.msra.mxu0 0.0
        %1679 = vmatprep.subr.mxu0 0.0
        %1680 = vmatpush1.xpose.msra.mxu0 0.0
        %1681 = vmatprep.subr.mxu0 0.0
        %1682 = vmatpush1.xpose.msra.mxu0 0.0
        %1683 = vmatprep.subr.mxu0 0.0
        %1684 = vmatpush1.xpose.msra.mxu0 0.0
        %1685 = vmatprep.subr.mxu0 0.0
        %1686 = vmatpush1.xpose.msra.mxu0 0.0
        %1687 = vmatprep.subr.mxu0 0.0
        %1688 = vmatpush1.xpose.msra.mxu0 0.0
        %1689 = vmatprep.subr.mxu0 0.0
        %1690 = vmatpush1.xpose.msra.mxu0 %v1659
        %1691 = vmatprep.subr.mxu0 0.0
        %1692 = vmatpush1.xpose.msra.mxu0 %v1657
        %1693 = vmatprep.subr.mxu0 0.0
        %1694 = vmatpush2.xpose.msra.mxu0 0.0
        %1695 = vmatprep.subr.mxu0 0.0
        %1696 = vmatpush2.xpose.msra.mxu0 0.0
        %1697 = vmatprep.subr.mxu0 0.0
        %1698 = vmatpush2.xpose.msra.mxu0 0.0
        %1699 = vmatprep.subr.mxu0 0.0
        %1700 = vmatpush2.xpose.msra.mxu0 0.0
        %1701 = vmatprep.subr.mxu0 0.0
        %1702 = vmatpush2.xpose.msra.mxu0 0.0
        %1703 = vmatprep.subr.mxu0 0.0
        %1704 = vmatpush2.xpose.msra.mxu0 0.0
        %1705 = vmatprep.subr.mxu0 0.0
        %1706 = vmatpush2.xpose.msra.mxu0 0.0
        %1707 = vmatprep.subr.mxu0 0.0
        %1708 = vmatpush2.xpose.msra.mxu0 0.0
        %1709 = vmatprep.subr.mxu0 0.0
        %1710 = vmatpush2.xpose.msra.mxu0 0.0
        %1711 = vmatprep.subr.mxu0 0.0
        %1712 = vmatpush2.xpose.msra.mxu0 0.0
        %1713 = vmatprep.subr.mxu0 0.0
        %1714 = vmatpush2.xpose.msra.mxu0 0.0
        %1715 = vmatprep.subr.mxu0 0.0
        %1716 = vmatpush2.xpose.msra.mxu0 0.0
        %1717 = vmatprep.subr.mxu0 0.0
        %1718 = vmatpush2.xpose.msra.mxu0 0.0
        %1719 = vmatprep.subr.mxu0 0.0
        %1720 = vmatpush2.xpose.msra.mxu0 0.0
        %1721 = vmatprep.subr.mxu0 0.0
        %1722 = vmatpush2.xpose.msra.mxu0 0.0
        %1723 = vmatprep.subr.mxu0 0.0
        %1724 = vmatpush2.xpose.msra.mxu0 0.0
        %1725 = vmatprep.mubr.f32.mxu0 0.0
        %1726 = vmatmul.mubr.f32.gmra.mxu0 %v1655
        %v1727 = vpop.f32.mrf.mxu0
        %v1728 = vadd.f32 0.0, %v1727
        %v1729 = vpop.f32.mrf.mxu0
        %1730 = vdwg.mxu0
        %v1731 = vsel %vm1387, -1e+09, %v1728
        %v1732 = vsel %vm1389, %v1731, -inf
        %1733 = vmax.xlane.f32.xlu0 %v1732
        %v1734 = vpop.xlane.xlu0 %1733
        %v1735 = vsub.f32 %v1731, %v1734
        %v1736 = vmul.f32 %v1735, 1.442695
        %v1737 = vpow.pop %v1736
        %v1738 = vsel %vm1389, %v1737, 0.0
        %1739 = vadd.xlane.f32.xlu0 %v1738
        %v1740 = vpop.xlane.xlu0 %1739
        %v1741 = vrcp.pop %v1740
        %v1742 = vmul.f32 %v1737, %v1741
        %1743 = vrot.lane.b32.xlu0 %v1299, 112
        %v1744 = vpop.permute.xlu0 %1743
        %1745 = vrot.lane.b32.xlu0 %v1304, 112
        %v1746 = vpop.permute.xlu0 %1745
        %v1750 = vsel %vm1389, %v1742, 0
        %1752 = vmatprep.subr.mxu0 0.0
        %1753 = vmatpush1.msra.mxu0 0.0
        %1754 = vmatprep.subr.mxu0 0.0
        %1755 = vmatpush1.msra.mxu0 0.0
        %1756 = vmatprep.subr.mxu0 0.0
        %1757 = vmatpush1.msra.mxu0 0.0
        %1758 = vmatprep.subr.mxu0 0.0
        %1759 = vmatpush1.msra.mxu0 0.0
        %1760 = vmatprep.subr.mxu0 0.0
        %1761 = vmatpush1.msra.mxu0 0.0
        %1762 = vmatprep.subr.mxu0 0.0
        %1763 = vmatpush1.msra.mxu0 0.0
        %1764 = vmatprep.subr.mxu0 0.0
        %1765 = vmatpush1.msra.mxu0 0.0
        %1766 = vmatprep.subr.mxu0 0.0
        %1767 = vmatpush1.msra.mxu0 0.0
        %1768 = vmatprep.subr.mxu0 0.0
        %1769 = vmatpush1.msra.mxu0 0.0
        %1770 = vmatprep.subr.mxu0 0.0
        %1771 = vmatpush1.msra.mxu0 0.0
        %1772 = vmatprep.subr.mxu0 0.0
        %1773 = vmatpush1.msra.mxu0 0.0
        %1774 = vmatprep.subr.mxu0 0.0
        %1775 = vmatpush1.msra.mxu0 0.0
        %1776 = vmatprep.subr.mxu0 0.0
        %1777 = vmatpush1.msra.mxu0 0.0
        %1778 = vmatprep.subr.mxu0 0.0
        %1779 = vmatpush1.msra.mxu0 0.0
        %1780 = vmatprep.subr.mxu0 0.0
        %1781 = vmatpush1.msra.mxu0 %v1746
        %1782 = vmatprep.subr.mxu0 0.0
        %1783 = vmatpush1.msra.mxu0 %v1744
        %1784 = vmatprep.subr.mxu0 0.0
        %1785 = vmatpush2.msra.mxu0 0.0
        %1786 = vmatprep.subr.mxu0 0.0
        %1787 = vmatpush2.msra.mxu0 0.0
        %1788 = vmatprep.subr.mxu0 0.0
        %1789 = vmatpush2.msra.mxu0 0.0
        %1790 = vmatprep.subr.mxu0 0.0
        %1791 = vmatpush2.msra.mxu0 0.0
        %1792 = vmatprep.subr.mxu0 0.0
        %1793 = vmatpush2.msra.mxu0 0.0
        %1794 = vmatprep.subr.mxu0 0.0
        %1795 = vmatpush2.msra.mxu0 0.0
        %1796 = vmatprep.subr.mxu0 0.0
        %1797 = vmatpush2.msra.mxu0 0.0
        %1798 = vmatprep.subr.mxu0 0.0
        %1799 = vmatpush2.msra.mxu0 0.0
        %1800 = vmatprep.subr.mxu0 0.0
        %1801 = vmatpush2.msra.mxu0 0.0
        %1802 = vmatprep.subr.mxu0 0.0
        %1803 = vmatpush2.msra.mxu0 0.0
        %1804 = vmatprep.subr.mxu0 0.0
        %1805 = vmatpush2.msra.mxu0 0.0
        %1806 = vmatprep.subr.mxu0 0.0
        %1807 = vmatpush2.msra.mxu0 0.0
        %1808 = vmatprep.subr.mxu0 0.0
        %1809 = vmatpush2.msra.mxu0 0.0
        %1810 = vmatprep.subr.mxu0 0.0
        %1811 = vmatpush2.msra.mxu0 0.0
        %1812 = vmatprep.subr.mxu0 0.0
        %1813 = vmatpush2.msra.mxu0 0.0
        %1814 = vmatprep.subr.mxu0 0.0
        %1815 = vmatpush2.msra.mxu0 0.0
        %1816 = vmatprep.mubr.f32.mxu0 0.0
        %1817 = vmatmul.mubr.f32.gmra.mxu0 %v1750
        %v1818 = vpop.f32.mrf.mxu0
        %v1819 = vadd.f32 0.0, %v1818
        %v1820 = vpop.f32.mrf.mxu0
        %1821 = vdwg.mxu0
        %1822 = vrot.lane.b32.xlu0 %v1138, 104
        %v1823 = vpop.permute.xlu0 %1822
        %1824 = vrot.lane.b32.xlu0 %v1218, 104
        %v1825 = vpop.permute.xlu0 %1824
        %1826 = vrot.lane.b32.xlu0 %v1223, 104
        %v1827 = vpop.permute.xlu0 %1826
        %v1828 = vsel %vm1307, %v1823, 0
        %v1830 = vsel %vm1307, %v1825, 0
        %v1832 = vsel %vm1307, %v1827, 0
        %1834 = vmatprep.subr.mxu0 0.0
        %1835 = vmatpush1.xpose.msra.mxu0 0.0
        %1836 = vmatprep.subr.mxu0 0.0
        %1837 = vmatpush1.xpose.msra.mxu0 0.0
        %1838 = vmatprep.subr.mxu0 0.0
        %1839 = vmatpush1.xpose.msra.mxu0 0.0
        %1840 = vmatprep.subr.mxu0 0.0
        %1841 = vmatpush1.xpose.msra.mxu0 0.0
        %1842 = vmatprep.subr.mxu0 0.0
        %1843 = vmatpush1.xpose.msra.mxu0 0.0
        %1844 = vmatprep.subr.mxu0 0.0
        %1845 = vmatpush1.xpose.msra.mxu0 0.0
        %1846 = vmatprep.subr.mxu0 0.0
        %1847 = vmatpush1.xpose.msra.mxu0 0.0
        %1848 = vmatprep.subr.mxu0 0.0
        %1849 = vmatpush1.xpose.msra.mxu0 0.0
        %1850 = vmatprep.subr.mxu0 0.0
        %1851 = vmatpush1.xpose.msra.mxu0 0.0
        %1852 = vmatprep.subr.mxu0 0.0
        %1853 = vmatpush1.xpose.msra.mxu0 0.0
        %1854 = vmatprep.subr.mxu0 0.0
        %1855 = vmatpush1.xpose.msra.mxu0 0.0
        %1856 = vmatprep.subr.mxu0 0.0
        %1857 = vmatpush1.xpose.msra.mxu0 0.0
        %1858 = vmatprep.subr.mxu0 0.0
        %1859 = vmatpush1.xpose.msra.mxu0 0.0
        %1860 = vmatprep.subr.mxu0 0.0
        %1861 = vmatpush1.xpose.msra.mxu0 0.0
        %1862 = vmatprep.subr.mxu0 0.0
        %1863 = vmatpush1.xpose.msra.mxu0 %v1832
        %1864 = vmatprep.subr.mxu0 0.0
        %1865 = vmatpush1.xpose.msra.mxu0 %v1830
        %1866 = vmatprep.subr.mxu0 0.0
        %1867 = vmatpush2.xpose.msra.mxu0 0.0
        %1868 = vmatprep.subr.mxu0 0.0
        %1869 = vmatpush2.xpose.msra.mxu0 0.0
        %1870 = vmatprep.subr.mxu0 0.0
        %1871 = vmatpush2.xpose.msra.mxu0 0.0
        %1872 = vmatprep.subr.mxu0 0.0
        %1873 = vmatpush2.xpose.msra.mxu0 0.0
        %1874 = vmatprep.subr.mxu0 0.0
        %1875 = vmatpush2.xpose.msra.mxu0 0.0
        %1876 = vmatprep.subr.mxu0 0.0
        %1877 = vmatpush2.xpose.msra.mxu0 0.0
        %1878 = vmatprep.subr.mxu0 0.0
        %1879 = vmatpush2.xpose.msra.mxu0 0.0
        %1880 = vmatprep.subr.mxu0 0.0
        %1881 = vmatpush2.xpose.msra.mxu0 0.0
        %1882 = vmatprep.subr.mxu0 0.0
        %1883 = vmatpush2.xpose.msra.mxu0 0.0
        %1884 = vmatprep.subr.mxu0 0.0
        %1885 = vmatpush2.xpose.msra.mxu0 0.0
        %1886 = vmatprep.subr.mxu0 0.0
        %1887 = vmatpush2.xpose.msra.mxu0 0.0
        %1888 = vmatprep.subr.mxu0 0.0
        %1889 = vmatpush2.xpose.msra.mxu0 0.0
        %1890 = vmatprep.subr.mxu0 0.0
        %1891 = vmatpush2.xpose.msra.mxu0 0.0
        %1892 = vmatprep.subr.mxu0 0.0
        %1893 = vmatpush2.xpose.msra.mxu0 0.0
        %1894 = vmatprep.subr.mxu0 0.0
        %1895 = vmatpush2.xpose.msra.mxu0 0.0
        %1896 = vmatprep.subr.mxu0 0.0
        %1897 = vmatpush2.xpose.msra.mxu0 0.0
        %1898 = vmatprep.mubr.f32.mxu0 0.0
        %1899 = vmatmul.mubr.f32.gmra.mxu0 %v1828
        %v1900 = vpop.f32.mrf.mxu0
        %v1901 = vadd.f32 0.0, %v1900
        %v1902 = vpop.f32.mrf.mxu0
        %1903 = vdwg.mxu0
        %v1904 = vsel %vm1387, -1e+09, %v1901
        %v1905 = vsel %vm1389, %v1904, -inf
        %1906 = vmax.xlane.f32.xlu0 %v1905
        %v1907 = vpop.xlane.xlu0 %1906
        %v1908 = vsub.f32 %v1904, %v1907
        %v1909 = vmul.f32 %v1908, 1.442695
        %v1910 = vpow.pop %v1909
        %v1911 = vsel %vm1389, %v1910, 0.0
        %1912 = vadd.xlane.f32.xlu0 %v1911
        %v1913 = vpop.xlane.xlu0 %1912
        %v1914 = vrcp.pop %v1913
        %v1915 = vmul.f32 %v1910, %v1914
        %1916 = vrot.lane.b32.xlu0 %v1299, 104
        %v1917 = vpop.permute.xlu0 %1916
        %1918 = vrot.lane.b32.xlu0 %v1304, 104
        %v1919 = vpop.permute.xlu0 %1918
        %v1923 = vsel %vm1389, %v1915, 0
        %1925 = vmatprep.subr.mxu0 0.0
        %1926 = vmatpush1.msra.mxu0 0.0
        %1927 = vmatprep.subr.mxu0 0.0
        %1928 = vmatpush1.msra.mxu0 0.0
        %1929 = vmatprep.subr.mxu0 0.0
        %1930 = vmatpush1.msra.mxu0 0.0
        %1931 = vmatprep.subr.mxu0 0.0
        %1932 = vmatpush1.msra.mxu0 0.0
        %1933 = vmatprep.subr.mxu0 0.0
        %1934 = vmatpush1.msra.mxu0 0.0
        %1935 = vmatprep.subr.mxu0 0.0
        %1936 = vmatpush1.msra.mxu0 0.0
        %1937 = vmatprep.subr.mxu0 0.0
        %1938 = vmatpush1.msra.mxu0 0.0
        %1939 = vmatprep.subr.mxu0 0.0
        %1940 = vmatpush1.msra.mxu0 0.0
        %1941 = vmatprep.subr.mxu0 0.0
        %1942 = vmatpush1.msra.mxu0 0.0
        %1943 = vmatprep.subr.mxu0 0.0
        %1944 = vmatpush1.msra.mxu0 0.0
        %1945 = vmatprep.subr.mxu0 0.0
        %1946 = vmatpush1.msra.mxu0 0.0
        %1947 = vmatprep.subr.mxu0 0.0
        %1948 = vmatpush1.msra.mxu0 0.0
        %1949 = vmatprep.subr.mxu0 0.0
        %1950 = vmatpush1.msra.mxu0 0.0
        %1951 = vmatprep.subr.mxu0 0.0
        %1952 = vmatpush1.msra.mxu0 0.0
        %1953 = vmatprep.subr.mxu0 0.0
        %1954 = vmatpush1.msra.mxu0 %v1919
        %1955 = vmatprep.subr.mxu0 0.0
        %1956 = vmatpush1.msra.mxu0 %v1917
        %1957 = vmatprep.subr.mxu0 0.0
        %1958 = vmatpush2.msra.mxu0 0.0
        %1959 = vmatprep.subr.mxu0 0.0
        %1960 = vmatpush2.msra.mxu0 0.0
        %1961 = vmatprep.subr.mxu0 0.0
        %1962 = vmatpush2.msra.mxu0 0.0
        %1963 = vmatprep.subr.mxu0 0.0
        %1964 = vmatpush2.msra.mxu0 0.0
        %1965 = vmatprep.subr.mxu0 0.0
        %1966 = vmatpush2.msra.mxu0 0.0
        %1967 = vmatprep.subr.mxu0 0.0
        %1968 = vmatpush2.msra.mxu0 0.0
        %1969 = vmatprep.subr.mxu0 0.0
        %1970 = vmatpush2.msra.mxu0 0.0
        %1971 = vmatprep.subr.mxu0 0.0
        %1972 = vmatpush2.msra.mxu0 0.0
        %1973 = vmatprep.subr.mxu0 0.0
        %1974 = vmatpush2.msra.mxu0 0.0
        %1975 = vmatprep.subr.mxu0 0.0
        %1976 = vmatpush2.msra.mxu0 0.0
        %1977 = vmatprep.subr.mxu0 0.0
        %1978 = vmatpush2.msra.mxu0 0.0
        %1979 = vmatprep.subr.mxu0 0.0
        %1980 = vmatpush2.msra.mxu0 0.0
        %1981 = vmatprep.subr.mxu0 0.0
        %1982 = vmatpush2.msra.mxu0 0.0
        %1983 = vmatprep.subr.mxu0 0.0
        %1984 = vmatpush2.msra.mxu0 0.0
        %1985 = vmatprep.subr.mxu0 0.0
        %1986 = vmatpush2.msra.mxu0 0.0
        %1987 = vmatprep.subr.mxu0 0.0
        %1988 = vmatpush2.msra.mxu0 0.0
        %1989 = vmatprep.mubr.f32.mxu0 0.0
        %1990 = vmatmul.mubr.f32.gmra.mxu0 %v1923
        %v1991 = vpop.f32.mrf.mxu0
        %v1992 = vadd.f32 0.0, %v1991
        %v1993 = vpop.f32.mrf.mxu0
        %1994 = vdwg.mxu0
        %1996 = vrot.lane.b32.xlu0 %v1646, 8
        %v1997 = vpop.permute.xlu0 %1996
        %2000 = vrot.lane.b32.xlu0 %v1819, 16
        %v2001 = vpop.permute.xlu0 %2000
        %2004 = vrot.lane.b32.xlu0 %v1992, 24
        %v2005 = vpop.permute.xlu0 %2004
        %v2007 = vsel %vm1307, %v1471, %v1997
        %v2008 = vsel %vm1389, %v2007, %v2001
        %vm2009 = vcmask 195584
        %v2010 = vsel %vm2009, %v2008, %v2005
        %v2012 = vlaneseq
        %v2013 = vshrl.u32 %v2012, 7
        %v2014 = vsub.s32 0, %v2013
        %v2015 = vrot.slane %v1057, %v2014
        %v2018 = vsel %vm1064, %v2010, 0
        %2020 = vmatprep.subr.mxu0 0.0
        %2021 = vmatpush1.msra.mxu0 0.0
        %2022 = vmatprep.subr.mxu0 0.0
        %2023 = vmatpush1.msra.mxu0 0.0
        %2024 = vmatprep.subr.mxu0 0.0
        %2025 = vmatpush1.msra.mxu0 0.0
        %2026 = vmatprep.subr.mxu0 0.0
        %2027 = vmatpush1.msra.mxu0 0.0
        %2028 = vmatprep.subr.mxu0 0.0
        %2029 = vmatpush1.msra.mxu0 0.0
        %2030 = vmatprep.subr.mxu0 0.0
        %2031 = vmatpush1.msra.mxu0 0.0
        %2032 = vmatprep.subr.mxu0 0.0
        %2033 = vmatpush1.msra.mxu0 0.0
        %2034 = vmatprep.subr.mxu0 0.0
        %2035 = vmatpush1.msra.mxu0 0.0
        %2036 = vmatprep.subr.mxu0 0.0
        %2037 = vmatpush1.msra.mxu0 0.0
        %2038 = vmatprep.subr.mxu0 0.0
        %2039 = vmatpush1.msra.mxu0 0.0
        %2040 = vmatprep.subr.mxu0 0.0
        %2041 = vmatpush1.msra.mxu0 0.0
        %2042 = vmatprep.subr.mxu0 0.0
        %2043 = vmatpush1.msra.mxu0 0.0
        %2044 = vmatprep.subr.mxu0 0.0
        %2045 = vmatpush1.msra.mxu0 %v1056
        %2046 = vmatprep.subr.mxu0 0.0
        %2047 = vmatpush1.msra.mxu0 %v1055
        %2048 = vmatprep.subr.mxu0 0.0
        %2049 = vmatpush1.msra.mxu0 %v1054
        %2050 = vmatprep.subr.mxu0 0.0
        %2051 = vmatpush1.msra.mxu0 %v1053
        %2052 = vmatprep.subr.mxu0 0.0
        %2053 = vmatpush2.msra.mxu0 0.0
        %2054 = vmatprep.subr.mxu0 0.0
        %2055 = vmatpush2.msra.mxu0 0.0
        %2056 = vmatprep.subr.mxu0 0.0
        %2057 = vmatpush2.msra.mxu0 0.0
        %2058 = vmatprep.subr.mxu0 0.0
        %2059 = vmatpush2.msra.mxu0 0.0
        %2060 = vmatprep.subr.mxu0 0.0
        %2061 = vmatpush2.msra.mxu0 0.0
        %2062 = vmatprep.subr.mxu0 0.0
        %2063 = vmatpush2.msra.mxu0 0.0
        %2064 = vmatprep.subr.mxu0 0.0
        %2065 = vmatpush2.msra.mxu0 0.0
        %2066 = vmatprep.subr.mxu0 0.0
        %2067 = vmatpush2.msra.mxu0 0.0
        %2068 = vmatprep.subr.mxu0 0.0
        %2069 = vmatpush2.msra.mxu0 0.0
        %2070 = vmatprep.subr.mxu0 0.0
        %2071 = vmatpush2.msra.mxu0 0.0
        %2072 = vmatprep.subr.mxu0 0.0
        %2073 = vmatpush2.msra.mxu0 0.0
        %2074 = vmatprep.subr.mxu0 0.0
        %2075 = vmatpush2.msra.mxu0 0.0
        %2076 = vmatprep.subr.mxu0 0.0
        %2077 = vmatpush2.msra.mxu0 0.0
        %2078 = vmatprep.subr.mxu0 0.0
        %2079 = vmatpush2.msra.mxu0 0.0
        %2080 = vmatprep.subr.mxu0 0.0
        %2081 = vmatpush2.msra.mxu0 0.0
        %2082 = vmatprep.subr.mxu0 0.0
        %2083 = vmatpush2.msra.mxu0 0.0
        %2084 = vmatprep.mubr.f32.mxu0 0.0
        %2085 = vmatmul.mubr.f32.gmra.mxu0 %v2018
        %v2086 = vpop.f32.mrf.mxu0
        %v2087 = vadd.f32 %v2015, %v2086
        %v2088 = vpop.f32.mrf.mxu0
        %2089 = vdwg.mxu0
        %v2090 = vld [vmem:[%s25] sm:$0x1]
        %v2091 = vld [vmem:[%s27] sm:$0x1]
        %v2092 = vadd.f32 %v1032, %v2087
        %v2093 = vsel %vm1064, %v2092, 0.0
        %2094 = vadd.xlane.f32.xlu0 %v2093
        %v2095 = vpop.xlane.xlu0 %2094
        %v2096 = vrcp.pop 32.0
        %v2097 = vmul.f32 %v2095, %v2096
        %v2098 = vsub.f32 %v2092, %v2097
        %v2099 = vmul.f32 %v2098, %v2098
        %v2100 = vsel %vm1064, %v2099, 0.0
        %2101 = vadd.xlane.f32.xlu0 %v2100
        %v2102 = vpop.xlane.xlu0 %2101
        %v2103 = vmul.f32 %v2102, %v2096
        %v2104 = vrsqrt.pop %v2103
        %v2105 = vmul.f32 %v2103, %v2104
        %vm2106 = vcmp.eq.f32.partialorder %v2103, inf
        %v2107 = vsel %vm2106, %v2103, %v2105
        %vm2108 = vcmp.eq.f32.partialorder %v2103, 0.0
        %v2109 = vand.u32 %v2103, 2147483648
        %v2110 = vsel %vm2108, %v2109, %v2107
        %v2112 = vlaneseq
        %v2113 = vshrl.u32 %v2112, 7
        %v2114 = vsub.s32 0, %v2113
        %v2115 = vrot.slane %v2090, %v2114
        %v2117 = vmul.f32 %v2115, %v2098
        %v2118 = vadd.f32 %v2110, 1e-10
        %v2119 = vrcp.pop %v2118
        %v2120 = vmul.f32 %v2117, %v2119
        %v2122 = vlaneseq
        %v2123 = vshrl.u32 %v2122, 7
        %v2124 = vsub.s32 0, %v2123
        %v2125 = vrot.slane %v2091, %v2124
        %v2127 = vadd.f32 %v2120, %v2125
        %v2128 = vld [vmem:[%s29] sm:$0xff]
        %v2129 = vld [vmem:[%s29 + $0x8] sm:$0xff]
        %v2130 = vld [vmem:[%s29 + $0x10] sm:$0xff]
        %v2131 = vld [vmem:[%s29 + $0x18] sm:$0xff]
        %v2132 = vld [vmem:[%s31] sm:$0x1]
        %v2133 = vld [vmem:[%s33] sm:$0xff]
        %v2134 = vld [vmem:[%s33 + $0x8] sm:$0xff]
        %v2135 = vld [vmem:[%s33 + $0x10] sm:$0xff]
        %v2136 = vld [vmem:[%s33 + $0x18] sm:$0xff]
        %v2137 = vld [vmem:[%s35] sm:$0x1]
        %v2138 = vld [vmem:[%s37] sm:$0xff]
        %v2139 = vld [vmem:[%s37 + $0x8] sm:$0xff]
        %v2140 = vld [vmem:[%s37 + $0x10] sm:$0xff]
        %v2141 = vld [vmem:[%s37 + $0x18] sm:$0xff]
        %v2142 = vld [vmem:[%s39] sm:$0x1]
        %v2143 = vld [vmem:[%s41] sm:$0xff]
        %v2144 = vld [vmem:[%s41 + $0x8] sm:$0xff]
        %v2145 = vld [vmem:[%s41 + $0x10] sm:$0xff]
        %v2146 = vld [vmem:[%s41 + $0x18] sm:$0xff]
        %v2147 = vld [vmem:[%s43] sm:$0x1]
        %v2149 = vlaneseq
        %v2150 = vshrl.u32 %v2149, 7
        %v2151 = vsub.s32 0, %v2150
        %v2152 = vrot.slane %v2132, %v2151
        %v2155 = vsel %vm1064, %v2127, 0
        %2157 = vmatprep.subr.mxu0 0.0
        %2158 = vmatpush1.msra.mxu0 0.0
        %2159 = vmatprep.subr.mxu0 0.0
        %2160 = vmatpush1.msra.mxu0 0.0
        %2161 = vmatprep.subr.mxu0 0.0
        %2162 = vmatpush1.msra.mxu0 0.0
        %2163 = vmatprep.subr.mxu0 0.0
        %2164 = vmatpush1.msra.mxu0 0.0
        %2165 = vmatprep.subr.mxu0 0.0
        %2166 = vmatpush1.msra.mxu0 0.0
        %2167 = vmatprep.subr.mxu0 0.0
        %2168 = vmatpush1.msra.mxu0 0.0
        %2169 = vmatprep.subr.mxu0 0.0
        %2170 = vmatpush1.msra.mxu0 0.0
        %2171 = vmatprep.subr.mxu0 0.0
        %2172 = vmatpush1.msra.mxu0 0.0
        %2173 = vmatprep.subr.mxu0 0.0
        %2174 = vmatpush1.msra.mxu0 0.0
        %2175 = vmatprep.subr.mxu0 0.0
        %2176 = vmatpush1.msra.mxu0 0.0
        %2177 = vmatprep.subr.mxu0 0.0
        %2178 = vmatpush1.msra.mxu0 0.0
        %2179 = vmatprep.subr.mxu0 0.0
        %2180 = vmatpush1.msra.mxu0 0.0
        %2181 = vmatprep.subr.mxu0 0.0
        %2182 = vmatpush1.msra.mxu0 %v2131
        %2183 = vmatprep.subr.mxu0 0.0
        %2184 = vmatpush1.msra.mxu0 %v2130
        %2185 = vmatprep.subr.mxu0 0.0
        %2186 = vmatpush1.msra.mxu0 %v2129
        %2187 = vmatprep.subr.mxu0 0.0
        %2188 = vmatpush1.msra.mxu0 %v2128
        %2189 = vmatprep.subr.mxu0 0.0
        %2190 = vmatpush2.msra.mxu0 0.0
        %2191 = vmatprep.subr.mxu0 0.0
        %2192 = vmatpush2.msra.mxu0 0.0
        %2193 = vmatprep.subr.mxu0 0.0
        %2194 = vmatpush2.msra.mxu0 0.0
        %2195 = vmatprep.subr.mxu0 0.0
        %2196 = vmatpush2.msra.mxu0 0.0
        %2197 = vmatprep.subr.mxu0 0.0
        %2198 = vmatpush2.msra.mxu0 0.0
        %2199 = vmatprep.subr.mxu0 0.0
        %2200 = vmatpush2.msra.mxu0 0.0
        %2201 = vmatprep.subr.mxu0 0.0
        %2202 = vmatpush2.msra.mxu0 0.0
        %2203 = vmatprep.subr.mxu0 0.0
        %2204 = vmatpush2.msra.mxu0 0.0
        %2205 = vmatprep.subr.mxu0 0.0
        %2206 = vmatpush2.msra.mxu0 0.0
        %2207 = vmatprep.subr.mxu0 0.0
        %2208 = vmatpush2.msra.mxu0 0.0
        %2209 = vmatprep.subr.mxu0 0.0
        %2210 = vmatpush2.msra.mxu0 0.0
        %2211 = vmatprep.subr.mxu0 0.0
        %2212 = vmatpush2.msra.mxu0 0.0
        %2213 = vmatprep.subr.mxu0 0.0
        %2214 = vmatpush2.msra.mxu0 0.0
        %2215 = vmatprep.subr.mxu0 0.0
        %2216 = vmatpush2.msra.mxu0 0.0
        %2217 = vmatprep.subr.mxu0 0.0
        %2218 = vmatpush2.msra.mxu0 0.0
        %2219 = vmatprep.subr.mxu0 0.0
        %2220 = vmatpush2.msra.mxu0 0.0
        %2221 = vmatprep.mubr.f32.mxu0 0.0
        %2222 = vmatmul.mubr.f32.gmra.mxu0 %v2155
        %v2223 = vpop.f32.mrf.mxu0
        %v2224 = vadd.f32 %v2152, %v2223
        %v2225 = vpop.f32.mrf.mxu0
        %2226 = vdwg.mxu0
        %v2227 = vmul.f32 %v2224, 0.35355338
        %v2229 = vlaneseq
        %v2230 = vshrl.u32 %v2229, 7
        %v2231 = vsub.s32 0, %v2230
        %v2232 = vrot.slane %v2137, %v2231
        %v2235 = vsel %vm1064, %v1035, 0
        %v2238 = vsel %vm1064, %v1036, 0
        %2240 = vmatprep.subr.mxu0 0.0
        %2241 = vmatpush1.msra.mxu0 0.0
        %2242 = vmatprep.subr.mxu0 0.0
        %2243 = vmatpush1.msra.mxu0 0.0
        %2244 = vmatprep.subr.mxu0 0.0
        %2245 = vmatpush1.msra.mxu0 0.0
        %2246 = vmatprep.subr.mxu0 0.0
        %2247 = vmatpush1.msra.mxu0 0.0
        %2248 = vmatprep.subr.mxu0 0.0
        %2249 = vmatpush1.msra.mxu0 0.0
        %2250 = vmatprep.subr.mxu0 0.0
        %2251 = vmatpush1.msra.mxu0 0.0
        %2252 = vmatprep.subr.mxu0 0.0
        %2253 = vmatpush1.msra.mxu0 0.0
        %2254 = vmatprep.subr.mxu0 0.0
        %2255 = vmatpush1.msra.mxu0 0.0
        %2256 = vmatprep.subr.mxu0 0.0
        %2257 = vmatpush1.msra.mxu0 0.0
        %2258 = vmatprep.subr.mxu0 0.0
        %2259 = vmatpush1.msra.mxu0 0.0
        %2260 = vmatprep.subr.mxu0 0.0
        %2261 = vmatpush1.msra.mxu0 0.0
        %2262 = vmatprep.subr.mxu0 0.0
        %2263 = vmatpush1.msra.mxu0 0.0
        %2264 = vmatprep.subr.mxu0 0.0
        %2265 = vmatpush1.msra.mxu0 %v2136
        %2266 = vmatprep.subr.mxu0 0.0
        %2267 = vmatpush1.msra.mxu0 %v2135
        %2268 = vmatprep.subr.mxu0 0.0
        %2269 = vmatpush1.msra.mxu0 %v2134
        %2270 = vmatprep.subr.mxu0 0.0
        %2271 = vmatpush1.msra.mxu0 %v2133
        %2272 = vmatprep.subr.mxu0 0.0
        %2273 = vmatpush2.msra.mxu0 0.0
        %2274 = vmatprep.subr.mxu0 0.0
        %2275 = vmatpush2.msra.mxu0 0.0
        %2276 = vmatprep.subr.mxu0 0.0
        %2277 = vmatpush2.msra.mxu0 0.0
        %2278 = vmatprep.subr.mxu0 0.0
        %2279 = vmatpush2.msra.mxu0 0.0
        %2280 = vmatprep.subr.mxu0 0.0
        %2281 = vmatpush2.msra.mxu0 0.0
        %2282 = vmatprep.subr.mxu0 0.0
        %2283 = vmatpush2.msra.mxu0 0.0
        %2284 = vmatprep.subr.mxu0 0.0
        %2285 = vmatpush2.msra.mxu0 0.0
        %2286 = vmatprep.subr.mxu0 0.0
        %2287 = vmatpush2.msra.mxu0 0.0
        %2288 = vmatprep.subr.mxu0 0.0
        %2289 = vmatpush2.msra.mxu0 0.0
        %2290 = vmatprep.subr.mxu0 0.0
        %2291 = vmatpush2.msra.mxu0 0.0
        %2292 = vmatprep.subr.mxu0 0.0
        %2293 = vmatpush2.msra.mxu0 0.0
        %2294 = vmatprep.subr.mxu0 0.0
        %2295 = vmatpush2.msra.mxu0 0.0
        %2296 = vmatprep.subr.mxu0 0.0
        %2297 = vmatpush2.msra.mxu0 0.0
        %2298 = vmatprep.subr.mxu0 0.0
        %2299 = vmatpush2.msra.mxu0 0.0
        %2300 = vmatprep.subr.mxu0 0.0
        %2301 = vmatpush2.msra.mxu0 0.0
        %2302 = vmatprep.subr.mxu0 0.0
        %2303 = vmatpush2.msra.mxu0 0.0
        %2304 = vmatprep.mubr.f32.mxu0 0.0
        %2305 = vmatmul.mubr.f32.gmra.mxu0 %v2235
        %v2306 = vpop.f32.mrf.mxu0
        %v2307 = vadd.f32 %v2232, %v2306
        %v2308 = vpop.f32.mrf.mxu0
        %2309 = vmatprep.mubr.f32.mxu0 0.0
        %2310 = vmatmul.mubr.f32.gmra.mxu0 %v2238
        %v2311 = vpop.f32.mrf.mxu0
        %v2312 = vadd.f32 %v2232, %v2311
        %v2313 = vpop.f32.mrf.mxu0
        %2314 = vdwg.mxu0
        %v2316 = vlaneseq
        %v2317 = vshrl.u32 %v2316, 7
        %v2318 = vsub.s32 0, %v2317
        %v2319 = vrot.slane %v2142, %v2318
        %2321 = vmatprep.subr.mxu0 0.0
        %2322 = vmatpush1.msra.mxu0 0.0
        %2323 = vmatprep.subr.mxu0 0.0
        %2324 = vmatpush1.msra.mxu0 0.0
        %2325 = vmatprep.subr.mxu0 0.0
        %2326 = vmatpush1.msra.mxu0 0.0
        %2327 = vmatprep.subr.mxu0 0.0
        %2328 = vmatpush1.msra.mxu0 0.0
        %2329 = vmatprep.subr.mxu0 0.0
        %2330 = vmatpush1.msra.mxu0 0.0
        %2331 = vmatprep.subr.mxu0 0.0
        %2332 = vmatpush1.msra.mxu0 0.0
        %2333 = vmatprep.subr.mxu0 0.0
        %2334 = vmatpush1.msra.mxu0 0.0
        %2335 = vmatprep.subr.mxu0 0.0
        %2336 = vmatpush1.msra.mxu0 0.0
        %2337 = vmatprep.subr.mxu0 0.0
        %2338 = vmatpush1.msra.mxu0 0.0
        %2339 = vmatprep.subr.mxu0 0.0
        %2340 = vmatpush1.msra.mxu0 0.0
        %2341 = vmatprep.subr.mxu0 0.0
        %2342 = vmatpush1.msra.mxu0 0.0
        %2343 = vmatprep.subr.mxu0 0.0
        %2344 = vmatpush1.msra.mxu0 0.0
        %2345 = vmatprep.subr.mxu0 0.0
        %2346 = vmatpush1.msra.mxu0 %v2141
        %2347 = vmatprep.subr.mxu0 0.0
        %2348 = vmatpush1.msra.mxu0 %v2140
        %2349 = vmatprep.subr.mxu0 0.0
        %2350 = vmatpush1.msra.mxu0 %v2139
        %2351 = vmatprep.subr.mxu0 0.0
        %2352 = vmatpush1.msra.mxu0 %v2138
        %2353 = vmatprep.subr.mxu0 0.0
        %2354 = vmatpush2.msra.mxu0 0.0
        %2355 = vmatprep.subr.mxu0 0.0
        %2356 = vmatpush2.msra.mxu0 0.0
        %2357 = vmatprep.subr.mxu0 0.0
        %2358 = vmatpush2.msra.mxu0 0.0
        %2359 = vmatprep.subr.mxu0 0.0
        %2360 = vmatpush2.msra.mxu0 0.0
        %2361 = vmatprep.subr.mxu0 0.0
        %2362 = vmatpush2.msra.mxu0 0.0
        %2363 = vmatprep.subr.mxu0 0.0
        %2364 = vmatpush2.msra.mxu0 0.0
        %2365 = vmatprep.subr.mxu0 0.0
        %2366 = vmatpush2.msra.mxu0 0.0
        %2367 = vmatprep.subr.mxu0 0.0
        %2368 = vmatpush2.msra.mxu0 0.0
        %2369 = vmatprep.subr.mxu0 0.0
        %2370 = vmatpush2.msra.mxu0 0.0
        %2371 = vmatprep.subr.mxu0 0.0
        %2372 = vmatpush2.msra.mxu0 0.0
        %2373 = vmatprep.subr.mxu0 0.0
        %2374 = vmatpush2.msra.mxu0 0.0
        %2375 = vmatprep.subr.mxu0 0.0
        %2376 = vmatpush2.msra.mxu0 0.0
        %2377 = vmatprep.subr.mxu0 0.0
        %2378 = vmatpush2.msra.mxu0 0.0
        %2379 = vmatprep.subr.mxu0 0.0
        %2380 = vmatpush2.msra.mxu0 0.0
        %2381 = vmatprep.subr.mxu0 0.0
        %2382 = vmatpush2.msra.mxu0 0.0
        %2383 = vmatprep.subr.mxu0 0.0
        %2384 = vmatpush2.msra.mxu0 0.0
        %2385 = vmatprep.mubr.f32.mxu0 0.0
        %2386 = vmatmul.mubr.f32.gmra.mxu0 %v2235
        %v2387 = vpop.f32.mrf.mxu0
        %v2388 = vadd.f32 %v2319, %v2387
        %v2389 = vpop.f32.mrf.mxu0
        %2390 = vmatprep.mubr.f32.mxu0 0.0
        %2391 = vmatmul.mubr.f32.gmra.mxu0 %v2238
        %v2392 = vpop.f32.mrf.mxu0
        %v2393 = vadd.f32 %v2319, %v2392
        %v2394 = vpop.f32.mrf.mxu0
        %2395 = vdwg.mxu0
        %v2397 = vsel %vm1307, %v2227, 0
        %v2400 = vsel %vm1307, %v2307, 0
        %v2403 = vsel %vm1307, %v2312, 0
        %2405 = vmatprep.subr.mxu0 0.0
        %2406 = vmatpush1.xpose.msra.mxu0 0.0
        %2407 = vmatprep.subr.mxu0 0.0
        %2408 = vmatpush1.xpose.msra.mxu0 0.0
        %2409 = vmatprep.subr.mxu0 0.0
        %2410 = vmatpush1.xpose.msra.mxu0 0.0
        %2411 = vmatprep.subr.mxu0 0.0
        %2412 = vmatpush1.xpose.msra.mxu0 0.0
        %2413 = vmatprep.subr.mxu0 0.0
        %2414 = vmatpush1.xpose.msra.mxu0 0.0
        %2415 = vmatprep.subr.mxu0 0.0
        %2416 = vmatpush1.xpose.msra.mxu0 0.0
        %2417 = vmatprep.subr.mxu0 0.0
        %2418 = vmatpush1.xpose.msra.mxu0 0.0
        %2419 = vmatprep.subr.mxu0 0.0
        %2420 = vmatpush1.xpose.msra.mxu0 0.0
        %2421 = vmatprep.subr.mxu0 0.0
        %2422 = vmatpush1.xpose.msra.mxu0 0.0
        %2423 = vmatprep.subr.mxu0 0.0
        %2424 = vmatpush1.xpose.msra.mxu0 0.0
        %2425 = vmatprep.subr.mxu0 0.0
        %2426 = vmatpush1.xpose.msra.mxu0 0.0
        %2427 = vmatprep.subr.mxu0 0.0
        %2428 = vmatpush1.xpose.msra.mxu0 0.0
        %2429 = vmatprep.subr.mxu0 0.0
        %2430 = vmatpush1.xpose.msra.mxu0 0.0
        %2431 = vmatprep.subr.mxu0 0.0
        %2432 = vmatpush1.xpose.msra.mxu0 0.0
        %2433 = vmatprep.subr.mxu0 0.0
        %2434 = vmatpush1.xpose.msra.mxu0 %v2403
        %2435 = vmatprep.subr.mxu0 0.0
        %2436 = vmatpush1.xpose.msra.mxu0 %v2400
        %2437 = vmatprep.subr.mxu0 0.0
        %2438 = vmatpush2.xpose.msra.mxu0 0.0
        %2439 = vmatprep.subr.mxu0 0.0
        %2440 = vmatpush2.xpose.msra.mxu0 0.0
        %2441 = vmatprep.subr.mxu0 0.0
        %2442 = vmatpush2.xpose.msra.mxu0 0.0
        %2443 = vmatprep.subr.mxu0 0.0
        %2444 = vmatpush2.xpose.msra.mxu0 0.0
        %2445 = vmatprep.subr.mxu0 0.0
        %2446 = vmatpush2.xpose.msra.mxu0 0.0
        %2447 = vmatprep.subr.mxu0 0.0
        %2448 = vmatpush2.xpose.msra.mxu0 0.0
        %2449 = vmatprep.subr.mxu0 0.0
        %2450 = vmatpush2.xpose.msra.mxu0 0.0
        %2451 = vmatprep.subr.mxu0 0.0
        %2452 = vmatpush2.xpose.msra.mxu0 0.0
        %2453 = vmatprep.subr.mxu0 0.0
        %2454 = vmatpush2.xpose.msra.mxu0 0.0
        %2455 = vmatprep.subr.mxu0 0.0
        %2456 = vmatpush2.xpose.msra.mxu0 0.0
        %2457 = vmatprep.subr.mxu0 0.0
        %2458 = vmatpush2.xpose.msra.mxu0 0.0
        %2459 = vmatprep.subr.mxu0 0.0
        %2460 = vmatpush2.xpose.msra.mxu0 0.0
        %2461 = vmatprep.subr.mxu0 0.0
        %2462 = vmatpush2.xpose.msra.mxu0 0.0
        %2463 = vmatprep.subr.mxu0 0.0
        %2464 = vmatpush2.xpose.msra.mxu0 0.0
        %2465 = vmatprep.subr.mxu0 0.0
        %2466 = vmatpush2.xpose.msra.mxu0 0.0
        %2467 = vmatprep.subr.mxu0 0.0
        %2468 = vmatpush2.xpose.msra.mxu0 0.0
        %2469 = vmatprep.mubr.f32.mxu0 0.0
        %2470 = vmatmul.mubr.f32.gmra.mxu0 %v2397
        %v2471 = vpop.f32.mrf.mxu0
        %v2472 = vadd.f32 0.0, %v2471
        %v2473 = vpop.f32.mrf.mxu0
        %2474 = vdwg.mxu0
        %v2475 = vsel %vm1389, %v2472, -inf
        %2476 = vmax.xlane.f32.xlu0 %v2475
        %v2477 = vpop.xlane.xlu0 %2476
        %v2478 = vsub.f32 %v2472, %v2477
        %v2479 = vmul.f32 %v2478, 1.442695
        %v2480 = vpow.pop %v2479
        %v2481 = vsel %vm1389, %v2480, 0.0
        %2482 = vadd.xlane.f32.xlu0 %v2481
        %v2483 = vpop.xlane.xlu0 %2482
        %v2484 = vrcp.pop %v2483
        %v2485 = vmul.f32 %v2480, %v2484
        %v2487 = vsel %vm1389, %v2485, 0
        %2489 = vmatprep.subr.mxu0 0.0
        %2490 = vmatpush1.msra.mxu0 0.0
        %2491 = vmatprep.subr.mxu0 0.0
        %2492 = vmatpush1.msra.mxu0 0.0
        %2493 = vmatprep.subr.mxu0 0.0
        %2494 = vmatpush1.msra.mxu0 0.0
        %2495 = vmatprep.subr.mxu0 0.0
        %2496 = vmatpush1.msra.mxu0 0.0
        %2497 = vmatprep.subr.mxu0 0.0
        %2498 = vmatpush1.msra.mxu0 0.0
        %2499 = vmatprep.subr.mxu0 0.0
        %2500 = vmatpush1.msra.mxu0 0.0
        %2501 = vmatprep.subr.mxu0 0.0
        %2502 = vmatpush1.msra.mxu0 0.0
        %2503 = vmatprep.subr.mxu0 0.0
        %2504 = vmatpush1.msra.mxu0 0.0
        %2505 = vmatprep.subr.mxu0 0.0
        %2506 = vmatpush1.msra.mxu0 0.0
        %2507 = vmatprep.subr.mxu0 0.0
        %2508 = vmatpush1.msra.mxu0 0.0
        %2509 = vmatprep.subr.mxu0 0.0
        %2510 = vmatpush1.msra.mxu0 0.0
        %2511 = vmatprep.subr.mxu0 0.0
        %2512 = vmatpush1.msra.mxu0 0.0
        %2513 = vmatprep.subr.mxu0 0.0
        %2514 = vmatpush1.msra.mxu0 0.0
        %2515 = vmatprep.subr.mxu0 0.0
        %2516 = vmatpush1.msra.mxu0 0.0
        %2517 = vmatprep.subr.mxu0 0.0
        %2518 = vmatpush1.msra.mxu0 %v2393
        %2519 = vmatprep.subr.mxu0 0.0
        %2520 = vmatpush1.msra.mxu0 %v2388
        %2521 = vmatprep.subr.mxu0 0.0
        %2522 = vmatpush2.msra.mxu0 0.0
        %2523 = vmatprep.subr.mxu0 0.0
        %2524 = vmatpush2.msra.mxu0 0.0
        %2525 = vmatprep.subr.mxu0 0.0
        %2526 = vmatpush2.msra.mxu0 0.0
        %2527 = vmatprep.subr.mxu0 0.0
        %2528 = vmatpush2.msra.mxu0 0.0
        %2529 = vmatprep.subr.mxu0 0.0
        %2530 = vmatpush2.msra.mxu0 0.0
        %2531 = vmatprep.subr.mxu0 0.0
        %2532 = vmatpush2.msra.mxu0 0.0
        %2533 = vmatprep.subr.mxu0 0.0
        %2534 = vmatpush2.msra.mxu0 0.0
        %2535 = vmatprep.subr.mxu0 0.0
        %2536 = vmatpush2.msra.mxu0 0.0
        %2537 = vmatprep.subr.mxu0 0.0
        %2538 = vmatpush2.msra.mxu0 0.0
        %2539 = vmatprep.subr.mxu0 0.0
        %2540 = vmatpush2.msra.mxu0 0.0
        %2541 = vmatprep.subr.mxu0 0.0
        %2542 = vmatpush2.msra.mxu0 0.0
        %2543 = vmatprep.subr.mxu0 0.0
        %2544 = vmatpush2.msra.mxu0 0.0
        %2545 = vmatprep.subr.mxu0 0.0
        %2546 = vmatpush2.msra.mxu0 0.0
        %2547 = vmatprep.subr.mxu0 0.0
        %2548 = vmatpush2.msra.mxu0 0.0
        %2549 = vmatprep.subr.mxu0 0.0
        %2550 = vmatpush2.msra.mxu0 0.0
        %2551 = vmatprep.subr.mxu0 0.0
        %2552 = vmatpush2.msra.mxu0 0.0
        %2553 = vmatprep.mubr.f32.mxu0 0.0
        %2554 = vmatmul.mubr.f32.gmra.mxu0 %v2487
        %v2555 = vpop.f32.mrf.mxu0
        %v2556 = vadd.f32 0.0, %v2555
        %v2557 = vpop.f32.mrf.mxu0
        %2558 = vdwg.mxu0
        %2559 = vrot.lane.b32.xlu0 %v2227, 120
        %v2560 = vpop.permute.xlu0 %2559
        %2561 = vrot.lane.b32.xlu0 %v2307, 120
        %v2562 = vpop.permute.xlu0 %2561
        %2563 = vrot.lane.b32.xlu0 %v2312, 120
        %v2564 = vpop.permute.xlu0 %2563
        %v2565 = vsel %vm1307, %v2560, 0
        %v2567 = vsel %vm1307, %v2562, 0
        %v2569 = vsel %vm1307, %v2564, 0
        %2571 = vmatprep.subr.mxu0 0.0
        %2572 = vmatpush1.xpose.msra.mxu0 0.0
        %2573 = vmatprep.subr.mxu0 0.0
        %2574 = vmatpush1.xpose.msra.mxu0 0.0
        %2575 = vmatprep.subr.mxu0 0.0
        %2576 = vmatpush1.xpose.msra.mxu0 0.0
        %2577 = vmatprep.subr.mxu0 0.0
        %2578 = vmatpush1.xpose.msra.mxu0 0.0
        %2579 = vmatprep.subr.mxu0 0.0
        %2580 = vmatpush1.xpose.msra.mxu0 0.0
        %2581 = vmatprep.subr.mxu0 0.0
        %2582 = vmatpush1.xpose.msra.mxu0 0.0
        %2583 = vmatprep.subr.mxu0 0.0
        %2584 = vmatpush1.xpose.msra.mxu0 0.0
        %2585 = vmatprep.subr.mxu0 0.0
        %2586 = vmatpush1.xpose.msra.mxu0 0.0
        %2587 = vmatprep.subr.mxu0 0.0
        %2588 = vmatpush1.xpose.msra.mxu0 0.0
        %2589 = vmatprep.subr.mxu0 0.0
        %2590 = vmatpush1.xpose.msra.mxu0 0.0
        %2591 = vmatprep.subr.mxu0 0.0
        %2592 = vmatpush1.xpose.msra.mxu0 0.0
        %2593 = vmatprep.subr.mxu0 0.0
        %2594 = vmatpush1.xpose.msra.mxu0 0.0
        %2595 = vmatprep.subr.mxu0 0.0
        %2596 = vmatpush1.xpose.msra.mxu0 0.0
        %2597 = vmatprep.subr.mxu0 0.0
        %2598 = vmatpush1.xpose.msra.mxu0 0.0
        %2599 = vmatprep.subr.mxu0 0.0
        %2600 = vmatpush1.xpose.msra.mxu0 %v2569
        %2601 = vmatprep.subr.mxu0 0.0
        %2602 = vmatpush1.xpose.msra.mxu0 %v2567
        %2603 = vmatprep.subr.mxu0 0.0
        %2604 = vmatpush2.xpose.msra.mxu0 0.0
        %2605 = vmatprep.subr.mxu0 0.0
        %2606 = vmatpush2.xpose.msra.mxu0 0.0
        %2607 = vmatprep.subr.mxu0 0.0
        %2608 = vmatpush2.xpose.msra.mxu0 0.0
        %2609 = vmatprep.subr.mxu0 0.0
        %2610 = vmatpush2.xpose.msra.mxu0 0.0
        %2611 = vmatprep.subr.mxu0 0.0
        %2612 = vmatpush2.xpose.msra.mxu0 0.0
        %2613 = vmatprep.subr.mxu0 0.0
        %2614 = vmatpush2.xpose.msra.mxu0 0.0
        %2615 = vmatprep.subr.mxu0 0.0
        %2616 = vmatpush2.xpose.msra.mxu0 0.0
        %2617 = vmatprep.subr.mxu0 0.0
        %2618 = vmatpush2.xpose.msra.mxu0 0.0
        %2619 = vmatprep.subr.mxu0 0.0
        %2620 = vmatpush2.xpose.msra.mxu0 0.0
        %2621 = vmatprep.subr.mxu0 0.0
        %2622 = vmatpush2.xpose.msra.mxu0 0.0
        %2623 = vmatprep.subr.mxu0 0.0
        %2624 = vmatpush2.xpose.msra.mxu0 0.0
        %2625 = vmatprep.subr.mxu0 0.0
        %2626 = vmatpush2.xpose.msra.mxu0 0.0
        %2627 = vmatprep.subr.mxu0 0.0
        %2628 = vmatpush2.xpose.msra.mxu0 0.0
        %2629 = vmatprep.subr.mxu0 0.0
        %2630 = vmatpush2.xpose.msra.mxu0 0.0
        %2631 = vmatprep.subr.mxu0 0.0
        %2632 = vmatpush2.xpose.msra.mxu0 0.0
        %2633 = vmatprep.subr.mxu0 0.0
        %2634 = vmatpush2.xpose.msra.mxu0 0.0
        %2635 = vmatprep.mubr.f32.mxu0 0.0
        %2636 = vmatmul.mubr.f32.gmra.mxu0 %v2565
        %v2637 = vpop.f32.mrf.mxu0
        %v2638 = vadd.f32 0.0, %v2637
        %v2639 = vpop.f32.mrf.mxu0
        %2640 = vdwg.mxu0
        %v2641 = vsel %vm1389, %v2638, -inf
        %2642 = vmax.xlane.f32.xlu0 %v2641
        %v2643 = vpop.xlane.xlu0 %2642
        %v2644 = vsub.f32 %v2638, %v2643
        %v2645 = vmul.f32 %v2644, 1.442695
        %v2646 = vpow.pop %v2645
        %v2647 = vsel %vm1389, %v2646, 0.0
        %2648 = vadd.xlane.f32.xlu0 %v2647
        %v2649 = vpop.xlane.xlu0 %2648
        %v2650 = vrcp.pop %v2649
        %v2651 = vmul.f32 %v2646, %v2650
        %2654 = vrot.lane.b32.xlu0 %v2388, 120
        %v2655 = vpop.permute.xlu0 %2654
        %2656 = vrot.lane.b32.xlu0 %v2393, 120
        %v2657 = vpop.permute.xlu0 %2656
        %v2661 = vsel %vm1389, %v2651, 0
        %2663 = vmatprep.subr.mxu0 0.0
        %2664 = vmatpush1.msra.mxu0 0.0
        %2665 = vmatprep.subr.mxu0 0.0
        %2666 = vmatpush1.msra.mxu0 0.0
        %2667 = vmatprep.subr.mxu0 0.0
        %2668 = vmatpush1.msra.mxu0 0.0
        %2669 = vmatprep.subr.mxu0 0.0
        %2670 = vmatpush1.msra.mxu0 0.0
        %2671 = vmatprep.subr.mxu0 0.0
        %2672 = vmatpush1.msra.mxu0 0.0
        %2673 = vmatprep.subr.mxu0 0.0
        %2674 = vmatpush1.msra.mxu0 0.0
        %2675 = vmatprep.subr.mxu0 0.0
        %2676 = vmatpush1.msra.mxu0 0.0
        %2677 = vmatprep.subr.mxu0 0.0
        %2678 = vmatpush1.msra.mxu0 0.0
        %2679 = vmatprep.subr.mxu0 0.0
        %2680 = vmatpush1.msra.mxu0 0.0
        %2681 = vmatprep.subr.mxu0 0.0
        %2682 = vmatpush1.msra.mxu0 0.0
        %2683 = vmatprep.subr.mxu0 0.0
        %2684 = vmatpush1.msra.mxu0 0.0
        %2685 = vmatprep.subr.mxu0 0.0
        %2686 = vmatpush1.msra.mxu0 0.0
        %2687 = vmatprep.subr.mxu0 0.0
        %2688 = vmatpush1.msra.mxu0 0.0
        %2689 = vmatprep.subr.mxu0 0.0
        %2690 = vmatpush1.msra.mxu0 0.0
        %2691 = vmatprep.subr.mxu0 0.0
        %2692 = vmatpush1.msra.mxu0 %v2657
        %2693 = vmatprep.subr.mxu0 0.0
        %2694 = vmatpush1.msra.mxu0 %v2655
        %2695 = vmatprep.subr.mxu0 0.0
        %2696 = vmatpush2.msra.mxu0 0.0
        %2697 = vmatprep.subr.mxu0 0.0
        %2698 = vmatpush2.msra.mxu0 0.0
        %2699 = vmatprep.subr.mxu0 0.0
        %2700 = vmatpush2.msra.mxu0 0.0
        %2701 = vmatprep.subr.mxu0 0.0
        %2702 = vmatpush2.msra.mxu0 0.0
        %2703 = vmatprep.subr.mxu0 0.0
        %2704 = vmatpush2.msra.mxu0 0.0
        %2705 = vmatprep.subr.mxu0 0.0
        %2706 = vmatpush2.msra.mxu0 0.0
        %2707 = vmatprep.subr.mxu0 0.0
        %2708 = vmatpush2.msra.mxu0 0.0
        %2709 = vmatprep.subr.mxu0 0.0
        %2710 = vmatpush2.msra.mxu0 0.0
        %2711 = vmatprep.subr.mxu0 0.0
        %2712 = vmatpush2.msra.mxu0 0.0
        %2713 = vmatprep.subr.mxu0 0.0
        %2714 = vmatpush2.msra.mxu0 0.0
        %2715 = vmatprep.subr.mxu0 0.0
        %2716 = vmatpush2.msra.mxu0 0.0
        %2717 = vmatprep.subr.mxu0 0.0
        %2718 = vmatpush2.msra.mxu0 0.0
        %2719 = vmatprep.subr.mxu0 0.0
        %2720 = vmatpush2.msra.mxu0 0.0
        %2721 = vmatprep.subr.mxu0 0.0
        %2722 = vmatpush2.msra.mxu0 0.0
        %2723 = vmatprep.subr.mxu0 0.0
        %2724 = vmatpush2.msra.mxu0 0.0
        %2725 = vmatprep.subr.mxu0 0.0
        %2726 = vmatpush2.msra.mxu0 0.0
        %2727 = vmatprep.mubr.f32.mxu0 0.0
        %2728 = vmatmul.mubr.f32.gmra.mxu0 %v2661
        %v2729 = vpop.f32.mrf.mxu0
        %v2730 = vadd.f32 0.0, %v2729
        %v2731 = vpop.f32.mrf.mxu0
        %2732 = vdwg.mxu0
        %2733 = vrot.lane.b32.xlu0 %v2227, 112
        %v2734 = vpop.permute.xlu0 %2733
        %2735 = vrot.lane.b32.xlu0 %v2307, 112
        %v2736 = vpop.permute.xlu0 %2735
        %2737 = vrot.lane.b32.xlu0 %v2312, 112
        %v2738 = vpop.permute.xlu0 %2737
        %v2739 = vsel %vm1307, %v2734, 0
        %v2741 = vsel %vm1307, %v2736, 0
        %v2743 = vsel %vm1307, %v2738, 0
        %2745 = vmatprep.subr.mxu0 0.0
        %2746 = vmatpush1.xpose.msra.mxu0 0.0
        %2747 = vmatprep.subr.mxu0 0.0
        %2748 = vmatpush1.xpose.msra.mxu0 0.0
        %2749 = vmatprep.subr.mxu0 0.0
        %2750 = vmatpush1.xpose.msra.mxu0 0.0
        %2751 = vmatprep.subr.mxu0 0.0
        %2752 = vmatpush1.xpose.msra.mxu0 0.0
        %2753 = vmatprep.subr.mxu0 0.0
        %2754 = vmatpush1.xpose.msra.mxu0 0.0
        %2755 = vmatprep.subr.mxu0 0.0
        %2756 = vmatpush1.xpose.msra.mxu0 0.0
        %2757 = vmatprep.subr.mxu0 0.0
        %2758 = vmatpush1.xpose.msra.mxu0 0.0
        %2759 = vmatprep.subr.mxu0 0.0
        %2760 = vmatpush1.xpose.msra.mxu0 0.0
        %2761 = vmatprep.subr.mxu0 0.0
        %2762 = vmatpush1.xpose.msra.mxu0 0.0
        %2763 = vmatprep.subr.mxu0 0.0
        %2764 = vmatpush1.xpose.msra.mxu0 0.0
        %2765 = vmatprep.subr.mxu0 0.0
        %2766 = vmatpush1.xpose.msra.mxu0 0.0
        %2767 = vmatprep.subr.mxu0 0.0
        %2768 = vmatpush1.xpose.msra.mxu0 0.0
        %2769 = vmatprep.subr.mxu0 0.0
        %2770 = vmatpush1.xpose.msra.mxu0 0.0
        %2771 = vmatprep.subr.mxu0 0.0
        %2772 = vmatpush1.xpose.msra.mxu0 0.0
        %2773 = vmatprep.subr.mxu0 0.0
        %2774 = vmatpush1.xpose.msra.mxu0 %v2743
        %2775 = vmatprep.subr.mxu0 0.0
        %2776 = vmatpush1.xpose.msra.mxu0 %v2741
        %2777 = vmatprep.subr.mxu0 0.0
        %2778 = vmatpush2.xpose.msra.mxu0 0.0
        %2779 = vmatprep.subr.mxu0 0.0
        %2780 = vmatpush2.xpose.msra.mxu0 0.0
        %2781 = vmatprep.subr.mxu0 0.0
        %2782 = vmatpush2.xpose.msra.mxu0 0.0
        %2783 = vmatprep.subr.mxu0 0.0
        %2784 = vmatpush2.xpose.msra.mxu0 0.0
        %2785 = vmatprep.subr.mxu0 0.0
        %2786 = vmatpush2.xpose.msra.mxu0 0.0
        %2787 = vmatprep.subr.mxu0 0.0
        %2788 = vmatpush2.xpose.msra.mxu0 0.0
        %2789 = vmatprep.subr.mxu0 0.0
        %2790 = vmatpush2.xpose.msra.mxu0 0.0
        %2791 = vmatprep.subr.mxu0 0.0
        %2792 = vmatpush2.xpose.msra.mxu0 0.0
        %2793 = vmatprep.subr.mxu0 0.0
        %2794 = vmatpush2.xpose.msra.mxu0 0.0
        %2795 = vmatprep.subr.mxu0 0.0
        %2796 = vmatpush2.xpose.msra.mxu0 0.0
        %2797 = vmatprep.subr.mxu0 0.0
        %2798 = vmatpush2.xpose.msra.mxu0 0.0
        %2799 = vmatprep.subr.mxu0 0.0
        %2800 = vmatpush2.xpose.msra.mxu0 0.0
        %2801 = vmatprep.subr.mxu0 0.0
        %2802 = vmatpush2.xpose.msra.mxu0 0.0
        %2803 = vmatprep.subr.mxu0 0.0
        %2804 = vmatpush2.xpose.msra.mxu0 0.0
        %2805 = vmatprep.subr.mxu0 0.0
        %2806 = vmatpush2.xpose.msra.mxu0 0.0
        %2807 = vmatprep.subr.mxu0 0.0
        %2808 = vmatpush2.xpose.msra.mxu0 0.0
        %2809 = vmatprep.mubr.f32.mxu0 0.0
        %2810 = vmatmul.mubr.f32.gmra.mxu0 %v2739
        %v2811 = vpop.f32.mrf.mxu0
        %v2812 = vadd.f32 0.0, %v2811
        %v2813 = vpop.f32.mrf.mxu0
        %2814 = vdwg.mxu0
        %v2815 = vsel %vm1389, %v2812, -inf
        %2816 = vmax.xlane.f32.xlu0 %v2815
        %v2817 = vpop.xlane.xlu0 %2816
        %v2818 = vsub.f32 %v2812, %v2817
        %v2819 = vmul.f32 %v2818, 1.442695
        %v2820 = vpow.pop %v2819
        %v2821 = vsel %vm1389, %v2820, 0.0
        %2822 = vadd.xlane.f32.xlu0 %v2821
        %v2823 = vpop.xlane.xlu0 %2822
        %v2824 = vrcp.pop %v2823
        %v2825 = vmul.f32 %v2820, %v2824
        %2826 = vrot.lane.b32.xlu0 %v2388, 112
        %v2827 = vpop.permute.xlu0 %2826
        %2828 = vrot.lane.b32.xlu0 %v2393, 112
        %v2829 = vpop.permute.xlu0 %2828
        %v2833 = vsel %vm1389, %v2825, 0
        %2835 = vmatprep.subr.mxu0 0.0
        %2836 = vmatpush1.msra.mxu0 0.0
        %2837 = vmatprep.subr.mxu0 0.0
        %2838 = vmatpush1.msra.mxu0 0.0
        %2839 = vmatprep.subr.mxu0 0.0
        %2840 = vmatpush1.msra.mxu0 0.0
        %2841 = vmatprep.subr.mxu0 0.0
        %2842 = vmatpush1.msra.mxu0 0.0
        %2843 = vmatprep.subr.mxu0 0.0
        %2844 = vmatpush1.msra.mxu0 0.0
        %2845 = vmatprep.subr.mxu0 0.0
        %2846 = vmatpush1.msra.mxu0 0.0
        %2847 = vmatprep.subr.mxu0 0.0
        %2848 = vmatpush1.msra.mxu0 0.0
        %2849 = vmatprep.subr.mxu0 0.0
        %2850 = vmatpush1.msra.mxu0 0.0
        %2851 = vmatprep.subr.mxu0 0.0
        %2852 = vmatpush1.msra.mxu0 0.0
        %2853 = vmatprep.subr.mxu0 0.0
        %2854 = vmatpush1.msra.mxu0 0.0
        %2855 = vmatprep.subr.mxu0 0.0
        %2856 = vmatpush1.msra.mxu0 0.0
        %2857 = vmatprep.subr.mxu0 0.0
        %2858 = vmatpush1.msra.mxu0 0.0
        %2859 = vmatprep.subr.mxu0 0.0
        %2860 = vmatpush1.msra.mxu0 0.0
        %2861 = vmatprep.subr.mxu0 0.0
        %2862 = vmatpush1.msra.mxu0 0.0
        %2863 = vmatprep.subr.mxu0 0.0
        %2864 = vmatpush1.msra.mxu0 %v2829
        %2865 = vmatprep.subr.mxu0 0.0
        %2866 = vmatpush1.msra.mxu0 %v2827
        %2867 = vmatprep.subr.mxu0 0.0
        %2868 = vmatpush2.msra.mxu0 0.0
        %2869 = vmatprep.subr.mxu0 0.0
        %2870 = vmatpush2.msra.mxu0 0.0
        %2871 = vmatprep.subr.mxu0 0.0
        %2872 = vmatpush2.msra.mxu0 0.0
        %2873 = vmatprep.subr.mxu0 0.0
        %2874 = vmatpush2.msra.mxu0 0.0
        %2875 = vmatprep.subr.mxu0 0.0
        %2876 = vmatpush2.msra.mxu0 0.0
        %2877 = vmatprep.subr.mxu0 0.0
        %2878 = vmatpush2.msra.mxu0 0.0
        %2879 = vmatprep.subr.mxu0 0.0
        %2880 = vmatpush2.msra.mxu0 0.0
        %2881 = vmatprep.subr.mxu0 0.0
        %2882 = vmatpush2.msra.mxu0 0.0
        %2883 = vmatprep.subr.mxu0 0.0
        %2884 = vmatpush2.msra.mxu0 0.0
        %2885 = vmatprep.subr.mxu0 0.0
        %2886 = vmatpush2.msra.mxu0 0.0
        %2887 = vmatprep.subr.mxu0 0.0
        %2888 = vmatpush2.msra.mxu0 0.0
        %2889 = vmatprep.subr.mxu0 0.0
        %2890 = vmatpush2.msra.mxu0 0.0
        %2891 = vmatprep.subr.mxu0 0.0
        %2892 = vmatpush2.msra.mxu0 0.0
        %2893 = vmatprep.subr.mxu0 0.0
        %2894 = vmatpush2.msra.mxu0 0.0
        %2895 = vmatprep.subr.mxu0 0.0
        %2896 = vmatpush2.msra.mxu0 0.0
        %2897 = vmatprep.subr.mxu0 0.0
        %2898 = vmatpush2.msra.mxu0 0.0
        %2899 = vmatprep.mubr.f32.mxu0 0.0
        %2900 = vmatmul.mubr.f32.gmra.mxu0 %v2833
        %v2901 = vpop.f32.mrf.mxu0
        %v2902 = vadd.f32 0.0, %v2901
        %v2903 = vpop.f32.mrf.mxu0
        %2904 = vdwg.mxu0
        %2905 = vrot.lane.b32.xlu0 %v2227, 104
        %v2906 = vpop.permute.xlu0 %2905
        %2907 = vrot.lane.b32.xlu0 %v2307, 104
        %v2908 = vpop.permute.xlu0 %2907
        %2909 = vrot.lane.b32.xlu0 %v2312, 104
        %v2910 = vpop.permute.xlu0 %2909
        %v2911 = vsel %vm1307, %v2906, 0
        %v2913 = vsel %vm1307, %v2908, 0
        %v2915 = vsel %vm1307, %v2910, 0
        %2917 = vmatprep.subr.mxu0 0.0
        %2918 = vmatpush1.xpose.msra.mxu0 0.0
        %2919 = vmatprep.subr.mxu0 0.0
        %2920 = vmatpush1.xpose.msra.mxu0 0.0
        %2921 = vmatprep.subr.mxu0 0.0
        %2922 = vmatpush1.xpose.msra.mxu0 0.0
        %2923 = vmatprep.subr.mxu0 0.0
        %2924 = vmatpush1.xpose.msra.mxu0 0.0
        %2925 = vmatprep.subr.mxu0 0.0
        %2926 = vmatpush1.xpose.msra.mxu0 0.0
        %2927 = vmatprep.subr.mxu0 0.0
        %2928 = vmatpush1.xpose.msra.mxu0 0.0
        %2929 = vmatprep.subr.mxu0 0.0
        %2930 = vmatpush1.xpose.msra.mxu0 0.0
        %2931 = vmatprep.subr.mxu0 0.0
        %2932 = vmatpush1.xpose.msra.mxu0 0.0
        %2933 = vmatprep.subr.mxu0 0.0
        %2934 = vmatpush1.xpose.msra.mxu0 0.0
        %2935 = vmatprep.subr.mxu0 0.0
        %2936 = vmatpush1.xpose.msra.mxu0 0.0
        %2937 = vmatprep.subr.mxu0 0.0
        %2938 = vmatpush1.xpose.msra.mxu0 0.0
        %2939 = vmatprep.subr.mxu0 0.0
        %2940 = vmatpush1.xpose.msra.mxu0 0.0
        %2941 = vmatprep.subr.mxu0 0.0
        %2942 = vmatpush1.xpose.msra.mxu0 0.0
        %2943 = vmatprep.subr.mxu0 0.0
        %2944 = vmatpush1.xpose.msra.mxu0 0.0
        %2945 = vmatprep.subr.mxu0 0.0
        %2946 = vmatpush1.xpose.msra.mxu0 %v2915
        %2947 = vmatprep.subr.mxu0 0.0
        %2948 = vmatpush1.xpose.msra.mxu0 %v2913
        %2949 = vmatprep.subr.mxu0 0.0
        %2950 = vmatpush2.xpose.msra.mxu0 0.0
        %2951 = vmatprep.subr.mxu0 0.0
        %2952 = vmatpush2.xpose.msra.mxu0 0.0
        %2953 = vmatprep.subr.mxu0 0.0
        %2954 = vmatpush2.xpose.msra.mxu0 0.0
        %2955 = vmatprep.subr.mxu0 0.0
        %2956 = vmatpush2.xpose.msra.mxu0 0.0
        %2957 = vmatprep.subr.mxu0 0.0
        %2958 = vmatpush2.xpose.msra.mxu0 0.0
        %2959 = vmatprep.subr.mxu0 0.0
        %2960 = vmatpush2.xpose.msra.mxu0 0.0
        %2961 = vmatprep.subr.mxu0 0.0
        %2962 = vmatpush2.xpose.msra.mxu0 0.0
        %2963 = vmatprep.subr.mxu0 0.0
        %2964 = vmatpush2.xpose.msra.mxu0 0.0
        %2965 = vmatprep.subr.mxu0 0.0
        %2966 = vmatpush2.xpose.msra.mxu0 0.0
        %2967 = vmatprep.subr.mxu0 0.0
        %2968 = vmatpush2.xpose.msra.mxu0 0.0
        %2969 = vmatprep.subr.mxu0 0.0
        %2970 = vmatpush2.xpose.msra.mxu0 0.0
        %2971 = vmatprep.subr.mxu0 0.0
        %2972 = vmatpush2.xpose.msra.mxu0 0.0
        %2973 = vmatprep.subr.mxu0 0.0
        %2974 = vmatpush2.xpose.msra.mxu0 0.0
        %2975 = vmatprep.subr.mxu0 0.0
        %2976 = vmatpush2.xpose.msra.mxu0 0.0
        %2977 = vmatprep.subr.mxu0 0.0
        %2978 = vmatpush2.xpose.msra.mxu0 0.0
        %2979 = vmatprep.subr.mxu0 0.0
        %2980 = vmatpush2.xpose.msra.mxu0 0.0
        %2981 = vmatprep.mubr.f32.mxu0 0.0
        %2982 = vmatmul.mubr.f32.gmra.mxu0 %v2911
        %v2983 = vpop.f32.mrf.mxu0
        %v2984 = vadd.f32 0.0, %v2983
        %v2985 = vpop.f32.mrf.mxu0
        %2986 = vdwg.mxu0
        %v2987 = vsel %vm1389, %v2984, -inf
        %2988 = vmax.xlane.f32.xlu0 %v2987
        %v2989 = vpop.xlane.xlu0 %2988
        %v2990 = vsub.f32 %v2984, %v2989
        %v2991 = vmul.f32 %v2990, 1.442695
        %v2992 = vpow.pop %v2991
        %v2993 = vsel %vm1389, %v2992, 0.0
        %2994 = vadd.xlane.f32.xlu0 %v2993
        %v2995 = vpop.xlane.xlu0 %2994
        %v2996 = vrcp.pop %v2995
        %v2997 = vmul.f32 %v2992, %v2996
        %2998 = vrot.lane.b32.xlu0 %v2388, 104
        %v2999 = vpop.permute.xlu0 %2998
        %3000 = vrot.lane.b32.xlu0 %v2393, 104
        %v3001 = vpop.permute.xlu0 %3000
        %v3005 = vsel %vm1389, %v2997, 0
        %3007 = vmatprep.subr.mxu0 0.0
        %3008 = vmatpush1.msra.mxu0 0.0
        %3009 = vmatprep.subr.mxu0 0.0
        %3010 = vmatpush1.msra.mxu0 0.0
        %3011 = vmatprep.subr.mxu0 0.0
        %3012 = vmatpush1.msra.mxu0 0.0
        %3013 = vmatprep.subr.mxu0 0.0
        %3014 = vmatpush1.msra.mxu0 0.0
        %3015 = vmatprep.subr.mxu0 0.0
        %3016 = vmatpush1.msra.mxu0 0.0
        %3017 = vmatprep.subr.mxu0 0.0
        %3018 = vmatpush1.msra.mxu0 0.0
        %3019 = vmatprep.subr.mxu0 0.0
        %3020 = vmatpush1.msra.mxu0 0.0
        %3021 = vmatprep.subr.mxu0 0.0
        %3022 = vmatpush1.msra.mxu0 0.0
        %3023 = vmatprep.subr.mxu0 0.0
        %3024 = vmatpush1.msra.mxu0 0.0
        %3025 = vmatprep.subr.mxu0 0.0
        %3026 = vmatpush1.msra.mxu0 0.0
        %3027 = vmatprep.subr.mxu0 0.0
        %3028 = vmatpush1.msra.mxu0 0.0
        %3029 = vmatprep.subr.mxu0 0.0
        %3030 = vmatpush1.msra.mxu0 0.0
        %3031 = vmatprep.subr.mxu0 0.0
        %3032 = vmatpush1.msra.mxu0 0.0
        %3033 = vmatprep.subr.mxu0 0.0
        %3034 = vmatpush1.msra.mxu0 0.0
        %3035 = vmatprep.subr.mxu0 0.0
        %3036 = vmatpush1.msra.mxu0 %v3001
        %3037 = vmatprep.subr.mxu0 0.0
        %3038 = vmatpush1.msra.mxu0 %v2999
        %3039 = vmatprep.subr.mxu0 0.0
        %3040 = vmatpush2.msra.mxu0 0.0
        %3041 = vmatprep.subr.mxu0 0.0
        %3042 = vmatpush2.msra.mxu0 0.0
        %3043 = vmatprep.subr.mxu0 0.0
        %3044 = vmatpush2.msra.mxu0 0.0
        %3045 = vmatprep.subr.mxu0 0.0
        %3046 = vmatpush2.msra.mxu0 0.0
        %3047 = vmatprep.subr.mxu0 0.0
        %3048 = vmatpush2.msra.mxu0 0.0
        %3049 = vmatprep.subr.mxu0 0.0
        %3050 = vmatpush2.msra.mxu0 0.0
        %3051 = vmatprep.subr.mxu0 0.0
        %3052 = vmatpush2.msra.mxu0 0.0
        %3053 = vmatprep.subr.mxu0 0.0
        %3054 = vmatpush2.msra.mxu0 0.0
        %3055 = vmatprep.subr.mxu0 0.0
        %3056 = vmatpush2.msra.mxu0 0.0
        %3057 = vmatprep.subr.mxu0 0.0
        %3058 = vmatpush2.msra.mxu0 0.0
        %3059 = vmatprep.subr.mxu0 0.0
        %3060 = vmatpush2.msra.mxu0 0.0
        %3061 = vmatprep.subr.mxu0 0.0
        %3062 = vmatpush2.msra.mxu0 0.0
        %3063 = vmatprep.subr.mxu0 0.0
        %3064 = vmatpush2.msra.mxu0 0.0
        %3065 = vmatprep.subr.mxu0 0.0
        %3066 = vmatpush2.msra.mxu0 0.0
        %3067 = vmatprep.subr.mxu0 0.0
        %3068 = vmatpush2.msra.mxu0 0.0
        %3069 = vmatprep.subr.mxu0 0.0
        %3070 = vmatpush2.msra.mxu0 0.0
        %3071 = vmatprep.mubr.f32.mxu0 0.0
        %3072 = vmatmul.mubr.f32.gmra.mxu0 %v3005
        %v3073 = vpop.f32.mrf.mxu0
        %v3074 = vadd.f32 0.0, %v3073
        %v3075 = vpop.f32.mrf.mxu0
        %3076 = vdwg.mxu0
        %3078 = vrot.lane.b32.xlu0 %v2730, 8
        %v3079 = vpop.permute.xlu0 %3078
        %3082 = vrot.lane.b32.xlu0 %v2902, 16
        %v3083 = vpop.permute.xlu0 %3082
        %3086 = vrot.lane.b32.xlu0 %v3074, 24
        %v3087 = vpop.permute.xlu0 %3086
        %v3089 = vsel %vm1307, %v2556, %v3079
        %v3090 = vsel %vm1389, %v3089, %v3083
        %v3091 = vsel %vm2009, %v3090, %v3087
        %v3093 = vlaneseq
        %v3094 = vshrl.u32 %v3093, 7
        %v3095 = vsub.s32 0, %v3094
        %v3096 = vrot.slane %v2147, %v3095
        %v3099 = vsel %vm1064, %v3091, 0
        %3101 = vmatprep.subr.mxu0 0.0
        %3102 = vmatpush1.msra.mxu0 0.0
        %3103 = vmatprep.subr.mxu0 0.0
        %3104 = vmatpush1.msra.mxu0 0.0
        %3105 = vmatprep.subr.mxu0 0.0
        %3106 = vmatpush1.msra.mxu0 0.0
        %3107 = vmatprep.subr.mxu0 0.0
        %3108 = vmatpush1.msra.mxu0 0.0
        %3109 = vmatprep.subr.mxu0 0.0
        %3110 = vmatpush1.msra.mxu0 0.0
        %3111 = vmatprep.subr.mxu0 0.0
        %3112 = vmatpush1.msra.mxu0 0.0
        %3113 = vmatprep.subr.mxu0 0.0
        %3114 = vmatpush1.msra.mxu0 0.0
        %3115 = vmatprep.subr.mxu0 0.0
        %3116 = vmatpush1.msra.mxu0 0.0
        %3117 = vmatprep.subr.mxu0 0.0
        %3118 = vmatpush1.msra.mxu0 0.0
        %3119 = vmatprep.subr.mxu0 0.0
        %3120 = vmatpush1.msra.mxu0 0.0
        %3121 = vmatprep.subr.mxu0 0.0
        %3122 = vmatpush1.msra.mxu0 0.0
        %3123 = vmatprep.subr.mxu0 0.0
        %3124 = vmatpush1.msra.mxu0 0.0
        %3125 = vmatprep.subr.mxu0 0.0
        %3126 = vmatpush1.msra.mxu0 %v2146
        %3127 = vmatprep.subr.mxu0 0.0
        %3128 = vmatpush1.msra.mxu0 %v2145
        %3129 = vmatprep.subr.mxu0 0.0
        %3130 = vmatpush1.msra.mxu0 %v2144
        %3131 = vmatprep.subr.mxu0 0.0
        %3132 = vmatpush1.msra.mxu0 %v2143
        %3133 = vmatprep.subr.mxu0 0.0
        %3134 = vmatpush2.msra.mxu0 0.0
        %3135 = vmatprep.subr.mxu0 0.0
        %3136 = vmatpush2.msra.mxu0 0.0
        %3137 = vmatprep.subr.mxu0 0.0
        %3138 = vmatpush2.msra.mxu0 0.0
        %3139 = vmatprep.subr.mxu0 0.0
        %3140 = vmatpush2.msra.mxu0 0.0
        %3141 = vmatprep.subr.mxu0 0.0
        %3142 = vmatpush2.msra.mxu0 0.0
        %3143 = vmatprep.subr.mxu0 0.0
        %3144 = vmatpush2.msra.mxu0 0.0
        %3145 = vmatprep.subr.mxu0 0.0
        %3146 = vmatpush2.msra.mxu0 0.0
        %3147 = vmatprep.subr.mxu0 0.0
        %3148 = vmatpush2.msra.mxu0 0.0
        %3149 = vmatprep.subr.mxu0 0.0
        %3150 = vmatpush2.msra.mxu0 0.0
        %3151 = vmatprep.subr.mxu0 0.0
        %3152 = vmatpush2.msra.mxu0 0.0
        %3153 = vmatprep.subr.mxu0 0.0
        %3154 = vmatpush2.msra.mxu0 0.0
        %3155 = vmatprep.subr.mxu0 0.0
        %3156 = vmatpush2.msra.mxu0 0.0
        %3157 = vmatprep.subr.mxu0 0.0
        %3158 = vmatpush2.msra.mxu0 0.0
        %3159 = vmatprep.subr.mxu0 0.0
        %3160 = vmatpush2.msra.mxu0 0.0
        %3161 = vmatprep.subr.mxu0 0.0
        %3162 = vmatpush2.msra.mxu0 0.0
        %3163 = vmatprep.subr.mxu0 0.0
        %3164 = vmatpush2.msra.mxu0 0.0
        %3165 = vmatprep.mubr.f32.mxu0 0.0
        %3166 = vmatmul.mubr.f32.gmra.mxu0 %v3099
        %v3167 = vpop.f32.mrf.mxu0
        %v3168 = vadd.f32 %v3096, %v3167
        %v3169 = vpop.f32.mrf.mxu0
        %3170 = vdwg.mxu0
        %v3171 = vld [vmem:[%s45] sm:$0x1]
        %v3172 = vld [vmem:[%s47] sm:$0x1]
        %v3173 = vadd.f32 %v2127, %v3168
        %v3174 = vsel %vm1064, %v3173, 0.0
        %3175 = vadd.xlane.f32.xlu0 %v3174
        %v3176 = vpop.xlane.xlu0 %3175
        %v3177 = vmul.f32 %v3176, %v2096
        %v3178 = vsub.f32 %v3173, %v3177
        %v3179 = vmul.f32 %v3178, %v3178
        %v3180 = vsel %vm1064, %v3179, 0.0
        %3181 = vadd.xlane.f32.xlu0 %v3180
        %v3182 = vpop.xlane.xlu0 %3181
        %v3183 = vmul.f32 %v3182, %v2096
        %v3184 = vrsqrt.pop %v3183
        %v3185 = vmul.f32 %v3183, %v3184
        %vm3186 = vcmp.eq.f32.partialorder %v3183, inf
        %v3187 = vsel %vm3186, %v3183, %v3185
        %vm3188 = vcmp.eq.f32.partialorder %v3183, 0.0
        %v3189 = vand.u32 %v3183, 2147483648
        %v3190 = vsel %vm3188, %v3189, %v3187
        %v3192 = vlaneseq
        %v3193 = vshrl.u32 %v3192, 7
        %v3194 = vsub.s32 0, %v3193
        %v3195 = vrot.slane %v3171, %v3194
        %v3197 = vmul.f32 %v3195, %v3178
        %v3198 = vadd.f32 %v3190, 1e-10
        %v3199 = vrcp.pop %v3198
        %v3200 = vmul.f32 %v3197, %v3199
        %v3202 = vlaneseq
        %v3203 = vshrl.u32 %v3202, 7
        %v3204 = vsub.s32 0, %v3203
        %v3205 = vrot.slane %v3172, %v3204
        %v3207 = vadd.f32 %v3200, %v3205
        %v3208 = vld [vmem:[%s49] sm:$0xff]
        %v3209 = vld [vmem:[%s49 + $0x8] sm:$0xff]
        %v3210 = vld [vmem:[%s49 + $0x10] sm:$0xff]
        %v3211 = vld [vmem:[%s49 + $0x18] sm:$0xff]
        %v3212 = vld [vmem:[%s51] sm:$0x1]
        %v3214 = vlaneseq
        %v3215 = vshrl.u32 %v3214, 7
        %v3216 = vsub.s32 0, %v3215
        %v3217 = vrot.slane %v3212, %v3216
        %v3220 = vsel %vm1064, %v3207, 0
        %3222 = vmatprep.subr.mxu0 0.0
        %3223 = vmatpush1.msra.mxu0 0.0
        %3224 = vmatprep.subr.mxu0 0.0
        %3225 = vmatpush1.msra.mxu0 0.0
        %3226 = vmatprep.subr.mxu0 0.0
        %3227 = vmatpush1.msra.mxu0 0.0
        %3228 = vmatprep.subr.mxu0 0.0
        %3229 = vmatpush1.msra.mxu0 0.0
        %3230 = vmatprep.subr.mxu0 0.0
        %3231 = vmatpush1.msra.mxu0 0.0
        %3232 = vmatprep.subr.mxu0 0.0
        %3233 = vmatpush1.msra.mxu0 0.0
        %3234 = vmatprep.subr.mxu0 0.0
        %3235 = vmatpush1.msra.mxu0 0.0
        %3236 = vmatprep.subr.mxu0 0.0
        %3237 = vmatpush1.msra.mxu0 0.0
        %3238 = vmatprep.subr.mxu0 0.0
        %3239 = vmatpush1.msra.mxu0 0.0
        %3240 = vmatprep.subr.mxu0 0.0
        %3241 = vmatpush1.msra.mxu0 0.0
        %3242 = vmatprep.subr.mxu0 0.0
        %3243 = vmatpush1.msra.mxu0 0.0
        %3244 = vmatprep.subr.mxu0 0.0
        %3245 = vmatpush1.msra.mxu0 0.0
        %3246 = vmatprep.subr.mxu0 0.0
        %3247 = vmatpush1.msra.mxu0 %v3211
        %3248 = vmatprep.subr.mxu0 0.0
        %3249 = vmatpush1.msra.mxu0 %v3210
        %3250 = vmatprep.subr.mxu0 0.0
        %3251 = vmatpush1.msra.mxu0 %v3209
        %3252 = vmatprep.subr.mxu0 0.0
        %3253 = vmatpush1.msra.mxu0 %v3208
        %3254 = vmatprep.subr.mxu0 0.0
        %3255 = vmatpush2.msra.mxu0 0.0
        %3256 = vmatprep.subr.mxu0 0.0
        %3257 = vmatpush2.msra.mxu0 0.0
        %3258 = vmatprep.subr.mxu0 0.0
        %3259 = vmatpush2.msra.mxu0 0.0
        %3260 = vmatprep.subr.mxu0 0.0
        %3261 = vmatpush2.msra.mxu0 0.0
        %3262 = vmatprep.subr.mxu0 0.0
        %3263 = vmatpush2.msra.mxu0 0.0
        %3264 = vmatprep.subr.mxu0 0.0
        %3265 = vmatpush2.msra.mxu0 0.0
        %3266 = vmatprep.subr.mxu0 0.0
        %3267 = vmatpush2.msra.mxu0 0.0
        %3268 = vmatprep.subr.mxu0 0.0
        %3269 = vmatpush2.msra.mxu0 0.0
        %3270 = vmatprep.subr.mxu0 0.0
        %3271 = vmatpush2.msra.mxu0 0.0
        %3272 = vmatprep.subr.mxu0 0.0
        %3273 = vmatpush2.msra.mxu0 0.0
        %3274 = vmatprep.subr.mxu0 0.0
        %3275 = vmatpush2.msra.mxu0 0.0
        %3276 = vmatprep.subr.mxu0 0.0
        %3277 = vmatpush2.msra.mxu0 0.0
        %3278 = vmatprep.subr.mxu0 0.0
        %3279 = vmatpush2.msra.mxu0 0.0
        %3280 = vmatprep.subr.mxu0 0.0
        %3281 = vmatpush2.msra.mxu0 0.0
        %3282 = vmatprep.subr.mxu0 0.0
        %3283 = vmatpush2.msra.mxu0 0.0
        %3284 = vmatprep.subr.mxu0 0.0
        %3285 = vmatpush2.msra.mxu0 0.0
        %3286 = vmatprep.mubr.f32.mxu0 0.0
        %3287 = vmatmul.mubr.f32.gmra.mxu0 %v3220
        %v3288 = vpop.f32.mrf.mxu0
        %v3289 = vadd.f32 %v3217, %v3288
        %v3290 = vpop.f32.mrf.mxu0
        %3291 = vdwg.mxu0
        %v3292 = vmax.f32 %v3289, 0.0
        %v3293 = vld [vmem:[%s53] sm:$0xff]
        %v3294 = vld [vmem:[%s53 + $0x8] sm:$0xff]
        %v3295 = vld [vmem:[%s53 + $0x10] sm:$0xff]
        %v3296 = vld [vmem:[%s53 + $0x18] sm:$0xff]
        %v3297 = vld [vmem:[%s53 + $0x20] sm:$0xff]
        %v3298 = vld [vmem:[%s53 + $0x28] sm:$0xff]
        %v3299 = vld [vmem:[%s53 + $0x30] sm:$0xff]
        %v3300 = vld [vmem:[%s53 + $0x38] sm:$0xff]
        %v3301 = vld [vmem:[%s55] sm:$0x1]
        %v3303 = vlaneseq
        %v3304 = vshrl.u32 %v3303, 7
        %v3305 = vsub.s32 0, %v3304
        %v3306 = vrot.slane %v3301, %v3305
        %vm3308 = vcmask 523264
        %v3310 = vsel %vm3308, %v3292, 0
        %3312 = vmatprep.subr.mxu0 0.0
        %3313 = vmatpush1.msra.mxu0 0.0
        %3314 = vmatprep.subr.mxu0 0.0
        %3315 = vmatpush1.msra.mxu0 0.0
        %3316 = vmatprep.subr.mxu0 0.0
        %3317 = vmatpush1.msra.mxu0 0.0
        %3318 = vmatprep.subr.mxu0 0.0
        %3319 = vmatpush1.msra.mxu0 0.0
        %3320 = vmatprep.subr.mxu0 0.0
        %3321 = vmatpush1.msra.mxu0 0.0
        %3322 = vmatprep.subr.mxu0 0.0
        %3323 = vmatpush1.msra.mxu0 0.0
        %3324 = vmatprep.subr.mxu0 0.0
        %3325 = vmatpush1.msra.mxu0 0.0
        %3326 = vmatprep.subr.mxu0 0.0
        %3327 = vmatpush1.msra.mxu0 0.0
        %3328 = vmatprep.subr.mxu0 0.0
        %3329 = vmatpush1.msra.mxu0 %v3300
        %3330 = vmatprep.subr.mxu0 0.0
        %3331 = vmatpush1.msra.mxu0 %v3299
        %3332 = vmatprep.subr.mxu0 0.0
        %3333 = vmatpush1.msra.mxu0 %v3298
        %3334 = vmatprep.subr.mxu0 0.0
        %3335 = vmatpush1.msra.mxu0 %v3297
        %3336 = vmatprep.subr.mxu0 0.0
        %3337 = vmatpush1.msra.mxu0 %v3296
        %3338 = vmatprep.subr.mxu0 0.0
        %3339 = vmatpush1.msra.mxu0 %v3295
        %3340 = vmatprep.subr.mxu0 0.0
        %3341 = vmatpush1.msra.mxu0 %v3294
        %3342 = vmatprep.subr.mxu0 0.0
        %3343 = vmatpush1.msra.mxu0 %v3293
        %3344 = vmatprep.subr.mxu0 0.0
        %3345 = vmatpush2.msra.mxu0 0.0
        %3346 = vmatprep.subr.mxu0 0.0
        %3347 = vmatpush2.msra.mxu0 0.0
        %3348 = vmatprep.subr.mxu0 0.0
        %3349 = vmatpush2.msra.mxu0 0.0
        %3350 = vmatprep.subr.mxu0 0.0
        %3351 = vmatpush2.msra.mxu0 0.0
        %3352 = vmatprep.subr.mxu0 0.0
        %3353 = vmatpush2.msra.mxu0 0.0
        %3354 = vmatprep.subr.mxu0 0.0
        %3355 = vmatpush2.msra.mxu0 0.0
        %3356 = vmatprep.subr.mxu0 0.0
        %3357 = vmatpush2.msra.mxu0 0.0
        %3358 = vmatprep.subr.mxu0 0.0
        %3359 = vmatpush2.msra.mxu0 0.0
        %3360 = vmatprep.subr.mxu0 0.0
        %3361 = vmatpush2.msra.mxu0 0.0
        %3362 = vmatprep.subr.mxu0 0.0
        %3363 = vmatpush2.msra.mxu0 0.0
        %3364 = vmatprep.subr.mxu0 0.0
        %3365 = vmatpush2.msra.mxu0 0.0
        %3366 = vmatprep.subr.mxu0 0.0
        %3367 = vmatpush2.msra.mxu0 0.0
        %3368 = vmatprep.subr.mxu0 0.0
        %3369 = vmatpush2.msra.mxu0 0.0
        %3370 = vmatprep.subr.mxu0 0.0
        %3371 = vmatpush2.msra.mxu0 0.0
        %3372 = vmatprep.subr.mxu0 0.0
        %3373 = vmatpush2.msra.mxu0 0.0
        %3374 = vmatprep.subr.mxu0 0.0
        %3375 = vmatpush2.msra.mxu0 0.0
        %3376 = vmatprep.mubr.f32.mxu0 0.0
        %3377 = vmatmul.mubr.f32.gmra.mxu0 %v3310
        %v3378 = vpop.f32.mrf.mxu0
        %v3379 = vadd.f32 %v3306, %v3378
        %v3380 = vpop.f32.mrf.mxu0
        %3381 = vdwg.mxu0
        %v3382 = vld [vmem:[%s57] sm:$0x1]
        %v3383 = vld [vmem:[#allocation2] sm:$0x1]
        %v3384 = vadd.f32 %v3207, %v3379
        %v3385 = vsel %vm1064, %v3384, 0.0
        %3386 = vadd.xlane.f32.xlu0 %v3385
        %v3387 = vpop.xlane.xlu0 %3386
        %v3388 = vmul.f32 %v3387, %v2096
        %v3389 = vsub.f32 %v3384, %v3388
        %v3390 = vmul.f32 %v3389, %v3389
        %v3391 = vsel %vm1064, %v3390, 0.0
        %3392 = vadd.xlane.f32.xlu0 %v3391
        %v3393 = vpop.xlane.xlu0 %3392
        %v3394 = vmul.f32 %v3393, %v2096
        %v3395 = vrsqrt.pop %v3394
        %v3396 = vmul.f32 %v3394, %v3395
        %vm3397 = vcmp.eq.f32.partialorder %v3394, inf
        %v3398 = vsel %vm3397, %v3394, %v3396
        %vm3399 = vcmp.eq.f32.partialorder %v3394, 0.0
        %v3400 = vand.u32 %v3394, 2147483648
        %v3401 = vsel %vm3399, %v3400, %v3398
        %v3403 = vlaneseq
        %v3404 = vshrl.u32 %v3403, 7
        %v3405 = vsub.s32 0, %v3404
        %v3406 = vrot.slane %v3382, %v3405
        %v3408 = vmul.f32 %v3406, %v3389
        %v3409 = vadd.f32 %v3401, 1e-10
        %v3410 = vrcp.pop %v3409
        %v3411 = vmul.f32 %v3408, %v3410
        %v3413 = vlaneseq
        %v3414 = vshrl.u32 %v3413, 7
        %v3415 = vsub.s32 0, %v3414
        %v3416 = vrot.slane %v3383, %v3415
        %v3418 = vadd.f32 %v3411, %v3416
        %3419 = vst.msk [vmem:[%s1031] sm:$0xff] %vm1064, %v3418
        %p3420 = scmp.lt.s32.totalorder %s77, 1
        %s3421 = scalar_select %p3420, %s77, 1
        %p3422 = scmp.lt.s32.totalorder %s78, 1
        %s3423 = scalar_select %p3422, %s78, 1
        %s3424 = smul.addr %s3421, 2
        %s3425 = sadd.s32 %s3423, %s3424
        %s3426 = smul.addr %s3425, 8
        %s3427 = scalar_lea.vmem %s61, %s3426
        // Predicated region
        $region145: #{decoder_forward.4} parent=139 // pred_check
          %p3428 = pneg %p757
        $region146: #{decoder_forward.4} parent=139 // pred_check_branch
          %3430 = sbr.rel (%p3428) target = $region148
        $region147: #{decoder_forward.4} parent=139 // pred_region
          _
        $region148: #{decoder_forward.4} parent=139 // pred_fallthru
          _
      $region140: #{decoder_forward.4} parent=5 // pred_fallthru
        _
      %p3431 = scmp.le.s32.totalorder 2, %s68
      // Predicated region
      $region149: #{decoder_forward.4} parent=5 // pred_check
        %p3432 = pneg %p3431
      $region150: #{decoder_forward.4} parent=5 // pred_check_branch
        %3434 = sbr.rel (%p3432) target = $region152
      $region151: #{decoder_forward.4} parent=5 // pred_region
        %s3435 = ssub.s32 %s68, 2
        // Predicated region
        $region153: #{decoder_forward.4} parent=151 // pred_check
          %p3436 = pneg %p763
        $region154: #{decoder_forward.4} parent=151 // pred_check_branch
          %3438 = sbr.rel (%p3436) target = $region156
        $region155: #{decoder_forward.4} parent=151 // pred_region
          %p3439 = scmp.lt.s32.totalorder %s79, 1
          %s3440 = scalar_select %p3439, %s79, 1
          %p3441 = scmp.lt.s32.totalorder %s80, 1
          %s3442 = scalar_select %p3441, %s80, 1
          %s3443 = smul.addr %s3440, 2
          %s3444 = sadd.s32 %s3442, %s3443
          %s3445 = smul.addr %s3444, 8
          %s3446 = scalar_lea.vmem %s61, %s3445
        $region156: #{decoder_forward.4} parent=151 // pred_fallthru
          _
      $region152: #{decoder_forward.4} parent=5 // pred_fallthru
        _
    $region6: #{decoder_forward.4} parent=1 // loop_footer
      %s72 = sadd.s32 1, %s68
    $region7: #{decoder_forward.4} parent=1 // loop_footer_branch
      %67 = sbr.rel target = $region3
    $region8: #{decoder_forward.4} parent=1 // loop_exit
      _
    %3447 = vsyncpa [#allocation3], 1
    %s3448 = scalar_lea.sflag [#allocation3], 1
    %3449 = vsyncpa %s3448, 1

// kernel: decoder_forward.3
$region0: #{decoder_forward.3}
  #allocation0 [shape = 'u32[]', space=smem, size = 0x4, offset = 0x4, fixed_abs, tag = 'smem constant byte address 0x4 - core index']
  #allocation1 [shape = 'u32[144,128]{1,0:T(1,128)}', space=vmem, size = 0x12000, scoped, tag = 'internal scratch']
  %s0 = inlined_call_operand.smem [shape: u32[31], index: -1, kind: input, shape index: {}]
  %s1 = sld [smem:[%s0]]
  %s2 = scalar_lea.smem %s0, 1
  %s3 = sld [smem:[%s2]]
  %s4 = scalar_lea.smem %s0, 2
  %s5 = sld [smem:[%s4]]
  %s6 = scalar_lea.smem %s0, 3
  %s7 = sld [smem:[%s6]]
  %s8 = scalar_lea.smem %s0, 4
  %s9 = sld [smem:[%s8]]
  %s10 = scalar_lea.smem %s0, 5
  %s11 = sld [smem:[%s10]]
  %s12 = scalar_lea.smem %s0, 6
  %s13 = sld [smem:[%s12]]
  %s14 = scalar_lea.smem %s0, 7
  %s15 = sld [smem:[%s14]]
  %s16 = scalar_lea.smem %s0, 8
  %s17 = sld [smem:[%s16]]
  %s18 = scalar_lea.smem %s0, 9
  %s19 = sld [smem:[%s18]]
  %s20 = scalar_lea.smem %s0, 10
  %s21 = sld [smem:[%s20]]
  %s22 = scalar_lea.smem %s0, 11
  %s23 = sld [smem:[%s22]]
  %s24 = scalar_lea.smem %s0, 12
  %s25 = sld [smem:[%s24]]
  %s26 = scalar_lea.smem %s0, 13
  %s27 = sld [smem:[%s26]]
  %s28 = scalar_lea.smem %s0, 14
  %s29 = sld [smem:[%s28]]
  %s30 = scalar_lea.smem %s0, 15
  %s31 = sld [smem:[%s30]]
  %s32 = scalar_lea.smem %s0, 16
  %s33 = sld [smem:[%s32]]
  %s34 = scalar_lea.smem %s0, 17
  %s35 = sld [smem:[%s34]]
  %s36 = scalar_lea.smem %s0, 18
  %s37 = sld [smem:[%s36]]
  %s38 = scalar_lea.smem %s0, 19
  %s39 = sld [smem:[%s38]]
  %s40 = scalar_lea.smem %s0, 20
  %s41 = sld [smem:[%s40]]
  %s42 = scalar_lea.smem %s0, 21
  %s43 = sld [smem:[%s42]]
  %s44 = scalar_lea.smem %s0, 22
  %s45 = sld [smem:[%s44]]
  %s46 = scalar_lea.smem %s0, 23
  %s47 = sld [smem:[%s46]]
  %s48 = scalar_lea.smem %s0, 24
  %s49 = sld [smem:[%s48]]
  %s50 = scalar_lea.smem %s0, 25
  %s51 = sld [smem:[%s50]]
  %s52 = scalar_lea.smem %s0, 26
  %s53 = sld [smem:[%s52]]
  %s54 = scalar_lea.smem %s0, 27
  %s55 = sld [smem:[%s54]]
  %s56 = scalar_lea.smem %s0, 28
  %s57 = sld [smem:[%s56]]
  %s58 = scalar_lea.smem %s0, 29
  %s59 = sld [smem:[%s58]]
  %s60 = scalar_lea.smem %s0, 30
  %s61 = sld [smem:[%s60]]
  %s62 = sld [smem:[#allocation0]]
  $region213: #{decoder_forward.3} parent=0
    _
  %s64 = ssub.s32 1, %s62
  %s65 = scalar_select 0, %s64, %s62
  $region1: #{decoder_forward.3} parent=0
    #allocation2 [shape = 'u8[16384]{0}', space=vmem, size = 0x4000, scoped, tag = 'input window, operand 4, single buffered']
    #allocation3 [shape = 's32[2]{0}', space=sflag, size = 0x8, scoped, tag = 'scoped memory for decoder_forward.3']
    #allocation4 [shape = 'u8[512]{0}', space=vmem, size = 0x400, scoped, tag = 'input window, operand 5, single buffered']
    #allocation5 [shape = 's32[1]{0}', space=sflag, size = 0x4, scoped, tag = 'scoped memory for decoder_forward.3']
    #allocation6 [shape = 'u8[16384]{0}', space=vmem, size = 0x4000, scoped, tag = 'input window, operand 6, single buffered']
    #allocation7 [shape = 'u8[512]{0}', space=vmem, size = 0x400, scoped, tag = 'input window, operand 7, single buffered']
    #allocation8 [shape = 's32[1]{0}', space=sflag, size = 0x4, scoped, tag = 'scoped memory for decoder_forward.3']
    #allocation9 [shape = 'u8[16384]{0}', space=vmem, size = 0x4000, scoped, tag = 'input window, operand 8, single buffered']
    #allocation10 [shape = 'u8[512]{0}', space=vmem, size = 0x400, scoped, tag = 'input window, operand 9, single buffered']
    #allocation11 [shape = 's32[1]{0}', space=sflag, size = 0x4, scoped, tag = 'scoped memory for decoder_forward.3']
    #allocation12 [shape = 'u8[16384]{0}', space=vmem, size = 0x4000, scoped, tag = 'input window, operand 10, single buffered']
    #allocation13 [shape = 'u8[512]{0}', space=vmem, size = 0x400, scoped, tag = 'input window, operand 11, single buffered']
    #allocation14 [shape = 's32[1]{0}', space=sflag, size = 0x4, scoped, tag = 'scoped memory for decoder_forward.3']
    #allocation15 [shape = 'u8[512]{0}', space=vmem, size = 0x400, scoped, tag = 'input window, operand 15, single buffered']
    #allocation16 [shape = 'u8[16384]{0}', space=vmem, size = 0x4000, scoped, tag = 'input window, operand 16, single buffered']
    #allocation17 [shape = 's32[1]{0}', space=sflag, size = 0x4, scoped, tag = 'scoped memory for decoder_forward.3']
    #allocation18 [shape = 'u8[512]{0}', space=vmem, size = 0x400, scoped, tag = 'input window, operand 17, single buffered']
    #allocation19 [shape = 'u8[16384]{0}', space=vmem, size = 0x4000, scoped, tag = 'input window, operand 18, single buffered']
    #allocation20 [shape = 's32[1]{0}', space=sflag, size = 0x4, scoped, tag = 'scoped memory for decoder_forward.3']
    #allocation21 [shape = 'u8[16384]{0}', space=vmem, size = 0x4000, scoped, tag = 'input window, operand 20, single buffered']
    #allocation22 [shape = 'u8[512]{0}', space=vmem, size = 0x400, scoped, tag = 'input window, operand 21, single buffered']
    #allocation23 [shape = 's32[1]{0}', space=sflag, size = 0x4, scoped, tag = 'scoped memory for decoder_forward.3']
    #allocation24 [shape = 'u8[16384]{0}', space=vmem, size = 0x4000, scoped, tag = 'input window, operand 24, single buffered']
    %66 = vsyncpa [#allocation3], 0
    %67 = vsyncpa [#allocation5], 0
    %68 = vsyncpa [#allocation8], 0
    %69 = vsyncpa [#allocation11], 0
    %70 = vsyncpa [#allocation14], 0
    %71 = vsyncpa [#allocation17], 0
    %72 = vsyncpa [#allocation20], 0
    %73 = vsyncpa [#allocation23], 0
    loop: start=0, step=1, limit=6
    $region2: #{decoder_forward.3} parent=1 // loop_pre_header
      _
    $region3: #{decoder_forward.3} parent=1 // loop_header
      %s75 = sphi 0, %s79
      %p76 = scmp.ge.s32.totalorder %s75, 6
      %s82 = sphi 0, %s94
      %s83 = sphi 0, %s90
      %s84 = sphi 0, %s82
      %s85 = sphi 0, %s83
      %s86 = sphi 0, %s84
      %s87 = sphi 0, %s85
      %s99 = sphi 0, %s101
      %s102 = sphi 0, %s99
      %s103 = sphi 0, %s102
      %s119 = sphi 0, %s103
      %s125 = sphi 0, %s127
      %s128 = sphi 0, %s125
      %s129 = sphi 0, %s128
      %s145 = sphi 0, %s129
      %s151 = sphi 0, %s153
      %s154 = sphi 0, %s151
      %s155 = sphi 0, %s154
      %s171 = sphi 0, %s155
      %s177 = sphi 0, %s179
      %s180 = sphi 0, %s177
      %s181 = sphi 0, %s180
      %s197 = sphi 0, %s181
      %s201 = sphi 0, %s201
      %s203 = sphi 0, %s201
      %s204 = sphi 0, %s203
      %s218 = sphi 0, %s204
      %s222 = sphi 0, %s222
      %s224 = sphi 0, %s222
      %s225 = sphi 0, %s224
      %s239 = sphi 0, %s225
      %s243 = sphi 0, %s243
      %s245 = sphi 0, %s243
      %s246 = sphi 0, %s245
      %s260 = sphi 0, %s246
      %s264 = sphi 0, %s264
      %s266 = sphi 0, %s264
      %s267 = sphi 0, %s266
      %s281 = sphi 0, %s267
      %s285 = sphi 0, %s285
      %s287 = sphi 0, %s285
      %s288 = sphi 0, %s287
      %s302 = sphi 0, %s288
      %s306 = sphi 0, %s306
      %s308 = sphi 0, %s306
      %s309 = sphi 0, %s308
      %s323 = sphi 0, %s309
      %s327 = sphi 0, %s327
      %s329 = sphi 0, %s327
      %s330 = sphi 0, %s329
      %s344 = sphi 0, %s330
      %s348 = sphi 0, %s348
      %s350 = sphi 0, %s348
      %s351 = sphi 0, %s350
      %s365 = sphi 0, %s351
      %s369 = sphi 0, %s369
      %s371 = sphi 0, %s369
      %s372 = sphi 0, %s371
      %s386 = sphi 0, %s372
      %s390 = sphi 0, %s390
      %s392 = sphi 0, %s390
      %s393 = sphi 0, %s392
      %s407 = sphi 0, %s393
      %s411 = sphi 0, %s411
      %s413 = sphi 0, %s411
      %s414 = sphi 0, %s413
      %s428 = sphi 0, %s414
      %s432 = sphi 0, %s432
      %s434 = sphi 0, %s432
      %s435 = sphi 0, %s434
      %s449 = sphi 0, %s435
      %s453 = sphi 0, %s453
      %s455 = sphi 0, %s453
      %s456 = sphi 0, %s455
      %s470 = sphi 0, %s456
      %s474 = sphi 0, %s474
      %s476 = sphi 0, %s474
      %s477 = sphi 0, %s476
      %s491 = sphi 0, %s477
      %s495 = sphi 0, %s495
      %s497 = sphi 0, %s495
      %s498 = sphi 0, %s497
      %s512 = sphi 0, %s498
      %s516 = sphi 0, %s516
      %s518 = sphi 0, %s516
      %s519 = sphi 0, %s518
      %s533 = sphi 0, %s519
      %s537 = sphi 0, %s537
      %s539 = sphi 0, %s537
      %s540 = sphi 0, %s539
      %s554 = sphi 0, %s540
      %s558 = sphi 0, %s558
      %s560 = sphi 0, %s558
      %s561 = sphi 0, %s560
      %s575 = sphi 0, %s561
      %s579 = sphi 0, %s579
      %s581 = sphi 0, %s579
      %s582 = sphi 0, %s581
      %s596 = sphi 0, %s582
      %s600 = sphi 0, %s600
      %s602 = sphi 0, %s600
      %s603 = sphi 0, %s602
      %s617 = sphi 0, %s603
      %s621 = sphi 0, %s621
      %s623 = sphi 0, %s621
      %s624 = sphi 0, %s623
      %s638 = sphi 0, %s624
      %s642 = sphi 0, %s642
      %s644 = sphi 0, %s642
      %s645 = sphi 0, %s644
      %s659 = sphi 0, %s645
      %s663 = sphi 0, %s663
      %s665 = sphi 0, %s663
      %s666 = sphi 0, %s665
      %s680 = sphi 0, %s666
      %s684 = sphi 0, %s684
      %s686 = sphi 0, %s684
      %s687 = sphi 0, %s686
      %s701 = sphi 0, %s687
      %s705 = sphi 0, %s705
      %s707 = sphi 0, %s705
      %s708 = sphi 0, %s707
      %s722 = sphi 0, %s708
      %s726 = sphi 0, %s726
      %s728 = sphi 0, %s726
      %s729 = sphi 0, %s728
      %s743 = sphi 0, %s729
      %s751 = sphi 0, %s753
      %s754 = sphi 0, %s751
      %s755 = sphi 0, %s754
      %s771 = sphi 0, %s755
    $region4: #{decoder_forward.3} parent=1 // loop_header_branch
      %78 = sbr.rel (%p76) target = $region8
    $region5: #{decoder_forward.3} parent=1 // loop_body
      %s80 = ssub.s32 %s75, 1
      %s81 = ssub.s32 %s75, 2
      %s88 = sadd.s32 1, %s83
      %p89 = scmp.ge.s32.totalorder %s88, 2
      %s90 = scalar_select %p89, 0, %s88
      %s91 = sadd.s32 1, %s82
      %s92 = scalar_select %p89, %s91, %s82
      %p93 = scmp.ge.s32.totalorder %s92, 2
      %s94 = scalar_select %p93, 0, %s92
      %s95 = ssub.s32 %s82, %s94
      %s96 = ssub.s32 %s83, %s90
      %s97 = sor.u32 %s95, %s96
      %p98 = scmp.eq.s32.totalorder %s97, 0
      %s100 = sadd.s32 %s99, 1
      %s101 = scalar_select %p98, %s99, %s100
      %p104 = pneg %p98
      %p105 = scmp.eq.s32.totalorder %s75, 3
      %p106 = por %p104, %p105
      %p107 = scmp.ne.s32.totalorder %s99, %s102
      %p108 = scmp.eq.s32.totalorder %s75, 0
      %p109 = por %p107, %p108
      %p110 = scmp.ne.s32.totalorder %s99, %s102
      %p111 = scmp.eq.s32.totalorder %s80, 3
      %p112 = por %p110, %p111
      %p113 = scmp.ne.s32.totalorder %s102, %s103
      %p114 = scmp.eq.s32.totalorder %s80, 0
      %p115 = por %p113, %p114
      %p116 = scmp.ne.s32.totalorder %s102, %s103
      %p117 = scmp.eq.s32.totalorder %s81, 3
      %p118 = por %p116, %p117
      %p120 = scmp.ne.s32.totalorder %s103, %s119
      %p121 = scmp.eq.s32.totalorder %s81, 0
      %p122 = por %p120, %p121
      %s123 = ssub.s32 %s82, %s94
      %p124 = scmp.eq.s32.totalorder %s123, 0
      %s126 = sadd.s32 %s125, 1
      %s127 = scalar_select %p124, %s125, %s126
      %p130 = pneg %p124
      %p131 = scmp.eq.s32.totalorder %s75, 3
      %p132 = por %p130, %p131
      %p133 = scmp.ne.s32.totalorder %s125, %s128
      %p134 = scmp.eq.s32.totalorder %s75, 0
      %p135 = por %p133, %p134
      %p136 = scmp.ne.s32.totalorder %s125, %s128
      %p137 = scmp.eq.s32.totalorder %s80, 3
      %p138 = por %p136, %p137
      %p139 = scmp.ne.s32.totalorder %s128, %s129
      %p140 = scmp.eq.s32.totalorder %s80, 0
      %p141 = por %p139, %p140
      %p142 = scmp.ne.s32.totalorder %s128, %s129
      %p143 = scmp.eq.s32.totalorder %s81, 3
      %p144 = por %p142, %p143
      %p146 = scmp.ne.s32.totalorder %s129, %s145
      %p147 = scmp.eq.s32.totalorder %s81, 0
      %p148 = por %p146, %p147
      %s149 = ssub.s32 %s82, %s94
      %p150 = scmp.eq.s32.totalorder %s149, 0
      %s152 = sadd.s32 %s151, 1
      %s153 = scalar_select %p150, %s151, %s152
      %p156 = pneg %p150
      %p157 = scmp.eq.s32.totalorder %s75, 3
      %p158 = por %p156, %p157
      %p159 = scmp.ne.s32.totalorder %s151, %s154
      %p160 = scmp.eq.s32.totalorder %s75, 0
      %p161 = por %p159, %p160
      %p162 = scmp.ne.s32.totalorder %s151, %s154
      %p163 = scmp.eq.s32.totalorder %s80, 3
      %p164 = por %p162, %p163
      %p165 = scmp.ne.s32.totalorder %s154, %s155
      %p166 = scmp.eq.s32.totalorder %s80, 0
      %p167 = por %p165, %p166
      %p168 = scmp.ne.s32.totalorder %s154, %s155
      %p169 = scmp.eq.s32.totalorder %s81, 3
      %p170 = por %p168, %p169
      %p172 = scmp.ne.s32.totalorder %s155, %s171
      %p173 = scmp.eq.s32.totalorder %s81, 0
      %p174 = por %p172, %p173
      %s175 = ssub.s32 %s83, %s90
      %p176 = scmp.eq.s32.totalorder %s175, 0
      %s178 = sadd.s32 %s177, 1
      %s179 = scalar_select %p176, %s177, %s178
      %p182 = pneg %p176
      %p183 = scmp.eq.s32.totalorder %s75, 3
      %p184 = por %p182, %p183
      %p185 = scmp.ne.s32.totalorder %s177, %s180
      %p186 = scmp.eq.s32.totalorder %s75, 0
      %p187 = por %p185, %p186
      %p188 = scmp.ne.s32.totalorder %s177, %s180
      %p189 = scmp.eq.s32.totalorder %s80, 3
      %p190 = por %p188, %p189
      %p191 = scmp.ne.s32.totalorder %s180, %s181
      %p192 = scmp.eq.s32.totalorder %s80, 0
      %p193 = por %p191, %p192
      %p194 = scmp.ne.s32.totalorder %s180, %s181
      %p195 = scmp.eq.s32.totalorder %s81, 3
      %p196 = por %p194, %p195
      %p198 = scmp.ne.s32.totalorder %s181, %s197
      %p199 = scmp.eq.s32.totalorder %s81, 0
      %p200 = por %p198, %p199
      %s202 = sadd.s32 %s201, 1
      %p205 = scmp.eq.s32.totalorder %s75, 3
      %p206 = scmp.ne.s32.totalorder %s201, %s203
      %p207 = scmp.eq.s32.totalorder %s75, 0
      %p208 = por %p206, %p207
      %p209 = scmp.ne.s32.totalorder %s201, %s203
      %p210 = scmp.eq.s32.totalorder %s80, 3
      %p211 = por %p209, %p210
      %p212 = scmp.ne.s32.totalorder %s203, %s204
      %p213 = scmp.eq.s32.totalorder %s80, 0
      %p214 = por %p212, %p213
      %p215 = scmp.ne.s32.totalorder %s203, %s204
      %p216 = scmp.eq.s32.totalorder %s81, 3
      %p217 = por %p215, %p216
      %p219 = scmp.ne.s32.totalorder %s204, %s218
      %p220 = scmp.eq.s32.totalorder %s81, 0
      %p221 = por %p219, %p220
      %s223 = sadd.s32 %s222, 1
      %p226 = scmp.eq.s32.totalorder %s75, 3
      %p227 = scmp.ne.s32.totalorder %s222, %s224
      %p228 = scmp.eq.s32.totalorder %s75, 0
      %p229 = por %p227, %p228
      %p230 = scmp.ne.s32.totalorder %s222, %s224
      %p231 = scmp.eq.s32.totalorder %s80, 3
      %p232 = por %p230, %p231
      %p233 = scmp.ne.s32.totalorder %s224, %s225
      %p234 = scmp.eq.s32.totalorder %s80, 0
      %p235 = por %p233, %p234
      %p236 = scmp.ne.s32.totalorder %s224, %s225
      %p237 = scmp.eq.s32.totalorder %s81, 3
      %p238 = por %p236, %p237
      %p240 = scmp.ne.s32.totalorder %s225, %s239
      %p241 = scmp.eq.s32.totalorder %s81, 0
      %p242 = por %p240, %p241
      %s244 = sadd.s32 %s243, 1
      %p247 = scmp.eq.s32.totalorder %s75, 3
      %p248 = scmp.ne.s32.totalorder %s243, %s245
      %p249 = scmp.eq.s32.totalorder %s75, 0
      %p250 = por %p248, %p249
      %p251 = scmp.ne.s32.totalorder %s243, %s245
      %p252 = scmp.eq.s32.totalorder %s80, 3
      %p253 = por %p251, %p252
      %p254 = scmp.ne.s32.totalorder %s245, %s246
      %p255 = scmp.eq.s32.totalorder %s80, 0
      %p256 = por %p254, %p255
      %p257 = scmp.ne.s32.totalorder %s245, %s246
      %p258 = scmp.eq.s32.totalorder %s81, 3
      %p259 = por %p257, %p258
      %p261 = scmp.ne.s32.totalorder %s246, %s260
      %p262 = scmp.eq.s32.totalorder %s81, 0
      %p263 = por %p261, %p262
      %s265 = sadd.s32 %s264, 1
      %p268 = scmp.eq.s32.totalorder %s75, 3
      %p269 = scmp.ne.s32.totalorder %s264, %s266
      %p270 = scmp.eq.s32.totalorder %s75, 0
      %p271 = por %p269, %p270
      %p272 = scmp.ne.s32.totalorder %s264, %s266
      %p273 = scmp.eq.s32.totalorder %s80, 3
      %p274 = por %p272, %p273
      %p275 = scmp.ne.s32.totalorder %s266, %s267
      %p276 = scmp.eq.s32.totalorder %s80, 0
      %p277 = por %p275, %p276
      %p278 = scmp.ne.s32.totalorder %s266, %s267
      %p279 = scmp.eq.s32.totalorder %s81, 3
      %p280 = por %p278, %p279
      %p282 = scmp.ne.s32.totalorder %s267, %s281
      %p283 = scmp.eq.s32.totalorder %s81, 0
      %p284 = por %p282, %p283
      %s286 = sadd.s32 %s285, 1
      %p289 = scmp.eq.s32.totalorder %s75, 3
      %p290 = scmp.ne.s32.totalorder %s285, %s287
      %p291 = scmp.eq.s32.totalorder %s75, 0
      %p292 = por %p290, %p291
      %p293 = scmp.ne.s32.totalorder %s285, %s287
      %p294 = scmp.eq.s32.totalorder %s80, 3
      %p295 = por %p293, %p294
      %p296 = scmp.ne.s32.totalorder %s287, %s288
      %p297 = scmp.eq.s32.totalorder %s80, 0
      %p298 = por %p296, %p297
      %p299 = scmp.ne.s32.totalorder %s287, %s288
      %p300 = scmp.eq.s32.totalorder %s81, 3
      %p301 = por %p299, %p300
      %p303 = scmp.ne.s32.totalorder %s288, %s302
      %p304 = scmp.eq.s32.totalorder %s81, 0
      %p305 = por %p303, %p304
      %s307 = sadd.s32 %s306, 1
      %p310 = scmp.eq.s32.totalorder %s75, 3
      %p311 = scmp.ne.s32.totalorder %s306, %s308
      %p312 = scmp.eq.s32.totalorder %s75, 0
      %p313 = por %p311, %p312
      %p314 = scmp.ne.s32.totalorder %s306, %s308
      %p315 = scmp.eq.s32.totalorder %s80, 3
      %p316 = por %p314, %p315
      %p317 = scmp.ne.s32.totalorder %s308, %s309
      %p318 = scmp.eq.s32.totalorder %s80, 0
      %p319 = por %p317, %p318
      %p320 = scmp.ne.s32.totalorder %s308, %s309
      %p321 = scmp.eq.s32.totalorder %s81, 3
      %p322 = por %p320, %p321
      %p324 = scmp.ne.s32.totalorder %s309, %s323
      %p325 = scmp.eq.s32.totalorder %s81, 0
      %p326 = por %p324, %p325
      %s328 = sadd.s32 %s327, 1
      %p331 = scmp.eq.s32.totalorder %s75, 3
      %p332 = scmp.ne.s32.totalorder %s327, %s329
      %p333 = scmp.eq.s32.totalorder %s75, 0
      %p334 = por %p332, %p333
      %p335 = scmp.ne.s32.totalorder %s327, %s329
      %p336 = scmp.eq.s32.totalorder %s80, 3
      %p337 = por %p335, %p336
      %p338 = scmp.ne.s32.totalorder %s329, %s330
      %p339 = scmp.eq.s32.totalorder %s80, 0
      %p340 = por %p338, %p339
      %p341 = scmp.ne.s32.totalorder %s329, %s330
      %p342 = scmp.eq.s32.totalorder %s81, 3
      %p343 = por %p341, %p342
      %p345 = scmp.ne.s32.totalorder %s330, %s344
      %p346 = scmp.eq.s32.totalorder %s81, 0
      %p347 = por %p345, %p346
      %s349 = sadd.s32 %s348, 1
      %p352 = scmp.eq.s32.totalorder %s75, 3
      %p353 = scmp.ne.s32.totalorder %s348, %s350
      %p354 = scmp.eq.s32.totalorder %s75, 0
      %p355 = por %p353, %p354
      %p356 = scmp.ne.s32.totalorder %s348, %s350
      %p357 = scmp.eq.s32.totalorder %s80, 3
      %p358 = por %p356, %p357
      %p359 = scmp.ne.s32.totalorder %s350, %s351
      %p360 = scmp.eq.s32.totalorder %s80, 0
      %p361 = por %p359, %p360
      %p362 = scmp.ne.s32.totalorder %s350, %s351
      %p363 = scmp.eq.s32.totalorder %s81, 3
      %p364 = por %p362, %p363
      %p366 = scmp.ne.s32.totalorder %s351, %s365
      %p367 = scmp.eq.s32.totalorder %s81, 0
      %p368 = por %p366, %p367
      %s370 = sadd.s32 %s369, 1
      %p373 = scmp.eq.s32.totalorder %s75, 3
      %p374 = scmp.ne.s32.totalorder %s369, %s371
      %p375 = scmp.eq.s32.totalorder %s75, 0
      %p376 = por %p374, %p375
      %p377 = scmp.ne.s32.totalorder %s369, %s371
      %p378 = scmp.eq.s32.totalorder %s80, 3
      %p379 = por %p377, %p378
      %p380 = scmp.ne.s32.totalorder %s371, %s372
      %p381 = scmp.eq.s32.totalorder %s80, 0
      %p382 = por %p380, %p381
      %p383 = scmp.ne.s32.totalorder %s371, %s372
      %p384 = scmp.eq.s32.totalorder %s81, 3
      %p385 = por %p383, %p384
      %p387 = scmp.ne.s32.totalorder %s372, %s386
      %p388 = scmp.eq.s32.totalorder %s81, 0
      %p389 = por %p387, %p388
      %s391 = sadd.s32 %s390, 1
      %p394 = scmp.eq.s32.totalorder %s75, 3
      %p395 = scmp.ne.s32.totalorder %s390, %s392
      %p396 = scmp.eq.s32.totalorder %s75, 0
      %p397 = por %p395, %p396
      %p398 = scmp.ne.s32.totalorder %s390, %s392
      %p399 = scmp.eq.s32.totalorder %s80, 3
      %p400 = por %p398, %p399
      %p401 = scmp.ne.s32.totalorder %s392, %s393
      %p402 = scmp.eq.s32.totalorder %s80, 0
      %p403 = por %p401, %p402
      %p404 = scmp.ne.s32.totalorder %s392, %s393
      %p405 = scmp.eq.s32.totalorder %s81, 3
      %p406 = por %p404, %p405
      %p408 = scmp.ne.s32.totalorder %s393, %s407
      %p409 = scmp.eq.s32.totalorder %s81, 0
      %p410 = por %p408, %p409
      %s412 = sadd.s32 %s411, 1
      %p415 = scmp.eq.s32.totalorder %s75, 3
      %p416 = scmp.ne.s32.totalorder %s411, %s413
      %p417 = scmp.eq.s32.totalorder %s75, 0
      %p418 = por %p416, %p417
      %p419 = scmp.ne.s32.totalorder %s411, %s413
      %p420 = scmp.eq.s32.totalorder %s80, 3
      %p421 = por %p419, %p420
      %p422 = scmp.ne.s32.totalorder %s413, %s414
      %p423 = scmp.eq.s32.totalorder %s80, 0
      %p424 = por %p422, %p423
      %p425 = scmp.ne.s32.totalorder %s413, %s414
      %p426 = scmp.eq.s32.totalorder %s81, 3
      %p427 = por %p425, %p426
      %p429 = scmp.ne.s32.totalorder %s414, %s428
      %p430 = scmp.eq.s32.totalorder %s81, 0
      %p431 = por %p429, %p430
      %s433 = sadd.s32 %s432, 1
      %p436 = scmp.eq.s32.totalorder %s75, 3
      %p437 = scmp.ne.s32.totalorder %s432, %s434
      %p438 = scmp.eq.s32.totalorder %s75, 0
      %p439 = por %p437, %p438
      %p440 = scmp.ne.s32.totalorder %s432, %s434
      %p441 = scmp.eq.s32.totalorder %s80, 3
      %p442 = por %p440, %p441
      %p443 = scmp.ne.s32.totalorder %s434, %s435
      %p444 = scmp.eq.s32.totalorder %s80, 0
      %p445 = por %p443, %p444
      %p446 = scmp.ne.s32.totalorder %s434, %s435
      %p447 = scmp.eq.s32.totalorder %s81, 3
      %p448 = por %p446, %p447
      %p450 = scmp.ne.s32.totalorder %s435, %s449
      %p451 = scmp.eq.s32.totalorder %s81, 0
      %p452 = por %p450, %p451
      %s454 = sadd.s32 %s453, 1
      %p457 = scmp.eq.s32.totalorder %s75, 3
      %p458 = scmp.ne.s32.totalorder %s453, %s455
      %p459 = scmp.eq.s32.totalorder %s75, 0
      %p460 = por %p458, %p459
      %p461 = scmp.ne.s32.totalorder %s453, %s455
      %p462 = scmp.eq.s32.totalorder %s80, 3
      %p463 = por %p461, %p462
      %p464 = scmp.ne.s32.totalorder %s455, %s456
      %p465 = scmp.eq.s32.totalorder %s80, 0
      %p466 = por %p464, %p465
      %p467 = scmp.ne.s32.totalorder %s455, %s456
      %p468 = scmp.eq.s32.totalorder %s81, 3
      %p469 = por %p467, %p468
      %p471 = scmp.ne.s32.totalorder %s456, %s470
      %p472 = scmp.eq.s32.totalorder %s81, 0
      %p473 = por %p471, %p472
      %s475 = sadd.s32 %s474, 1
      %p478 = scmp.eq.s32.totalorder %s75, 3
      %p479 = scmp.ne.s32.totalorder %s474, %s476
      %p480 = scmp.eq.s32.totalorder %s75, 0
      %p481 = por %p479, %p480
      %p482 = scmp.ne.s32.totalorder %s474, %s476
      %p483 = scmp.eq.s32.totalorder %s80, 3
      %p484 = por %p482, %p483
      %p485 = scmp.ne.s32.totalorder %s476, %s477
      %p486 = scmp.eq.s32.totalorder %s80, 0
      %p487 = por %p485, %p486
      %p488 = scmp.ne.s32.totalorder %s476, %s477
      %p489 = scmp.eq.s32.totalorder %s81, 3
      %p490 = por %p488, %p489
      %p492 = scmp.ne.s32.totalorder %s477, %s491
      %p493 = scmp.eq.s32.totalorder %s81, 0
      %p494 = por %p492, %p493
      %s496 = sadd.s32 %s495, 1
      %p499 = scmp.eq.s32.totalorder %s75, 3
      %p500 = scmp.ne.s32.totalorder %s495, %s497
      %p501 = scmp.eq.s32.totalorder %s75, 0
      %p502 = por %p500, %p501
      %p503 = scmp.ne.s32.totalorder %s495, %s497
      %p504 = scmp.eq.s32.totalorder %s80, 3
      %p505 = por %p503, %p504
      %p506 = scmp.ne.s32.totalorder %s497, %s498
      %p507 = scmp.eq.s32.totalorder %s80, 0
      %p508 = por %p506, %p507
      %p509 = scmp.ne.s32.totalorder %s497, %s498
      %p510 = scmp.eq.s32.totalorder %s81, 3
      %p511 = por %p509, %p510
      %p513 = scmp.ne.s32.totalorder %s498, %s512
      %p514 = scmp.eq.s32.totalorder %s81, 0
      %p515 = por %p513, %p514
      %s517 = sadd.s32 %s516, 1
      %p520 = scmp.eq.s32.totalorder %s75, 3
      %p521 = scmp.ne.s32.totalorder %s516, %s518
      %p522 = scmp.eq.s32.totalorder %s75, 0
      %p523 = por %p521, %p522
      %p524 = scmp.ne.s32.totalorder %s516, %s518
      %p525 = scmp.eq.s32.totalorder %s80, 3
      %p526 = por %p524, %p525
      %p527 = scmp.ne.s32.totalorder %s518, %s519
      %p528 = scmp.eq.s32.totalorder %s80, 0
      %p529 = por %p527, %p528
      %p530 = scmp.ne.s32.totalorder %s518, %s519
      %p531 = scmp.eq.s32.totalorder %s81, 3
      %p532 = por %p530, %p531
      %p534 = scmp.ne.s32.totalorder %s519, %s533
      %p535 = scmp.eq.s32.totalorder %s81, 0
      %p536 = por %p534, %p535
      %s538 = sadd.s32 %s537, 1
      %p541 = scmp.eq.s32.totalorder %s75, 3
      %p542 = scmp.ne.s32.totalorder %s537, %s539
      %p543 = scmp.eq.s32.totalorder %s75, 0
      %p544 = por %p542, %p543
      %p545 = scmp.ne.s32.totalorder %s537, %s539
      %p546 = scmp.eq.s32.totalorder %s80, 3
      %p547 = por %p545, %p546
      %p548 = scmp.ne.s32.totalorder %s539, %s540
      %p549 = scmp.eq.s32.totalorder %s80, 0
      %p550 = por %p548, %p549
      %p551 = scmp.ne.s32.totalorder %s539, %s540
      %p552 = scmp.eq.s32.totalorder %s81, 3
      %p553 = por %p551, %p552
      %p555 = scmp.ne.s32.totalorder %s540, %s554
      %p556 = scmp.eq.s32.totalorder %s81, 0
      %p557 = por %p555, %p556
      %s559 = sadd.s32 %s558, 1
      %p562 = scmp.eq.s32.totalorder %s75, 3
      %p563 = scmp.ne.s32.totalorder %s558, %s560
      %p564 = scmp.eq.s32.totalorder %s75, 0
      %p565 = por %p563, %p564
      %p566 = scmp.ne.s32.totalorder %s558, %s560
      %p567 = scmp.eq.s32.totalorder %s80, 3
      %p568 = por %p566, %p567
      %p569 = scmp.ne.s32.totalorder %s560, %s561
      %p570 = scmp.eq.s32.totalorder %s80, 0
      %p571 = por %p569, %p570
      %p572 = scmp.ne.s32.totalorder %s560, %s561
      %p573 = scmp.eq.s32.totalorder %s81, 3
      %p574 = por %p572, %p573
      %p576 = scmp.ne.s32.totalorder %s561, %s575
      %p577 = scmp.eq.s32.totalorder %s81, 0
      %p578 = por %p576, %p577
      %s580 = sadd.s32 %s579, 1
      %p583 = scmp.eq.s32.totalorder %s75, 3
      %p584 = scmp.ne.s32.totalorder %s579, %s581
      %p585 = scmp.eq.s32.totalorder %s75, 0
      %p586 = por %p584, %p585
      %p587 = scmp.ne.s32.totalorder %s579, %s581
      %p588 = scmp.eq.s32.totalorder %s80, 3
      %p589 = por %p587, %p588
      %p590 = scmp.ne.s32.totalorder %s581, %s582
      %p591 = scmp.eq.s32.totalorder %s80, 0
      %p592 = por %p590, %p591
      %p593 = scmp.ne.s32.totalorder %s581, %s582
      %p594 = scmp.eq.s32.totalorder %s81, 3
      %p595 = por %p593, %p594
      %p597 = scmp.ne.s32.totalorder %s582, %s596
      %p598 = scmp.eq.s32.totalorder %s81, 0
      %p599 = por %p597, %p598
      %s601 = sadd.s32 %s600, 1
      %p604 = scmp.eq.s32.totalorder %s75, 3
      %p605 = scmp.ne.s32.totalorder %s600, %s602
      %p606 = scmp.eq.s32.totalorder %s75, 0
      %p607 = por %p605, %p606
      %p608 = scmp.ne.s32.totalorder %s600, %s602
      %p609 = scmp.eq.s32.totalorder %s80, 3
      %p610 = por %p608, %p609
      %p611 = scmp.ne.s32.totalorder %s602, %s603
      %p612 = scmp.eq.s32.totalorder %s80, 0
      %p613 = por %p611, %p612
      %p614 = scmp.ne.s32.totalorder %s602, %s603
      %p615 = scmp.eq.s32.totalorder %s81, 3
      %p616 = por %p614, %p615
      %p618 = scmp.ne.s32.totalorder %s603, %s617
      %p619 = scmp.eq.s32.totalorder %s81, 0
      %p620 = por %p618, %p619
      %s622 = sadd.s32 %s621, 1
      %p625 = scmp.eq.s32.totalorder %s75, 3
      %p626 = scmp.ne.s32.totalorder %s621, %s623
      %p627 = scmp.eq.s32.totalorder %s75, 0
      %p628 = por %p626, %p627
      %p629 = scmp.ne.s32.totalorder %s621, %s623
      %p630 = scmp.eq.s32.totalorder %s80, 3
      %p631 = por %p629, %p630
      %p632 = scmp.ne.s32.totalorder %s623, %s624
      %p633 = scmp.eq.s32.totalorder %s80, 0
      %p634 = por %p632, %p633
      %p635 = scmp.ne.s32.totalorder %s623, %s624
      %p636 = scmp.eq.s32.totalorder %s81, 3
      %p637 = por %p635, %p636
      %p639 = scmp.ne.s32.totalorder %s624, %s638
      %p640 = scmp.eq.s32.totalorder %s81, 0
      %p641 = por %p639, %p640
      %s643 = sadd.s32 %s642, 1
      %p646 = scmp.eq.s32.totalorder %s75, 3
      %p647 = scmp.ne.s32.totalorder %s642, %s644
      %p648 = scmp.eq.s32.totalorder %s75, 0
      %p649 = por %p647, %p648
      %p650 = scmp.ne.s32.totalorder %s642, %s644
      %p651 = scmp.eq.s32.totalorder %s80, 3
      %p652 = por %p650, %p651
      %p653 = scmp.ne.s32.totalorder %s644, %s645
      %p654 = scmp.eq.s32.totalorder %s80, 0
      %p655 = por %p653, %p654
      %p656 = scmp.ne.s32.totalorder %s644, %s645
      %p657 = scmp.eq.s32.totalorder %s81, 3
      %p658 = por %p656, %p657
      %p660 = scmp.ne.s32.totalorder %s645, %s659
      %p661 = scmp.eq.s32.totalorder %s81, 0
      %p662 = por %p660, %p661
      %s664 = sadd.s32 %s663, 1
      %p667 = scmp.eq.s32.totalorder %s75, 3
      %p668 = scmp.ne.s32.totalorder %s663, %s665
      %p669 = scmp.eq.s32.totalorder %s75, 0
      %p670 = por %p668, %p669
      %p671 = scmp.ne.s32.totalorder %s663, %s665
      %p672 = scmp.eq.s32.totalorder %s80, 3
      %p673 = por %p671, %p672
      %p674 = scmp.ne.s32.totalorder %s665, %s666
      %p675 = scmp.eq.s32.totalorder %s80, 0
      %p676 = por %p674, %p675
      %p677 = scmp.ne.s32.totalorder %s665, %s666
      %p678 = scmp.eq.s32.totalorder %s81, 3
      %p679 = por %p677, %p678
      %p681 = scmp.ne.s32.totalorder %s666, %s680
      %p682 = scmp.eq.s32.totalorder %s81, 0
      %p683 = por %p681, %p682
      %s685 = sadd.s32 %s684, 1
      %p688 = scmp.eq.s32.totalorder %s75, 3
      %p689 = scmp.ne.s32.totalorder %s684, %s686
      %p690 = scmp.eq.s32.totalorder %s75, 0
      %p691 = por %p689, %p690
      %p692 = scmp.ne.s32.totalorder %s684, %s686
      %p693 = scmp.eq.s32.totalorder %s80, 3
      %p694 = por %p692, %p693
      %p695 = scmp.ne.s32.totalorder %s686, %s687
      %p696 = scmp.eq.s32.totalorder %s80, 0
      %p697 = por %p695, %p696
      %p698 = scmp.ne.s32.totalorder %s686, %s687
      %p699 = scmp.eq.s32.totalorder %s81, 3
      %p700 = por %p698, %p699
      %p702 = scmp.ne.s32.totalorder %s687, %s701
      %p703 = scmp.eq.s32.totalorder %s81, 0
      %p704 = por %p702, %p703
      %s706 = sadd.s32 %s705, 1
      %p709 = scmp.eq.s32.totalorder %s75, 3
      %p710 = scmp.ne.s32.totalorder %s705, %s707
      %p711 = scmp.eq.s32.totalorder %s75, 0
      %p712 = por %p710, %p711
      %p713 = scmp.ne.s32.totalorder %s705, %s707
      %p714 = scmp.eq.s32.totalorder %s80, 3
      %p715 = por %p713, %p714
      %p716 = scmp.ne.s32.totalorder %s707, %s708
      %p717 = scmp.eq.s32.totalorder %s80, 0
      %p718 = por %p716, %p717
      %p719 = scmp.ne.s32.totalorder %s707, %s708
      %p720 = scmp.eq.s32.totalorder %s81, 3
      %p721 = por %p719, %p720
      %p723 = scmp.ne.s32.totalorder %s708, %s722
      %p724 = scmp.eq.s32.totalorder %s81, 0
      %p725 = por %p723, %p724
      %s727 = sadd.s32 %s726, 1
      %p730 = scmp.eq.s32.totalorder %s75, 3
      %p731 = scmp.ne.s32.totalorder %s726, %s728
      %p732 = scmp.eq.s32.totalorder %s75, 0
      %p733 = por %p731, %p732
      %p734 = scmp.ne.s32.totalorder %s726, %s728
      %p735 = scmp.eq.s32.totalorder %s80, 3
      %p736 = por %p734, %p735
      %p737 = scmp.ne.s32.totalorder %s728, %s729
      %p738 = scmp.eq.s32.totalorder %s80, 0
      %p739 = por %p737, %p738
      %p740 = scmp.ne.s32.totalorder %s728, %s729
      %p741 = scmp.eq.s32.totalorder %s81, 3
      %p742 = por %p740, %p741
      %p744 = scmp.ne.s32.totalorder %s729, %s743
      %p745 = scmp.eq.s32.totalorder %s81, 0
      %p746 = por %p744, %p745
      %s747 = ssub.s32 %s82, %s94
      %s748 = ssub.s32 %s83, %s90
      %s749 = sor.u32 %s747, %s748
      %p750 = scmp.eq.s32.totalorder %s749, 0
      %s752 = sadd.s32 %s751, 1
      %s753 = scalar_select %p750, %s751, %s752
      %p756 = pneg %p750
      %p757 = scmp.eq.s32.totalorder %s75, 3
      %p758 = por %p756, %p757
      %p759 = scmp.ne.s32.totalorder %s751, %s754
      %p760 = scmp.eq.s32.totalorder %s75, 0
      %p761 = por %p759, %p760
      %p762 = scmp.ne.s32.totalorder %s751, %s754
      %p763 = scmp.eq.s32.totalorder %s80, 3
      %p764 = por %p762, %p763
      %p765 = scmp.ne.s32.totalorder %s754, %s755
      %p766 = scmp.eq.s32.totalorder %s80, 0
      %p767 = por %p765, %p766
      %p768 = scmp.ne.s32.totalorder %s754, %s755
      %p769 = scmp.eq.s32.totalorder %s81, 3
      %p770 = por %p768, %p769
      %p772 = scmp.ne.s32.totalorder %s755, %s771
      %p773 = scmp.eq.s32.totalorder %s81, 0
      %p774 = por %p772, %p773
      %p775 = scmp.le.s32.totalorder 1, %s75
      %p776 = scmp.lt.s32.totalorder %s75, 5
      %p777 = pnand %p775, %p776
      %p778 = pneg %p777
      // Predicated region
      $region9: #{decoder_forward.3} parent=5 // pred_check
        _
      $region10: #{decoder_forward.3} parent=5 // pred_check_branch
        %780 = sbr.rel (%p777) target = $region12
      $region11: #{decoder_forward.3} parent=5 // pred_region
        %s781 = ssub.s32 %s75, 1
        // Predicated region
        $region13: #{decoder_forward.3} parent=11 // pred_check
          %p782 = pneg %p214
        $region14: #{decoder_forward.3} parent=11 // pred_check_branch
          %784 = sbr.rel (%p782) target = $region16
        $region15: #{decoder_forward.3} parent=11 // pred_region
          %s786 = ssub.s32 512, 512
          %787 = vsyncadd [#allocation3], %s786
          %s788 = sshll.u32 [#allocation2], 4
          %s789 = int_to_ptr.vmem [resolvable:$true] %s788
          %794 = dma.hbm_to_vmem [thread:$0]  %s9, 512, %s789, [#allocation3], 128, 128, 8
        $region16: #{decoder_forward.3} parent=11 // pred_fallthru
          _
        // Predicated region
        $region17: #{decoder_forward.3} parent=11 // pred_check
          %p795 = pneg %p235
        $region18: #{decoder_forward.3} parent=11 // pred_check_branch
          %797 = sbr.rel (%p795) target = $region20
        $region19: #{decoder_forward.3} parent=11 // pred_region
          %s799 = ssub.s32 16, 16
          %800 = vsyncadd [#allocation5], %s799
          %s802 = sshll.u32 [#allocation4], 4
          %s803 = int_to_ptr.vmem [resolvable:$true] %s802
          %805 = dma.hbm_to_vmem [thread:$0]  %s11, 16, %s803, [#allocation5]
        $region20: #{decoder_forward.3} parent=11 // pred_fallthru
          _
        // Predicated region
        $region21: #{decoder_forward.3} parent=11 // pred_check
          %p806 = pneg %p256
        $region22: #{decoder_forward.3} parent=11 // pred_check_branch
          %808 = sbr.rel (%p806) target = $region24
        $region23: #{decoder_forward.3} parent=11 // pred_region
          %s810 = ssub.s32 512, 512
          %811 = vsyncadd [#allocation5], %s810
          %s812 = sshll.u32 [#allocation6], 4
          %s813 = int_to_ptr.vmem [resolvable:$true] %s812
          %818 = dma.hbm_to_vmem [thread:$0]  %s13, 512, %s813, [#allocation5], 128, 128, 8
        $region24: #{decoder_forward.3} parent=11 // pred_fallthru
          _
        // Predicated region
        $region25: #{decoder_forward.3} parent=11 // pred_check
          %p819 = pneg %p277
        $region26: #{decoder_forward.3} parent=11 // pred_check_branch
          %821 = sbr.rel (%p819) target = $region28
        $region27: #{decoder_forward.3} parent=11 // pred_region
          %s823 = ssub.s32 16, 16
          %824 = vsyncadd [#allocation8], %s823
          %s826 = sshll.u32 [#allocation7], 4
          %s827 = int_to_ptr.vmem [resolvable:$true] %s826
          %829 = dma.hbm_to_vmem [thread:$0]  %s15, 16, %s827, [#allocation8]
        $region28: #{decoder_forward.3} parent=11 // pred_fallthru
          _
        // Predicated region
        $region29: #{decoder_forward.3} parent=11 // pred_check
          %p830 = pneg %p298
        $region30: #{decoder_forward.3} parent=11 // pred_check_branch
          %832 = sbr.rel (%p830) target = $region32
        $region31: #{decoder_forward.3} parent=11 // pred_region
          %s834 = ssub.s32 512, 512
          %835 = vsyncadd [#allocation8], %s834
          %s836 = sshll.u32 [#allocation9], 4
          %s837 = int_to_ptr.vmem [resolvable:$true] %s836
          %842 = dma.hbm_to_vmem [thread:$0]  %s17, 512, %s837, [#allocation8], 128, 128, 8
        $region32: #{decoder_forward.3} parent=11 // pred_fallthru
          _
        // Predicated region
        $region33: #{decoder_forward.3} parent=11 // pred_check
          %p843 = pneg %p319
        $region34: #{decoder_forward.3} parent=11 // pred_check_branch
          %845 = sbr.rel (%p843) target = $region36
        $region35: #{decoder_forward.3} parent=11 // pred_region
          %s847 = ssub.s32 16, 16
          %848 = vsyncadd [#allocation11], %s847
          %s850 = sshll.u32 [#allocation10], 4
          %s851 = int_to_ptr.vmem [resolvable:$true] %s850
          %853 = dma.hbm_to_vmem [thread:$0]  %s19, 16, %s851, [#allocation11]
        $region36: #{decoder_forward.3} parent=11 // pred_fallthru
          _
        // Predicated region
        $region37: #{decoder_forward.3} parent=11 // pred_check
          %p854 = pneg %p340
        $region38: #{decoder_forward.3} parent=11 // pred_check_branch
          %856 = sbr.rel (%p854) target = $region40
        $region39: #{decoder_forward.3} parent=11 // pred_region
          %s858 = ssub.s32 512, 512
          %859 = vsyncadd [#allocation11], %s858
          %s860 = sshll.u32 [#allocation12], 4
          %s861 = int_to_ptr.vmem [resolvable:$true] %s860
          %866 = dma.hbm_to_vmem [thread:$0]  %s21, 512, %s861, [#allocation11], 128, 128, 8
        $region40: #{decoder_forward.3} parent=11 // pred_fallthru
          _
        // Predicated region
        $region41: #{decoder_forward.3} parent=11 // pred_check
          %p867 = pneg %p361
        $region42: #{decoder_forward.3} parent=11 // pred_check_branch
          %869 = sbr.rel (%p867) target = $region44
        $region43: #{decoder_forward.3} parent=11 // pred_region
          %s871 = ssub.s32 16, 16
          %872 = vsyncadd [#allocation14], %s871
          %s874 = sshll.u32 [#allocation13], 4
          %s875 = int_to_ptr.vmem [resolvable:$true] %s874
          %877 = dma.hbm_to_vmem [thread:$0]  %s23, 16, %s875, [#allocation14]
        $region44: #{decoder_forward.3} parent=11 // pred_fallthru
          _
        // Predicated region
        $region45: #{decoder_forward.3} parent=11 // pred_check
          %p878 = pneg %p382
        $region46: #{decoder_forward.3} parent=11 // pred_check_branch
          %880 = sbr.rel (%p878) target = $region48
        $region47: #{decoder_forward.3} parent=11 // pred_region
          _
        $region48: #{decoder_forward.3} parent=11 // pred_fallthru
          _
        // Predicated region
        $region49: #{decoder_forward.3} parent=11 // pred_check
          %p881 = pneg %p403
        $region50: #{decoder_forward.3} parent=11 // pred_check_branch
          %883 = sbr.rel (%p881) target = $region52
        $region51: #{decoder_forward.3} parent=11 // pred_region
          _
        $region52: #{decoder_forward.3} parent=11 // pred_fallthru
          _
        // Predicated region
        $region53: #{decoder_forward.3} parent=11 // pred_check
          %p884 = pneg %p424
        $region54: #{decoder_forward.3} parent=11 // pred_check_branch
          %886 = sbr.rel (%p884) target = $region56
        $region55: #{decoder_forward.3} parent=11 // pred_region
          _
        $region56: #{decoder_forward.3} parent=11 // pred_fallthru
          _
        // Predicated region
        $region57: #{decoder_forward.3} parent=11 // pred_check
          %p887 = pneg %p445
        $region58: #{decoder_forward.3} parent=11 // pred_check_branch
          %889 = sbr.rel (%p887) target = $region60
        $region59: #{decoder_forward.3} parent=11 // pred_region
          %s891 = ssub.s32 16, 16
          %892 = vsyncadd [#allocation14], %s891
          %s894 = sshll.u32 [#allocation15], 4
          %s895 = int_to_ptr.vmem [resolvable:$true] %s894
          %897 = dma.hbm_to_vmem [thread:$0]  %s31, 16, %s895, [#allocation14]
        $region60: #{decoder_forward.3} parent=11 // pred_fallthru
          _
        // Predicated region
        $region61: #{decoder_forward.3} parent=11 // pred_check
          %p898 = pneg %p466
        $region62: #{decoder_forward.3} parent=11 // pred_check_branch
          %900 = sbr.rel (%p898) target = $region64
        $region63: #{decoder_forward.3} parent=11 // pred_region
          %s902 = ssub.s32 512, 512
          %903 = vsyncadd [#allocation17], %s902
          %s904 = sshll.u32 [#allocation16], 4
          %s905 = int_to_ptr.vmem [resolvable:$true] %s904
          %910 = dma.hbm_to_vmem [thread:$0]  %s33, 512, %s905, [#allocation17], 128, 128, 8
        $region64: #{decoder_forward.3} parent=11 // pred_fallthru
          _
        // Predicated region
        $region65: #{decoder_forward.3} parent=11 // pred_check
          %p911 = pneg %p487
        $region66: #{decoder_forward.3} parent=11 // pred_check_branch
          %913 = sbr.rel (%p911) target = $region68
        $region67: #{decoder_forward.3} parent=11 // pred_region
          %s915 = ssub.s32 16, 16
          %916 = vsyncadd [#allocation17], %s915
          %s918 = sshll.u32 [#allocation18], 4
          %s919 = int_to_ptr.vmem [resolvable:$true] %s918
          %921 = dma.hbm_to_vmem [thread:$0]  %s35, 16, %s919, [#allocation17]
        $region68: #{decoder_forward.3} parent=11 // pred_fallthru
          _
        // Predicated region
        $region69: #{decoder_forward.3} parent=11 // pred_check
          %p922 = pneg %p508
        $region70: #{decoder_forward.3} parent=11 // pred_check_branch
          %924 = sbr.rel (%p922) target = $region72
        $region71: #{decoder_forward.3} parent=11 // pred_region
          %s926 = ssub.s32 512, 512
          %927 = vsyncadd [#allocation20], %s926
          %s928 = sshll.u32 [#allocation19], 4
          %s929 = int_to_ptr.vmem [resolvable:$true] %s928
          %934 = dma.hbm_to_vmem [thread:$0]  %s37, 512, %s929, [#allocation20], 128, 128, 8
        $region72: #{decoder_forward.3} parent=11 // pred_fallthru
          _
        // Predicated region
        $region73: #{decoder_forward.3} parent=11 // pred_check
          %p935 = pneg %p529
        $region74: #{decoder_forward.3} parent=11 // pred_check_branch
          %937 = sbr.rel (%p935) target = $region76
        $region75: #{decoder_forward.3} parent=11 // pred_region
          _
        $region76: #{decoder_forward.3} parent=11 // pred_fallthru
          _
        // Predicated region
        $region77: #{decoder_forward.3} parent=11 // pred_check
          %p938 = pneg %p550
        $region78: #{decoder_forward.3} parent=11 // pred_check_branch
          %940 = sbr.rel (%p938) target = $region80
        $region79: #{decoder_forward.3} parent=11 // pred_region
          %s942 = ssub.s32 512, 512
          %943 = vsyncadd [#allocation20], %s942
          %s944 = sshll.u32 [#allocation21], 4
          %s945 = int_to_ptr.vmem [resolvable:$true] %s944
          %950 = dma.hbm_to_vmem [thread:$0]  %s41, 512, %s945, [#allocation20], 128, 128, 8
        $region80: #{decoder_forward.3} parent=11 // pred_fallthru
          _
        // Predicated region
        $region81: #{decoder_forward.3} parent=11 // pred_check
          %p951 = pneg %p571
        $region82: #{decoder_forward.3} parent=11 // pred_check_branch
          %953 = sbr.rel (%p951) target = $region84
        $region83: #{decoder_forward.3} parent=11 // pred_region
          %s955 = ssub.s32 16, 16
          %956 = vsyncadd [#allocation23], %s955
          %s958 = sshll.u32 [#allocation22], 4
          %s959 = int_to_ptr.vmem [resolvable:$true] %s958
          %961 = dma.hbm_to_vmem [thread:$0]  %s43, 16, %s959, [#allocation23]
        $region84: #{decoder_forward.3} parent=11 // pred_fallthru
          _
        // Predicated region
        $region85: #{decoder_forward.3} parent=11 // pred_check
          %p962 = pneg %p592
        $region86: #{decoder_forward.3} parent=11 // pred_check_branch
          %964 = sbr.rel (%p962) target = $region88
        $region87: #{decoder_forward.3} parent=11 // pred_region
          _
        $region88: #{decoder_forward.3} parent=11 // pred_fallthru
          _
        // Predicated region
        $region89: #{decoder_forward.3} parent=11 // pred_check
          %p965 = pneg %p613
        $region90: #{decoder_forward.3} parent=11 // pred_check_branch
          %967 = sbr.rel (%p965) target = $region92
        $region91: #{decoder_forward.3} parent=11 // pred_region
          _
        $region92: #{decoder_forward.3} parent=11 // pred_fallthru
          _
        // Predicated region
        $region93: #{decoder_forward.3} parent=11 // pred_check
          %p968 = pneg %p634
        $region94: #{decoder_forward.3} parent=11 // pred_check_branch
          %970 = sbr.rel (%p968) target = $region96
        $region95: #{decoder_forward.3} parent=11 // pred_region
          %s972 = ssub.s32 512, 512
          %973 = vsyncadd [#allocation23], %s972
          %s974 = sshll.u32 [#allocation24], 4
          %s975 = int_to_ptr.vmem [resolvable:$true] %s974
          %980 = dma.hbm_to_vmem [thread:$0]  %s49, 512, %s975, [#allocation23], 128, 128, 8
        $region96: #{decoder_forward.3} parent=11 // pred_fallthru
          _
        // Predicated region
        $region97: #{decoder_forward.3} parent=11 // pred_check
          %p981 = pneg %p655
        $region98: #{decoder_forward.3} parent=11 // pred_check_branch
          %983 = sbr.rel (%p981) target = $region100
        $region99: #{decoder_forward.3} parent=11 // pred_region
          _
        $region100: #{decoder_forward.3} parent=11 // pred_fallthru
          _
        // Predicated region
        $region101: #{decoder_forward.3} parent=11 // pred_check
          %p984 = pneg %p676
        $region102: #{decoder_forward.3} parent=11 // pred_check_branch
          %986 = sbr.rel (%p984) target = $region104
        $region103: #{decoder_forward.3} parent=11 // pred_region
          _
        $region104: #{decoder_forward.3} parent=11 // pred_fallthru
          _
        // Predicated region
        $region105: #{decoder_forward.3} parent=11 // pred_check
          %p987 = pneg %p697
        $region106: #{decoder_forward.3} parent=11 // pred_check_branch
          %989 = sbr.rel (%p987) target = $region108
        $region107: #{decoder_forward.3} parent=11 // pred_region
          _
        $region108: #{decoder_forward.3} parent=11 // pred_fallthru
          _
        // Predicated region
        $region109: #{decoder_forward.3} parent=11 // pred_check
          %p990 = pneg %p718
        $region110: #{decoder_forward.3} parent=11 // pred_check_branch
          %992 = sbr.rel (%p990) target = $region112
        $region111: #{decoder_forward.3} parent=11 // pred_region
          _
        $region112: #{decoder_forward.3} parent=11 // pred_fallthru
          _
        // Predicated region
        $region113: #{decoder_forward.3} parent=11 // pred_check
          %p993 = pneg %p739
        $region114: #{decoder_forward.3} parent=11 // pred_check_branch
          %995 = sbr.rel (%p993) target = $region116
        $region115: #{decoder_forward.3} parent=11 // pred_region
          _
        $region116: #{decoder_forward.3} parent=11 // pred_fallthru
          _
      $region12: #{decoder_forward.3} parent=5 // pred_fallthru
        _
      %p996 = scmp.lt.s32.totalorder %s75, 4
      // Predicated region
      $region117: #{decoder_forward.3} parent=5 // pred_check
        %p997 = pneg %p996
      $region118: #{decoder_forward.3} parent=5 // pred_check_branch
        %999 = sbr.rel (%p997) target = $region120
      $region119: #{decoder_forward.3} parent=5 // pred_region
        // Predicated region
        $region121: #{decoder_forward.3} parent=119 // pred_check
          %p1000 = pneg %p109
        $region122: #{decoder_forward.3} parent=119 // pred_check_branch
          %1002 = sbr.rel (%p1000) target = $region124
        $region123: #{decoder_forward.3} parent=119 // pred_region
          %p1003 = scmp.lt.s32.totalorder %s82, 1
          %s1004 = scalar_select %p1003, %s82, 1
          %p1005 = scmp.lt.s32.totalorder %s83, 1
          %s1006 = scalar_select %p1005, %s83, 1
          %s1007 = smul.addr %s1004, 2
          %s1008 = sadd.s32 %s1006, %s1007
          %s1009 = smul.addr %s1008, 8
          %s1010 = scalar_lea.vmem %s1, %s1009
        $region124: #{decoder_forward.3} parent=119 // pred_fallthru
          _
        // Predicated region
        $region125: #{decoder_forward.3} parent=119 // pred_check
          %p1011 = pneg %p135
        $region126: #{decoder_forward.3} parent=119 // pred_check_branch
          %1013 = sbr.rel (%p1011) target = $region128
        $region127: #{decoder_forward.3} parent=119 // pred_region
          %p1014 = scmp.lt.s32.totalorder %s82, 1
          %s1015 = scalar_select %p1014, %s82, 1
          %s1016 = smul.addr %s1015, 2
          %s1017 = smul.addr %s1016, 8
          %s1018 = scalar_lea.vmem %s3, %s1017
        $region128: #{decoder_forward.3} parent=119 // pred_fallthru
          _
        // Predicated region
        $region129: #{decoder_forward.3} parent=119 // pred_check
          %p1019 = pneg %p161
        $region130: #{decoder_forward.3} parent=119 // pred_check_branch
          %1021 = sbr.rel (%p1019) target = $region132
        $region131: #{decoder_forward.3} parent=119 // pred_region
          %p1022 = scmp.lt.s32.totalorder %s82, 1
          %s1023 = scalar_select %p1022, %s82, 1
          %s1024 = smul.addr %s1023, 2
          %s1025 = smul.addr %s1024, 8
          %s1026 = scalar_lea.vmem %s5, %s1025
        $region132: #{decoder_forward.3} parent=119 // pred_fallthru
          _
        // Predicated region
        $region133: #{decoder_forward.3} parent=119 // pred_check
          %p1027 = pneg %p187
        $region134: #{decoder_forward.3} parent=119 // pred_check_branch
          %1029 = sbr.rel (%p1027) target = $region136
        $region135: #{decoder_forward.3} parent=119 // pred_region
          %p1030 = scmp.lt.s32.totalorder %s83, 1
          %s1031 = scalar_select %p1030, %s83, 1
          %s1032 = smul.addr %s1031, 8
          %s1033 = scalar_lea.vmem %s7, %s1032
        $region136: #{decoder_forward.3} parent=119 // pred_fallthru
          _
      $region120: #{decoder_forward.3} parent=5 // pred_fallthru
        _
      %p1034 = scmp.le.s32.totalorder 1, %s75
      %p1035 = scmp.lt.s32.totalorder %s75, 5
      %p1036 = pnand %p1034, %p1035
      %p1037 = pneg %p1036
      // Predicated region
      $region137: #{decoder_forward.3} parent=5 // pred_check
        _
      $region138: #{decoder_forward.3} parent=5 // pred_check_branch
        %1039 = sbr.rel (%p1036) target = $region140
      $region139: #{decoder_forward.3} parent=5 // pred_region
        %s1040 = ssub.s32 %s75, 1
        // Predicated region
        $region141: #{decoder_forward.3} parent=139 // pred_check
          %p1041 = pneg %p214
        $region142: #{decoder_forward.3} parent=139 // pred_check_branch
          %1043 = sbr.rel (%p1041) target = $region144
        $region143: #{decoder_forward.3} parent=139 // pred_region
          %1044 = dma.done [#allocation3], 512
        $region144: #{decoder_forward.3} parent=139 // pred_fallthru
          _
        // Predicated region
        $region145: #{decoder_forward.3} parent=139 // pred_check
          %p1045 = pneg %p235
        $region146: #{decoder_forward.3} parent=139 // pred_check_branch
          %1047 = sbr.rel (%p1045) target = $region148
        $region147: #{decoder_forward.3} parent=139 // pred_region
          %1048 = dma.done [#allocation5], 16
        $region148: #{decoder_forward.3} parent=139 // pred_fallthru
          _
        // Predicated region
        $region149: #{decoder_forward.3} parent=139 // pred_check
          %p1049 = pneg %p256
        $region150: #{decoder_forward.3} parent=139 // pred_check_branch
          %1051 = sbr.rel (%p1049) target = $region152
        $region151: #{decoder_forward.3} parent=139 // pred_region
          %1052 = dma.done [#allocation5], 512
        $region152: #{decoder_forward.3} parent=139 // pred_fallthru
          _
        // Predicated region
        $region153: #{decoder_forward.3} parent=139 // pred_check
          %p1053 = pneg %p277
        $region154: #{decoder_forward.3} parent=139 // pred_check_branch
          %1055 = sbr.rel (%p1053) target = $region156
        $region155: #{decoder_forward.3} parent=139 // pred_region
          %1056 = dma.done [#allocation8], 16
        $region156: #{decoder_forward.3} parent=139 // pred_fallthru
          _
        // Predicated region
        $region157: #{decoder_forward.3} parent=139 // pred_check
          %p1057 = pneg %p298
        $region158: #{decoder_forward.3} parent=139 // pred_check_branch
          %1059 = sbr.rel (%p1057) target = $region160
        $region159: #{decoder_forward.3} parent=139 // pred_region
          %1060 = dma.done [#allocation8], 512
        $region160: #{decoder_forward.3} parent=139 // pred_fallthru
          _
        // Predicated region
        $region161: #{decoder_forward.3} parent=139 // pred_check
          %p1061 = pneg %p319
        $region162: #{decoder_forward.3} parent=139 // pred_check_branch
          %1063 = sbr.rel (%p1061) target = $region164
        $region163: #{decoder_forward.3} parent=139 // pred_region
          %1064 = dma.done [#allocation11], 16
        $region164: #{decoder_forward.3} parent=139 // pred_fallthru
          _
        // Predicated region
        $region165: #{decoder_forward.3} parent=139 // pred_check
          %p1065 = pneg %p340
        $region166: #{decoder_forward.3} parent=139 // pred_check_branch
          %1067 = sbr.rel (%p1065) target = $region168
        $region167: #{decoder_forward.3} parent=139 // pred_region
          %1068 = dma.done [#allocation11], 512
        $region168: #{decoder_forward.3} parent=139 // pred_fallthru
          _
        // Predicated region
        $region169: #{decoder_forward.3} parent=139 // pred_check
          %p1069 = pneg %p361
        $region170: #{decoder_forward.3} parent=139 // pred_check_branch
          %1071 = sbr.rel (%p1069) target = $region172
        $region171: #{decoder_forward.3} parent=139 // pred_region
          %1072 = dma.done [#allocation14], 16
        $region172: #{decoder_forward.3} parent=139 // pred_fallthru
          _
        // Predicated region
        $region173: #{decoder_forward.3} parent=139 // pred_check
          %p1073 = pneg %p445
        $region174: #{decoder_forward.3} parent=139 // pred_check_branch
          %1075 = sbr.rel (%p1073) target = $region176
        $region175: #{decoder_forward.3} parent=139 // pred_region
          %1076 = dma.done [#allocation14], 16
        $region176: #{decoder_forward.3} parent=139 // pred_fallthru
          _
        // Predicated region
        $region177: #{decoder_forward.3} parent=139 // pred_check
          %p1077 = pneg %p466
        $region178: #{decoder_forward.3} parent=139 // pred_check_branch
          %1079 = sbr.rel (%p1077) target = $region180
        $region179: #{decoder_forward.3} parent=139 // pred_region
          %1080 = dma.done [#allocation17], 512
        $region180: #{decoder_forward.3} parent=139 // pred_fallthru
          _
        // Predicated region
        $region181: #{decoder_forward.3} parent=139 // pred_check
          %p1081 = pneg %p487
        $region182: #{decoder_forward.3} parent=139 // pred_check_branch
          %1083 = sbr.rel (%p1081) target = $region184
        $region183: #{decoder_forward.3} parent=139 // pred_region
          %1084 = dma.done [#allocation17], 16
        $region184: #{decoder_forward.3} parent=139 // pred_fallthru
          _
        // Predicated region
        $region185: #{decoder_forward.3} parent=139 // pred_check
          %p1085 = pneg %p508
        $region186: #{decoder_forward.3} parent=139 // pred_check_branch
          %1087 = sbr.rel (%p1085) target = $region188
        $region187: #{decoder_forward.3} parent=139 // pred_region
          %1088 = dma.done [#allocation20], 512
        $region188: #{decoder_forward.3} parent=139 // pred_fallthru
          _
        // Predicated region
        $region189: #{decoder_forward.3} parent=139 // pred_check
          %p1089 = pneg %p550
        $region190: #{decoder_forward.3} parent=139 // pred_check_branch
          %1091 = sbr.rel (%p1089) target = $region192
        $region191: #{decoder_forward.3} parent=139 // pred_region
          %1092 = dma.done [#allocation20], 512
        $region192: #{decoder_forward.3} parent=139 // pred_fallthru
          _
        // Predicated region
        $region193: #{decoder_forward.3} parent=139 // pred_check
          %p1093 = pneg %p571
        $region194: #{decoder_forward.3} parent=139 // pred_check_branch
          %1095 = sbr.rel (%p1093) target = $region196
        $region195: #{decoder_forward.3} parent=139 // pred_region
          %1096 = dma.done [#allocation23], 16
        $region196: #{decoder_forward.3} parent=139 // pred_fallthru
          _
        // Predicated region
        $region197: #{decoder_forward.3} parent=139 // pred_check
          %p1097 = pneg %p634
        $region198: #{decoder_forward.3} parent=139 // pred_check_branch
          %1099 = sbr.rel (%p1097) target = $region200
        $region199: #{decoder_forward.3} parent=139 // pred_region
          %1100 = dma.done [#allocation23], 512
        $region200: #{decoder_forward.3} parent=139 // pred_fallthru
          _
        %p1101 = scmp.lt.s32.totalorder %s84, 1
        %s1102 = scalar_select %p1101, %s84, 1
        %p1103 = scmp.lt.s32.totalorder %s85, 1
        %s1104 = scalar_select %p1103, %s85, 1
        %s1105 = smul.addr %s1102, 2
        %s1106 = sadd.s32 %s1104, %s1105
        %s1107 = smul.addr %s1106, 8
        %s1108 = scalar_lea.vmem %s1, %s1107
        %p1109 = pneg %p115
        %p1110 = pneg %p112
        %p1111 = scmp.lt.s32.totalorder %s84, 1
        %s1112 = scalar_select %p1111, %s84, 1
        %s1113 = smul.addr %s1112, 2
        %s1114 = smul.addr %s1113, 8
        %s1115 = scalar_lea.vmem %s3, %s1114
        %p1116 = pneg %p141
        %p1117 = pneg %p138
        %p1118 = scmp.lt.s32.totalorder %s84, 1
        %s1119 = scalar_select %p1118, %s84, 1
        %s1120 = smul.addr %s1119, 2
        %s1121 = smul.addr %s1120, 8
        %s1122 = scalar_lea.vmem %s5, %s1121
        %p1123 = pneg %p167
        %p1124 = pneg %p164
        %p1125 = scmp.lt.s32.totalorder %s85, 1
        %s1126 = scalar_select %p1125, %s85, 1
        %s1127 = smul.addr %s1126, 8
        %s1128 = scalar_lea.vmem %s7, %s1127
        %p1129 = pneg %p193
        %p1130 = pneg %p190
        %p1131 = pneg %p214
        %p1132 = pneg %p211
        %p1133 = pneg %p235
        %p1134 = pneg %p232
        %p1135 = pneg %p256
        %p1136 = pneg %p253
        %p1137 = pneg %p277
        %p1138 = pneg %p274
        %p1139 = pneg %p298
        %p1140 = pneg %p295
        %p1141 = pneg %p319
        %p1142 = pneg %p316
        %p1143 = pneg %p340
        %p1144 = pneg %p337
        %p1145 = pneg %p361
        %p1146 = pneg %p358
        %p1147 = pneg %p382
        %p1148 = pneg %p379
        %p1149 = pneg %p403
        %p1150 = pneg %p400
        %p1151 = pneg %p424
        %p1152 = pneg %p421
        %p1153 = pneg %p445
        %p1154 = pneg %p442
        %p1155 = pneg %p466
        %p1156 = pneg %p463
        %p1157 = pneg %p487
        %p1158 = pneg %p484
        %p1159 = pneg %p508
        %p1160 = pneg %p505
        %p1161 = pneg %p529
        %p1162 = pneg %p526
        %p1163 = pneg %p550
        %p1164 = pneg %p547
        %p1165 = pneg %p571
        %p1166 = pneg %p568
        %p1167 = pneg %p592
        %p1168 = pneg %p589
        %p1169 = pneg %p613
        %p1170 = pneg %p610
        %p1171 = pneg %p634
        %p1172 = pneg %p631
        %p1173 = pneg %p655
        %p1174 = pneg %p652
        %p1175 = pneg %p676
        %p1176 = pneg %p673
        %p1177 = pneg %p697
        %p1178 = pneg %p694
        %p1179 = pneg %p718
        %p1180 = pneg %p715
        %p1181 = pneg %p739
        %p1182 = pneg %p736
        %p1183 = pneg %p767
        %p1184 = pneg %p764
        %p1185 = scmp.lt.s32.totalorder %s84, 1
        %s1186 = scalar_select %p1185, %s84, 1
        %p1187 = scmp.lt.s32.totalorder %s85, 1
        %s1188 = scalar_select %p1187, %s85, 1
        %s1189 = smul.addr %s1186, 2
        %s1190 = sadd.s32 %s1188, %s1189
        %s1191 = smul.addr %s1190, 8
        %s1192 = scalar_lea.vmem %s61, %s1191
        %p1193 = scmp.lt.s32.totalorder %s84, 1
        %s1194 = scalar_select %p1193, %s84, 1
        %p1195 = scmp.lt.s32.totalorder %s85, 1
        %s1196 = scalar_select %p1195, %s85, 1
        %s1197 = smul.addr %s1194, 2
        %s1198 = sadd.s32 %s1196, %s1197
        %s1199 = smul.addr %s1198, 8
        %s1200 = scalar_lea.vmem %s1, %s1199
        %p1201 = scmp.lt.s32.totalorder %s84, 1
        %s1202 = scalar_select %p1201, %s84, 1
        %s1203 = smul.addr %s1202, 2
        %s1204 = smul.addr %s1203, 8
        %s1205 = scalar_lea.vmem %s3, %s1204
        %p1206 = scmp.lt.s32.totalorder %s84, 1
        %s1207 = scalar_select %p1206, %s84, 1
        %s1208 = smul.addr %s1207, 2
        %s1209 = smul.addr %s1208, 8
        %s1210 = scalar_lea.vmem %s5, %s1209
        %p1211 = scmp.lt.s32.totalorder %s85, 1
        %s1212 = scalar_select %p1211, %s85, 1
        %s1213 = smul.addr %s1212, 8
        %s1214 = scalar_lea.vmem %s7, %s1213
        %p1215 = scmp.lt.s32.totalorder %s84, 1
        %s1216 = scalar_select %p1215, %s84, 1
        %p1217 = scmp.lt.s32.totalorder %s85, 1
        %s1218 = scalar_select %p1217, %s85, 1
        %s1219 = smul.addr %s1216, 2
        %s1220 = sadd.s32 %s1218, %s1219
        %s1221 = smul.addr %s1220, 8
        %s1222 = scalar_lea.vmem %s61, %s1221
        %v1223 = vld [vmem:[%s1200] sm:$0xff]
        %v1224 = vld [vmem:[%s1205] sm:$0xff]
        %v1225 = vld [vmem:[%s1205 + $0x8] sm:$0xff]
        %v1226 = vld [vmem:[%s1210] sm:$0xff]
        %v1227 = vld [vmem:[%s1210 + $0x8] sm:$0xff]
        %v1228 = vld [vmem:[%s1214] sm:$0xff]
        %v1229 = vld [vmem:[#allocation2] sm:$0xff]
        %v1230 = vld [vmem:[#allocation2 + $0x8] sm:$0xff]
        %v1231 = vld [vmem:[#allocation2 + $0x10] sm:$0xff]
        %v1232 = vld [vmem:[#allocation2 + $0x18] sm:$0xff]
        %v1233 = vld [vmem:[#allocation4] sm:$0x1]
        %v1234 = vld [vmem:[#allocation6] sm:$0xff]
        %v1235 = vld [vmem:[#allocation6 + $0x8] sm:$0xff]
        %v1236 = vld [vmem:[#allocation6 + $0x10] sm:$0xff]
        %v1237 = vld [vmem:[#allocation6 + $0x18] sm:$0xff]
        %v1238 = vld [vmem:[#allocation7] sm:$0x1]
        %v1239 = vld [vmem:[#allocation9] sm:$0xff]
        %v1240 = vld [vmem:[#allocation9 + $0x8] sm:$0xff]
        %v1241 = vld [vmem:[#allocation9 + $0x10] sm:$0xff]
        %v1242 = vld [vmem:[#allocation9 + $0x18] sm:$0xff]
        %v1243 = vld [vmem:[#allocation10] sm:$0x1]
        %v1244 = vld [vmem:[#allocation12] sm:$0xff]
        %v1245 = vld [vmem:[#allocation12 + $0x8] sm:$0xff]
        %v1246 = vld [vmem:[#allocation12 + $0x10] sm:$0xff]
        %v1247 = vld [vmem:[#allocation12 + $0x18] sm:$0xff]
        %v1248 = vld [vmem:[#allocation13] sm:$0x1]
        %v1250 = vlaneseq
        %v1251 = vshrl.u32 %v1250, 7
        %v1252 = vsub.s32 0, %v1251
        %v1253 = vrot.slane %v1233, %v1252
        %vm1255 = vcmask 261120
        %v1257 = vsel %vm1255, %v1223, 0
        %1259 = vmatprep.subr.mxu0 0.0
        %1260 = vmatpush1.msra.mxu0 0.0
        %1261 = vmatprep.subr.mxu0 0.0
        %1262 = vmatpush1.msra.mxu0 0.0
        %1263 = vmatprep.subr.mxu0 0.0
        %1264 = vmatpush1.msra.mxu0 0.0
        %1265 = vmatprep.subr.mxu0 0.0
        %1266 = vmatpush1.msra.mxu0 0.0
        %1267 = vmatprep.subr.mxu0 0.0
        %1268 = vmatpush1.msra.mxu0 0.0
        %1269 = vmatprep.subr.mxu0 0.0
        %1270 = vmatpush1.msra.mxu0 0.0
        %1271 = vmatprep.subr.mxu0 0.0
        %1272 = vmatpush1.msra.mxu0 0.0
        %1273 = vmatprep.subr.mxu0 0.0
        %1274 = vmatpush1.msra.mxu0 0.0
        %1275 = vmatprep.subr.mxu0 0.0
        %1276 = vmatpush1.msra.mxu0 0.0
        %1277 = vmatprep.subr.mxu0 0.0
        %1278 = vmatpush1.msra.mxu0 0.0
        %1279 = vmatprep.subr.mxu0 0.0
        %1280 = vmatpush1.msra.mxu0 0.0
        %1281 = vmatprep.subr.mxu0 0.0
        %1282 = vmatpush1.msra.mxu0 0.0
        %1283 = vmatprep.subr.mxu0 0.0
        %1284 = vmatpush1.msra.mxu0 %v1232
        %1285 = vmatprep.subr.mxu0 0.0
        %1286 = vmatpush1.msra.mxu0 %v1231
        %1287 = vmatprep.subr.mxu0 0.0
        %1288 = vmatpush1.msra.mxu0 %v1230
        %1289 = vmatprep.subr.mxu0 0.0
        %1290 = vmatpush1.msra.mxu0 %v1229
        %1291 = vmatprep.subr.mxu0 0.0
        %1292 = vmatpush2.msra.mxu0 0.0
        %1293 = vmatprep.subr.mxu0 0.0
        %1294 = vmatpush2.msra.mxu0 0.0
        %1295 = vmatprep.subr.mxu0 0.0
        %1296 = vmatpush2.msra.mxu0 0.0
        %1297 = vmatprep.subr.mxu0 0.0
        %1298 = vmatpush2.msra.mxu0 0.0
        %1299 = vmatprep.subr.mxu0 0.0
        %1300 = vmatpush2.msra.mxu0 0.0
        %1301 = vmatprep.subr.mxu0 0.0
        %1302 = vmatpush2.msra.mxu0 0.0
        %1303 = vmatprep.subr.mxu0 0.0
        %1304 = vmatpush2.msra.mxu0 0.0
        %1305 = vmatprep.subr.mxu0 0.0
        %1306 = vmatpush2.msra.mxu0 0.0
        %1307 = vmatprep.subr.mxu0 0.0
        %1308 = vmatpush2.msra.mxu0 0.0
        %1309 = vmatprep.subr.mxu0 0.0
        %1310 = vmatpush2.msra.mxu0 0.0
        %1311 = vmatprep.subr.mxu0 0.0
        %1312 = vmatpush2.msra.mxu0 0.0
        %1313 = vmatprep.subr.mxu0 0.0
        %1314 = vmatpush2.msra.mxu0 0.0
        %1315 = vmatprep.subr.mxu0 0.0
        %1316 = vmatpush2.msra.mxu0 0.0
        %1317 = vmatprep.subr.mxu0 0.0
        %1318 = vmatpush2.msra.mxu0 0.0
        %1319 = vmatprep.subr.mxu0 0.0
        %1320 = vmatpush2.msra.mxu0 0.0
        %1321 = vmatprep.subr.mxu0 0.0
        %1322 = vmatpush2.msra.mxu0 0.0
        %1323 = vmatprep.mubr.f32.mxu0 0.0
        %1324 = vmatmul.mubr.f32.gmra.mxu0 %v1257
        %v1325 = vpop.f32.mrf.mxu0
        %v1326 = vadd.f32 %v1253, %v1325
        %v1327 = vpop.f32.mrf.mxu0
        %1328 = vdwg.mxu0
        %v1329 = vmul.f32 %v1326, 0.35355338
        %v1331 = vlaneseq
        %v1332 = vshrl.u32 %v1331, 7
        %v1333 = vsub.s32 0, %v1332
        %v1334 = vrot.slane %v1238, %v1333
        %v1337 = vsel %vm1255, %v1224, 0
        %v1340 = vsel %vm1255, %v1225, 0
        %1342 = vmatprep.subr.mxu0 0.0
        %1343 = vmatpush1.msra.mxu0 0.0
        %1344 = vmatprep.subr.mxu0 0.0
        %1345 = vmatpush1.msra.mxu0 0.0
        %1346 = vmatprep.subr.mxu0 0.0
        %1347 = vmatpush1.msra.mxu0 0.0
        %1348 = vmatprep.subr.mxu0 0.0
        %1349 = vmatpush1.msra.mxu0 0.0
        %1350 = vmatprep.subr.mxu0 0.0
        %1351 = vmatpush1.msra.mxu0 0.0
        %1352 = vmatprep.subr.mxu0 0.0
        %1353 = vmatpush1.msra.mxu0 0.0
        %1354 = vmatprep.subr.mxu0 0.0
        %1355 = vmatpush1.msra.mxu0 0.0
        %1356 = vmatprep.subr.mxu0 0.0
        %1357 = vmatpush1.msra.mxu0 0.0
        %1358 = vmatprep.subr.mxu0 0.0
        %1359 = vmatpush1.msra.mxu0 0.0
        %1360 = vmatprep.subr.mxu0 0.0
        %1361 = vmatpush1.msra.mxu0 0.0
        %1362 = vmatprep.subr.mxu0 0.0
        %1363 = vmatpush1.msra.mxu0 0.0
        %1364 = vmatprep.subr.mxu0 0.0
        %1365 = vmatpush1.msra.mxu0 0.0
        %1366 = vmatprep.subr.mxu0 0.0
        %1367 = vmatpush1.msra.mxu0 %v1237
        %1368 = vmatprep.subr.mxu0 0.0
        %1369 = vmatpush1.msra.mxu0 %v1236
        %1370 = vmatprep.subr.mxu0 0.0
        %1371 = vmatpush1.msra.mxu0 %v1235
        %1372 = vmatprep.subr.mxu0 0.0
        %1373 = vmatpush1.msra.mxu0 %v1234
        %1374 = vmatprep.subr.mxu0 0.0
        %1375 = vmatpush2.msra.mxu0 0.0
        %1376 = vmatprep.subr.mxu0 0.0
        %1377 = vmatpush2.msra.mxu0 0.0
        %1378 = vmatprep.subr.mxu0 0.0
        %1379 = vmatpush2.msra.mxu0 0.0
        %1380 = vmatprep.subr.mxu0 0.0
        %1381 = vmatpush2.msra.mxu0 0.0
        %1382 = vmatprep.subr.mxu0 0.0
        %1383 = vmatpush2.msra.mxu0 0.0
        %1384 = vmatprep.subr.mxu0 0.0
        %1385 = vmatpush2.msra.mxu0 0.0
        %1386 = vmatprep.subr.mxu0 0.0
        %1387 = vmatpush2.msra.mxu0 0.0
        %1388 = vmatprep.subr.mxu0 0.0
        %1389 = vmatpush2.msra.mxu0 0.0
        %1390 = vmatprep.subr.mxu0 0.0
        %1391 = vmatpush2.msra.mxu0 0.0
        %1392 = vmatprep.subr.mxu0 0.0
        %1393 = vmatpush2.msra.mxu0 0.0
        %1394 = vmatprep.subr.mxu0 0.0
        %1395 = vmatpush2.msra.mxu0 0.0
        %1396 = vmatprep.subr.mxu0 0.0
        %1397 = vmatpush2.msra.mxu0 0.0
        %1398 = vmatprep.subr.mxu0 0.0
        %1399 = vmatpush2.msra.mxu0 0.0
        %1400 = vmatprep.subr.mxu0 0.0
        %1401 = vmatpush2.msra.mxu0 0.0
        %1402 = vmatprep.subr.mxu0 0.0
        %1403 = vmatpush2.msra.mxu0 0.0
        %1404 = vmatprep.subr.mxu0 0.0
        %1405 = vmatpush2.msra.mxu0 0.0
        %1406 = vmatprep.mubr.f32.mxu0 0.0
        %1407 = vmatmul.mubr.f32.gmra.mxu0 %v1337
        %v1408 = vpop.f32.mrf.mxu0
        %v1409 = vadd.f32 %v1334, %v1408
        %v1410 = vpop.f32.mrf.mxu0
        %1411 = vmatprep.mubr.f32.mxu0 0.0
        %1412 = vmatmul.mubr.f32.gmra.mxu0 %v1340
        %v1413 = vpop.f32.mrf.mxu0
        %v1414 = vadd.f32 %v1334, %v1413
        %v1415 = vpop.f32.mrf.mxu0
        %1416 = vdwg.mxu0
        %v1418 = vlaneseq
        %v1419 = vshrl.u32 %v1418, 7
        %v1420 = vsub.s32 0, %v1419
        %v1421 = vrot.slane %v1243, %v1420
        %1423 = vmatprep.subr.mxu0 0.0
        %1424 = vmatpush1.msra.mxu0 0.0
        %1425 = vmatprep.subr.mxu0 0.0
        %1426 = vmatpush1.msra.mxu0 0.0
        %1427 = vmatprep.subr.mxu0 0.0
        %1428 = vmatpush1.msra.mxu0 0.0
        %1429 = vmatprep.subr.mxu0 0.0
        %1430 = vmatpush1.msra.mxu0 0.0
        %1431 = vmatprep.subr.mxu0 0.0
        %1432 = vmatpush1.msra.mxu0 0.0
        %1433 = vmatprep.subr.mxu0 0.0
        %1434 = vmatpush1.msra.mxu0 0.0
        %1435 = vmatprep.subr.mxu0 0.0
        %1436 = vmatpush1.msra.mxu0 0.0
        %1437 = vmatprep.subr.mxu0 0.0
        %1438 = vmatpush1.msra.mxu0 0.0
        %1439 = vmatprep.subr.mxu0 0.0
        %1440 = vmatpush1.msra.mxu0 0.0
        %1441 = vmatprep.subr.mxu0 0.0
        %1442 = vmatpush1.msra.mxu0 0.0
        %1443 = vmatprep.subr.mxu0 0.0
        %1444 = vmatpush1.msra.mxu0 0.0
        %1445 = vmatprep.subr.mxu0 0.0
        %1446 = vmatpush1.msra.mxu0 0.0
        %1447 = vmatprep.subr.mxu0 0.0
        %1448 = vmatpush1.msra.mxu0 %v1242
        %1449 = vmatprep.subr.mxu0 0.0
        %1450 = vmatpush1.msra.mxu0 %v1241
        %1451 = vmatprep.subr.mxu0 0.0
        %1452 = vmatpush1.msra.mxu0 %v1240
        %1453 = vmatprep.subr.mxu0 0.0
        %1454 = vmatpush1.msra.mxu0 %v1239
        %1455 = vmatprep.subr.mxu0 0.0
        %1456 = vmatpush2.msra.mxu0 0.0
        %1457 = vmatprep.subr.mxu0 0.0
        %1458 = vmatpush2.msra.mxu0 0.0
        %1459 = vmatprep.subr.mxu0 0.0
        %1460 = vmatpush2.msra.mxu0 0.0
        %1461 = vmatprep.subr.mxu0 0.0
        %1462 = vmatpush2.msra.mxu0 0.0
        %1463 = vmatprep.subr.mxu0 0.0
        %1464 = vmatpush2.msra.mxu0 0.0
        %1465 = vmatprep.subr.mxu0 0.0
        %1466 = vmatpush2.msra.mxu0 0.0
        %1467 = vmatprep.subr.mxu0 0.0
        %1468 = vmatpush2.msra.mxu0 0.0
        %1469 = vmatprep.subr.mxu0 0.0
        %1470 = vmatpush2.msra.mxu0 0.0
        %1471 = vmatprep.subr.mxu0 0.0
        %1472 = vmatpush2.msra.mxu0 0.0
        %1473 = vmatprep.subr.mxu0 0.0
        %1474 = vmatpush2.msra.mxu0 0.0
        %1475 = vmatprep.subr.mxu0 0.0
        %1476 = vmatpush2.msra.mxu0 0.0
        %1477 = vmatprep.subr.mxu0 0.0
        %1478 = vmatpush2.msra.mxu0 0.0
        %1479 = vmatprep.subr.mxu0 0.0
        %1480 = vmatpush2.msra.mxu0 0.0
        %1481 = vmatprep.subr.mxu0 0.0
        %1482 = vmatpush2.msra.mxu0 0.0
        %1483 = vmatprep.subr.mxu0 0.0
        %1484 = vmatpush2.msra.mxu0 0.0
        %1485 = vmatprep.subr.mxu0 0.0
        %1486 = vmatpush2.msra.mxu0 0.0
        %1487 = vmatprep.mubr.f32.mxu0 0.0
        %1488 = vmatmul.mubr.f32.gmra.mxu0 %v1337
        %v1489 = vpop.f32.mrf.mxu0
        %v1490 = vadd.f32 %v1421, %v1489
        %v1491 = vpop.f32.mrf.mxu0
        %1492 = vmatprep.mubr.f32.mxu0 0.0
        %1493 = vmatmul.mubr.f32.gmra.mxu0 %v1340
        %v1494 = vpop.f32.mrf.mxu0
        %v1495 = vadd.f32 %v1421, %v1494
        %v1496 = vpop.f32.mrf.mxu0
        %1497 = vdwg.mxu0
        %vm1498 = vcmask 64512
        %v1500 = vsel %vm1498, %v1329, 0
        %v1503 = vsel %vm1498, %v1409, 0
        %v1506 = vsel %vm1498, %v1414, 0
        %1508 = vmatprep.subr.mxu0 0.0
        %1509 = vmatpush1.xpose.msra.mxu0 0.0
        %1510 = vmatprep.subr.mxu0 0.0
        %1511 = vmatpush1.xpose.msra.mxu0 0.0
        %1512 = vmatprep.subr.mxu0 0.0
        %1513 = vmatpush1.xpose.msra.mxu0 0.0
        %1514 = vmatprep.subr.mxu0 0.0
        %1515 = vmatpush1.xpose.msra.mxu0 0.0
        %1516 = vmatprep.subr.mxu0 0.0
        %1517 = vmatpush1.xpose.msra.mxu0 0.0
        %1518 = vmatprep.subr.mxu0 0.0
        %1519 = vmatpush1.xpose.msra.mxu0 0.0
        %1520 = vmatprep.subr.mxu0 0.0
        %1521 = vmatpush1.xpose.msra.mxu0 0.0
        %1522 = vmatprep.subr.mxu0 0.0
        %1523 = vmatpush1.xpose.msra.mxu0 0.0
        %1524 = vmatprep.subr.mxu0 0.0
        %1525 = vmatpush1.xpose.msra.mxu0 0.0
        %1526 = vmatprep.subr.mxu0 0.0
        %1527 = vmatpush1.xpose.msra.mxu0 0.0
        %1528 = vmatprep.subr.mxu0 0.0
        %1529 = vmatpush1.xpose.msra.mxu0 0.0
        %1530 = vmatprep.subr.mxu0 0.0
        %1531 = vmatpush1.xpose.msra.mxu0 0.0
        %1532 = vmatprep.subr.mxu0 0.0
        %1533 = vmatpush1.xpose.msra.mxu0 0.0
        %1534 = vmatprep.subr.mxu0 0.0
        %1535 = vmatpush1.xpose.msra.mxu0 0.0
        %1536 = vmatprep.subr.mxu0 0.0
        %1537 = vmatpush1.xpose.msra.mxu0 %v1506
        %1538 = vmatprep.subr.mxu0 0.0
        %1539 = vmatpush1.xpose.msra.mxu0 %v1503
        %1540 = vmatprep.subr.mxu0 0.0
        %1541 = vmatpush2.xpose.msra.mxu0 0.0
        %1542 = vmatprep.subr.mxu0 0.0
        %1543 = vmatpush2.xpose.msra.mxu0 0.0
        %1544 = vmatprep.subr.mxu0 0.0
        %1545 = vmatpush2.xpose.msra.mxu0 0.0
        %1546 = vmatprep.subr.mxu0 0.0
        %1547 = vmatpush2.xpose.msra.mxu0 0.0
        %1548 = vmatprep.subr.mxu0 0.0
        %1549 = vmatpush2.xpose.msra.mxu0 0.0
        %1550 = vmatprep.subr.mxu0 0.0
        %1551 = vmatpush2.xpose.msra.mxu0 0.0
        %1552 = vmatprep.subr.mxu0 0.0
        %1553 = vmatpush2.xpose.msra.mxu0 0.0
        %1554 = vmatprep.subr.mxu0 0.0
        %1555 = vmatpush2.xpose.msra.mxu0 0.0
        %1556 = vmatprep.subr.mxu0 0.0
        %1557 = vmatpush2.xpose.msra.mxu0 0.0
        %1558 = vmatprep.subr.mxu0 0.0
        %1559 = vmatpush2.xpose.msra.mxu0 0.0
        %1560 = vmatprep.subr.mxu0 0.0
        %1561 = vmatpush2.xpose.msra.mxu0 0.0
        %1562 = vmatprep.subr.mxu0 0.0
        %1563 = vmatpush2.xpose.msra.mxu0 0.0
        %1564 = vmatprep.subr.mxu0 0.0
        %1565 = vmatpush2.xpose.msra.mxu0 0.0
        %1566 = vmatprep.subr.mxu0 0.0
        %1567 = vmatpush2.xpose.msra.mxu0 0.0
        %1568 = vmatprep.subr.mxu0 0.0
        %1569 = vmatpush2.xpose.msra.mxu0 0.0
        %1570 = vmatprep.subr.mxu0 0.0
        %1571 = vmatpush2.xpose.msra.mxu0 0.0
        %1572 = vmatprep.mubr.f32.mxu0 0.0
        %1573 = vmatmul.mubr.f32.gmra.mxu0 %v1500
        %v1574 = vpop.f32.mrf.mxu0
        %v1575 = vadd.f32 0.0, %v1574
        %v1576 = vpop.f32.mrf.mxu0
        %1577 = vdwg.mxu0
        %vm1578 = vcmp.gt.f32.partialorder %v1228, 0.0
        %v1579 = vsel %vm1578, -1e+09, %v1575
        %vm1580 = vcmask 130048
        %v1581 = vsel %vm1580, %v1579, -inf
        %1582 = vmax.xlane.f32.xlu0 %v1581
        %v1583 = vpop.xlane.xlu0 %1582
        %v1584 = vsub.f32 %v1579, %v1583
        %v1585 = vmul.f32 %v1584, 1.442695
        %v1586 = vpow.pop %v1585
        %v1587 = vsel %vm1580, %v1586, 0.0
        %1588 = vadd.xlane.f32.xlu0 %v1587
        %v1589 = vpop.xlane.xlu0 %1588
        %v1590 = vrcp.pop %v1589
        %v1591 = vmul.f32 %v1586, %v1590
        %v1593 = vsel %vm1580, %v1591, 0
        %1595 = vmatprep.subr.mxu0 0.0
        %1596 = vmatpush1.msra.mxu0 0.0
        %1597 = vmatprep.subr.mxu0 0.0
        %1598 = vmatpush1.msra.mxu0 0.0
        %1599 = vmatprep.subr.mxu0 0.0
        %1600 = vmatpush1.msra.mxu0 0.0
        %1601 = vmatprep.subr.mxu0 0.0
        %1602 = vmatpush1.msra.mxu0 0.0
        %1603 = vmatprep.subr.mxu0 0.0
        %1604 = vmatpush1.msra.mxu0 0.0
        %1605 = vmatprep.subr.mxu0 0.0
        %1606 = vmatpush1.msra.mxu0 0.0
        %1607 = vmatprep.subr.mxu0 0.0
        %1608 = vmatpush1.msra.mxu0 0.0
        %1609 = vmatprep.subr.mxu0 0.0
        %1610 = vmatpush1.msra.mxu0 0.0
        %1611 = vmatprep.subr.mxu0 0.0
        %1612 = vmatpush1.msra.mxu0 0.0
        %1613 = vmatprep.subr.mxu0 0.0
        %1614 = vmatpush1.msra.mxu0 0.0
        %1615 = vmatprep.subr.mxu0 0.0
        %1616 = vmatpush1.msra.mxu0 0.0
        %1617 = vmatprep.subr.mxu0 0.0
        %1618 = vmatpush1.msra.mxu0 0.0
        %1619 = vmatprep.subr.mxu0 0.0
        %1620 = vmatpush1.msra.mxu0 0.0
        %1621 = vmatprep.subr.mxu0 0.0
        %1622 = vmatpush1.msra.mxu0 0.0
        %1623 = vmatprep.subr.mxu0 0.0
        %1624 = vmatpush1.msra.mxu0 %v1495
        %1625 = vmatprep.subr.mxu0 0.0
        %1626 = vmatpush1.msra.mxu0 %v1490
        %1627 = vmatprep.subr.mxu0 0.0
        %1628 = vmatpush2.msra.mxu0 0.0
        %1629 = vmatprep.subr.mxu0 0.0
        %1630 = vmatpush2.msra.mxu0 0.0
        %1631 = vmatprep.subr.mxu0 0.0
        %1632 = vmatpush2.msra.mxu0 0.0
        %1633 = vmatprep.subr.mxu0 0.0
        %1634 = vmatpush2.msra.mxu0 0.0
        %1635 = vmatprep.subr.mxu0 0.0
        %1636 = vmatpush2.msra.mxu0 0.0
        %1637 = vmatprep.subr.mxu0 0.0
        %1638 = vmatpush2.msra.mxu0 0.0
        %1639 = vmatprep.subr.mxu0 0.0
        %1640 = vmatpush2.msra.mxu0 0.0
        %1641 = vmatprep.subr.mxu0 0.0
        %1642 = vmatpush2.msra.mxu0 0.0
        %1643 = vmatprep.subr.mxu0 0.0
        %1644 = vmatpush2.msra.mxu0 0.0
        %1645 = vmatprep.subr.mxu0 0.0
        %1646 = vmatpush2.msra.mxu0 0.0
        %1647 = vmatprep.subr.mxu0 0.0
        %1648 = vmatpush2.msra.mxu0 0.0
        %1649 = vmatprep.subr.mxu0 0.0
        %1650 = vmatpush2.msra.mxu0 0.0
        %1651 = vmatprep.subr.mxu0 0.0
        %1652 = vmatpush2.msra.mxu0 0.0
        %1653 = vmatprep.subr.mxu0 0.0
        %1654 = vmatpush2.msra.mxu0 0.0
        %1655 = vmatprep.subr.mxu0 0.0
        %1656 = vmatpush2.msra.mxu0 0.0
        %1657 = vmatprep.subr.mxu0 0.0
        %1658 = vmatpush2.msra.mxu0 0.0
        %1659 = vmatprep.mubr.f32.mxu0 0.0
        %1660 = vmatmul.mubr.f32.gmra.mxu0 %v1593
        %v1661 = vpop.f32.mrf.mxu0
        %v1662 = vadd.f32 0.0, %v1661
        %v1663 = vpop.f32.mrf.mxu0
        %1664 = vdwg.mxu0
        %1665 = vrot.lane.b32.xlu0 %v1329, 120
        %v1666 = vpop.permute.xlu0 %1665
        %1667 = vrot.lane.b32.xlu0 %v1409, 120
        %v1668 = vpop.permute.xlu0 %1667
        %1669 = vrot.lane.b32.xlu0 %v1414, 120
        %v1670 = vpop.permute.xlu0 %1669
        %v1671 = vsel %vm1498, %v1666, 0
        %v1673 = vsel %vm1498, %v1668, 0
        %v1675 = vsel %vm1498, %v1670, 0
        %1677 = vmatprep.subr.mxu0 0.0
        %1678 = vmatpush1.xpose.msra.mxu0 0.0
        %1679 = vmatprep.subr.mxu0 0.0
        %1680 = vmatpush1.xpose.msra.mxu0 0.0
        %1681 = vmatprep.subr.mxu0 0.0
        %1682 = vmatpush1.xpose.msra.mxu0 0.0
        %1683 = vmatprep.subr.mxu0 0.0
        %1684 = vmatpush1.xpose.msra.mxu0 0.0
        %1685 = vmatprep.subr.mxu0 0.0
        %1686 = vmatpush1.xpose.msra.mxu0 0.0
        %1687 = vmatprep.subr.mxu0 0.0
        %1688 = vmatpush1.xpose.msra.mxu0 0.0
        %1689 = vmatprep.subr.mxu0 0.0
        %1690 = vmatpush1.xpose.msra.mxu0 0.0
        %1691 = vmatprep.subr.mxu0 0.0
        %1692 = vmatpush1.xpose.msra.mxu0 0.0
        %1693 = vmatprep.subr.mxu0 0.0
        %1694 = vmatpush1.xpose.msra.mxu0 0.0
        %1695 = vmatprep.subr.mxu0 0.0
        %1696 = vmatpush1.xpose.msra.mxu0 0.0
        %1697 = vmatprep.subr.mxu0 0.0
        %1698 = vmatpush1.xpose.msra.mxu0 0.0
        %1699 = vmatprep.subr.mxu0 0.0
        %1700 = vmatpush1.xpose.msra.mxu0 0.0
        %1701 = vmatprep.subr.mxu0 0.0
        %1702 = vmatpush1.xpose.msra.mxu0 0.0
        %1703 = vmatprep.subr.mxu0 0.0
        %1704 = vmatpush1.xpose.msra.mxu0 0.0
        %1705 = vmatprep.subr.mxu0 0.0
        %1706 = vmatpush1.xpose.msra.mxu0 %v1675
        %1707 = vmatprep.subr.mxu0 0.0
        %1708 = vmatpush1.xpose.msra.mxu0 %v1673
        %1709 = vmatprep.subr.mxu0 0.0
        %1710 = vmatpush2.xpose.msra.mxu0 0.0
        %1711 = vmatprep.subr.mxu0 0.0
        %1712 = vmatpush2.xpose.msra.mxu0 0.0
        %1713 = vmatprep.subr.mxu0 0.0
        %1714 = vmatpush2.xpose.msra.mxu0 0.0
        %1715 = vmatprep.subr.mxu0 0.0
        %1716 = vmatpush2.xpose.msra.mxu0 0.0
        %1717 = vmatprep.subr.mxu0 0.0
        %1718 = vmatpush2.xpose.msra.mxu0 0.0
        %1719 = vmatprep.subr.mxu0 0.0
        %1720 = vmatpush2.xpose.msra.mxu0 0.0
        %1721 = vmatprep.subr.mxu0 0.0
        %1722 = vmatpush2.xpose.msra.mxu0 0.0
        %1723 = vmatprep.subr.mxu0 0.0
        %1724 = vmatpush2.xpose.msra.mxu0 0.0
        %1725 = vmatprep.subr.mxu0 0.0
        %1726 = vmatpush2.xpose.msra.mxu0 0.0
        %1727 = vmatprep.subr.mxu0 0.0
        %1728 = vmatpush2.xpose.msra.mxu0 0.0
        %1729 = vmatprep.subr.mxu0 0.0
        %1730 = vmatpush2.xpose.msra.mxu0 0.0
        %1731 = vmatprep.subr.mxu0 0.0
        %1732 = vmatpush2.xpose.msra.mxu0 0.0
        %1733 = vmatprep.subr.mxu0 0.0
        %1734 = vmatpush2.xpose.msra.mxu0 0.0
        %1735 = vmatprep.subr.mxu0 0.0
        %1736 = vmatpush2.xpose.msra.mxu0 0.0
        %1737 = vmatprep.subr.mxu0 0.0
        %1738 = vmatpush2.xpose.msra.mxu0 0.0
        %1739 = vmatprep.subr.mxu0 0.0
        %1740 = vmatpush2.xpose.msra.mxu0 0.0
        %1741 = vmatprep.mubr.f32.mxu0 0.0
        %1742 = vmatmul.mubr.f32.gmra.mxu0 %v1671
        %v1743 = vpop.f32.mrf.mxu0
        %v1744 = vadd.f32 0.0, %v1743
        %v1745 = vpop.f32.mrf.mxu0
        %1746 = vdwg.mxu0
        %v1747 = vsel %vm1578, -1e+09, %v1744
        %v1748 = vsel %vm1580, %v1747, -inf
        %1749 = vmax.xlane.f32.xlu0 %v1748
        %v1750 = vpop.xlane.xlu0 %1749
        %v1751 = vsub.f32 %v1747, %v1750
        %v1752 = vmul.f32 %v1751, 1.442695
        %v1753 = vpow.pop %v1752
        %v1754 = vsel %vm1580, %v1753, 0.0
        %1755 = vadd.xlane.f32.xlu0 %v1754
        %v1756 = vpop.xlane.xlu0 %1755
        %v1757 = vrcp.pop %v1756
        %v1758 = vmul.f32 %v1753, %v1757
        %1761 = vrot.lane.b32.xlu0 %v1490, 120
        %v1762 = vpop.permute.xlu0 %1761
        %1763 = vrot.lane.b32.xlu0 %v1495, 120
        %v1764 = vpop.permute.xlu0 %1763
        %v1768 = vsel %vm1580, %v1758, 0
        %1770 = vmatprep.subr.mxu0 0.0
        %1771 = vmatpush1.msra.mxu0 0.0
        %1772 = vmatprep.subr.mxu0 0.0
        %1773 = vmatpush1.msra.mxu0 0.0
        %1774 = vmatprep.subr.mxu0 0.0
        %1775 = vmatpush1.msra.mxu0 0.0
        %1776 = vmatprep.subr.mxu0 0.0
        %1777 = vmatpush1.msra.mxu0 0.0
        %1778 = vmatprep.subr.mxu0 0.0
        %1779 = vmatpush1.msra.mxu0 0.0
        %1780 = vmatprep.subr.mxu0 0.0
        %1781 = vmatpush1.msra.mxu0 0.0
        %1782 = vmatprep.subr.mxu0 0.0
        %1783 = vmatpush1.msra.mxu0 0.0
        %1784 = vmatprep.subr.mxu0 0.0
        %1785 = vmatpush1.msra.mxu0 0.0
        %1786 = vmatprep.subr.mxu0 0.0
        %1787 = vmatpush1.msra.mxu0 0.0
        %1788 = vmatprep.subr.mxu0 0.0
        %1789 = vmatpush1.msra.mxu0 0.0
        %1790 = vmatprep.subr.mxu0 0.0
        %1791 = vmatpush1.msra.mxu0 0.0
        %1792 = vmatprep.subr.mxu0 0.0
        %1793 = vmatpush1.msra.mxu0 0.0
        %1794 = vmatprep.subr.mxu0 0.0
        %1795 = vmatpush1.msra.mxu0 0.0
        %1796 = vmatprep.subr.mxu0 0.0
        %1797 = vmatpush1.msra.mxu0 0.0
        %1798 = vmatprep.subr.mxu0 0.0
        %1799 = vmatpush1.msra.mxu0 %v1764
        %1800 = vmatprep.subr.mxu0 0.0
        %1801 = vmatpush1.msra.mxu0 %v1762
        %1802 = vmatprep.subr.mxu0 0.0
        %1803 = vmatpush2.msra.mxu0 0.0
        %1804 = vmatprep.subr.mxu0 0.0
        %1805 = vmatpush2.msra.mxu0 0.0
        %1806 = vmatprep.subr.mxu0 0.0
        %1807 = vmatpush2.msra.mxu0 0.0
        %1808 = vmatprep.subr.mxu0 0.0
        %1809 = vmatpush2.msra.mxu0 0.0
        %1810 = vmatprep.subr.mxu0 0.0
        %1811 = vmatpush2.msra.mxu0 0.0
        %1812 = vmatprep.subr.mxu0 0.0
        %1813 = vmatpush2.msra.mxu0 0.0
        %1814 = vmatprep.subr.mxu0 0.0
        %1815 = vmatpush2.msra.mxu0 0.0
        %1816 = vmatprep.subr.mxu0 0.0
        %1817 = vmatpush2.msra.mxu0 0.0
        %1818 = vmatprep.subr.mxu0 0.0
        %1819 = vmatpush2.msra.mxu0 0.0
        %1820 = vmatprep.subr.mxu0 0.0
        %1821 = vmatpush2.msra.mxu0 0.0
        %1822 = vmatprep.subr.mxu0 0.0
        %1823 = vmatpush2.msra.mxu0 0.0
        %1824 = vmatprep.subr.mxu0 0.0
        %1825 = vmatpush2.msra.mxu0 0.0
        %1826 = vmatprep.subr.mxu0 0.0
        %1827 = vmatpush2.msra.mxu0 0.0
        %1828 = vmatprep.subr.mxu0 0.0
        %1829 = vmatpush2.msra.mxu0 0.0
        %1830 = vmatprep.subr.mxu0 0.0
        %1831 = vmatpush2.msra.mxu0 0.0
        %1832 = vmatprep.subr.mxu0 0.0
        %1833 = vmatpush2.msra.mxu0 0.0
        %1834 = vmatprep.mubr.f32.mxu0 0.0
        %1835 = vmatmul.mubr.f32.gmra.mxu0 %v1768
        %v1836 = vpop.f32.mrf.mxu0
        %v1837 = vadd.f32 0.0, %v1836
        %v1838 = vpop.f32.mrf.mxu0
        %1839 = vdwg.mxu0
        %1840 = vrot.lane.b32.xlu0 %v1329, 112
        %v1841 = vpop.permute.xlu0 %1840
        %1842 = vrot.lane.b32.xlu0 %v1409, 112
        %v1843 = vpop.permute.xlu0 %1842
        %1844 = vrot.lane.b32.xlu0 %v1414, 112
        %v1845 = vpop.permute.xlu0 %1844
        %v1846 = vsel %vm1498, %v1841, 0
        %v1848 = vsel %vm1498, %v1843, 0
        %v1850 = vsel %vm1498, %v1845, 0
        %1852 = vmatprep.subr.mxu0 0.0
        %1853 = vmatpush1.xpose.msra.mxu0 0.0
        %1854 = vmatprep.subr.mxu0 0.0
        %1855 = vmatpush1.xpose.msra.mxu0 0.0
        %1856 = vmatprep.subr.mxu0 0.0
        %1857 = vmatpush1.xpose.msra.mxu0 0.0
        %1858 = vmatprep.subr.mxu0 0.0
        %1859 = vmatpush1.xpose.msra.mxu0 0.0
        %1860 = vmatprep.subr.mxu0 0.0
        %1861 = vmatpush1.xpose.msra.mxu0 0.0
        %1862 = vmatprep.subr.mxu0 0.0
        %1863 = vmatpush1.xpose.msra.mxu0 0.0
        %1864 = vmatprep.subr.mxu0 0.0
        %1865 = vmatpush1.xpose.msra.mxu0 0.0
        %1866 = vmatprep.subr.mxu0 0.0
        %1867 = vmatpush1.xpose.msra.mxu0 0.0
        %1868 = vmatprep.subr.mxu0 0.0
        %1869 = vmatpush1.xpose.msra.mxu0 0.0
        %1870 = vmatprep.subr.mxu0 0.0
        %1871 = vmatpush1.xpose.msra.mxu0 0.0
        %1872 = vmatprep.subr.mxu0 0.0
        %1873 = vmatpush1.xpose.msra.mxu0 0.0
        %1874 = vmatprep.subr.mxu0 0.0
        %1875 = vmatpush1.xpose.msra.mxu0 0.0
        %1876 = vmatprep.subr.mxu0 0.0
        %1877 = vmatpush1.xpose.msra.mxu0 0.0
        %1878 = vmatprep.subr.mxu0 0.0
        %1879 = vmatpush1.xpose.msra.mxu0 0.0
        %1880 = vmatprep.subr.mxu0 0.0
        %1881 = vmatpush1.xpose.msra.mxu0 %v1850
        %1882 = vmatprep.subr.mxu0 0.0
        %1883 = vmatpush1.xpose.msra.mxu0 %v1848
        %1884 = vmatprep.subr.mxu0 0.0
        %1885 = vmatpush2.xpose.msra.mxu0 0.0
        %1886 = vmatprep.subr.mxu0 0.0
        %1887 = vmatpush2.xpose.msra.mxu0 0.0
        %1888 = vmatprep.subr.mxu0 0.0
        %1889 = vmatpush2.xpose.msra.mxu0 0.0
        %1890 = vmatprep.subr.mxu0 0.0
        %1891 = vmatpush2.xpose.msra.mxu0 0.0
        %1892 = vmatprep.subr.mxu0 0.0
        %1893 = vmatpush2.xpose.msra.mxu0 0.0
        %1894 = vmatprep.subr.mxu0 0.0
        %1895 = vmatpush2.xpose.msra.mxu0 0.0
        %1896 = vmatprep.subr.mxu0 0.0
        %1897 = vmatpush2.xpose.msra.mxu0 0.0
        %1898 = vmatprep.subr.mxu0 0.0
        %1899 = vmatpush2.xpose.msra.mxu0 0.0
        %1900 = vmatprep.subr.mxu0 0.0
        %1901 = vmatpush2.xpose.msra.mxu0 0.0
        %1902 = vmatprep.subr.mxu0 0.0
        %1903 = vmatpush2.xpose.msra.mxu0 0.0
        %1904 = vmatprep.subr.mxu0 0.0
        %1905 = vmatpush2.xpose.msra.mxu0 0.0
        %1906 = vmatprep.subr.mxu0 0.0
        %1907 = vmatpush2.xpose.msra.mxu0 0.0
        %1908 = vmatprep.subr.mxu0 0.0
        %1909 = vmatpush2.xpose.msra.mxu0 0.0
        %1910 = vmatprep.subr.mxu0 0.0
        %1911 = vmatpush2.xpose.msra.mxu0 0.0
        %1912 = vmatprep.subr.mxu0 0.0
        %1913 = vmatpush2.xpose.msra.mxu0 0.0
        %1914 = vmatprep.subr.mxu0 0.0
        %1915 = vmatpush2.xpose.msra.mxu0 0.0
        %1916 = vmatprep.mubr.f32.mxu0 0.0
        %1917 = vmatmul.mubr.f32.gmra.mxu0 %v1846
        %v1918 = vpop.f32.mrf.mxu0
        %v1919 = vadd.f32 0.0, %v1918
        %v1920 = vpop.f32.mrf.mxu0
        %1921 = vdwg.mxu0
        %v1922 = vsel %vm1578, -1e+09, %v1919
        %v1923 = vsel %vm1580, %v1922, -inf
        %1924 = vmax.xlane.f32.xlu0 %v1923
        %v1925 = vpop.xlane.xlu0 %1924
        %v1926 = vsub.f32 %v1922, %v1925
        %v1927 = vmul.f32 %v1926, 1.442695
        %v1928 = vpow.pop %v1927
        %v1929 = vsel %vm1580, %v1928, 0.0
        %1930 = vadd.xlane.f32.xlu0 %v1929
        %v1931 = vpop.xlane.xlu0 %1930
        %v1932 = vrcp.pop %v1931
        %v1933 = vmul.f32 %v1928, %v1932
        %1934 = vrot.lane.b32.xlu0 %v1490, 112
        %v1935 = vpop.permute.xlu0 %1934
        %1936 = vrot.lane.b32.xlu0 %v1495, 112
        %v1937 = vpop.permute.xlu0 %1936
        %v1941 = vsel %vm1580, %v1933, 0
        %1943 = vmatprep.subr.mxu0 0.0
        %1944 = vmatpush1.msra.mxu0 0.0
        %1945 = vmatprep.subr.mxu0 0.0
        %1946 = vmatpush1.msra.mxu0 0.0
        %1947 = vmatprep.subr.mxu0 0.0
        %1948 = vmatpush1.msra.mxu0 0.0
        %1949 = vmatprep.subr.mxu0 0.0
        %1950 = vmatpush1.msra.mxu0 0.0
        %1951 = vmatprep.subr.mxu0 0.0
        %1952 = vmatpush1.msra.mxu0 0.0
        %1953 = vmatprep.subr.mxu0 0.0
        %1954 = vmatpush1.msra.mxu0 0.0
        %1955 = vmatprep.subr.mxu0 0.0
        %1956 = vmatpush1.msra.mxu0 0.0
        %1957 = vmatprep.subr.mxu0 0.0
        %1958 = vmatpush1.msra.mxu0 0.0
        %1959 = vmatprep.subr.mxu0 0.0
        %1960 = vmatpush1.msra.mxu0 0.0
        %1961 = vmatprep.subr.mxu0 0.0
        %1962 = vmatpush1.msra.mxu0 0.0
        %1963 = vmatprep.subr.mxu0 0.0
        %1964 = vmatpush1.msra.mxu0 0.0
        %1965 = vmatprep.subr.mxu0 0.0
        %1966 = vmatpush1.msra.mxu0 0.0
        %1967 = vmatprep.subr.mxu0 0.0
        %1968 = vmatpush1.msra.mxu0 0.0
        %1969 = vmatprep.subr.mxu0 0.0
        %1970 = vmatpush1.msra.mxu0 0.0
        %1971 = vmatprep.subr.mxu0 0.0
        %1972 = vmatpush1.msra.mxu0 %v1937
        %1973 = vmatprep.subr.mxu0 0.0
        %1974 = vmatpush1.msra.mxu0 %v1935
        %1975 = vmatprep.subr.mxu0 0.0
        %1976 = vmatpush2.msra.mxu0 0.0
        %1977 = vmatprep.subr.mxu0 0.0
        %1978 = vmatpush2.msra.mxu0 0.0
        %1979 = vmatprep.subr.mxu0 0.0
        %1980 = vmatpush2.msra.mxu0 0.0
        %1981 = vmatprep.subr.mxu0 0.0
        %1982 = vmatpush2.msra.mxu0 0.0
        %1983 = vmatprep.subr.mxu0 0.0
        %1984 = vmatpush2.msra.mxu0 0.0
        %1985 = vmatprep.subr.mxu0 0.0
        %1986 = vmatpush2.msra.mxu0 0.0
        %1987 = vmatprep.subr.mxu0 0.0
        %1988 = vmatpush2.msra.mxu0 0.0
        %1989 = vmatprep.subr.mxu0 0.0
        %1990 = vmatpush2.msra.mxu0 0.0
        %1991 = vmatprep.subr.mxu0 0.0
        %1992 = vmatpush2.msra.mxu0 0.0
        %1993 = vmatprep.subr.mxu0 0.0
        %1994 = vmatpush2.msra.mxu0 0.0
        %1995 = vmatprep.subr.mxu0 0.0
        %1996 = vmatpush2.msra.mxu0 0.0
        %1997 = vmatprep.subr.mxu0 0.0
        %1998 = vmatpush2.msra.mxu0 0.0
        %1999 = vmatprep.subr.mxu0 0.0
        %2000 = vmatpush2.msra.mxu0 0.0
        %2001 = vmatprep.subr.mxu0 0.0
        %2002 = vmatpush2.msra.mxu0 0.0
        %2003 = vmatprep.subr.mxu0 0.0
        %2004 = vmatpush2.msra.mxu0 0.0
        %2005 = vmatprep.subr.mxu0 0.0
        %2006 = vmatpush2.msra.mxu0 0.0
        %2007 = vmatprep.mubr.f32.mxu0 0.0
        %2008 = vmatmul.mubr.f32.gmra.mxu0 %v1941
        %v2009 = vpop.f32.mrf.mxu0
        %v2010 = vadd.f32 0.0, %v2009
        %v2011 = vpop.f32.mrf.mxu0
        %2012 = vdwg.mxu0
        %2013 = vrot.lane.b32.xlu0 %v1329, 104
        %v2014 = vpop.permute.xlu0 %2013
        %2015 = vrot.lane.b32.xlu0 %v1409, 104
        %v2016 = vpop.permute.xlu0 %2015
        %2017 = vrot.lane.b32.xlu0 %v1414, 104
        %v2018 = vpop.permute.xlu0 %2017
        %v2019 = vsel %vm1498, %v2014, 0
        %v2021 = vsel %vm1498, %v2016, 0
        %v2023 = vsel %vm1498, %v2018, 0
        %2025 = vmatprep.subr.mxu0 0.0
        %2026 = vmatpush1.xpose.msra.mxu0 0.0
        %2027 = vmatprep.subr.mxu0 0.0
        %2028 = vmatpush1.xpose.msra.mxu0 0.0
        %2029 = vmatprep.subr.mxu0 0.0
        %2030 = vmatpush1.xpose.msra.mxu0 0.0
        %2031 = vmatprep.subr.mxu0 0.0
        %2032 = vmatpush1.xpose.msra.mxu0 0.0
        %2033 = vmatprep.subr.mxu0 0.0
        %2034 = vmatpush1.xpose.msra.mxu0 0.0
        %2035 = vmatprep.subr.mxu0 0.0
        %2036 = vmatpush1.xpose.msra.mxu0 0.0
        %2037 = vmatprep.subr.mxu0 0.0
        %2038 = vmatpush1.xpose.msra.mxu0 0.0
        %2039 = vmatprep.subr.mxu0 0.0
        %2040 = vmatpush1.xpose.msra.mxu0 0.0
        %2041 = vmatprep.subr.mxu0 0.0
        %2042 = vmatpush1.xpose.msra.mxu0 0.0
        %2043 = vmatprep.subr.mxu0 0.0
        %2044 = vmatpush1.xpose.msra.mxu0 0.0
        %2045 = vmatprep.subr.mxu0 0.0
        %2046 = vmatpush1.xpose.msra.mxu0 0.0
        %2047 = vmatprep.subr.mxu0 0.0
        %2048 = vmatpush1.xpose.msra.mxu0 0.0
        %2049 = vmatprep.subr.mxu0 0.0
        %2050 = vmatpush1.xpose.msra.mxu0 0.0
        %2051 = vmatprep.subr.mxu0 0.0
        %2052 = vmatpush1.xpose.msra.mxu0 0.0
        %2053 = vmatprep.subr.mxu0 0.0
        %2054 = vmatpush1.xpose.msra.mxu0 %v2023
        %2055 = vmatprep.subr.mxu0 0.0
        %2056 = vmatpush1.xpose.msra.mxu0 %v2021
        %2057 = vmatprep.subr.mxu0 0.0
        %2058 = vmatpush2.xpose.msra.mxu0 0.0
        %2059 = vmatprep.subr.mxu0 0.0
        %2060 = vmatpush2.xpose.msra.mxu0 0.0
        %2061 = vmatprep.subr.mxu0 0.0
        %2062 = vmatpush2.xpose.msra.mxu0 0.0
        %2063 = vmatprep.subr.mxu0 0.0
        %2064 = vmatpush2.xpose.msra.mxu0 0.0
        %2065 = vmatprep.subr.mxu0 0.0
        %2066 = vmatpush2.xpose.msra.mxu0 0.0
        %2067 = vmatprep.subr.mxu0 0.0
        %2068 = vmatpush2.xpose.msra.mxu0 0.0
        %2069 = vmatprep.subr.mxu0 0.0
        %2070 = vmatpush2.xpose.msra.mxu0 0.0
        %2071 = vmatprep.subr.mxu0 0.0
        %2072 = vmatpush2.xpose.msra.mxu0 0.0
        %2073 = vmatprep.subr.mxu0 0.0
        %2074 = vmatpush2.xpose.msra.mxu0 0.0
        %2075 = vmatprep.subr.mxu0 0.0
        %2076 = vmatpush2.xpose.msra.mxu0 0.0
        %2077 = vmatprep.subr.mxu0 0.0
        %2078 = vmatpush2.xpose.msra.mxu0 0.0
        %2079 = vmatprep.subr.mxu0 0.0
        %2080 = vmatpush2.xpose.msra.mxu0 0.0
        %2081 = vmatprep.subr.mxu0 0.0
        %2082 = vmatpush2.xpose.msra.mxu0 0.0
        %2083 = vmatprep.subr.mxu0 0.0
        %2084 = vmatpush2.xpose.msra.mxu0 0.0
        %2085 = vmatprep.subr.mxu0 0.0
        %2086 = vmatpush2.xpose.msra.mxu0 0.0
        %2087 = vmatprep.subr.mxu0 0.0
        %2088 = vmatpush2.xpose.msra.mxu0 0.0
        %2089 = vmatprep.mubr.f32.mxu0 0.0
        %2090 = vmatmul.mubr.f32.gmra.mxu0 %v2019
        %v2091 = vpop.f32.mrf.mxu0
        %v2092 = vadd.f32 0.0, %v2091
        %v2093 = vpop.f32.mrf.mxu0
        %2094 = vdwg.mxu0
        %v2095 = vsel %vm1578, -1e+09, %v2092
        %v2096 = vsel %vm1580, %v2095, -inf
        %2097 = vmax.xlane.f32.xlu0 %v2096
        %v2098 = vpop.xlane.xlu0 %2097
        %v2099 = vsub.f32 %v2095, %v2098
        %v2100 = vmul.f32 %v2099, 1.442695
        %v2101 = vpow.pop %v2100
        %v2102 = vsel %vm1580, %v2101, 0.0
        %2103 = vadd.xlane.f32.xlu0 %v2102
        %v2104 = vpop.xlane.xlu0 %2103
        %v2105 = vrcp.pop %v2104
        %v2106 = vmul.f32 %v2101, %v2105
        %2107 = vrot.lane.b32.xlu0 %v1490, 104
        %v2108 = vpop.permute.xlu0 %2107
        %2109 = vrot.lane.b32.xlu0 %v1495, 104
        %v2110 = vpop.permute.xlu0 %2109
        %v2114 = vsel %vm1580, %v2106, 0
        %2116 = vmatprep.subr.mxu0 0.0
        %2117 = vmatpush1.msra.mxu0 0.0
        %2118 = vmatprep.subr.mxu0 0.0
        %2119 = vmatpush1.msra.mxu0 0.0
        %2120 = vmatprep.subr.mxu0 0.0
        %2121 = vmatpush1.msra.mxu0 0.0
        %2122 = vmatprep.subr.mxu0 0.0
        %2123 = vmatpush1.msra.mxu0 0.0
        %2124 = vmatprep.subr.mxu0 0.0
        %2125 = vmatpush1.msra.mxu0 0.0
        %2126 = vmatprep.subr.mxu0 0.0
        %2127 = vmatpush1.msra.mxu0 0.0
        %2128 = vmatprep.subr.mxu0 0.0
        %2129 = vmatpush1.msra.mxu0 0.0
        %2130 = vmatprep.subr.mxu0 0.0
        %2131 = vmatpush1.msra.mxu0 0.0
        %2132 = vmatprep.subr.mxu0 0.0
        %2133 = vmatpush1.msra.mxu0 0.0
        %2134 = vmatprep.subr.mxu0 0.0
        %2135 = vmatpush1.msra.mxu0 0.0
        %2136 = vmatprep.subr.mxu0 0.0
        %2137 = vmatpush1.msra.mxu0 0.0
        %2138 = vmatprep.subr.mxu0 0.0
        %2139 = vmatpush1.msra.mxu0 0.0
        %2140 = vmatprep.subr.mxu0 0.0
        %2141 = vmatpush1.msra.mxu0 0.0
        %2142 = vmatprep.subr.mxu0 0.0
        %2143 = vmatpush1.msra.mxu0 0.0
        %2144 = vmatprep.subr.mxu0 0.0
        %2145 = vmatpush1.msra.mxu0 %v2110
        %2146 = vmatprep.subr.mxu0 0.0
        %2147 = vmatpush1.msra.mxu0 %v2108
        %2148 = vmatprep.subr.mxu0 0.0
        %2149 = vmatpush2.msra.mxu0 0.0
        %2150 = vmatprep.subr.mxu0 0.0
        %2151 = vmatpush2.msra.mxu0 0.0
        %2152 = vmatprep.subr.mxu0 0.0
        %2153 = vmatpush2.msra.mxu0 0.0
        %2154 = vmatprep.subr.mxu0 0.0
        %2155 = vmatpush2.msra.mxu0 0.0
        %2156 = vmatprep.subr.mxu0 0.0
        %2157 = vmatpush2.msra.mxu0 0.0
        %2158 = vmatprep.subr.mxu0 0.0
        %2159 = vmatpush2.msra.mxu0 0.0
        %2160 = vmatprep.subr.mxu0 0.0
        %2161 = vmatpush2.msra.mxu0 0.0
        %2162 = vmatprep.subr.mxu0 0.0
        %2163 = vmatpush2.msra.mxu0 0.0
        %2164 = vmatprep.subr.mxu0 0.0
        %2165 = vmatpush2.msra.mxu0 0.0
        %2166 = vmatprep.subr.mxu0 0.0
        %2167 = vmatpush2.msra.mxu0 0.0
        %2168 = vmatprep.subr.mxu0 0.0
        %2169 = vmatpush2.msra.mxu0 0.0
        %2170 = vmatprep.subr.mxu0 0.0
        %2171 = vmatpush2.msra.mxu0 0.0
        %2172 = vmatprep.subr.mxu0 0.0
        %2173 = vmatpush2.msra.mxu0 0.0
        %2174 = vmatprep.subr.mxu0 0.0
        %2175 = vmatpush2.msra.mxu0 0.0
        %2176 = vmatprep.subr.mxu0 0.0
        %2177 = vmatpush2.msra.mxu0 0.0
        %2178 = vmatprep.subr.mxu0 0.0
        %2179 = vmatpush2.msra.mxu0 0.0
        %2180 = vmatprep.mubr.f32.mxu0 0.0
        %2181 = vmatmul.mubr.f32.gmra.mxu0 %v2114
        %v2182 = vpop.f32.mrf.mxu0
        %v2183 = vadd.f32 0.0, %v2182
        %v2184 = vpop.f32.mrf.mxu0
        %2185 = vdwg.mxu0
        %2187 = vrot.lane.b32.xlu0 %v1837, 8
        %v2188 = vpop.permute.xlu0 %2187
        %2191 = vrot.lane.b32.xlu0 %v2010, 16
        %v2192 = vpop.permute.xlu0 %2191
        %2195 = vrot.lane.b32.xlu0 %v2183, 24
        %v2196 = vpop.permute.xlu0 %2195
        %v2198 = vsel %vm1498, %v1662, %v2188
        %v2199 = vsel %vm1580, %v2198, %v2192
        %vm2200 = vcmask 195584
        %v2201 = vsel %vm2200, %v2199, %v2196
        %v2203 = vlaneseq
        %v2204 = vshrl.u32 %v2203, 7
        %v2205 = vsub.s32 0, %v2204
        %v2206 = vrot.slane %v1248, %v2205
        %v2209 = vsel %vm1255, %v2201, 0
        %2211 = vmatprep.subr.mxu0 0.0
        %2212 = vmatpush1.msra.mxu0 0.0
        %2213 = vmatprep.subr.mxu0 0.0
        %2214 = vmatpush1.msra.mxu0 0.0
        %2215 = vmatprep.subr.mxu0 0.0
        %2216 = vmatpush1.msra.mxu0 0.0
        %2217 = vmatprep.subr.mxu0 0.0
        %2218 = vmatpush1.msra.mxu0 0.0
        %2219 = vmatprep.subr.mxu0 0.0
        %2220 = vmatpush1.msra.mxu0 0.0
        %2221 = vmatprep.subr.mxu0 0.0
        %2222 = vmatpush1.msra.mxu0 0.0
        %2223 = vmatprep.subr.mxu0 0.0
        %2224 = vmatpush1.msra.mxu0 0.0
        %2225 = vmatprep.subr.mxu0 0.0
        %2226 = vmatpush1.msra.mxu0 0.0
        %2227 = vmatprep.subr.mxu0 0.0
        %2228 = vmatpush1.msra.mxu0 0.0
        %2229 = vmatprep.subr.mxu0 0.0
        %2230 = vmatpush1.msra.mxu0 0.0
        %2231 = vmatprep.subr.mxu0 0.0
        %2232 = vmatpush1.msra.mxu0 0.0
        %2233 = vmatprep.subr.mxu0 0.0
        %2234 = vmatpush1.msra.mxu0 0.0
        %2235 = vmatprep.subr.mxu0 0.0
        %2236 = vmatpush1.msra.mxu0 %v1247
        %2237 = vmatprep.subr.mxu0 0.0
        %2238 = vmatpush1.msra.mxu0 %v1246
        %2239 = vmatprep.subr.mxu0 0.0
        %2240 = vmatpush1.msra.mxu0 %v1245
        %2241 = vmatprep.subr.mxu0 0.0
        %2242 = vmatpush1.msra.mxu0 %v1244
        %2243 = vmatprep.subr.mxu0 0.0
        %2244 = vmatpush2.msra.mxu0 0.0
        %2245 = vmatprep.subr.mxu0 0.0
        %2246 = vmatpush2.msra.mxu0 0.0
        %2247 = vmatprep.subr.mxu0 0.0
        %2248 = vmatpush2.msra.mxu0 0.0
        %2249 = vmatprep.subr.mxu0 0.0
        %2250 = vmatpush2.msra.mxu0 0.0
        %2251 = vmatprep.subr.mxu0 0.0
        %2252 = vmatpush2.msra.mxu0 0.0
        %2253 = vmatprep.subr.mxu0 0.0
        %2254 = vmatpush2.msra.mxu0 0.0
        %2255 = vmatprep.subr.mxu0 0.0
        %2256 = vmatpush2.msra.mxu0 0.0
        %2257 = vmatprep.subr.mxu0 0.0
        %2258 = vmatpush2.msra.mxu0 0.0
        %2259 = vmatprep.subr.mxu0 0.0
        %2260 = vmatpush2.msra.mxu0 0.0
        %2261 = vmatprep.subr.mxu0 0.0
        %2262 = vmatpush2.msra.mxu0 0.0
        %2263 = vmatprep.subr.mxu0 0.0
        %2264 = vmatpush2.msra.mxu0 0.0
        %2265 = vmatprep.subr.mxu0 0.0
        %2266 = vmatpush2.msra.mxu0 0.0
        %2267 = vmatprep.subr.mxu0 0.0
        %2268 = vmatpush2.msra.mxu0 0.0
        %2269 = vmatprep.subr.mxu0 0.0
        %2270 = vmatpush2.msra.mxu0 0.0
        %2271 = vmatprep.subr.mxu0 0.0
        %2272 = vmatpush2.msra.mxu0 0.0
        %2273 = vmatprep.subr.mxu0 0.0
        %2274 = vmatpush2.msra.mxu0 0.0
        %2275 = vmatprep.mubr.f32.mxu0 0.0
        %2276 = vmatmul.mubr.f32.gmra.mxu0 %v2209
        %v2277 = vpop.f32.mrf.mxu0
        %v2278 = vadd.f32 %v2206, %v2277
        %v2279 = vpop.f32.mrf.mxu0
        %2280 = vdwg.mxu0
        %v2281 = vld [vmem:[%s25] sm:$0x1]
        %v2282 = vld [vmem:[%s27] sm:$0x1]
        %v2283 = vadd.f32 %v1223, %v2278
        %v2284 = vsel %vm1255, %v2283, 0.0
        %2285 = vadd.xlane.f32.xlu0 %v2284
        %v2286 = vpop.xlane.xlu0 %2285
        %v2287 = vrcp.pop 32.0
        %v2288 = vmul.f32 %v2286, %v2287
        %v2289 = vsub.f32 %v2283, %v2288
        %v2290 = vmul.f32 %v2289, %v2289
        %v2291 = vsel %vm1255, %v2290, 0.0
        %2292 = vadd.xlane.f32.xlu0 %v2291
        %v2293 = vpop.xlane.xlu0 %2292
        %v2294 = vmul.f32 %v2293, %v2287
        %v2295 = vrsqrt.pop %v2294
        %v2296 = vmul.f32 %v2294, %v2295
        %vm2297 = vcmp.eq.f32.partialorder %v2294, inf
        %v2298 = vsel %vm2297, %v2294, %v2296
        %vm2299 = vcmp.eq.f32.partialorder %v2294, 0.0
        %v2300 = vand.u32 %v2294, 2147483648
        %v2301 = vsel %vm2299, %v2300, %v2298
        %v2303 = vlaneseq
        %v2304 = vshrl.u32 %v2303, 7
        %v2305 = vsub.s32 0, %v2304
        %v2306 = vrot.slane %v2281, %v2305
        %v2308 = vmul.f32 %v2306, %v2289
        %v2309 = vadd.f32 %v2301, 1e-10
        %v2310 = vrcp.pop %v2309
        %v2311 = vmul.f32 %v2308, %v2310
        %v2313 = vlaneseq
        %v2314 = vshrl.u32 %v2313, 7
        %v2315 = vsub.s32 0, %v2314
        %v2316 = vrot.slane %v2282, %v2315
        %v2318 = vadd.f32 %v2311, %v2316
        %v2319 = vld [vmem:[%s29] sm:$0xff]
        %v2320 = vld [vmem:[%s29 + $0x8] sm:$0xff]
        %v2321 = vld [vmem:[%s29 + $0x10] sm:$0xff]
        %v2322 = vld [vmem:[%s29 + $0x18] sm:$0xff]
        %v2323 = vld [vmem:[#allocation15] sm:$0x1]
        %v2324 = vld [vmem:[#allocation16] sm:$0xff]
        %v2325 = vld [vmem:[#allocation16 + $0x8] sm:$0xff]
        %v2326 = vld [vmem:[#allocation16 + $0x10] sm:$0xff]
        %v2327 = vld [vmem:[#allocation16 + $0x18] sm:$0xff]
        %v2328 = vld [vmem:[#allocation18] sm:$0x1]
        %v2329 = vld [vmem:[#allocation19] sm:$0xff]
        %v2330 = vld [vmem:[#allocation19 + $0x8] sm:$0xff]
        %v2331 = vld [vmem:[#allocation19 + $0x10] sm:$0xff]
        %v2332 = vld [vmem:[#allocation19 + $0x18] sm:$0xff]
        %v2333 = vld [vmem:[%s39] sm:$0x1]
        %v2334 = vld [vmem:[#allocation21] sm:$0xff]
        %v2335 = vld [vmem:[#allocation21 + $0x8] sm:$0xff]
        %v2336 = vld [vmem:[#allocation21 + $0x10] sm:$0xff]
        %v2337 = vld [vmem:[#allocation21 + $0x18] sm:$0xff]
        %v2338 = vld [vmem:[#allocation22] sm:$0x1]
        %v2340 = vlaneseq
        %v2341 = vshrl.u32 %v2340, 7
        %v2342 = vsub.s32 0, %v2341
        %v2343 = vrot.slane %v2323, %v2342
        %v2346 = vsel %vm1255, %v2318, 0
        %2348 = vmatprep.subr.mxu0 0.0
        %2349 = vmatpush1.msra.mxu0 0.0
        %2350 = vmatprep.subr.mxu0 0.0
        %2351 = vmatpush1.msra.mxu0 0.0
        %2352 = vmatprep.subr.mxu0 0.0
        %2353 = vmatpush1.msra.mxu0 0.0
        %2354 = vmatprep.subr.mxu0 0.0
        %2355 = vmatpush1.msra.mxu0 0.0
        %2356 = vmatprep.subr.mxu0 0.0
        %2357 = vmatpush1.msra.mxu0 0.0
        %2358 = vmatprep.subr.mxu0 0.0
        %2359 = vmatpush1.msra.mxu0 0.0
        %2360 = vmatprep.subr.mxu0 0.0
        %2361 = vmatpush1.msra.mxu0 0.0
        %2362 = vmatprep.subr.mxu0 0.0
        %2363 = vmatpush1.msra.mxu0 0.0
        %2364 = vmatprep.subr.mxu0 0.0
        %2365 = vmatpush1.msra.mxu0 0.0
        %2366 = vmatprep.subr.mxu0 0.0
        %2367 = vmatpush1.msra.mxu0 0.0
        %2368 = vmatprep.subr.mxu0 0.0
        %2369 = vmatpush1.msra.mxu0 0.0
        %2370 = vmatprep.subr.mxu0 0.0
        %2371 = vmatpush1.msra.mxu0 0.0
        %2372 = vmatprep.subr.mxu0 0.0
        %2373 = vmatpush1.msra.mxu0 %v2322
        %2374 = vmatprep.subr.mxu0 0.0
        %2375 = vmatpush1.msra.mxu0 %v2321
        %2376 = vmatprep.subr.mxu0 0.0
        %2377 = vmatpush1.msra.mxu0 %v2320
        %2378 = vmatprep.subr.mxu0 0.0
        %2379 = vmatpush1.msra.mxu0 %v2319
        %2380 = vmatprep.subr.mxu0 0.0
        %2381 = vmatpush2.msra.mxu0 0.0
        %2382 = vmatprep.subr.mxu0 0.0
        %2383 = vmatpush2.msra.mxu0 0.0
        %2384 = vmatprep.subr.mxu0 0.0
        %2385 = vmatpush2.msra.mxu0 0.0
        %2386 = vmatprep.subr.mxu0 0.0
        %2387 = vmatpush2.msra.mxu0 0.0
        %2388 = vmatprep.subr.mxu0 0.0
        %2389 = vmatpush2.msra.mxu0 0.0
        %2390 = vmatprep.subr.mxu0 0.0
        %2391 = vmatpush2.msra.mxu0 0.0
        %2392 = vmatprep.subr.mxu0 0.0
        %2393 = vmatpush2.msra.mxu0 0.0
        %2394 = vmatprep.subr.mxu0 0.0
        %2395 = vmatpush2.msra.mxu0 0.0
        %2396 = vmatprep.subr.mxu0 0.0
        %2397 = vmatpush2.msra.mxu0 0.0
        %2398 = vmatprep.subr.mxu0 0.0
        %2399 = vmatpush2.msra.mxu0 0.0
        %2400 = vmatprep.subr.mxu0 0.0
        %2401 = vmatpush2.msra.mxu0 0.0
        %2402 = vmatprep.subr.mxu0 0.0
        %2403 = vmatpush2.msra.mxu0 0.0
        %2404 = vmatprep.subr.mxu0 0.0
        %2405 = vmatpush2.msra.mxu0 0.0
        %2406 = vmatprep.subr.mxu0 0.0
        %2407 = vmatpush2.msra.mxu0 0.0
        %2408 = vmatprep.subr.mxu0 0.0
        %2409 = vmatpush2.msra.mxu0 0.0
        %2410 = vmatprep.subr.mxu0 0.0
        %2411 = vmatpush2.msra.mxu0 0.0
        %2412 = vmatprep.mubr.f32.mxu0 0.0
        %2413 = vmatmul.mubr.f32.gmra.mxu0 %v2346
        %v2414 = vpop.f32.mrf.mxu0
        %v2415 = vadd.f32 %v2343, %v2414
        %v2416 = vpop.f32.mrf.mxu0
        %2417 = vdwg.mxu0
        %v2418 = vmul.f32 %v2415, 0.35355338
        %v2420 = vlaneseq
        %v2421 = vshrl.u32 %v2420, 7
        %v2422 = vsub.s32 0, %v2421
        %v2423 = vrot.slane %v2328, %v2422
        %v2426 = vsel %vm1255, %v1226, 0
        %v2429 = vsel %vm1255, %v1227, 0
        %2431 = vmatprep.subr.mxu0 0.0
        %2432 = vmatpush1.msra.mxu0 0.0
        %2433 = vmatprep.subr.mxu0 0.0
        %2434 = vmatpush1.msra.mxu0 0.0
        %2435 = vmatprep.subr.mxu0 0.0
        %2436 = vmatpush1.msra.mxu0 0.0
        %2437 = vmatprep.subr.mxu0 0.0
        %2438 = vmatpush1.msra.mxu0 0.0
        %2439 = vmatprep.subr.mxu0 0.0
        %2440 = vmatpush1.msra.mxu0 0.0
        %2441 = vmatprep.subr.mxu0 0.0
        %2442 = vmatpush1.msra.mxu0 0.0
        %2443 = vmatprep.subr.mxu0 0.0
        %2444 = vmatpush1.msra.mxu0 0.0
        %2445 = vmatprep.subr.mxu0 0.0
        %2446 = vmatpush1.msra.mxu0 0.0
        %2447 = vmatprep.subr.mxu0 0.0
        %2448 = vmatpush1.msra.mxu0 0.0
        %2449 = vmatprep.subr.mxu0 0.0
        %2450 = vmatpush1.msra.mxu0 0.0
        %2451 = vmatprep.subr.mxu0 0.0
        %2452 = vmatpush1.msra.mxu0 0.0
        %2453 = vmatprep.subr.mxu0 0.0
        %2454 = vmatpush1.msra.mxu0 0.0
        %2455 = vmatprep.subr.mxu0 0.0
        %2456 = vmatpush1.msra.mxu0 %v2327
        %2457 = vmatprep.subr.mxu0 0.0
        %2458 = vmatpush1.msra.mxu0 %v2326
        %2459 = vmatprep.subr.mxu0 0.0
        %2460 = vmatpush1.msra.mxu0 %v2325
        %2461 = vmatprep.subr.mxu0 0.0
        %2462 = vmatpush1.msra.mxu0 %v2324
        %2463 = vmatprep.subr.mxu0 0.0
        %2464 = vmatpush2.msra.mxu0 0.0
        %2465 = vmatprep.subr.mxu0 0.0
        %2466 = vmatpush2.msra.mxu0 0.0
        %2467 = vmatprep.subr.mxu0 0.0
        %2468 = vmatpush2.msra.mxu0 0.0
        %2469 = vmatprep.subr.mxu0 0.0
        %2470 = vmatpush2.msra.mxu0 0.0
        %2471 = vmatprep.subr.mxu0 0.0
        %2472 = vmatpush2.msra.mxu0 0.0
        %2473 = vmatprep.subr.mxu0 0.0
        %2474 = vmatpush2.msra.mxu0 0.0
        %2475 = vmatprep.subr.mxu0 0.0
        %2476 = vmatpush2.msra.mxu0 0.0
        %2477 = vmatprep.subr.mxu0 0.0
        %2478 = vmatpush2.msra.mxu0 0.0
        %2479 = vmatprep.subr.mxu0 0.0
        %2480 = vmatpush2.msra.mxu0 0.0
        %2481 = vmatprep.subr.mxu0 0.0
        %2482 = vmatpush2.msra.mxu0 0.0
        %2483 = vmatprep.subr.mxu0 0.0
        %2484 = vmatpush2.msra.mxu0 0.0
        %2485 = vmatprep.subr.mxu0 0.0
        %2486 = vmatpush2.msra.mxu0 0.0
        %2487 = vmatprep.subr.mxu0 0.0
        %2488 = vmatpush2.msra.mxu0 0.0
        %2489 = vmatprep.subr.mxu0 0.0
        %2490 = vmatpush2.msra.mxu0 0.0
        %2491 = vmatprep.subr.mxu0 0.0
        %2492 = vmatpush2.msra.mxu0 0.0
        %2493 = vmatprep.subr.mxu0 0.0
        %2494 = vmatpush2.msra.mxu0 0.0
        %2495 = vmatprep.mubr.f32.mxu0 0.0
        %2496 = vmatmul.mubr.f32.gmra.mxu0 %v2426
        %v2497 = vpop.f32.mrf.mxu0
        %v2498 = vadd.f32 %v2423, %v2497
        %v2499 = vpop.f32.mrf.mxu0
        %2500 = vmatprep.mubr.f32.mxu0 0.0
        %2501 = vmatmul.mubr.f32.gmra.mxu0 %v2429
        %v2502 = vpop.f32.mrf.mxu0
        %v2503 = vadd.f32 %v2423, %v2502
        %v2504 = vpop.f32.mrf.mxu0
        %2505 = vdwg.mxu0
        %v2507 = vlaneseq
        %v2508 = vshrl.u32 %v2507, 7
        %v2509 = vsub.s32 0, %v2508
        %v2510 = vrot.slane %v2333, %v2509
        %2512 = vmatprep.subr.mxu0 0.0
        %2513 = vmatpush1.msra.mxu0 0.0
        %2514 = vmatprep.subr.mxu0 0.0
        %2515 = vmatpush1.msra.mxu0 0.0
        %2516 = vmatprep.subr.mxu0 0.0
        %2517 = vmatpush1.msra.mxu0 0.0
        %2518 = vmatprep.subr.mxu0 0.0
        %2519 = vmatpush1.msra.mxu0 0.0
        %2520 = vmatprep.subr.mxu0 0.0
        %2521 = vmatpush1.msra.mxu0 0.0
        %2522 = vmatprep.subr.mxu0 0.0
        %2523 = vmatpush1.msra.mxu0 0.0
        %2524 = vmatprep.subr.mxu0 0.0
        %2525 = vmatpush1.msra.mxu0 0.0
        %2526 = vmatprep.subr.mxu0 0.0
        %2527 = vmatpush1.msra.mxu0 0.0
        %2528 = vmatprep.subr.mxu0 0.0
        %2529 = vmatpush1.msra.mxu0 0.0
        %2530 = vmatprep.subr.mxu0 0.0
        %2531 = vmatpush1.msra.mxu0 0.0
        %2532 = vmatprep.subr.mxu0 0.0
        %2533 = vmatpush1.msra.mxu0 0.0
        %2534 = vmatprep.subr.mxu0 0.0
        %2535 = vmatpush1.msra.mxu0 0.0
        %2536 = vmatprep.subr.mxu0 0.0
        %2537 = vmatpush1.msra.mxu0 %v2332
        %2538 = vmatprep.subr.mxu0 0.0
        %2539 = vmatpush1.msra.mxu0 %v2331
        %2540 = vmatprep.subr.mxu0 0.0
        %2541 = vmatpush1.msra.mxu0 %v2330
        %2542 = vmatprep.subr.mxu0 0.0
        %2543 = vmatpush1.msra.mxu0 %v2329
        %2544 = vmatprep.subr.mxu0 0.0
        %2545 = vmatpush2.msra.mxu0 0.0
        %2546 = vmatprep.subr.mxu0 0.0
        %2547 = vmatpush2.msra.mxu0 0.0
        %2548 = vmatprep.subr.mxu0 0.0
        %2549 = vmatpush2.msra.mxu0 0.0
        %2550 = vmatprep.subr.mxu0 0.0
        %2551 = vmatpush2.msra.mxu0 0.0
        %2552 = vmatprep.subr.mxu0 0.0
        %2553 = vmatpush2.msra.mxu0 0.0
        %2554 = vmatprep.subr.mxu0 0.0
        %2555 = vmatpush2.msra.mxu0 0.0
        %2556 = vmatprep.subr.mxu0 0.0
        %2557 = vmatpush2.msra.mxu0 0.0
        %2558 = vmatprep.subr.mxu0 0.0
        %2559 = vmatpush2.msra.mxu0 0.0
        %2560 = vmatprep.subr.mxu0 0.0
        %2561 = vmatpush2.msra.mxu0 0.0
        %2562 = vmatprep.subr.mxu0 0.0
        %2563 = vmatpush2.msra.mxu0 0.0
        %2564 = vmatprep.subr.mxu0 0.0
        %2565 = vmatpush2.msra.mxu0 0.0
        %2566 = vmatprep.subr.mxu0 0.0
        %2567 = vmatpush2.msra.mxu0 0.0
        %2568 = vmatprep.subr.mxu0 0.0
        %2569 = vmatpush2.msra.mxu0 0.0
        %2570 = vmatprep.subr.mxu0 0.0
        %2571 = vmatpush2.msra.mxu0 0.0
        %2572 = vmatprep.subr.mxu0 0.0
        %2573 = vmatpush2.msra.mxu0 0.0
        %2574 = vmatprep.subr.mxu0 0.0
        %2575 = vmatpush2.msra.mxu0 0.0
        %2576 = vmatprep.mubr.f32.mxu0 0.0
        %2577 = vmatmul.mubr.f32.gmra.mxu0 %v2426
        %v2578 = vpop.f32.mrf.mxu0
        %v2579 = vadd.f32 %v2510, %v2578
        %v2580 = vpop.f32.mrf.mxu0
        %2581 = vmatprep.mubr.f32.mxu0 0.0
        %2582 = vmatmul.mubr.f32.gmra.mxu0 %v2429
        %v2583 = vpop.f32.mrf.mxu0
        %v2584 = vadd.f32 %v2510, %v2583
        %v2585 = vpop.f32.mrf.mxu0
        %2586 = vdwg.mxu0
        %v2588 = vsel %vm1498, %v2418, 0
        %v2591 = vsel %vm1498, %v2498, 0
        %v2594 = vsel %vm1498, %v2503, 0
        %2596 = vmatprep.subr.mxu0 0.0
        %2597 = vmatpush1.xpose.msra.mxu0 0.0
        %2598 = vmatprep.subr.mxu0 0.0
        %2599 = vmatpush1.xpose.msra.mxu0 0.0
        %2600 = vmatprep.subr.mxu0 0.0
        %2601 = vmatpush1.xpose.msra.mxu0 0.0
        %2602 = vmatprep.subr.mxu0 0.0
        %2603 = vmatpush1.xpose.msra.mxu0 0.0
        %2604 = vmatprep.subr.mxu0 0.0
        %2605 = vmatpush1.xpose.msra.mxu0 0.0
        %2606 = vmatprep.subr.mxu0 0.0
        %2607 = vmatpush1.xpose.msra.mxu0 0.0
        %2608 = vmatprep.subr.mxu0 0.0
        %2609 = vmatpush1.xpose.msra.mxu0 0.0
        %2610 = vmatprep.subr.mxu0 0.0
        %2611 = vmatpush1.xpose.msra.mxu0 0.0
        %2612 = vmatprep.subr.mxu0 0.0
        %2613 = vmatpush1.xpose.msra.mxu0 0.0
        %2614 = vmatprep.subr.mxu0 0.0
        %2615 = vmatpush1.xpose.msra.mxu0 0.0
        %2616 = vmatprep.subr.mxu0 0.0
        %2617 = vmatpush1.xpose.msra.mxu0 0.0
        %2618 = vmatprep.subr.mxu0 0.0
        %2619 = vmatpush1.xpose.msra.mxu0 0.0
        %2620 = vmatprep.subr.mxu0 0.0
        %2621 = vmatpush1.xpose.msra.mxu0 0.0
        %2622 = vmatprep.subr.mxu0 0.0
        %2623 = vmatpush1.xpose.msra.mxu0 0.0
        %2624 = vmatprep.subr.mxu0 0.0
        %2625 = vmatpush1.xpose.msra.mxu0 %v2594
        %2626 = vmatprep.subr.mxu0 0.0
        %2627 = vmatpush1.xpose.msra.mxu0 %v2591
        %2628 = vmatprep.subr.mxu0 0.0
        %2629 = vmatpush2.xpose.msra.mxu0 0.0
        %2630 = vmatprep.subr.mxu0 0.0
        %2631 = vmatpush2.xpose.msra.mxu0 0.0
        %2632 = vmatprep.subr.mxu0 0.0
        %2633 = vmatpush2.xpose.msra.mxu0 0.0
        %2634 = vmatprep.subr.mxu0 0.0
        %2635 = vmatpush2.xpose.msra.mxu0 0.0
        %2636 = vmatprep.subr.mxu0 0.0
        %2637 = vmatpush2.xpose.msra.mxu0 0.0
        %2638 = vmatprep.subr.mxu0 0.0
        %2639 = vmatpush2.xpose.msra.mxu0 0.0
        %2640 = vmatprep.subr.mxu0 0.0
        %2641 = vmatpush2.xpose.msra.mxu0 0.0
        %2642 = vmatprep.subr.mxu0 0.0
        %2643 = vmatpush2.xpose.msra.mxu0 0.0
        %2644 = vmatprep.subr.mxu0 0.0
        %2645 = vmatpush2.xpose.msra.mxu0 0.0
        %2646 = vmatprep.subr.mxu0 0.0
        %2647 = vmatpush2.xpose.msra.mxu0 0.0
        %2648 = vmatprep.subr.mxu0 0.0
        %2649 = vmatpush2.xpose.msra.mxu0 0.0
        %2650 = vmatprep.subr.mxu0 0.0
        %2651 = vmatpush2.xpose.msra.mxu0 0.0
        %2652 = vmatprep.subr.mxu0 0.0
        %2653 = vmatpush2.xpose.msra.mxu0 0.0
        %2654 = vmatprep.subr.mxu0 0.0
        %2655 = vmatpush2.xpose.msra.mxu0 0.0
        %2656 = vmatprep.subr.mxu0 0.0
        %2657 = vmatpush2.xpose.msra.mxu0 0.0
        %2658 = vmatprep.subr.mxu0 0.0
        %2659 = vmatpush2.xpose.msra.mxu0 0.0
        %2660 = vmatprep.mubr.f32.mxu0 0.0
        %2661 = vmatmul.mubr.f32.gmra.mxu0 %v2588
        %v2662 = vpop.f32.mrf.mxu0
        %v2663 = vadd.f32 0.0, %v2662
        %v2664 = vpop.f32.mrf.mxu0
        %2665 = vdwg.mxu0
        %v2666 = vsel %vm1580, %v2663, -inf
        %2667 = vmax.xlane.f32.xlu0 %v2666
        %v2668 = vpop.xlane.xlu0 %2667
        %v2669 = vsub.f32 %v2663, %v2668
        %v2670 = vmul.f32 %v2669, 1.442695
        %v2671 = vpow.pop %v2670
        %v2672 = vsel %vm1580, %v2671, 0.0
        %2673 = vadd.xlane.f32.xlu0 %v2672
        %v2674 = vpop.xlane.xlu0 %2673
        %v2675 = vrcp.pop %v2674
        %v2676 = vmul.f32 %v2671, %v2675
        %v2678 = vsel %vm1580, %v2676, 0
        %2680 = vmatprep.subr.mxu0 0.0
        %2681 = vmatpush1.msra.mxu0 0.0
        %2682 = vmatprep.subr.mxu0 0.0
        %2683 = vmatpush1.msra.mxu0 0.0
        %2684 = vmatprep.subr.mxu0 0.0
        %2685 = vmatpush1.msra.mxu0 0.0
        %2686 = vmatprep.subr.mxu0 0.0
        %2687 = vmatpush1.msra.mxu0 0.0
        %2688 = vmatprep.subr.mxu0 0.0
        %2689 = vmatpush1.msra.mxu0 0.0
        %2690 = vmatprep.subr.mxu0 0.0
        %2691 = vmatpush1.msra.mxu0 0.0
        %2692 = vmatprep.subr.mxu0 0.0
        %2693 = vmatpush1.msra.mxu0 0.0
        %2694 = vmatprep.subr.mxu0 0.0
        %2695 = vmatpush1.msra.mxu0 0.0
        %2696 = vmatprep.subr.mxu0 0.0
        %2697 = vmatpush1.msra.mxu0 0.0
        %2698 = vmatprep.subr.mxu0 0.0
        %2699 = vmatpush1.msra.mxu0 0.0
        %2700 = vmatprep.subr.mxu0 0.0
        %2701 = vmatpush1.msra.mxu0 0.0
        %2702 = vmatprep.subr.mxu0 0.0
        %2703 = vmatpush1.msra.mxu0 0.0
        %2704 = vmatprep.subr.mxu0 0.0
        %2705 = vmatpush1.msra.mxu0 0.0
        %2706 = vmatprep.subr.mxu0 0.0
        %2707 = vmatpush1.msra.mxu0 0.0
        %2708 = vmatprep.subr.mxu0 0.0
        %2709 = vmatpush1.msra.mxu0 %v2584
        %2710 = vmatprep.subr.mxu0 0.0
        %2711 = vmatpush1.msra.mxu0 %v2579
        %2712 = vmatprep.subr.mxu0 0.0
        %2713 = vmatpush2.msra.mxu0 0.0
        %2714 = vmatprep.subr.mxu0 0.0
        %2715 = vmatpush2.msra.mxu0 0.0
        %2716 = vmatprep.subr.mxu0 0.0
        %2717 = vmatpush2.msra.mxu0 0.0
        %2718 = vmatprep.subr.mxu0 0.0
        %2719 = vmatpush2.msra.mxu0 0.0
        %2720 = vmatprep.subr.mxu0 0.0
        %2721 = vmatpush2.msra.mxu0 0.0
        %2722 = vmatprep.subr.mxu0 0.0
        %2723 = vmatpush2.msra.mxu0 0.0
        %2724 = vmatprep.subr.mxu0 0.0
        %2725 = vmatpush2.msra.mxu0 0.0
        %2726 = vmatprep.subr.mxu0 0.0
        %2727 = vmatpush2.msra.mxu0 0.0
        %2728 = vmatprep.subr.mxu0 0.0
        %2729 = vmatpush2.msra.mxu0 0.0
        %2730 = vmatprep.subr.mxu0 0.0
        %2731 = vmatpush2.msra.mxu0 0.0
        %2732 = vmatprep.subr.mxu0 0.0
        %2733 = vmatpush2.msra.mxu0 0.0
        %2734 = vmatprep.subr.mxu0 0.0
        %2735 = vmatpush2.msra.mxu0 0.0
        %2736 = vmatprep.subr.mxu0 0.0
        %2737 = vmatpush2.msra.mxu0 0.0
        %2738 = vmatprep.subr.mxu0 0.0
        %2739 = vmatpush2.msra.mxu0 0.0
        %2740 = vmatprep.subr.mxu0 0.0
        %2741 = vmatpush2.msra.mxu0 0.0
        %2742 = vmatprep.subr.mxu0 0.0
        %2743 = vmatpush2.msra.mxu0 0.0
        %2744 = vmatprep.mubr.f32.mxu0 0.0
        %2745 = vmatmul.mubr.f32.gmra.mxu0 %v2678
        %v2746 = vpop.f32.mrf.mxu0
        %v2747 = vadd.f32 0.0, %v2746
        %v2748 = vpop.f32.mrf.mxu0
        %2749 = vdwg.mxu0
        %2750 = vrot.lane.b32.xlu0 %v2418, 120
        %v2751 = vpop.permute.xlu0 %2750
        %2752 = vrot.lane.b32.xlu0 %v2498, 120
        %v2753 = vpop.permute.xlu0 %2752
        %2754 = vrot.lane.b32.xlu0 %v2503, 120
        %v2755 = vpop.permute.xlu0 %2754
        %v2756 = vsel %vm1498, %v2751, 0
        %v2758 = vsel %vm1498, %v2753, 0
        %v2760 = vsel %vm1498, %v2755, 0
        %2762 = vmatprep.subr.mxu0 0.0
        %2763 = vmatpush1.xpose.msra.mxu0 0.0
        %2764 = vmatprep.subr.mxu0 0.0
        %2765 = vmatpush1.xpose.msra.mxu0 0.0
        %2766 = vmatprep.subr.mxu0 0.0
        %2767 = vmatpush1.xpose.msra.mxu0 0.0
        %2768 = vmatprep.subr.mxu0 0.0
        %2769 = vmatpush1.xpose.msra.mxu0 0.0
        %2770 = vmatprep.subr.mxu0 0.0
        %2771 = vmatpush1.xpose.msra.mxu0 0.0
        %2772 = vmatprep.subr.mxu0 0.0
        %2773 = vmatpush1.xpose.msra.mxu0 0.0
        %2774 = vmatprep.subr.mxu0 0.0
        %2775 = vmatpush1.xpose.msra.mxu0 0.0
        %2776 = vmatprep.subr.mxu0 0.0
        %2777 = vmatpush1.xpose.msra.mxu0 0.0
        %2778 = vmatprep.subr.mxu0 0.0
        %2779 = vmatpush1.xpose.msra.mxu0 0.0
        %2780 = vmatprep.subr.mxu0 0.0
        %2781 = vmatpush1.xpose.msra.mxu0 0.0
        %2782 = vmatprep.subr.mxu0 0.0
        %2783 = vmatpush1.xpose.msra.mxu0 0.0
        %2784 = vmatprep.subr.mxu0 0.0
        %2785 = vmatpush1.xpose.msra.mxu0 0.0
        %2786 = vmatprep.subr.mxu0 0.0
        %2787 = vmatpush1.xpose.msra.mxu0 0.0
        %2788 = vmatprep.subr.mxu0 0.0
        %2789 = vmatpush1.xpose.msra.mxu0 0.0
        %2790 = vmatprep.subr.mxu0 0.0
        %2791 = vmatpush1.xpose.msra.mxu0 %v2760
        %2792 = vmatprep.subr.mxu0 0.0
        %2793 = vmatpush1.xpose.msra.mxu0 %v2758
        %2794 = vmatprep.subr.mxu0 0.0
        %2795 = vmatpush2.xpose.msra.mxu0 0.0
        %2796 = vmatprep.subr.mxu0 0.0
        %2797 = vmatpush2.xpose.msra.mxu0 0.0
        %2798 = vmatprep.subr.mxu0 0.0
        %2799 = vmatpush2.xpose.msra.mxu0 0.0
        %2800 = vmatprep.subr.mxu0 0.0
        %2801 = vmatpush2.xpose.msra.mxu0 0.0
        %2802 = vmatprep.subr.mxu0 0.0
        %2803 = vmatpush2.xpose.msra.mxu0 0.0
        %2804 = vmatprep.subr.mxu0 0.0
        %2805 = vmatpush2.xpose.msra.mxu0 0.0
        %2806 = vmatprep.subr.mxu0 0.0
        %2807 = vmatpush2.xpose.msra.mxu0 0.0
        %2808 = vmatprep.subr.mxu0 0.0
        %2809 = vmatpush2.xpose.msra.mxu0 0.0
        %2810 = vmatprep.subr.mxu0 0.0
        %2811 = vmatpush2.xpose.msra.mxu0 0.0
        %2812 = vmatprep.subr.mxu0 0.0
        %2813 = vmatpush2.xpose.msra.mxu0 0.0
        %2814 = vmatprep.subr.mxu0 0.0
        %2815 = vmatpush2.xpose.msra.mxu0 0.0
        %2816 = vmatprep.subr.mxu0 0.0
        %2817 = vmatpush2.xpose.msra.mxu0 0.0
        %2818 = vmatprep.subr.mxu0 0.0
        %2819 = vmatpush2.xpose.msra.mxu0 0.0
        %2820 = vmatprep.subr.mxu0 0.0
        %2821 = vmatpush2.xpose.msra.mxu0 0.0
        %2822 = vmatprep.subr.mxu0 0.0
        %2823 = vmatpush2.xpose.msra.mxu0 0.0
        %2824 = vmatprep.subr.mxu0 0.0
        %2825 = vmatpush2.xpose.msra.mxu0 0.0
        %2826 = vmatprep.mubr.f32.mxu0 0.0
        %2827 = vmatmul.mubr.f32.gmra.mxu0 %v2756
        %v2828 = vpop.f32.mrf.mxu0
        %v2829 = vadd.f32 0.0, %v2828
        %v2830 = vpop.f32.mrf.mxu0
        %2831 = vdwg.mxu0
        %v2832 = vsel %vm1580, %v2829, -inf
        %2833 = vmax.xlane.f32.xlu0 %v2832
        %v2834 = vpop.xlane.xlu0 %2833
        %v2835 = vsub.f32 %v2829, %v2834
        %v2836 = vmul.f32 %v2835, 1.442695
        %v2837 = vpow.pop %v2836
        %v2838 = vsel %vm1580, %v2837, 0.0
        %2839 = vadd.xlane.f32.xlu0 %v2838
        %v2840 = vpop.xlane.xlu0 %2839
        %v2841 = vrcp.pop %v2840
        %v2842 = vmul.f32 %v2837, %v2841
        %2845 = vrot.lane.b32.xlu0 %v2579, 120
        %v2846 = vpop.permute.xlu0 %2845
        %2847 = vrot.lane.b32.xlu0 %v2584, 120
        %v2848 = vpop.permute.xlu0 %2847
        %v2852 = vsel %vm1580, %v2842, 0
        %2854 = vmatprep.subr.mxu0 0.0
        %2855 = vmatpush1.msra.mxu0 0.0
        %2856 = vmatprep.subr.mxu0 0.0
        %2857 = vmatpush1.msra.mxu0 0.0
        %2858 = vmatprep.subr.mxu0 0.0
        %2859 = vmatpush1.msra.mxu0 0.0
        %2860 = vmatprep.subr.mxu0 0.0
        %2861 = vmatpush1.msra.mxu0 0.0
        %2862 = vmatprep.subr.mxu0 0.0
        %2863 = vmatpush1.msra.mxu0 0.0
        %2864 = vmatprep.subr.mxu0 0.0
        %2865 = vmatpush1.msra.mxu0 0.0
        %2866 = vmatprep.subr.mxu0 0.0
        %2867 = vmatpush1.msra.mxu0 0.0
        %2868 = vmatprep.subr.mxu0 0.0
        %2869 = vmatpush1.msra.mxu0 0.0
        %2870 = vmatprep.subr.mxu0 0.0
        %2871 = vmatpush1.msra.mxu0 0.0
        %2872 = vmatprep.subr.mxu0 0.0
        %2873 = vmatpush1.msra.mxu0 0.0
        %2874 = vmatprep.subr.mxu0 0.0
        %2875 = vmatpush1.msra.mxu0 0.0
        %2876 = vmatprep.subr.mxu0 0.0
        %2877 = vmatpush1.msra.mxu0 0.0
        %2878 = vmatprep.subr.mxu0 0.0
        %2879 = vmatpush1.msra.mxu0 0.0
        %2880 = vmatprep.subr.mxu0 0.0
        %2881 = vmatpush1.msra.mxu0 0.0
        %2882 = vmatprep.subr.mxu0 0.0
        %2883 = vmatpush1.msra.mxu0 %v2848
        %2884 = vmatprep.subr.mxu0 0.0
        %2885 = vmatpush1.msra.mxu0 %v2846
        %2886 = vmatprep.subr.mxu0 0.0
        %2887 = vmatpush2.msra.mxu0 0.0
        %2888 = vmatprep.subr.mxu0 0.0
        %2889 = vmatpush2.msra.mxu0 0.0
        %2890 = vmatprep.subr.mxu0 0.0
        %2891 = vmatpush2.msra.mxu0 0.0
        %2892 = vmatprep.subr.mxu0 0.0
        %2893 = vmatpush2.msra.mxu0 0.0
        %2894 = vmatprep.subr.mxu0 0.0
        %2895 = vmatpush2.msra.mxu0 0.0
        %2896 = vmatprep.subr.mxu0 0.0
        %2897 = vmatpush2.msra.mxu0 0.0
        %2898 = vmatprep.subr.mxu0 0.0
        %2899 = vmatpush2.msra.mxu0 0.0
        %2900 = vmatprep.subr.mxu0 0.0
        %2901 = vmatpush2.msra.mxu0 0.0
        %2902 = vmatprep.subr.mxu0 0.0
        %2903 = vmatpush2.msra.mxu0 0.0
        %2904 = vmatprep.subr.mxu0 0.0
        %2905 = vmatpush2.msra.mxu0 0.0
        %2906 = vmatprep.subr.mxu0 0.0
        %2907 = vmatpush2.msra.mxu0 0.0
        %2908 = vmatprep.subr.mxu0 0.0
        %2909 = vmatpush2.msra.mxu0 0.0
        %2910 = vmatprep.subr.mxu0 0.0
        %2911 = vmatpush2.msra.mxu0 0.0
        %2912 = vmatprep.subr.mxu0 0.0
        %2913 = vmatpush2.msra.mxu0 0.0
        %2914 = vmatprep.subr.mxu0 0.0
        %2915 = vmatpush2.msra.mxu0 0.0
        %2916 = vmatprep.subr.mxu0 0.0
        %2917 = vmatpush2.msra.mxu0 0.0
        %2918 = vmatprep.mubr.f32.mxu0 0.0
        %2919 = vmatmul.mubr.f32.gmra.mxu0 %v2852
        %v2920 = vpop.f32.mrf.mxu0
        %v2921 = vadd.f32 0.0, %v2920
        %v2922 = vpop.f32.mrf.mxu0
        %2923 = vdwg.mxu0
        %2924 = vrot.lane.b32.xlu0 %v2418, 112
        %v2925 = vpop.permute.xlu0 %2924
        %2926 = vrot.lane.b32.xlu0 %v2498, 112
        %v2927 = vpop.permute.xlu0 %2926
        %2928 = vrot.lane.b32.xlu0 %v2503, 112
        %v2929 = vpop.permute.xlu0 %2928
        %v2930 = vsel %vm1498, %v2925, 0
        %v2932 = vsel %vm1498, %v2927, 0
        %v2934 = vsel %vm1498, %v2929, 0
        %2936 = vmatprep.subr.mxu0 0.0
        %2937 = vmatpush1.xpose.msra.mxu0 0.0
        %2938 = vmatprep.subr.mxu0 0.0
        %2939 = vmatpush1.xpose.msra.mxu0 0.0
        %2940 = vmatprep.subr.mxu0 0.0
        %2941 = vmatpush1.xpose.msra.mxu0 0.0
        %2942 = vmatprep.subr.mxu0 0.0
        %2943 = vmatpush1.xpose.msra.mxu0 0.0
        %2944 = vmatprep.subr.mxu0 0.0
        %2945 = vmatpush1.xpose.msra.mxu0 0.0
        %2946 = vmatprep.subr.mxu0 0.0
        %2947 = vmatpush1.xpose.msra.mxu0 0.0
        %2948 = vmatprep.subr.mxu0 0.0
        %2949 = vmatpush1.xpose.msra.mxu0 0.0
        %2950 = vmatprep.subr.mxu0 0.0
        %2951 = vmatpush1.xpose.msra.mxu0 0.0
        %2952 = vmatprep.subr.mxu0 0.0
        %2953 = vmatpush1.xpose.msra.mxu0 0.0
        %2954 = vmatprep.subr.mxu0 0.0
        %2955 = vmatpush1.xpose.msra.mxu0 0.0
        %2956 = vmatprep.subr.mxu0 0.0
        %2957 = vmatpush1.xpose.msra.mxu0 0.0
        %2958 = vmatprep.subr.mxu0 0.0
        %2959 = vmatpush1.xpose.msra.mxu0 0.0
        %2960 = vmatprep.subr.mxu0 0.0
        %2961 = vmatpush1.xpose.msra.mxu0 0.0
        %2962 = vmatprep.subr.mxu0 0.0
        %2963 = vmatpush1.xpose.msra.mxu0 0.0
        %2964 = vmatprep.subr.mxu0 0.0
        %2965 = vmatpush1.xpose.msra.mxu0 %v2934
        %2966 = vmatprep.subr.mxu0 0.0
        %2967 = vmatpush1.xpose.msra.mxu0 %v2932
        %2968 = vmatprep.subr.mxu0 0.0
        %2969 = vmatpush2.xpose.msra.mxu0 0.0
        %2970 = vmatprep.subr.mxu0 0.0
        %2971 = vmatpush2.xpose.msra.mxu0 0.0
        %2972 = vmatprep.subr.mxu0 0.0
        %2973 = vmatpush2.xpose.msra.mxu0 0.0
        %2974 = vmatprep.subr.mxu0 0.0
        %2975 = vmatpush2.xpose.msra.mxu0 0.0
        %2976 = vmatprep.subr.mxu0 0.0
        %2977 = vmatpush2.xpose.msra.mxu0 0.0
        %2978 = vmatprep.subr.mxu0 0.0
        %2979 = vmatpush2.xpose.msra.mxu0 0.0
        %2980 = vmatprep.subr.mxu0 0.0
        %2981 = vmatpush2.xpose.msra.mxu0 0.0
        %2982 = vmatprep.subr.mxu0 0.0
        %2983 = vmatpush2.xpose.msra.mxu0 0.0
        %2984 = vmatprep.subr.mxu0 0.0
        %2985 = vmatpush2.xpose.msra.mxu0 0.0
        %2986 = vmatprep.subr.mxu0 0.0
        %2987 = vmatpush2.xpose.msra.mxu0 0.0
        %2988 = vmatprep.subr.mxu0 0.0
        %2989 = vmatpush2.xpose.msra.mxu0 0.0
        %2990 = vmatprep.subr.mxu0 0.0
        %2991 = vmatpush2.xpose.msra.mxu0 0.0
        %2992 = vmatprep.subr.mxu0 0.0
        %2993 = vmatpush2.xpose.msra.mxu0 0.0
        %2994 = vmatprep.subr.mxu0 0.0
        %2995 = vmatpush2.xpose.msra.mxu0 0.0
        %2996 = vmatprep.subr.mxu0 0.0
        %2997 = vmatpush2.xpose.msra.mxu0 0.0
        %2998 = vmatprep.subr.mxu0 0.0
        %2999 = vmatpush2.xpose.msra.mxu0 0.0
        %3000 = vmatprep.mubr.f32.mxu0 0.0
        %3001 = vmatmul.mubr.f32.gmra.mxu0 %v2930
        %v3002 = vpop.f32.mrf.mxu0
        %v3003 = vadd.f32 0.0, %v3002
        %v3004 = vpop.f32.mrf.mxu0
        %3005 = vdwg.mxu0
        %v3006 = vsel %vm1580, %v3003, -inf
        %3007 = vmax.xlane.f32.xlu0 %v3006
        %v3008 = vpop.xlane.xlu0 %3007
        %v3009 = vsub.f32 %v3003, %v3008
        %v3010 = vmul.f32 %v3009, 1.442695
        %v3011 = vpow.pop %v3010
        %v3012 = vsel %vm1580, %v3011, 0.0
        %3013 = vadd.xlane.f32.xlu0 %v3012
        %v3014 = vpop.xlane.xlu0 %3013
        %v3015 = vrcp.pop %v3014
        %v3016 = vmul.f32 %v3011, %v3015
        %3017 = vrot.lane.b32.xlu0 %v2579, 112
        %v3018 = vpop.permute.xlu0 %3017
        %3019 = vrot.lane.b32.xlu0 %v2584, 112
        %v3020 = vpop.permute.xlu0 %3019
        %v3024 = vsel %vm1580, %v3016, 0
        %3026 = vmatprep.subr.mxu0 0.0
        %3027 = vmatpush1.msra.mxu0 0.0
        %3028 = vmatprep.subr.mxu0 0.0
        %3029 = vmatpush1.msra.mxu0 0.0
        %3030 = vmatprep.subr.mxu0 0.0
        %3031 = vmatpush1.msra.mxu0 0.0
        %3032 = vmatprep.subr.mxu0 0.0
        %3033 = vmatpush1.msra.mxu0 0.0
        %3034 = vmatprep.subr.mxu0 0.0
        %3035 = vmatpush1.msra.mxu0 0.0
        %3036 = vmatprep.subr.mxu0 0.0
        %3037 = vmatpush1.msra.mxu0 0.0
        %3038 = vmatprep.subr.mxu0 0.0
        %3039 = vmatpush1.msra.mxu0 0.0
        %3040 = vmatprep.subr.mxu0 0.0
        %3041 = vmatpush1.msra.mxu0 0.0
        %3042 = vmatprep.subr.mxu0 0.0
        %3043 = vmatpush1.msra.mxu0 0.0
        %3044 = vmatprep.subr.mxu0 0.0
        %3045 = vmatpush1.msra.mxu0 0.0
        %3046 = vmatprep.subr.mxu0 0.0
        %3047 = vmatpush1.msra.mxu0 0.0
        %3048 = vmatprep.subr.mxu0 0.0
        %3049 = vmatpush1.msra.mxu0 0.0
        %3050 = vmatprep.subr.mxu0 0.0
        %3051 = vmatpush1.msra.mxu0 0.0
        %3052 = vmatprep.subr.mxu0 0.0
        %3053 = vmatpush1.msra.mxu0 0.0
        %3054 = vmatprep.subr.mxu0 0.0
        %3055 = vmatpush1.msra.mxu0 %v3020
        %3056 = vmatprep.subr.mxu0 0.0
        %3057 = vmatpush1.msra.mxu0 %v3018
        %3058 = vmatprep.subr.mxu0 0.0
        %3059 = vmatpush2.msra.mxu0 0.0
        %3060 = vmatprep.subr.mxu0 0.0
        %3061 = vmatpush2.msra.mxu0 0.0
        %3062 = vmatprep.subr.mxu0 0.0
        %3063 = vmatpush2.msra.mxu0 0.0
        %3064 = vmatprep.subr.mxu0 0.0
        %3065 = vmatpush2.msra.mxu0 0.0
        %3066 = vmatprep.subr.mxu0 0.0
        %3067 = vmatpush2.msra.mxu0 0.0
        %3068 = vmatprep.subr.mxu0 0.0
        %3069 = vmatpush2.msra.mxu0 0.0
        %3070 = vmatprep.subr.mxu0 0.0
        %3071 = vmatpush2.msra.mxu0 0.0
        %3072 = vmatprep.subr.mxu0 0.0
        %3073 = vmatpush2.msra.mxu0 0.0
        %3074 = vmatprep.subr.mxu0 0.0
        %3075 = vmatpush2.msra.mxu0 0.0
        %3076 = vmatprep.subr.mxu0 0.0
        %3077 = vmatpush2.msra.mxu0 0.0
        %3078 = vmatprep.subr.mxu0 0.0
        %3079 = vmatpush2.msra.mxu0 0.0
        %3080 = vmatprep.subr.mxu0 0.0
        %3081 = vmatpush2.msra.mxu0 0.0
        %3082 = vmatprep.subr.mxu0 0.0
        %3083 = vmatpush2.msra.mxu0 0.0
        %3084 = vmatprep.subr.mxu0 0.0
        %3085 = vmatpush2.msra.mxu0 0.0
        %3086 = vmatprep.subr.mxu0 0.0
        %3087 = vmatpush2.msra.mxu0 0.0
        %3088 = vmatprep.subr.mxu0 0.0
        %3089 = vmatpush2.msra.mxu0 0.0
        %3090 = vmatprep.mubr.f32.mxu0 0.0
        %3091 = vmatmul.mubr.f32.gmra.mxu0 %v3024
        %v3092 = vpop.f32.mrf.mxu0
        %v3093 = vadd.f32 0.0, %v3092
        %v3094 = vpop.f32.mrf.mxu0
        %3095 = vdwg.mxu0
        %3096 = vrot.lane.b32.xlu0 %v2418, 104
        %v3097 = vpop.permute.xlu0 %3096
        %3098 = vrot.lane.b32.xlu0 %v2498, 104
        %v3099 = vpop.permute.xlu0 %3098
        %3100 = vrot.lane.b32.xlu0 %v2503, 104
        %v3101 = vpop.permute.xlu0 %3100
        %v3102 = vsel %vm1498, %v3097, 0
        %v3104 = vsel %vm1498, %v3099, 0
        %v3106 = vsel %vm1498, %v3101, 0
        %3108 = vmatprep.subr.mxu0 0.0
        %3109 = vmatpush1.xpose.msra.mxu0 0.0
        %3110 = vmatprep.subr.mxu0 0.0
        %3111 = vmatpush1.xpose.msra.mxu0 0.0
        %3112 = vmatprep.subr.mxu0 0.0
        %3113 = vmatpush1.xpose.msra.mxu0 0.0
        %3114 = vmatprep.subr.mxu0 0.0
        %3115 = vmatpush1.xpose.msra.mxu0 0.0
        %3116 = vmatprep.subr.mxu0 0.0
        %3117 = vmatpush1.xpose.msra.mxu0 0.0
        %3118 = vmatprep.subr.mxu0 0.0
        %3119 = vmatpush1.xpose.msra.mxu0 0.0
        %3120 = vmatprep.subr.mxu0 0.0
        %3121 = vmatpush1.xpose.msra.mxu0 0.0
        %3122 = vmatprep.subr.mxu0 0.0
        %3123 = vmatpush1.xpose.msra.mxu0 0.0
        %3124 = vmatprep.subr.mxu0 0.0
        %3125 = vmatpush1.xpose.msra.mxu0 0.0
        %3126 = vmatprep.subr.mxu0 0.0
        %3127 = vmatpush1.xpose.msra.mxu0 0.0
        %3128 = vmatprep.subr.mxu0 0.0
        %3129 = vmatpush1.xpose.msra.mxu0 0.0
        %3130 = vmatprep.subr.mxu0 0.0
        %3131 = vmatpush1.xpose.msra.mxu0 0.0
        %3132 = vmatprep.subr.mxu0 0.0
        %3133 = vmatpush1.xpose.msra.mxu0 0.0
        %3134 = vmatprep.subr.mxu0 0.0
        %3135 = vmatpush1.xpose.msra.mxu0 0.0
        %3136 = vmatprep.subr.mxu0 0.0
        %3137 = vmatpush1.xpose.msra.mxu0 %v3106
        %3138 = vmatprep.subr.mxu0 0.0
        %3139 = vmatpush1.xpose.msra.mxu0 %v3104
        %3140 = vmatprep.subr.mxu0 0.0
        %3141 = vmatpush2.xpose.msra.mxu0 0.0
        %3142 = vmatprep.subr.mxu0 0.0
        %3143 = vmatpush2.xpose.msra.mxu0 0.0
        %3144 = vmatprep.subr.mxu0 0.0
        %3145 = vmatpush2.xpose.msra.mxu0 0.0
        %3146 = vmatprep.subr.mxu0 0.0
        %3147 = vmatpush2.xpose.msra.mxu0 0.0
        %3148 = vmatprep.subr.mxu0 0.0
        %3149 = vmatpush2.xpose.msra.mxu0 0.0
        %3150 = vmatprep.subr.mxu0 0.0
        %3151 = vmatpush2.xpose.msra.mxu0 0.0
        %3152 = vmatprep.subr.mxu0 0.0
        %3153 = vmatpush2.xpose.msra.mxu0 0.0
        %3154 = vmatprep.subr.mxu0 0.0
        %3155 = vmatpush2.xpose.msra.mxu0 0.0
        %3156 = vmatprep.subr.mxu0 0.0
        %3157 = vmatpush2.xpose.msra.mxu0 0.0
        %3158 = vmatprep.subr.mxu0 0.0
        %3159 = vmatpush2.xpose.msra.mxu0 0.0
        %3160 = vmatprep.subr.mxu0 0.0
        %3161 = vmatpush2.xpose.msra.mxu0 0.0
        %3162 = vmatprep.subr.mxu0 0.0
        %3163 = vmatpush2.xpose.msra.mxu0 0.0
        %3164 = vmatprep.subr.mxu0 0.0
        %3165 = vmatpush2.xpose.msra.mxu0 0.0
        %3166 = vmatprep.subr.mxu0 0.0
        %3167 = vmatpush2.xpose.msra.mxu0 0.0
        %3168 = vmatprep.subr.mxu0 0.0
        %3169 = vmatpush2.xpose.msra.mxu0 0.0
        %3170 = vmatprep.subr.mxu0 0.0
        %3171 = vmatpush2.xpose.msra.mxu0 0.0
        %3172 = vmatprep.mubr.f32.mxu0 0.0
        %3173 = vmatmul.mubr.f32.gmra.mxu0 %v3102
        %v3174 = vpop.f32.mrf.mxu0
        %v3175 = vadd.f32 0.0, %v3174
        %v3176 = vpop.f32.mrf.mxu0
        %3177 = vdwg.mxu0
        %v3178 = vsel %vm1580, %v3175, -inf
        %3179 = vmax.xlane.f32.xlu0 %v3178
        %v3180 = vpop.xlane.xlu0 %3179
        %v3181 = vsub.f32 %v3175, %v3180
        %v3182 = vmul.f32 %v3181, 1.442695
        %v3183 = vpow.pop %v3182
        %v3184 = vsel %vm1580, %v3183, 0.0
        %3185 = vadd.xlane.f32.xlu0 %v3184
        %v3186 = vpop.xlane.xlu0 %3185
        %v3187 = vrcp.pop %v3186
        %v3188 = vmul.f32 %v3183, %v3187
        %3189 = vrot.lane.b32.xlu0 %v2579, 104
        %v3190 = vpop.permute.xlu0 %3189
        %3191 = vrot.lane.b32.xlu0 %v2584, 104
        %v3192 = vpop.permute.xlu0 %3191
        %v3196 = vsel %vm1580, %v3188, 0
        %3198 = vmatprep.subr.mxu0 0.0
        %3199 = vmatpush1.msra.mxu0 0.0
        %3200 = vmatprep.subr.mxu0 0.0
        %3201 = vmatpush1.msra.mxu0 0.0
        %3202 = vmatprep.subr.mxu0 0.0
        %3203 = vmatpush1.msra.mxu0 0.0
        %3204 = vmatprep.subr.mxu0 0.0
        %3205 = vmatpush1.msra.mxu0 0.0
        %3206 = vmatprep.subr.mxu0 0.0
        %3207 = vmatpush1.msra.mxu0 0.0
        %3208 = vmatprep.subr.mxu0 0.0
        %3209 = vmatpush1.msra.mxu0 0.0
        %3210 = vmatprep.subr.mxu0 0.0
        %3211 = vmatpush1.msra.mxu0 0.0
        %3212 = vmatprep.subr.mxu0 0.0
        %3213 = vmatpush1.msra.mxu0 0.0
        %3214 = vmatprep.subr.mxu0 0.0
        %3215 = vmatpush1.msra.mxu0 0.0
        %3216 = vmatprep.subr.mxu0 0.0
        %3217 = vmatpush1.msra.mxu0 0.0
        %3218 = vmatprep.subr.mxu0 0.0
        %3219 = vmatpush1.msra.mxu0 0.0
        %3220 = vmatprep.subr.mxu0 0.0
        %3221 = vmatpush1.msra.mxu0 0.0
        %3222 = vmatprep.subr.mxu0 0.0
        %3223 = vmatpush1.msra.mxu0 0.0
        %3224 = vmatprep.subr.mxu0 0.0
        %3225 = vmatpush1.msra.mxu0 0.0
        %3226 = vmatprep.subr.mxu0 0.0
        %3227 = vmatpush1.msra.mxu0 %v3192
        %3228 = vmatprep.subr.mxu0 0.0
        %3229 = vmatpush1.msra.mxu0 %v3190
        %3230 = vmatprep.subr.mxu0 0.0
        %3231 = vmatpush2.msra.mxu0 0.0
        %3232 = vmatprep.subr.mxu0 0.0
        %3233 = vmatpush2.msra.mxu0 0.0
        %3234 = vmatprep.subr.mxu0 0.0
        %3235 = vmatpush2.msra.mxu0 0.0
        %3236 = vmatprep.subr.mxu0 0.0
        %3237 = vmatpush2.msra.mxu0 0.0
        %3238 = vmatprep.subr.mxu0 0.0
        %3239 = vmatpush2.msra.mxu0 0.0
        %3240 = vmatprep.subr.mxu0 0.0
        %3241 = vmatpush2.msra.mxu0 0.0
        %3242 = vmatprep.subr.mxu0 0.0
        %3243 = vmatpush2.msra.mxu0 0.0
        %3244 = vmatprep.subr.mxu0 0.0
        %3245 = vmatpush2.msra.mxu0 0.0
        %3246 = vmatprep.subr.mxu0 0.0
        %3247 = vmatpush2.msra.mxu0 0.0
        %3248 = vmatprep.subr.mxu0 0.0
        %3249 = vmatpush2.msra.mxu0 0.0
        %3250 = vmatprep.subr.mxu0 0.0
        %3251 = vmatpush2.msra.mxu0 0.0
        %3252 = vmatprep.subr.mxu0 0.0
        %3253 = vmatpush2.msra.mxu0 0.0
        %3254 = vmatprep.subr.mxu0 0.0
        %3255 = vmatpush2.msra.mxu0 0.0
        %3256 = vmatprep.subr.mxu0 0.0
        %3257 = vmatpush2.msra.mxu0 0.0
        %3258 = vmatprep.subr.mxu0 0.0
        %3259 = vmatpush2.msra.mxu0 0.0
        %3260 = vmatprep.subr.mxu0 0.0
        %3261 = vmatpush2.msra.mxu0 0.0
        %3262 = vmatprep.mubr.f32.mxu0 0.0
        %3263 = vmatmul.mubr.f32.gmra.mxu0 %v3196
        %v3264 = vpop.f32.mrf.mxu0
        %v3265 = vadd.f32 0.0, %v3264
        %v3266 = vpop.f32.mrf.mxu0
        %3267 = vdwg.mxu0
        %3269 = vrot.lane.b32.xlu0 %v2921, 8
        %v3270 = vpop.permute.xlu0 %3269
        %3273 = vrot.lane.b32.xlu0 %v3093, 16
        %v3274 = vpop.permute.xlu0 %3273
        %3277 = vrot.lane.b32.xlu0 %v3265, 24
        %v3278 = vpop.permute.xlu0 %3277
        %v3280 = vsel %vm1498, %v2747, %v3270
        %v3281 = vsel %vm1580, %v3280, %v3274
        %v3282 = vsel %vm2200, %v3281, %v3278
        %v3284 = vlaneseq
        %v3285 = vshrl.u32 %v3284, 7
        %v3286 = vsub.s32 0, %v3285
        %v3287 = vrot.slane %v2338, %v3286
        %v3290 = vsel %vm1255, %v3282, 0
        %3292 = vmatprep.subr.mxu0 0.0
        %3293 = vmatpush1.msra.mxu0 0.0
        %3294 = vmatprep.subr.mxu0 0.0
        %3295 = vmatpush1.msra.mxu0 0.0
        %3296 = vmatprep.subr.mxu0 0.0
        %3297 = vmatpush1.msra.mxu0 0.0
        %3298 = vmatprep.subr.mxu0 0.0
        %3299 = vmatpush1.msra.mxu0 0.0
        %3300 = vmatprep.subr.mxu0 0.0
        %3301 = vmatpush1.msra.mxu0 0.0
        %3302 = vmatprep.subr.mxu0 0.0
        %3303 = vmatpush1.msra.mxu0 0.0
        %3304 = vmatprep.subr.mxu0 0.0
        %3305 = vmatpush1.msra.mxu0 0.0
        %3306 = vmatprep.subr.mxu0 0.0
        %3307 = vmatpush1.msra.mxu0 0.0
        %3308 = vmatprep.subr.mxu0 0.0
        %3309 = vmatpush1.msra.mxu0 0.0
        %3310 = vmatprep.subr.mxu0 0.0
        %3311 = vmatpush1.msra.mxu0 0.0
        %3312 = vmatprep.subr.mxu0 0.0
        %3313 = vmatpush1.msra.mxu0 0.0
        %3314 = vmatprep.subr.mxu0 0.0
        %3315 = vmatpush1.msra.mxu0 0.0
        %3316 = vmatprep.subr.mxu0 0.0
        %3317 = vmatpush1.msra.mxu0 %v2337
        %3318 = vmatprep.subr.mxu0 0.0
        %3319 = vmatpush1.msra.mxu0 %v2336
        %3320 = vmatprep.subr.mxu0 0.0
        %3321 = vmatpush1.msra.mxu0 %v2335
        %3322 = vmatprep.subr.mxu0 0.0
        %3323 = vmatpush1.msra.mxu0 %v2334
        %3324 = vmatprep.subr.mxu0 0.0
        %3325 = vmatpush2.msra.mxu0 0.0
        %3326 = vmatprep.subr.mxu0 0.0
        %3327 = vmatpush2.msra.mxu0 0.0
        %3328 = vmatprep.subr.mxu0 0.0
        %3329 = vmatpush2.msra.mxu0 0.0
        %3330 = vmatprep.subr.mxu0 0.0
        %3331 = vmatpush2.msra.mxu0 0.0
        %3332 = vmatprep.subr.mxu0 0.0
        %3333 = vmatpush2.msra.mxu0 0.0
        %3334 = vmatprep.subr.mxu0 0.0
        %3335 = vmatpush2.msra.mxu0 0.0
        %3336 = vmatprep.subr.mxu0 0.0
        %3337 = vmatpush2.msra.mxu0 0.0
        %3338 = vmatprep.subr.mxu0 0.0
        %3339 = vmatpush2.msra.mxu0 0.0
        %3340 = vmatprep.subr.mxu0 0.0
        %3341 = vmatpush2.msra.mxu0 0.0
        %3342 = vmatprep.subr.mxu0 0.0
        %3343 = vmatpush2.msra.mxu0 0.0
        %3344 = vmatprep.subr.mxu0 0.0
        %3345 = vmatpush2.msra.mxu0 0.0
        %3346 = vmatprep.subr.mxu0 0.0
        %3347 = vmatpush2.msra.mxu0 0.0
        %3348 = vmatprep.subr.mxu0 0.0
        %3349 = vmatpush2.msra.mxu0 0.0
        %3350 = vmatprep.subr.mxu0 0.0
        %3351 = vmatpush2.msra.mxu0 0.0
        %3352 = vmatprep.subr.mxu0 0.0
        %3353 = vmatpush2.msra.mxu0 0.0
        %3354 = vmatprep.subr.mxu0 0.0
        %3355 = vmatpush2.msra.mxu0 0.0
        %3356 = vmatprep.mubr.f32.mxu0 0.0
        %3357 = vmatmul.mubr.f32.gmra.mxu0 %v3290
        %v3358 = vpop.f32.mrf.mxu0
        %v3359 = vadd.f32 %v3287, %v3358
        %v3360 = vpop.f32.mrf.mxu0
        %3361 = vdwg.mxu0
        %v3362 = vld [vmem:[%s45] sm:$0x1]
        %v3363 = vld [vmem:[%s47] sm:$0x1]
        %v3364 = vadd.f32 %v2318, %v3359
        %v3365 = vsel %vm1255, %v3364, 0.0
        %3366 = vadd.xlane.f32.xlu0 %v3365
        %v3367 = vpop.xlane.xlu0 %3366
        %v3368 = vmul.f32 %v3367, %v2287
        %v3369 = vsub.f32 %v3364, %v3368
        %v3370 = vmul.f32 %v3369, %v3369
        %v3371 = vsel %vm1255, %v3370, 0.0
        %3372 = vadd.xlane.f32.xlu0 %v3371
        %v3373 = vpop.xlane.xlu0 %3372
        %v3374 = vmul.f32 %v3373, %v2287
        %v3375 = vrsqrt.pop %v3374
        %v3376 = vmul.f32 %v3374, %v3375
        %vm3377 = vcmp.eq.f32.partialorder %v3374, inf
        %v3378 = vsel %vm3377, %v3374, %v3376
        %vm3379 = vcmp.eq.f32.partialorder %v3374, 0.0
        %v3380 = vand.u32 %v3374, 2147483648
        %v3381 = vsel %vm3379, %v3380, %v3378
        %v3383 = vlaneseq
        %v3384 = vshrl.u32 %v3383, 7
        %v3385 = vsub.s32 0, %v3384
        %v3386 = vrot.slane %v3362, %v3385
        %v3388 = vmul.f32 %v3386, %v3369
        %v3389 = vadd.f32 %v3381, 1e-10
        %v3390 = vrcp.pop %v3389
        %v3391 = vmul.f32 %v3388, %v3390
        %v3393 = vlaneseq
        %v3394 = vshrl.u32 %v3393, 7
        %v3395 = vsub.s32 0, %v3394
        %v3396 = vrot.slane %v3363, %v3395
        %v3398 = vadd.f32 %v3391, %v3396
        %v3399 = vld [vmem:[#allocation24] sm:$0xff]
        %v3400 = vld [vmem:[#allocation24 + $0x8] sm:$0xff]
        %v3401 = vld [vmem:[#allocation24 + $0x10] sm:$0xff]
        %v3402 = vld [vmem:[#allocation24 + $0x18] sm:$0xff]
        %v3403 = vld [vmem:[%s51] sm:$0x1]
        %v3405 = vlaneseq
        %v3406 = vshrl.u32 %v3405, 7
        %v3407 = vsub.s32 0, %v3406
        %v3408 = vrot.slane %v3403, %v3407
        %v3411 = vsel %vm1255, %v3398, 0
        %3413 = vmatprep.subr.mxu0 0.0
        %3414 = vmatpush1.msra.mxu0 0.0
        %3415 = vmatprep.subr.mxu0 0.0
        %3416 = vmatpush1.msra.mxu0 0.0
        %3417 = vmatprep.subr.mxu0 0.0
        %3418 = vmatpush1.msra.mxu0 0.0
        %3419 = vmatprep.subr.mxu0 0.0
        %3420 = vmatpush1.msra.mxu0 0.0
        %3421 = vmatprep.subr.mxu0 0.0
        %3422 = vmatpush1.msra.mxu0 0.0
        %3423 = vmatprep.subr.mxu0 0.0
        %3424 = vmatpush1.msra.mxu0 0.0
        %3425 = vmatprep.subr.mxu0 0.0
        %3426 = vmatpush1.msra.mxu0 0.0
        %3427 = vmatprep.subr.mxu0 0.0
        %3428 = vmatpush1.msra.mxu0 0.0
        %3429 = vmatprep.subr.mxu0 0.0
        %3430 = vmatpush1.msra.mxu0 0.0
        %3431 = vmatprep.subr.mxu0 0.0
        %3432 = vmatpush1.msra.mxu0 0.0
        %3433 = vmatprep.subr.mxu0 0.0
        %3434 = vmatpush1.msra.mxu0 0.0
        %3435 = vmatprep.subr.mxu0 0.0
        %3436 = vmatpush1.msra.mxu0 0.0
        %3437 = vmatprep.subr.mxu0 0.0
        %3438 = vmatpush1.msra.mxu0 %v3402
        %3439 = vmatprep.subr.mxu0 0.0
        %3440 = vmatpush1.msra.mxu0 %v3401
        %3441 = vmatprep.subr.mxu0 0.0
        %3442 = vmatpush1.msra.mxu0 %v3400
        %3443 = vmatprep.subr.mxu0 0.0
        %3444 = vmatpush1.msra.mxu0 %v3399
        %3445 = vmatprep.subr.mxu0 0.0
        %3446 = vmatpush2.msra.mxu0 0.0
        %3447 = vmatprep.subr.mxu0 0.0
        %3448 = vmatpush2.msra.mxu0 0.0
        %3449 = vmatprep.subr.mxu0 0.0
        %3450 = vmatpush2.msra.mxu0 0.0
        %3451 = vmatprep.subr.mxu0 0.0
        %3452 = vmatpush2.msra.mxu0 0.0
        %3453 = vmatprep.subr.mxu0 0.0
        %3454 = vmatpush2.msra.mxu0 0.0
        %3455 = vmatprep.subr.mxu0 0.0
        %3456 = vmatpush2.msra.mxu0 0.0
        %3457 = vmatprep.subr.mxu0 0.0
        %3458 = vmatpush2.msra.mxu0 0.0
        %3459 = vmatprep.subr.mxu0 0.0
        %3460 = vmatpush2.msra.mxu0 0.0
        %3461 = vmatprep.subr.mxu0 0.0
        %3462 = vmatpush2.msra.mxu0 0.0
        %3463 = vmatprep.subr.mxu0 0.0
        %3464 = vmatpush2.msra.mxu0 0.0
        %3465 = vmatprep.subr.mxu0 0.0
        %3466 = vmatpush2.msra.mxu0 0.0
        %3467 = vmatprep.subr.mxu0 0.0
        %3468 = vmatpush2.msra.mxu0 0.0
        %3469 = vmatprep.subr.mxu0 0.0
        %3470 = vmatpush2.msra.mxu0 0.0
        %3471 = vmatprep.subr.mxu0 0.0
        %3472 = vmatpush2.msra.mxu0 0.0
        %3473 = vmatprep.subr.mxu0 0.0
        %3474 = vmatpush2.msra.mxu0 0.0
        %3475 = vmatprep.subr.mxu0 0.0
        %3476 = vmatpush2.msra.mxu0 0.0
        %3477 = vmatprep.mubr.f32.mxu0 0.0
        %3478 = vmatmul.mubr.f32.gmra.mxu0 %v3411
        %v3479 = vpop.f32.mrf.mxu0
        %v3480 = vadd.f32 %v3408, %v3479
        %v3481 = vpop.f32.mrf.mxu0
        %3482 = vdwg.mxu0
        %v3483 = vmax.f32 %v3480, 0.0
        %v3484 = vld [vmem:[%s53] sm:$0xff]
        %v3485 = vld [vmem:[%s53 + $0x8] sm:$0xff]
        %v3486 = vld [vmem:[%s53 + $0x10] sm:$0xff]
        %v3487 = vld [vmem:[%s53 + $0x18] sm:$0xff]
        %v3488 = vld [vmem:[%s53 + $0x20] sm:$0xff]
        %v3489 = vld [vmem:[%s53 + $0x28] sm:$0xff]
        %v3490 = vld [vmem:[%s53 + $0x30] sm:$0xff]
        %v3491 = vld [vmem:[%s53 + $0x38] sm:$0xff]
        %v3492 = vld [vmem:[%s55] sm:$0x1]
        %v3494 = vlaneseq
        %v3495 = vshrl.u32 %v3494, 7
        %v3496 = vsub.s32 0, %v3495
        %v3497 = vrot.slane %v3492, %v3496
        %vm3499 = vcmask 523264
        %v3501 = vsel %vm3499, %v3483, 0
        %3503 = vmatprep.subr.mxu0 0.0
        %3504 = vmatpush1.msra.mxu0 0.0
        %3505 = vmatprep.subr.mxu0 0.0
        %3506 = vmatpush1.msra.mxu0 0.0
        %3507 = vmatprep.subr.mxu0 0.0
        %3508 = vmatpush1.msra.mxu0 0.0
        %3509 = vmatprep.subr.mxu0 0.0
        %3510 = vmatpush1.msra.mxu0 0.0
        %3511 = vmatprep.subr.mxu0 0.0
        %3512 = vmatpush1.msra.mxu0 0.0
        %3513 = vmatprep.subr.mxu0 0.0
        %3514 = vmatpush1.msra.mxu0 0.0
        %3515 = vmatprep.subr.mxu0 0.0
        %3516 = vmatpush1.msra.mxu0 0.0
        %3517 = vmatprep.subr.mxu0 0.0
        %3518 = vmatpush1.msra.mxu0 0.0
        %3519 = vmatprep.subr.mxu0 0.0
        %3520 = vmatpush1.msra.mxu0 %v3491
        %3521 = vmatprep.subr.mxu0 0.0
        %3522 = vmatpush1.msra.mxu0 %v3490
        %3523 = vmatprep.subr.mxu0 0.0
        %3524 = vmatpush1.msra.mxu0 %v3489
        %3525 = vmatprep.subr.mxu0 0.0
        %3526 = vmatpush1.msra.mxu0 %v3488
        %3527 = vmatprep.subr.mxu0 0.0
        %3528 = vmatpush1.msra.mxu0 %v3487
        %3529 = vmatprep.subr.mxu0 0.0
        %3530 = vmatpush1.msra.mxu0 %v3486
        %3531 = vmatprep.subr.mxu0 0.0
        %3532 = vmatpush1.msra.mxu0 %v3485
        %3533 = vmatprep.subr.mxu0 0.0
        %3534 = vmatpush1.msra.mxu0 %v3484
        %3535 = vmatprep.subr.mxu0 0.0
        %3536 = vmatpush2.msra.mxu0 0.0
        %3537 = vmatprep.subr.mxu0 0.0
        %3538 = vmatpush2.msra.mxu0 0.0
        %3539 = vmatprep.subr.mxu0 0.0
        %3540 = vmatpush2.msra.mxu0 0.0
        %3541 = vmatprep.subr.mxu0 0.0
        %3542 = vmatpush2.msra.mxu0 0.0
        %3543 = vmatprep.subr.mxu0 0.0
        %3544 = vmatpush2.msra.mxu0 0.0
        %3545 = vmatprep.subr.mxu0 0.0
        %3546 = vmatpush2.msra.mxu0 0.0
        %3547 = vmatprep.subr.mxu0 0.0
        %3548 = vmatpush2.msra.mxu0 0.0
        %3549 = vmatprep.subr.mxu0 0.0
        %3550 = vmatpush2.msra.mxu0 0.0
        %3551 = vmatprep.subr.mxu0 0.0
        %3552 = vmatpush2.msra.mxu0 0.0
        %3553 = vmatprep.subr.mxu0 0.0
        %3554 = vmatpush2.msra.mxu0 0.0
        %3555 = vmatprep.subr.mxu0 0.0
        %3556 = vmatpush2.msra.mxu0 0.0
        %3557 = vmatprep.subr.mxu0 0.0
        %3558 = vmatpush2.msra.mxu0 0.0
        %3559 = vmatprep.subr.mxu0 0.0
        %3560 = vmatpush2.msra.mxu0 0.0
        %3561 = vmatprep.subr.mxu0 0.0
        %3562 = vmatpush2.msra.mxu0 0.0
        %3563 = vmatprep.subr.mxu0 0.0
        %3564 = vmatpush2.msra.mxu0 0.0
        %3565 = vmatprep.subr.mxu0 0.0
        %3566 = vmatpush2.msra.mxu0 0.0
        %3567 = vmatprep.mubr.f32.mxu0 0.0
        %3568 = vmatmul.mubr.f32.gmra.mxu0 %v3501
        %v3569 = vpop.f32.mrf.mxu0
        %v3570 = vadd.f32 %v3497, %v3569
        %v3571 = vpop.f32.mrf.mxu0
        %3572 = vdwg.mxu0
        %v3573 = vld [vmem:[%s57] sm:$0x1]
        %v3574 = vld [vmem:[%s59] sm:$0x1]
        %v3575 = vadd.f32 %v3398, %v3570
        %v3576 = vsel %vm1255, %v3575, 0.0
        %3577 = vadd.xlane.f32.xlu0 %v3576
        %v3578 = vpop.xlane.xlu0 %3577
        %v3579 = vmul.f32 %v3578, %v2287
        %v3580 = vsub.f32 %v3575, %v3579
        %v3581 = vmul.f32 %v3580, %v3580
        %v3582 = vsel %vm1255, %v3581, 0.0
        %3583 = vadd.xlane.f32.xlu0 %v3582
        %v3584 = vpop.xlane.xlu0 %3583
        %v3585 = vmul.f32 %v3584, %v2287
        %v3586 = vrsqrt.pop %v3585
        %v3587 = vmul.f32 %v3585, %v3586
        %vm3588 = vcmp.eq.f32.partialorder %v3585, inf
        %v3589 = vsel %vm3588, %v3585, %v3587
        %vm3590 = vcmp.eq.f32.partialorder %v3585, 0.0
        %v3591 = vand.u32 %v3585, 2147483648
        %v3592 = vsel %vm3590, %v3591, %v3589
        %v3594 = vlaneseq
        %v3595 = vshrl.u32 %v3594, 7
        %v3596 = vsub.s32 0, %v3595
        %v3597 = vrot.slane %v3573, %v3596
        %v3599 = vmul.f32 %v3597, %v3580
        %v3600 = vadd.f32 %v3592, 1e-10
        %v3601 = vrcp.pop %v3600
        %v3602 = vmul.f32 %v3599, %v3601
        %v3604 = vlaneseq
        %v3605 = vshrl.u32 %v3604, 7
        %v3606 = vsub.s32 0, %v3605
        %v3607 = vrot.slane %v3574, %v3606
        %v3609 = vadd.f32 %v3602, %v3607
        %3610 = vst.msk [vmem:[%s1222] sm:$0xff] %vm1255, %v3609
        %p3611 = scmp.lt.s32.totalorder %s84, 1
        %s3612 = scalar_select %p3611, %s84, 1
        %p3613 = scmp.lt.s32.totalorder %s85, 1
        %s3614 = scalar_select %p3613, %s85, 1
        %s3615 = smul.addr %s3612, 2
        %s3616 = sadd.s32 %s3614, %s3615
        %s3617 = smul.addr %s3616, 8
        %s3618 = scalar_lea.vmem %s61, %s3617
        // Predicated region
        $region201: #{decoder_forward.3} parent=139 // pred_check
          %p3619 = pneg %p764
        $region202: #{decoder_forward.3} parent=139 // pred_check_branch
          %3621 = sbr.rel (%p3619) target = $region204
        $region203: #{decoder_forward.3} parent=139 // pred_region
          _
        $region204: #{decoder_forward.3} parent=139 // pred_fallthru
          _
      $region140: #{decoder_forward.3} parent=5 // pred_fallthru
        _
      %p3622 = scmp.le.s32.totalorder 2, %s75
      // Predicated region
      $region205: #{decoder_forward.3} parent=5 // pred_check
        %p3623 = pneg %p3622
      $region206: #{decoder_forward.3} parent=5 // pred_check_branch
        %3625 = sbr.rel (%p3623) target = $region208
      $region207: #{decoder_forward.3} parent=5 // pred_region
        %s3626 = ssub.s32 %s75, 2
        // Predicated region
        $region209: #{decoder_forward.3} parent=207 // pred_check
          %p3627 = pneg %p770
        $region210: #{decoder_forward.3} parent=207 // pred_check_branch
          %3629 = sbr.rel (%p3627) target = $region212
        $region211: #{decoder_forward.3} parent=207 // pred_region
          %p3630 = scmp.lt.s32.totalorder %s86, 1
          %s3631 = scalar_select %p3630, %s86, 1
          %p3632 = scmp.lt.s32.totalorder %s87, 1
          %s3633 = scalar_select %p3632, %s87, 1
          %s3634 = smul.addr %s3631, 2
          %s3635 = sadd.s32 %s3633, %s3634
          %s3636 = smul.addr %s3635, 8
          %s3637 = scalar_lea.vmem %s61, %s3636
        $region212: #{decoder_forward.3} parent=207 // pred_fallthru
          _
      $region208: #{decoder_forward.3} parent=5 // pred_fallthru
        _
    $region6: #{decoder_forward.3} parent=1 // loop_footer
      %s79 = sadd.s32 1, %s75
    $region7: #{decoder_forward.3} parent=1 // loop_footer_branch
      %74 = sbr.rel target = $region3
    $region8: #{decoder_forward.3} parent=1 // loop_exit
      _
    %3638 = vsyncpa [#allocation3], 1
    %s3639 = scalar_lea.sflag [#allocation3], 1
    %3640 = vsyncpa %s3639, 1
    %3641 = vsyncpa [#allocation5], 1
    %3642 = vsyncpa [#allocation8], 1
    %3643 = vsyncpa [#allocation11], 1
    %3644 = vsyncpa [#allocation14], 1
    %3645 = vsyncpa [#allocation17], 1
    %3646 = vsyncpa [#allocation20], 1
    %3647 = vsyncpa [#allocation23], 1

</llo_original>
